<compile_context>
chip_gen: v7x
topology: tpu7x:2x2x1
jax: 0.10.0
libtpu: 0.0.40
codegen_flags: <defaults>
</compile_context>

<pallas_src>
import jax
import jax.numpy as jnp
from jax.experimental import pallas as pl
from jax.experimental.pallas import tpu as pltpu

EPS = 1e-3

# Module shapes (from M.__init__ / forward):
#   cat([1,64,25,25],[1,64,25,25],[1,96,25,25],[1,64,25,25], dim=1) -> (1,288,25,25)
#   Conv2d(288, 384, k=3, stride=2, bias=False) -> (1,384,12,12)
#   BatchNorm2d(384, eps=1e-3)  (train mode -> batch statistics)
C_IN, C_OUT, KH, KW, STRIDE = 288, 384, 3, 3, 2
H_IN, W_IN = 25, 25
H_OUT = (H_IN - KH) // STRIDE + 1      # 12
W_OUT = (W_IN - KW) // STRIDE + 1      # 12
P = H_OUT * W_OUT                      # 144 output positions (batch=1), 18*8
K = KH * KW * C_IN                     # 2592 reduction length
K_PAD = 2688                           # 21*128: clean unmasked MXU tiles
C_TILE = 128                           # lane-dense epilogue chunk
N_CTILES = C_OUT // C_TILE             # 3 in-kernel epilogue chunks


def conv_bn_kernel(a_ref, w_ref, gamma_ref, beta_ref, o_ref):
    """a_ref: (P, K_PAD) bf16 im2col patches; w_ref: (K_PAD, C_OUT) bf16;
    gamma/beta: (1, C_OUT) f32; o_ref: (P, C_OUT) f32."""
    inv_p = 1.0 / P
    # Static 3-chunk loop keeps the f32 accumulator + epilogue temporaries to
    # ~20 live vregs per chunk instead of ~60 for the full 384-lane slab.
    for j in range(N_CTILES):
        lo, hi = j * C_TILE, (j + 1) * C_TILE
        # Conv hot path: single-pass bf16 MXU matmul, f32 accumulation.
        acc = jnp.dot(
            a_ref[...], w_ref[:, lo:hi],
            preferred_element_type=jnp.float32,
        )  # (P, C_TILE) float32

        # Training-mode BatchNorm2d, batch stats over all N*H*W positions,
        # centered (cancellation-free) variance.
        mean = jnp.sum(acc, axis=0, keepdims=True) * inv_p       # (1, C_TILE)
        d = acc - mean
        var = jnp.sum(d * d, axis=0, keepdims=True) * inv_p      # biased var
        scale = jax.lax.rsqrt(var + EPS) * gamma_ref[:, lo:hi]
        o_ref[:, lo:hi] = (d * scale + beta_ref[:, lo:hi]).astype(o_ref.dtype)


def prepare_weight(w_oihw):
    """One-time (init-time) weight relayout: OIHW -> (K_PAD, C_OUT) bf16.

    K index = (kh*KW + kw)*C_IN + c, matching the im2col ordering below; the
    last K_PAD-K rows are zero so the padded contraction is exact.
    """
    w_mat = jnp.transpose(w_oihw, (2, 3, 1, 0)).reshape(K, C_OUT)
    return jnp.pad(w_mat, ((0, K_PAD - K), (0, 0))).astype(jnp.bfloat16)


def _conv_bn_pallas(a, w_kc, gamma2, beta2):
    return pl.pallas_call(
        conv_bn_kernel,
        out_shape=jax.ShapeDtypeStruct((P, C_OUT), jnp.float32),
        grid=(1,),
        in_specs=[
            pl.BlockSpec((P, K_PAD), lambda j: (0, 0)),       # A (resident)
            pl.BlockSpec((K_PAD, C_OUT), lambda j: (0, 0)),   # full weight
            pl.BlockSpec((1, C_OUT), lambda j: (0, 0)),       # gamma
            pl.BlockSpec((1, C_OUT), lambda j: (0, 0)),       # beta
        ],
        out_specs=pl.BlockSpec((P, C_OUT), lambda j: (0, 0)),
        compiler_params=pltpu.CompilerParams(
            dimension_semantics=("arbitrary",),
        ),
        cost_estimate=pl.CostEstimate(
            flops=2 * P * K * C_OUT,
            transcendentals=0,
            bytes_accessed=2 * (P * K_PAD + K_PAD * C_OUT)
            + 4 * (P * C_OUT + 2 * C_OUT),
        ),
    )(a, w_kc, gamma2, beta2)


@jax.jit
def forward(x79, x85, x94, x98, w_kc, gamma, beta):
    """Forward of M: cat(dim=1) -> conv(3x3,s2) -> train-mode BN. NCHW in/out."""
    # torch.cat([...], dim=1) on NCHW == channel concat; cast to bf16 first so
    # the whole wrapper-glue path (concat/transpose/im2col/pad) moves half the
    # bytes the f32 version did.
    parts = [x.astype(jnp.bfloat16) for x in (x79, x85, x94, x98)]
    x_nchw = jnp.concatenate(parts, axis=1)                     # (1, 288, 25, 25)
    x_nhwc = jnp.transpose(x_nchw, (0, 2, 3, 1))                # (1, 25, 25, 288)

    # glue: im2col patch extraction (pure strided slicing / reshape, bf16)
    cols = []
    for kh in range(KH):
        for kw in range(KW):
            cols.append(
                x_nhwc[0,
                       kh:kh + STRIDE * (H_OUT - 1) + 1:STRIDE,
                       kw:kw + STRIDE * (W_OUT - 1) + 1:STRIDE,
                       :]
            )  # (12, 12, 288)
    a = jnp.stack(cols, axis=2).reshape(P, K)       # K index = (kh*3+kw)*288 + c
    a = jnp.pad(a, ((0, 0), (0, K_PAD - K)))        # (144, 2688) bf16

    gamma2 = gamma.reshape(1, C_OUT)
    beta2 = beta.reshape(1, C_OUT)

    out_flat = _conv_bn_pallas(a, w_kc, gamma2, beta2)          # (144, 384) f32

    # (P, C_OUT) -> (1, 12, 12, 384) -> NCHW (1, 384, 12, 12)
    return jnp.transpose(out_flat.reshape(1, H_OUT, W_OUT, C_OUT), (0, 3, 1, 2))


def reference(x_nchw, w_oihw, gamma, beta):
    y = jax.lax.conv_general_dilated(
        x_nchw, w_oihw, window_strides=(STRIDE, STRIDE), padding="VALID",
        dimension_numbers=("NCHW", "OIHW", "NCHW"),
        precision=jax.lax.Precision.HIGHEST,
    )
    mean = jnp.mean(y, axis=(0, 2, 3), keepdims=True)
    var = jnp.mean((y - mean) ** 2, axis=(0, 2, 3), keepdims=True)
    return (y - mean) * jax.lax.rsqrt(var + EPS) * gamma.reshape(1, -1, 1, 1) \
        + beta.reshape(1, -1, 1, 1)


if __name__ == "__main__":
    key = jax.random.PRNGKey(0)
    k79, k85, k94, k98, kw_, kg, kb = jax.random.split(key, 7)

    # inputs exactly as in the PyTorch script (NCHW)
    x79 = jax.random.normal(k79, (1, 64, 25, 25), jnp.float32)
    x85 = jax.random.normal(k85, (1, 64, 25, 25), jnp.float32)
    x94 = jax.random.normal(k94, (1, 96, 25, 25), jnp.float32)
    x98 = jax.random.normal(k98, (1, 64, 25, 25), jnp.float32)

    # deterministic parameter init (shapes from the module's __init__)
    w = jax.random.normal(kw_, (C_OUT, C_IN, KH, KW), jnp.float32) * 0.05
    gamma = 1.0 + 0.1 * jax.random.normal(kg, (C_OUT,), jnp.float32)
    beta = 0.1 * jax.random.normal(kb, (C_OUT,), jnp.float32)

    # init-time (hoisted) weight relayout + bf16 cast — NOT in the per-call path
    w_kc = jax.block_until_ready(prepare_weight(w))             # (2688, 384) bf16

    out = forward(x79, x85, x94, x98, w_kc, gamma, beta)
    out = jax.block_until_ready(out)

    x_nchw = jnp.concatenate([x79, x85, x94, x98], axis=1)
    ref = reference(x_nchw, w, gamma, beta)
    assert out.shape == (1, C_OUT, H_OUT, W_OUT), out.shape
    # bf16 operands -> bf16-class accuracy (abs error ~1e-2 worst case on
    # BN-normalized O(1) outputs).
    assert jnp.allclose(out, ref, rtol=3e-2, atol=3e-2), float(
        jnp.max(jnp.abs(out - ref))
    )
    print("KERNEL_OK")
</pallas_src>

<mosaic_0001>
module attributes {stable_mosaic.version = 11 : i64} {
  func.func @conv_bn_kernel(%arg0: i32, %arg1: memref<144x2688xbf16, #tpu.memory_space<vmem>>, %arg2: memref<2688x384xbf16, #tpu.memory_space<vmem>>, %arg3: memref<1x384xf32, #tpu.memory_space<vmem>>, %arg4: memref<1x384xf32, #tpu.memory_space<vmem>>, %arg5: memref<144x384xf32, #tpu.memory_space<vmem>>) attributes {dimension_semantics = [#tpu.dimension_semantics<arbitrary>], iteration_bounds = array<i64: 1>, scalar_prefetch = 0 : i64, scratch_operands = 0 : i64, tpu.core_type = #tpu.core_type<tc>, window_params = [{pipeline_mode = #tpu.pipeline_mode<synchronous>, transform_indices = @transform_0, window_bounds = array<i64: 144, 2688>}, {pipeline_mode = #tpu.pipeline_mode<synchronous>, transform_indices = @transform_1, window_bounds = array<i64: 2688, 384>}, {pipeline_mode = #tpu.pipeline_mode<synchronous>, transform_indices = @transform_2, window_bounds = array<i64: 1, 384>}, {pipeline_mode = #tpu.pipeline_mode<synchronous>, transform_indices = @transform_3, window_bounds = array<i64: 1, 384>}, {pipeline_mode = #tpu.pipeline_mode<synchronous>, transform_indices = @transform_4, window_bounds = array<i64: 144, 384>}]} {
    %c0 = arith.constant 0 : index
    %c0_0 = arith.constant 0 : index
    %0 = vector.load %arg1[%c0, %c0_0] : memref<144x2688xbf16, #tpu.memory_space<vmem>>, vector<144x2688xbf16>
    %c0_1 = arith.constant 0 : index
    %c0_2 = arith.constant 0 : index
    %1 = vector.load %arg2[%c0_1, %c0_2] : memref<2688x384xbf16, #tpu.memory_space<vmem>>, vector<2688x128xbf16>
    %cst = arith.constant dense<0.000000e+00> : vector<144x128xf32>
    %2 = tpu.matmul %0, %1, %cst {dimension_numbers = #tpu.dot_dimension_numbers<[1], [0], [0], [1], [0, 0, 1, 1], [], []>} : vector<144x2688xbf16>, vector<2688x128xbf16>, vector<144x128xf32> -> vector<144x128xf32>
    %cst_3 = arith.constant dense<0.000000e+00> : vector<128xf32>
    %3 = vector.multi_reduction <add>, %2, %cst_3 [0] : vector<144x128xf32> to vector<128xf32>
    %4 = vector.shape_cast %3 : vector<128xf32> to vector<1x128xf32>
    %cst_4 = arith.constant 0.0069444445 : f32
    %5 = vector.broadcast %cst_4 : f32 to vector<1x128xf32>
    %6 = arith.mulf %4, %5 : vector<1x128xf32>
    %7 = vector.broadcast %6 : vector<1x128xf32> to vector<144x128xf32>
    %8 = arith.subf %2, %7 : vector<144x128xf32>
    %9 = arith.mulf %8, %8 : vector<144x128xf32>
    %cst_5 = arith.constant dense<0.000000e+00> : vector<128xf32>
    %10 = vector.multi_reduction <add>, %9, %cst_5 [0] : vector<144x128xf32> to vector<128xf32>
    %11 = vector.shape_cast %10 : vector<128xf32> to vector<1x128xf32>
    %cst_6 = arith.constant 0.0069444445 : f32
    %12 = vector.broadcast %cst_6 : f32 to vector<1x128xf32>
    %13 = arith.mulf %11, %12 : vector<1x128xf32>
    %cst_7 = arith.constant 1.000000e-03 : f32
    %14 = vector.broadcast %cst_7 : f32 to vector<1x128xf32>
    %15 = arith.addf %13, %14 : vector<1x128xf32>
    %16 = math.rsqrt %15 : vector<1x128xf32>
    %c0_8 = arith.constant 0 : index
    %c0_9 = arith.constant 0 : index
    %17 = vector.load %arg3[%c0_8, %c0_9] : memref<1x384xf32, #tpu.memory_space<vmem>>, vector<1x128xf32>
    %18 = arith.mulf %16, %17 : vector<1x128xf32>
    %19 = vector.broadcast %18 : vector<1x128xf32> to vector<144x128xf32>
    %20 = arith.mulf %8, %19 : vector<144x128xf32>
    %c0_10 = arith.constant 0 : index
    %c0_11 = arith.constant 0 : index
    %21 = vector.load %arg4[%c0_10, %c0_11] : memref<1x384xf32, #tpu.memory_space<vmem>>, vector<1x128xf32>
    %22 = vector.broadcast %21 : vector<1x128xf32> to vector<144x128xf32>
    %23 = arith.addf %20, %22 : vector<144x128xf32>
    %c0_12 = arith.constant 0 : index
    %c0_13 = arith.constant 0 : index
    %24 = vector.load %arg5[%c0_12, %c0_13] : memref<144x384xf32, #tpu.memory_space<vmem>>, vector<144x128xf32>
    tpu.vector_store %arg5[%c0_12, %c0_13], %23 {strides = array<i32>} : memref<144x384xf32, #tpu.memory_space<vmem>>, vector<144x128xf32>,
    %c0_14 = arith.constant 0 : index
    %c0_15 = arith.constant 0 : index
    %25 = vector.load %arg1[%c0_14, %c0_15] : memref<144x2688xbf16, #tpu.memory_space<vmem>>, vector<144x2688xbf16>
    %c0_16 = arith.constant 0 : index
    %c128 = arith.constant 128 : index
    %26 = vector.load %arg2[%c0_16, %c128] : memref<2688x384xbf16, #tpu.memory_space<vmem>>, vector<2688x128xbf16>
    %cst_17 = arith.constant dense<0.000000e+00> : vector<144x128xf32>
    %27 = tpu.matmul %25, %26, %cst_17 {dimension_numbers = #tpu.dot_dimension_numbers<[1], [0], [0], [1], [0, 0, 1, 1], [], []>} : vector<144x2688xbf16>, vector<2688x128xbf16>, vector<144x128xf32> -> vector<144x128xf32>
    %cst_18 = arith.constant dense<0.000000e+00> : vector<128xf32>
    %28 = vector.multi_reduction <add>, %27, %cst_18 [0] : vector<144x128xf32> to vector<128xf32>
    %29 = vector.shape_cast %28 : vector<128xf32> to vector<1x128xf32>
    %cst_19 = arith.constant 0.0069444445 : f32
    %30 = vector.broadcast %cst_19 : f32 to vector<1x128xf32>
    %31 = arith.mulf %29, %30 : vector<1x128xf32>
    %32 = vector.broadcast %31 : vector<1x128xf32> to vector<144x128xf32>
    %33 = arith.subf %27, %32 : vector<144x128xf32>
    %34 = arith.mulf %33, %33 : vector<144x128xf32>
    %cst_20 = arith.constant dense<0.000000e+00> : vector<128xf32>
    %35 = vector.multi_reduction <add>, %34, %cst_20 [0] : vector<144x128xf32> to vector<128xf32>
    %36 = vector.shape_cast %35 : vector<128xf32> to vector<1x128xf32>
    %cst_21 = arith.constant 0.0069444445 : f32
    %37 = vector.broadcast %cst_21 : f32 to vector<1x128xf32>
    %38 = arith.mulf %36, %37 : vector<1x128xf32>
    %cst_22 = arith.constant 1.000000e-03 : f32
    %39 = vector.broadcast %cst_22 : f32 to vector<1x128xf32>
    %40 = arith.addf %38, %39 : vector<1x128xf32>
    %41 = math.rsqrt %40 : vector<1x128xf32>
    %c0_23 = arith.constant 0 : index
    %c128_24 = arith.constant 128 : index
    %42 = vector.load %arg3[%c0_23, %c128_24] : memref<1x384xf32, #tpu.memory_space<vmem>>, vector<1x128xf32>
    %43 = arith.mulf %41, %42 : vector<1x128xf32>
    %44 = vector.broadcast %43 : vector<1x128xf32> to vector<144x128xf32>
    %45 = arith.mulf %33, %44 : vector<144x128xf32>
    %c0_25 = arith.constant 0 : index
    %c128_26 = arith.constant 128 : index
    %46 = vector.load %arg4[%c0_25, %c128_26] : memref<1x384xf32, #tpu.memory_space<vmem>>, vector<1x128xf32>
    %47 = vector.broadcast %46 : vector<1x128xf32> to vector<144x128xf32>
    %48 = arith.addf %45, %47 : vector<144x128xf32>
    %c0_27 = arith.constant 0 : index
    %c128_28 = arith.constant 128 : index
    %49 = vector.load %arg5[%c0_27, %c128_28] : memref<144x384xf32, #tpu.memory_space<vmem>>, vector<144x128xf32>
    tpu.vector_store %arg5[%c0_27, %c128_28], %48 {strides = array<i32>} : memref<144x384xf32, #tpu.memory_space<vmem>>, vector<144x128xf32>,
    %c0_29 = arith.constant 0 : index
    %c0_30 = arith.constant 0 : index
    %50 = vector.load %arg1[%c0_29, %c0_30] : memref<144x2688xbf16, #tpu.memory_space<vmem>>, vector<144x2688xbf16>
    %c0_31 = arith.constant 0 : index
    %c256 = arith.constant 256 : index
    %51 = vector.load %arg2[%c0_31, %c256] : memref<2688x384xbf16, #tpu.memory_space<vmem>>, vector<2688x128xbf16>
    %cst_32 = arith.constant dense<0.000000e+00> : vector<144x128xf32>
    %52 = tpu.matmul %50, %51, %cst_32 {dimension_numbers = #tpu.dot_dimension_numbers<[1], [0], [0], [1], [0, 0, 1, 1], [], []>} : vector<144x2688xbf16>, vector<2688x128xbf16>, vector<144x128xf32> -> vector<144x128xf32>
    %cst_33 = arith.constant dense<0.000000e+00> : vector<128xf32>
    %53 = vector.multi_reduction <add>, %52, %cst_33 [0] : vector<144x128xf32> to vector<128xf32>
    %54 = vector.shape_cast %53 : vector<128xf32> to vector<1x128xf32>
    %cst_34 = arith.constant 0.0069444445 : f32
    %55 = vector.broadcast %cst_34 : f32 to vector<1x128xf32>
    %56 = arith.mulf %54, %55 : vector<1x128xf32>
    %57 = vector.broadcast %56 : vector<1x128xf32> to vector<144x128xf32>
    %58 = arith.subf %52, %57 : vector<144x128xf32>
    %59 = arith.mulf %58, %58 : vector<144x128xf32>
    %cst_35 = arith.constant dense<0.000000e+00> : vector<128xf32>
    %60 = vector.multi_reduction <add>, %59, %cst_35 [0] : vector<144x128xf32> to vector<128xf32>
    %61 = vector.shape_cast %60 : vector<128xf32> to vector<1x128xf32>
    %cst_36 = arith.constant 0.0069444445 : f32
    %62 = vector.broadcast %cst_36 : f32 to vector<1x128xf32>
    %63 = arith.mulf %61, %62 : vector<1x128xf32>
    %cst_37 = arith.constant 1.000000e-03 : f32
    %64 = vector.broadcast %cst_37 : f32 to vector<1x128xf32>
    %65 = arith.addf %63, %64 : vector<1x128xf32>
    %66 = math.rsqrt %65 : vector<1x128xf32>
    %c0_38 = arith.constant 0 : index
    %c256_39 = arith.constant 256 : index
    %67 = vector.load %arg3[%c0_38, %c256_39] : memref<1x384xf32, #tpu.memory_space<vmem>>, vector<1x128xf32>
    %68 = arith.mulf %66, %67 : vector<1x128xf32>
    %69 = vector.broadcast %68 : vector<1x128xf32> to vector<144x128xf32>
    %70 = arith.mulf %58, %69 : vector<144x128xf32>
    %c0_40 = arith.constant 0 : index
    %c256_41 = arith.constant 256 : index
    %71 = vector.load %arg4[%c0_40, %c256_41] : memref<1x384xf32, #tpu.memory_space<vmem>>, vector<1x128xf32>
    %72 = vector.broadcast %71 : vector<1x128xf32> to vector<144x128xf32>
    %73 = arith.addf %70, %72 : vector<144x128xf32>
    %c0_42 = arith.constant 0 : index
    %c256_43 = arith.constant 256 : index
    %74 = vector.load %arg5[%c0_42, %c256_43] : memref<144x384xf32, #tpu.memory_space<vmem>>, vector<144x128xf32>
    tpu.vector_store %arg5[%c0_42, %c256_43], %73 {strides = array<i32>} : memref<144x384xf32, #tpu.memory_space<vmem>>, vector<144x128xf32>,
    return
  }
  func.func @transform_0(%arg0: i32) -> (i32, i32) {
    %c0_i32 = arith.constant 0 : i32
    %c0_i32_0 = arith.constant 0 : i32
    %c0_i32_1 = arith.constant 0 : i32
    return %c0_i32, %c0_i32_0 : i32, i32
  }
  func.func @transform_1(%arg0: i32) -> (i32, i32) {
    %c0_i32 = arith.constant 0 : i32
    %c0_i32_0 = arith.constant 0 : i32
    %c0_i32_1 = arith.constant 0 : i32
    return %c0_i32, %c0_i32_0 : i32, i32
  }
  func.func @transform_2(%arg0: i32) -> (i32, i32) {
    %c0_i32 = arith.constant 0 : i32
    %c0_i32_0 = arith.constant 0 : i32
    %c0_i32_1 = arith.constant 0 : i32
    return %c0_i32, %c0_i32_0 : i32, i32
  }
  func.func @transform_3(%arg0: i32) -> (i32, i32) {
    %c0_i32 = arith.constant 0 : i32
    %c0_i32_0 = arith.constant 0 : i32
    %c0_i32_1 = arith.constant 0 : i32
    return %c0_i32, %c0_i32_0 : i32, i32
  }
  func.func @transform_4(%arg0: i32) -> (i32, i32) {
    %c0_i32 = arith.constant 0 : i32
    %c0_i32_0 = arith.constant 0 : i32
    %c0_i32_1 = arith.constant 0 : i32
    return %c0_i32, %c0_i32_0 : i32, i32
  }
}

</mosaic_0001>

<llo_original>
// kernel: forward.1
$region0: #{forward.1}
  #allocation0 [shape = 'u32[]', space=smem, size = 0x4, offset = 0x4, fixed_abs, tag = 'smem constant byte address 0x4 - core index']
  #allocation1 [shape = 'u32[144,128]{1,0:T(1,128)}', space=vmem, size = 0x12000, scoped, tag = 'internal scratch']
  %s0 = inlined_call_operand.vmem [shape: bf16[144,2688], index: 0, kind: input, shape index: {}]
  %s1 = inlined_call_operand.vmem [shape: bf16[2688,384], index: 1, kind: input, shape index: {}]
  %s2 = inlined_call_operand.vmem [shape: f32[1,384], index: 2, kind: input, shape index: {}]
  %s3 = inlined_call_operand.vmem [shape: f32[1,384], index: 3, kind: input, shape index: {}]
  %s4 = inlined_call_operand.vmem [shape: f32[144,384], index: 4, kind: output, shape index: {}]
  %s5 = sld [smem:[#allocation0]]
  $region26: #{forward.1} parent=0
    _
  %s7 = ssub.s32 1, %s5
  %s8 = scalar_select 0, %s7, %s5
  // Predicated region
  $region2: #{forward.1} parent=0 // pred_check
    _
  $region3: #{forward.1} parent=0 // pred_check_branch
    %10 = sbr.rel (0) target = $region5
  $region4: #{forward.1} parent=0 // pred_region
    _
  $region5: #{forward.1} parent=0 // pred_fallthru
    _
  // Predicated region
  $region6: #{forward.1} parent=0 // pred_check
    _
  $region7: #{forward.1} parent=0 // pred_check_branch
    %12 = sbr.rel (0) target = $region9
  $region8: #{forward.1} parent=0 // pred_region
    _
  $region9: #{forward.1} parent=0 // pred_fallthru
    _
  // Predicated region
  $region10: #{forward.1} parent=0 // pred_check
    _
  $region11: #{forward.1} parent=0 // pred_check_branch
    %14 = sbr.rel (0) target = $region13
  $region12: #{forward.1} parent=0 // pred_region
    _
  $region13: #{forward.1} parent=0 // pred_fallthru
    _
  // Predicated region
  $region14: #{forward.1} parent=0 // pred_check
    _
  $region15: #{forward.1} parent=0 // pred_check_branch
    %16 = sbr.rel (0) target = $region17
  $region16: #{forward.1} parent=0 // pred_region
    _
  $region17: #{forward.1} parent=0 // pred_fallthru
    _
  %v18 = vld [vmem:[%s0] sm:$0xff]
  %v19 = vld [vmem:[%s0 + $0x8] sm:$0xff]
  %v20 = vld [vmem:[%s0 + $0x10] sm:$0xff]
  %v21 = vld [vmem:[%s0 + $0x18] sm:$0xff]
  %v22 = vld [vmem:[%s0 + $0x20] sm:$0xff]
  %v23 = vld [vmem:[%s0 + $0x28] sm:$0xff]
  %v24 = vld [vmem:[%s0 + $0x30] sm:$0xff]
  %v25 = vld [vmem:[%s0 + $0x38] sm:$0xff]
  %v26 = vld [vmem:[%s0 + $0x40] sm:$0xff]
  %v27 = vld [vmem:[%s0 + $0x48] sm:$0xff]
  %v28 = vld [vmem:[%s0 + $0x50] sm:$0xf]
  %v29 = vld [vmem:[%s0 + $0x54] sm:$0xff]
  %v30 = vld [vmem:[%s0 + $0x5c] sm:$0xff]
  %v31 = vld [vmem:[%s0 + $0x64] sm:$0xff]
  %v32 = vld [vmem:[%s0 + $0x6c] sm:$0xff]
  %v33 = vld [vmem:[%s0 + $0x74] sm:$0xff]
  %v34 = vld [vmem:[%s0 + $0x7c] sm:$0xff]
  %v35 = vld [vmem:[%s0 + $0x84] sm:$0xff]
  %v36 = vld [vmem:[%s0 + $0x8c] sm:$0xff]
  %v37 = vld [vmem:[%s0 + $0x94] sm:$0xff]
  %v38 = vld [vmem:[%s0 + $0x9c] sm:$0xff]
  %v39 = vld [vmem:[%s0 + $0xa4] sm:$0xf]
  %v40 = vld [vmem:[%s0 + $0xa8] sm:$0xff]
  %v41 = vld [vmem:[%s0 + $0xb0] sm:$0xff]
  %v42 = vld [vmem:[%s0 + $0xb8] sm:$0xff]
  %v43 = vld [vmem:[%s0 + $0xc0] sm:$0xff]
  %v44 = vld [vmem:[%s0 + $0xc8] sm:$0xff]
  %v45 = vld [vmem:[%s0 + $0xd0] sm:$0xff]
  %v46 = vld [vmem:[%s0 + $0xd8] sm:$0xff]
  %v47 = vld [vmem:[%s0 + $0xe0] sm:$0xff]
  %v48 = vld [vmem:[%s0 + $0xe8] sm:$0xff]
  %v49 = vld [vmem:[%s0 + $0xf0] sm:$0xff]
  %v50 = vld [vmem:[%s0 + $0xf8] sm:$0xf]
  %v51 = vld [vmem:[%s0 + $0xfc] sm:$0xff]
  %v52 = vld [vmem:[%s0 + $0x104] sm:$0xff]
  %v53 = vld [vmem:[%s0 + $0x10c] sm:$0xff]
  %v54 = vld [vmem:[%s0 + $0x114] sm:$0xff]
  %v55 = vld [vmem:[%s0 + $0x11c] sm:$0xff]
  %v56 = vld [vmem:[%s0 + $0x124] sm:$0xff]
  %v57 = vld [vmem:[%s0 + $0x12c] sm:$0xff]
  %v58 = vld [vmem:[%s0 + $0x134] sm:$0xff]
  %v59 = vld [vmem:[%s0 + $0x13c] sm:$0xff]
  %v60 = vld [vmem:[%s0 + $0x144] sm:$0xff]
  %v61 = vld [vmem:[%s0 + $0x14c] sm:$0xf]
  %v62 = vld [vmem:[%s0 + $0x150] sm:$0xff]
  %v63 = vld [vmem:[%s0 + $0x158] sm:$0xff]
  %v64 = vld [vmem:[%s0 + $0x160] sm:$0xff]
  %v65 = vld [vmem:[%s0 + $0x168] sm:$0xff]
  %v66 = vld [vmem:[%s0 + $0x170] sm:$0xff]
  %v67 = vld [vmem:[%s0 + $0x178] sm:$0xff]
  %v68 = vld [vmem:[%s0 + $0x180] sm:$0xff]
  %v69 = vld [vmem:[%s0 + $0x188] sm:$0xff]
  %v70 = vld [vmem:[%s0 + $0x190] sm:$0xff]
  %v71 = vld [vmem:[%s0 + $0x198] sm:$0xff]
  %v72 = vld [vmem:[%s0 + $0x1a0] sm:$0xf]
  %v73 = vld [vmem:[%s0 + $0x1a4] sm:$0xff]
  %v74 = vld [vmem:[%s0 + $0x1ac] sm:$0xff]
  %v75 = vld [vmem:[%s0 + $0x1b4] sm:$0xff]
  %v76 = vld [vmem:[%s0 + $0x1bc] sm:$0xff]
  %v77 = vld [vmem:[%s0 + $0x1c4] sm:$0xff]
  %v78 = vld [vmem:[%s0 + $0x1cc] sm:$0xff]
  %v79 = vld [vmem:[%s0 + $0x1d4] sm:$0xff]
  %v80 = vld [vmem:[%s0 + $0x1dc] sm:$0xff]
  %v81 = vld [vmem:[%s0 + $0x1e4] sm:$0xff]
  %v82 = vld [vmem:[%s0 + $0x1ec] sm:$0xff]
  %v83 = vld [vmem:[%s0 + $0x1f4] sm:$0xf]
  %v84 = vld [vmem:[%s0 + $0x1f8] sm:$0xff]
  %v85 = vld [vmem:[%s0 + $0x200] sm:$0xff]
  %v86 = vld [vmem:[%s0 + $0x208] sm:$0xff]
  %v87 = vld [vmem:[%s0 + $0x210] sm:$0xff]
  %v88 = vld [vmem:[%s0 + $0x218] sm:$0xff]
  %v89 = vld [vmem:[%s0 + $0x220] sm:$0xff]
  %v90 = vld [vmem:[%s0 + $0x228] sm:$0xff]
  %v91 = vld [vmem:[%s0 + $0x230] sm:$0xff]
  %v92 = vld [vmem:[%s0 + $0x238] sm:$0xff]
  %v93 = vld [vmem:[%s0 + $0x240] sm:$0xff]
  %v94 = vld [vmem:[%s0 + $0x248] sm:$0xf]
  %v95 = vld [vmem:[%s0 + $0x24c] sm:$0xff]
  %v96 = vld [vmem:[%s0 + $0x254] sm:$0xff]
  %v97 = vld [vmem:[%s0 + $0x25c] sm:$0xff]
  %v98 = vld [vmem:[%s0 + $0x264] sm:$0xff]
  %v99 = vld [vmem:[%s0 + $0x26c] sm:$0xff]
  %v100 = vld [vmem:[%s0 + $0x274] sm:$0xff]
  %v101 = vld [vmem:[%s0 + $0x27c] sm:$0xff]
  %v102 = vld [vmem:[%s0 + $0x284] sm:$0xff]
  %v103 = vld [vmem:[%s0 + $0x28c] sm:$0xff]
  %v104 = vld [vmem:[%s0 + $0x294] sm:$0xff]
  %v105 = vld [vmem:[%s0 + $0x29c] sm:$0xf]
  %v106 = vld [vmem:[%s0 + $0x2a0] sm:$0xff]
  %v107 = vld [vmem:[%s0 + $0x2a8] sm:$0xff]
  %v108 = vld [vmem:[%s0 + $0x2b0] sm:$0xff]
  %v109 = vld [vmem:[%s0 + $0x2b8] sm:$0xff]
  %v110 = vld [vmem:[%s0 + $0x2c0] sm:$0xff]
  %v111 = vld [vmem:[%s0 + $0x2c8] sm:$0xff]
  %v112 = vld [vmem:[%s0 + $0x2d0] sm:$0xff]
  %v113 = vld [vmem:[%s0 + $0x2d8] sm:$0xff]
  %v114 = vld [vmem:[%s0 + $0x2e0] sm:$0xff]
  %v115 = vld [vmem:[%s0 + $0x2e8] sm:$0xff]
  %v116 = vld [vmem:[%s0 + $0x2f0] sm:$0xf]
  %v117 = vld [vmem:[%s0 + $0x2f4] sm:$0xff]
  %v118 = vld [vmem:[%s0 + $0x2fc] sm:$0xff]
  %v119 = vld [vmem:[%s0 + $0x304] sm:$0xff]
  %v120 = vld [vmem:[%s0 + $0x30c] sm:$0xff]
  %v121 = vld [vmem:[%s0 + $0x314] sm:$0xff]
  %v122 = vld [vmem:[%s0 + $0x31c] sm:$0xff]
  %v123 = vld [vmem:[%s0 + $0x324] sm:$0xff]
  %v124 = vld [vmem:[%s0 + $0x32c] sm:$0xff]
  %v125 = vld [vmem:[%s0 + $0x334] sm:$0xff]
  %v126 = vld [vmem:[%s0 + $0x33c] sm:$0xff]
  %v127 = vld [vmem:[%s0 + $0x344] sm:$0xf]
  %v128 = vld [vmem:[%s0 + $0x348] sm:$0xff]
  %v129 = vld [vmem:[%s0 + $0x350] sm:$0xff]
  %v130 = vld [vmem:[%s0 + $0x358] sm:$0xff]
  %v131 = vld [vmem:[%s0 + $0x360] sm:$0xff]
  %v132 = vld [vmem:[%s0 + $0x368] sm:$0xff]
  %v133 = vld [vmem:[%s0 + $0x370] sm:$0xff]
  %v134 = vld [vmem:[%s0 + $0x378] sm:$0xff]
  %v135 = vld [vmem:[%s0 + $0x380] sm:$0xff]
  %v136 = vld [vmem:[%s0 + $0x388] sm:$0xff]
  %v137 = vld [vmem:[%s0 + $0x390] sm:$0xff]
  %v138 = vld [vmem:[%s0 + $0x398] sm:$0xf]
  %v139 = vld [vmem:[%s0 + $0x39c] sm:$0xff]
  %v140 = vld [vmem:[%s0 + $0x3a4] sm:$0xff]
  %v141 = vld [vmem:[%s0 + $0x3ac] sm:$0xff]
  %v142 = vld [vmem:[%s0 + $0x3b4] sm:$0xff]
  %v143 = vld [vmem:[%s0 + $0x3bc] sm:$0xff]
  %v144 = vld [vmem:[%s0 + $0x3c4] sm:$0xff]
  %v145 = vld [vmem:[%s0 + $0x3cc] sm:$0xff]
  %v146 = vld [vmem:[%s0 + $0x3d4] sm:$0xff]
  %v147 = vld [vmem:[%s0 + $0x3dc] sm:$0xff]
  %v148 = vld [vmem:[%s0 + $0x3e4] sm:$0xff]
  %v149 = vld [vmem:[%s0 + $0x3ec] sm:$0xf]
  %v150 = vld [vmem:[%s0 + $0x3f0] sm:$0xff]
  %v151 = vld [vmem:[%s0 + $0x3f8] sm:$0xff]
  %v152 = vld [vmem:[%s0 + $0x400] sm:$0xff]
  %v153 = vld [vmem:[%s0 + $0x408] sm:$0xff]
  %v154 = vld [vmem:[%s0 + $0x410] sm:$0xff]
  %v155 = vld [vmem:[%s0 + $0x418] sm:$0xff]
  %v156 = vld [vmem:[%s0 + $0x420] sm:$0xff]
  %v157 = vld [vmem:[%s0 + $0x428] sm:$0xff]
  %v158 = vld [vmem:[%s0 + $0x430] sm:$0xff]
  %v159 = vld [vmem:[%s0 + $0x438] sm:$0xff]
  %v160 = vld [vmem:[%s0 + $0x440] sm:$0xf]
  %v161 = vld [vmem:[%s0 + $0x444] sm:$0xff]
  %v162 = vld [vmem:[%s0 + $0x44c] sm:$0xff]
  %v163 = vld [vmem:[%s0 + $0x454] sm:$0xff]
  %v164 = vld [vmem:[%s0 + $0x45c] sm:$0xff]
  %v165 = vld [vmem:[%s0 + $0x464] sm:$0xff]
  %v166 = vld [vmem:[%s0 + $0x46c] sm:$0xff]
  %v167 = vld [vmem:[%s0 + $0x474] sm:$0xff]
  %v168 = vld [vmem:[%s0 + $0x47c] sm:$0xff]
  %v169 = vld [vmem:[%s0 + $0x484] sm:$0xff]
  %v170 = vld [vmem:[%s0 + $0x48c] sm:$0xff]
  %v171 = vld [vmem:[%s0 + $0x494] sm:$0xf]
  %v172 = vld [vmem:[%s0 + $0x498] sm:$0xff]
  %v173 = vld [vmem:[%s0 + $0x4a0] sm:$0xff]
  %v174 = vld [vmem:[%s0 + $0x4a8] sm:$0xff]
  %v175 = vld [vmem:[%s0 + $0x4b0] sm:$0xff]
  %v176 = vld [vmem:[%s0 + $0x4b8] sm:$0xff]
  %v177 = vld [vmem:[%s0 + $0x4c0] sm:$0xff]
  %v178 = vld [vmem:[%s0 + $0x4c8] sm:$0xff]
  %v179 = vld [vmem:[%s0 + $0x4d0] sm:$0xff]
  %v180 = vld [vmem:[%s0 + $0x4d8] sm:$0xff]
  %v181 = vld [vmem:[%s0 + $0x4e0] sm:$0xff]
  %v182 = vld [vmem:[%s0 + $0x4e8] sm:$0xf]
  %v183 = vld [vmem:[%s0 + $0x4ec] sm:$0xff]
  %v184 = vld [vmem:[%s0 + $0x4f4] sm:$0xff]
  %v185 = vld [vmem:[%s0 + $0x4fc] sm:$0xff]
  %v186 = vld [vmem:[%s0 + $0x504] sm:$0xff]
  %v187 = vld [vmem:[%s0 + $0x50c] sm:$0xff]
  %v188 = vld [vmem:[%s0 + $0x514] sm:$0xff]
  %v189 = vld [vmem:[%s0 + $0x51c] sm:$0xff]
  %v190 = vld [vmem:[%s0 + $0x524] sm:$0xff]
  %v191 = vld [vmem:[%s0 + $0x52c] sm:$0xff]
  %v192 = vld [vmem:[%s0 + $0x534] sm:$0xff]
  %v193 = vld [vmem:[%s0 + $0x53c] sm:$0xf]
  %v194 = vld [vmem:[%s0 + $0x540] sm:$0xff]
  %v195 = vld [vmem:[%s0 + $0x548] sm:$0xff]
  %v196 = vld [vmem:[%s0 + $0x550] sm:$0xff]
  %v197 = vld [vmem:[%s0 + $0x558] sm:$0xff]
  %v198 = vld [vmem:[%s0 + $0x560] sm:$0xff]
  %v199 = vld [vmem:[%s0 + $0x568] sm:$0xff]
  %v200 = vld [vmem:[%s0 + $0x570] sm:$0xff]
  %v201 = vld [vmem:[%s0 + $0x578] sm:$0xff]
  %v202 = vld [vmem:[%s0 + $0x580] sm:$0xff]
  %v203 = vld [vmem:[%s0 + $0x588] sm:$0xff]
  %v204 = vld [vmem:[%s0 + $0x590] sm:$0xf]
  %v205 = vld [vmem:[%s0 + $0x594] sm:$0xff]
  %v206 = vld [vmem:[%s0 + $0x59c] sm:$0xff]
  %v207 = vld [vmem:[%s0 + $0x5a4] sm:$0xff]
  %v208 = vld [vmem:[%s0 + $0x5ac] sm:$0xff]
  %v209 = vld [vmem:[%s0 + $0x5b4] sm:$0xff]
  %v210 = vld [vmem:[%s0 + $0x5bc] sm:$0xff]
  %v211 = vld [vmem:[%s0 + $0x5c4] sm:$0xff]
  %v212 = vld [vmem:[%s0 + $0x5cc] sm:$0xff]
  %v213 = vld [vmem:[%s0 + $0x5d4] sm:$0xff]
  %v214 = vld [vmem:[%s0 + $0x5dc] sm:$0xff]
  %v215 = vld [vmem:[%s0 + $0x5e4] sm:$0xf]
  %v216 = vld [vmem:[%s1] sm:$0xf]
  %v217 = vld [vmem:[%s1 + $0xc] sm:$0xf]
  %v218 = vld [vmem:[%s1 + $0x18] sm:$0xf]
  %v219 = vld [vmem:[%s1 + $0x24] sm:$0xf]
  %v220 = vld [vmem:[%s1 + $0x30] sm:$0xf]
  %v221 = vld [vmem:[%s1 + $0x3c] sm:$0xf]
  %v222 = vld [vmem:[%s1 + $0x48] sm:$0xf]
  %v223 = vld [vmem:[%s1 + $0x54] sm:$0xf]
  %v224 = vld [vmem:[%s1 + $0x60] sm:$0xf]
  %v225 = vld [vmem:[%s1 + $0x6c] sm:$0xf]
  %v226 = vld [vmem:[%s1 + $0x78] sm:$0xf]
  %v227 = vld [vmem:[%s1 + $0x84] sm:$0xf]
  %v228 = vld [vmem:[%s1 + $0x90] sm:$0xf]
  %v229 = vld [vmem:[%s1 + $0x9c] sm:$0xf]
  %v230 = vld [vmem:[%s1 + $0xa8] sm:$0xf]
  %v231 = vld [vmem:[%s1 + $0xb4] sm:$0xf]
  %v232 = vld [vmem:[%s1 + $0xc0] sm:$0xf]
  %v233 = vld [vmem:[%s1 + $0xcc] sm:$0xf]
  %v234 = vld [vmem:[%s1 + $0xd8] sm:$0xf]
  %v235 = vld [vmem:[%s1 + $0xe4] sm:$0xf]
  %v236 = vld [vmem:[%s1 + $0xf0] sm:$0xf]
  %v237 = vld [vmem:[%s1 + $0xfc] sm:$0xf]
  %v238 = vld [vmem:[%s1 + $0x108] sm:$0xf]
  %v239 = vld [vmem:[%s1 + $0x114] sm:$0xf]
  %v240 = vld [vmem:[%s1 + $0x120] sm:$0xf]
  %v241 = vld [vmem:[%s1 + $0x12c] sm:$0xf]
  %v242 = vld [vmem:[%s1 + $0x138] sm:$0xf]
  %v243 = vld [vmem:[%s1 + $0x144] sm:$0xf]
  %v244 = vld [vmem:[%s1 + $0x150] sm:$0xf]
  %v245 = vld [vmem:[%s1 + $0x15c] sm:$0xf]
  %v246 = vld [vmem:[%s1 + $0x168] sm:$0xf]
  %v247 = vld [vmem:[%s1 + $0x174] sm:$0xf]
  %v248 = vld [vmem:[%s1 + $0x180] sm:$0xf]
  %v249 = vld [vmem:[%s1 + $0x18c] sm:$0xf]
  %v250 = vld [vmem:[%s1 + $0x198] sm:$0xf]
  %v251 = vld [vmem:[%s1 + $0x1a4] sm:$0xf]
  %v252 = vld [vmem:[%s1 + $0x1b0] sm:$0xf]
  %v253 = vld [vmem:[%s1 + $0x1bc] sm:$0xf]
  %v254 = vld [vmem:[%s1 + $0x1c8] sm:$0xf]
  %v255 = vld [vmem:[%s1 + $0x1d4] sm:$0xf]
  %v256 = vld [vmem:[%s1 + $0x1e0] sm:$0xf]
  %v257 = vld [vmem:[%s1 + $0x1ec] sm:$0xf]
  %v258 = vld [vmem:[%s1 + $0x1f8] sm:$0xf]
  %v259 = vld [vmem:[%s1 + $0x204] sm:$0xf]
  %v260 = vld [vmem:[%s1 + $0x210] sm:$0xf]
  %v261 = vld [vmem:[%s1 + $0x21c] sm:$0xf]
  %v262 = vld [vmem:[%s1 + $0x228] sm:$0xf]
  %v263 = vld [vmem:[%s1 + $0x234] sm:$0xf]
  %v264 = vld [vmem:[%s1 + $0x240] sm:$0xf]
  %v265 = vld [vmem:[%s1 + $0x24c] sm:$0xf]
  %v266 = vld [vmem:[%s1 + $0x258] sm:$0xf]
  %v267 = vld [vmem:[%s1 + $0x264] sm:$0xf]
  %v268 = vld [vmem:[%s1 + $0x270] sm:$0xf]
  %v269 = vld [vmem:[%s1 + $0x27c] sm:$0xf]
  %v270 = vld [vmem:[%s1 + $0x288] sm:$0xf]
  %v271 = vld [vmem:[%s1 + $0x294] sm:$0xf]
  %v272 = vld [vmem:[%s1 + $0x2a0] sm:$0xf]
  %v273 = vld [vmem:[%s1 + $0x2ac] sm:$0xf]
  %v274 = vld [vmem:[%s1 + $0x2b8] sm:$0xf]
  %v275 = vld [vmem:[%s1 + $0x2c4] sm:$0xf]
  %v276 = vld [vmem:[%s1 + $0x2d0] sm:$0xf]
  %v277 = vld [vmem:[%s1 + $0x2dc] sm:$0xf]
  %v278 = vld [vmem:[%s1 + $0x2e8] sm:$0xf]
  %v279 = vld [vmem:[%s1 + $0x2f4] sm:$0xf]
  %v280 = vld [vmem:[%s1 + $0x300] sm:$0xf]
  %v281 = vld [vmem:[%s1 + $0x30c] sm:$0xf]
  %v282 = vld [vmem:[%s1 + $0x318] sm:$0xf]
  %v283 = vld [vmem:[%s1 + $0x324] sm:$0xf]
  %v284 = vld [vmem:[%s1 + $0x330] sm:$0xf]
  %v285 = vld [vmem:[%s1 + $0x33c] sm:$0xf]
  %v286 = vld [vmem:[%s1 + $0x348] sm:$0xf]
  %v287 = vld [vmem:[%s1 + $0x354] sm:$0xf]
  %v288 = vld [vmem:[%s1 + $0x360] sm:$0xf]
  %v289 = vld [vmem:[%s1 + $0x36c] sm:$0xf]
  %v290 = vld [vmem:[%s1 + $0x378] sm:$0xf]
  %v291 = vld [vmem:[%s1 + $0x384] sm:$0xf]
  %v292 = vld [vmem:[%s1 + $0x390] sm:$0xf]
  %v293 = vld [vmem:[%s1 + $0x39c] sm:$0xf]
  %v294 = vld [vmem:[%s1 + $0x3a8] sm:$0xf]
  %v295 = vld [vmem:[%s1 + $0x3b4] sm:$0xf]
  %v296 = vld [vmem:[%s1 + $0x3c0] sm:$0xf]
  %v297 = vld [vmem:[%s1 + $0x3cc] sm:$0xf]
  %v298 = vld [vmem:[%s1 + $0x3d8] sm:$0xf]
  %v299 = vld [vmem:[%s1 + $0x3e4] sm:$0xf]
  %v300 = vld [vmem:[%s1 + $0x3f0] sm:$0xf]
  %v301 = vld [vmem:[%s1 + $0x3fc] sm:$0xf]
  %v302 = vld [vmem:[%s1 + $0x408] sm:$0xf]
  %v303 = vld [vmem:[%s1 + $0x414] sm:$0xf]
  %v304 = vld [vmem:[%s1 + $0x420] sm:$0xf]
  %v305 = vld [vmem:[%s1 + $0x42c] sm:$0xf]
  %v306 = vld [vmem:[%s1 + $0x438] sm:$0xf]
  %v307 = vld [vmem:[%s1 + $0x444] sm:$0xf]
  %v308 = vld [vmem:[%s1 + $0x450] sm:$0xf]
  %v309 = vld [vmem:[%s1 + $0x45c] sm:$0xf]
  %v310 = vld [vmem:[%s1 + $0x468] sm:$0xf]
  %v311 = vld [vmem:[%s1 + $0x474] sm:$0xf]
  %v312 = vld [vmem:[%s1 + $0x480] sm:$0xf]
  %v313 = vld [vmem:[%s1 + $0x48c] sm:$0xf]
  %v314 = vld [vmem:[%s1 + $0x498] sm:$0xf]
  %v315 = vld [vmem:[%s1 + $0x4a4] sm:$0xf]
  %v316 = vld [vmem:[%s1 + $0x4b0] sm:$0xf]
  %v317 = vld [vmem:[%s1 + $0x4bc] sm:$0xf]
  %v318 = vld [vmem:[%s1 + $0x4c8] sm:$0xf]
  %v319 = vld [vmem:[%s1 + $0x4d4] sm:$0xf]
  %v320 = vld [vmem:[%s1 + $0x4e0] sm:$0xf]
  %v321 = vld [vmem:[%s1 + $0x4ec] sm:$0xf]
  %v322 = vld [vmem:[%s1 + $0x4f8] sm:$0xf]
  %v323 = vld [vmem:[%s1 + $0x504] sm:$0xf]
  %v324 = vld [vmem:[%s1 + $0x510] sm:$0xf]
  %v325 = vld [vmem:[%s1 + $0x51c] sm:$0xf]
  %v326 = vld [vmem:[%s1 + $0x528] sm:$0xf]
  %v327 = vld [vmem:[%s1 + $0x534] sm:$0xf]
  %v328 = vld [vmem:[%s1 + $0x540] sm:$0xf]
  %v329 = vld [vmem:[%s1 + $0x54c] sm:$0xf]
  %v330 = vld [vmem:[%s1 + $0x558] sm:$0xf]
  %v331 = vld [vmem:[%s1 + $0x564] sm:$0xf]
  %v332 = vld [vmem:[%s1 + $0x570] sm:$0xf]
  %v333 = vld [vmem:[%s1 + $0x57c] sm:$0xf]
  %v334 = vld [vmem:[%s1 + $0x588] sm:$0xf]
  %v335 = vld [vmem:[%s1 + $0x594] sm:$0xf]
  %v336 = vld [vmem:[%s1 + $0x5a0] sm:$0xf]
  %v337 = vld [vmem:[%s1 + $0x5ac] sm:$0xf]
  %v338 = vld [vmem:[%s1 + $0x5b8] sm:$0xf]
  %v339 = vld [vmem:[%s1 + $0x5c4] sm:$0xf]
  %v340 = vld [vmem:[%s1 + $0x5d0] sm:$0xf]
  %v341 = vld [vmem:[%s1 + $0x5dc] sm:$0xf]
  %v342 = vld [vmem:[%s1 + $0x5e8] sm:$0xf]
  %v343 = vld [vmem:[%s1 + $0x5f4] sm:$0xf]
  %v344 = vld [vmem:[%s1 + $0x600] sm:$0xf]
  %v345 = vld [vmem:[%s1 + $0x60c] sm:$0xf]
  %v346 = vld [vmem:[%s1 + $0x618] sm:$0xf]
  %v347 = vld [vmem:[%s1 + $0x624] sm:$0xf]
  %v348 = vld [vmem:[%s1 + $0x630] sm:$0xf]
  %v349 = vld [vmem:[%s1 + $0x63c] sm:$0xf]
  %v350 = vld [vmem:[%s1 + $0x648] sm:$0xf]
  %v351 = vld [vmem:[%s1 + $0x654] sm:$0xf]
  %v352 = vld [vmem:[%s1 + $0x660] sm:$0xf]
  %v353 = vld [vmem:[%s1 + $0x66c] sm:$0xf]
  %v354 = vld [vmem:[%s1 + $0x678] sm:$0xf]
  %v355 = vld [vmem:[%s1 + $0x684] sm:$0xf]
  %v356 = vld [vmem:[%s1 + $0x690] sm:$0xf]
  %v357 = vld [vmem:[%s1 + $0x69c] sm:$0xf]
  %v358 = vld [vmem:[%s1 + $0x6a8] sm:$0xf]
  %v359 = vld [vmem:[%s1 + $0x6b4] sm:$0xf]
  %v360 = vld [vmem:[%s1 + $0x6c0] sm:$0xf]
  %v361 = vld [vmem:[%s1 + $0x6cc] sm:$0xf]
  %v362 = vld [vmem:[%s1 + $0x6d8] sm:$0xf]
  %v363 = vld [vmem:[%s1 + $0x6e4] sm:$0xf]
  %v364 = vld [vmem:[%s1 + $0x6f0] sm:$0xf]
  %v365 = vld [vmem:[%s1 + $0x6fc] sm:$0xf]
  %v366 = vld [vmem:[%s1 + $0x708] sm:$0xf]
  %v367 = vld [vmem:[%s1 + $0x714] sm:$0xf]
  %v368 = vld [vmem:[%s1 + $0x720] sm:$0xf]
  %v369 = vld [vmem:[%s1 + $0x72c] sm:$0xf]
  %v370 = vld [vmem:[%s1 + $0x738] sm:$0xf]
  %v371 = vld [vmem:[%s1 + $0x744] sm:$0xf]
  %v372 = vld [vmem:[%s1 + $0x750] sm:$0xf]
  %v373 = vld [vmem:[%s1 + $0x75c] sm:$0xf]
  %v374 = vld [vmem:[%s1 + $0x768] sm:$0xf]
  %v375 = vld [vmem:[%s1 + $0x774] sm:$0xf]
  %v376 = vld [vmem:[%s1 + $0x780] sm:$0xf]
  %v377 = vld [vmem:[%s1 + $0x78c] sm:$0xf]
  %v378 = vld [vmem:[%s1 + $0x798] sm:$0xf]
  %v379 = vld [vmem:[%s1 + $0x7a4] sm:$0xf]
  %v380 = vld [vmem:[%s1 + $0x7b0] sm:$0xf]
  %v381 = vld [vmem:[%s1 + $0x7bc] sm:$0xf]
  %v382 = vld [vmem:[%s1 + $0x7c8] sm:$0xf]
  %v383 = vld [vmem:[%s1 + $0x7d4] sm:$0xf]
  %v384 = vld [vmem:[%s1 + $0x7e0] sm:$0xf]
  %v385 = vld [vmem:[%s1 + $0x7ec] sm:$0xf]
  %v386 = vld [vmem:[%s1 + $0x7f8] sm:$0xf]
  %v387 = vld [vmem:[%s1 + $0x804] sm:$0xf]
  %v388 = vld [vmem:[%s1 + $0x810] sm:$0xf]
  %v389 = vld [vmem:[%s1 + $0x81c] sm:$0xf]
  %v390 = vld [vmem:[%s1 + $0x828] sm:$0xf]
  %v391 = vld [vmem:[%s1 + $0x834] sm:$0xf]
  %v392 = vld [vmem:[%s1 + $0x840] sm:$0xf]
  %v393 = vld [vmem:[%s1 + $0x84c] sm:$0xf]
  %v394 = vld [vmem:[%s1 + $0x858] sm:$0xf]
  %v395 = vld [vmem:[%s1 + $0x864] sm:$0xf]
  %v396 = vld [vmem:[%s1 + $0x870] sm:$0xf]
  %v397 = vld [vmem:[%s1 + $0x87c] sm:$0xf]
  %v398 = vld [vmem:[%s1 + $0x888] sm:$0xf]
  %v399 = vld [vmem:[%s1 + $0x894] sm:$0xf]
  %v400 = vld [vmem:[%s1 + $0x8a0] sm:$0xf]
  %v401 = vld [vmem:[%s1 + $0x8ac] sm:$0xf]
  %v402 = vld [vmem:[%s1 + $0x8b8] sm:$0xf]
  %v403 = vld [vmem:[%s1 + $0x8c4] sm:$0xf]
  %v404 = vld [vmem:[%s1 + $0x8d0] sm:$0xf]
  %v405 = vld [vmem:[%s1 + $0x8dc] sm:$0xf]
  %v406 = vld [vmem:[%s1 + $0x8e8] sm:$0xf]
  %v407 = vld [vmem:[%s1 + $0x8f4] sm:$0xf]
  %v408 = vld [vmem:[%s1 + $0x900] sm:$0xf]
  %v409 = vld [vmem:[%s1 + $0x90c] sm:$0xf]
  %v410 = vld [vmem:[%s1 + $0x918] sm:$0xf]
  %v411 = vld [vmem:[%s1 + $0x924] sm:$0xf]
  %v412 = vld [vmem:[%s1 + $0x930] sm:$0xf]
  %v413 = vld [vmem:[%s1 + $0x93c] sm:$0xf]
  %v414 = vld [vmem:[%s1 + $0x948] sm:$0xf]
  %v415 = vld [vmem:[%s1 + $0x954] sm:$0xf]
  %v416 = vld [vmem:[%s1 + $0x960] sm:$0xf]
  %v417 = vld [vmem:[%s1 + $0x96c] sm:$0xf]
  %v418 = vld [vmem:[%s1 + $0x978] sm:$0xf]
  %v419 = vld [vmem:[%s1 + $0x984] sm:$0xf]
  %v420 = vld [vmem:[%s1 + $0x990] sm:$0xf]
  %v421 = vld [vmem:[%s1 + $0x99c] sm:$0xf]
  %v422 = vld [vmem:[%s1 + $0x9a8] sm:$0xf]
  %v423 = vld [vmem:[%s1 + $0x9b4] sm:$0xf]
  %v424 = vld [vmem:[%s1 + $0x9c0] sm:$0xf]
  %v425 = vld [vmem:[%s1 + $0x9cc] sm:$0xf]
  %v426 = vld [vmem:[%s1 + $0x9d8] sm:$0xf]
  %v427 = vld [vmem:[%s1 + $0x9e4] sm:$0xf]
  %v428 = vld [vmem:[%s1 + $0x9f0] sm:$0xf]
  %v429 = vld [vmem:[%s1 + $0x9fc] sm:$0xf]
  %v430 = vld [vmem:[%s1 + $0xa08] sm:$0xf]
  %v431 = vld [vmem:[%s1 + $0xa14] sm:$0xf]
  %v432 = vld [vmem:[%s1 + $0xa20] sm:$0xf]
  %v433 = vld [vmem:[%s1 + $0xa2c] sm:$0xf]
  %v434 = vld [vmem:[%s1 + $0xa38] sm:$0xf]
  %v435 = vld [vmem:[%s1 + $0xa44] sm:$0xf]
  %v436 = vld [vmem:[%s1 + $0xa50] sm:$0xf]
  %v437 = vld [vmem:[%s1 + $0xa5c] sm:$0xf]
  %v438 = vld [vmem:[%s1 + $0xa68] sm:$0xf]
  %v439 = vld [vmem:[%s1 + $0xa74] sm:$0xf]
  %v440 = vld [vmem:[%s1 + $0xa80] sm:$0xf]
  %v441 = vld [vmem:[%s1 + $0xa8c] sm:$0xf]
  %v442 = vld [vmem:[%s1 + $0xa98] sm:$0xf]
  %v443 = vld [vmem:[%s1 + $0xaa4] sm:$0xf]
  %v444 = vld [vmem:[%s1 + $0xab0] sm:$0xf]
  %v445 = vld [vmem:[%s1 + $0xabc] sm:$0xf]
  %v446 = vld [vmem:[%s1 + $0xac8] sm:$0xf]
  %v447 = vld [vmem:[%s1 + $0xad4] sm:$0xf]
  %v448 = vld [vmem:[%s1 + $0xae0] sm:$0xf]
  %v449 = vld [vmem:[%s1 + $0xaec] sm:$0xf]
  %v450 = vld [vmem:[%s1 + $0xaf8] sm:$0xf]
  %v451 = vld [vmem:[%s1 + $0xb04] sm:$0xf]
  %v452 = vld [vmem:[%s1 + $0xb10] sm:$0xf]
  %v453 = vld [vmem:[%s1 + $0xb1c] sm:$0xf]
  %v454 = vld [vmem:[%s1 + $0xb28] sm:$0xf]
  %v455 = vld [vmem:[%s1 + $0xb34] sm:$0xf]
  %v456 = vld [vmem:[%s1 + $0xb40] sm:$0xf]
  %v457 = vld [vmem:[%s1 + $0xb4c] sm:$0xf]
  %v458 = vld [vmem:[%s1 + $0xb58] sm:$0xf]
  %v459 = vld [vmem:[%s1 + $0xb64] sm:$0xf]
  %v460 = vld [vmem:[%s1 + $0xb70] sm:$0xf]
  %v461 = vld [vmem:[%s1 + $0xb7c] sm:$0xf]
  %v462 = vld [vmem:[%s1 + $0xb88] sm:$0xf]
  %v463 = vld [vmem:[%s1 + $0xb94] sm:$0xf]
  %v464 = vld [vmem:[%s1 + $0xba0] sm:$0xf]
  %v465 = vld [vmem:[%s1 + $0xbac] sm:$0xf]
  %v466 = vld [vmem:[%s1 + $0xbb8] sm:$0xf]
  %v467 = vld [vmem:[%s1 + $0xbc4] sm:$0xf]
  %v468 = vld [vmem:[%s1 + $0xbd0] sm:$0xf]
  %v469 = vld [vmem:[%s1 + $0xbdc] sm:$0xf]
  %v470 = vld [vmem:[%s1 + $0xbe8] sm:$0xf]
  %v471 = vld [vmem:[%s1 + $0xbf4] sm:$0xf]
  %v472 = vld [vmem:[%s1 + $0xc00] sm:$0xf]
  %v473 = vld [vmem:[%s1 + $0xc0c] sm:$0xf]
  %v474 = vld [vmem:[%s1 + $0xc18] sm:$0xf]
  %v475 = vld [vmem:[%s1 + $0xc24] sm:$0xf]
  %v476 = vld [vmem:[%s1 + $0xc30] sm:$0xf]
  %v477 = vld [vmem:[%s1 + $0xc3c] sm:$0xf]
  %v478 = vld [vmem:[%s1 + $0xc48] sm:$0xf]
  %v479 = vld [vmem:[%s1 + $0xc54] sm:$0xf]
  %v480 = vld [vmem:[%s1 + $0xc60] sm:$0xf]
  %v481 = vld [vmem:[%s1 + $0xc6c] sm:$0xf]
  %v482 = vld [vmem:[%s1 + $0xc78] sm:$0xf]
  %v483 = vld [vmem:[%s1 + $0xc84] sm:$0xf]
  %v484 = vld [vmem:[%s1 + $0xc90] sm:$0xf]
  %v485 = vld [vmem:[%s1 + $0xc9c] sm:$0xf]
  %v486 = vld [vmem:[%s1 + $0xca8] sm:$0xf]
  %v487 = vld [vmem:[%s1 + $0xcb4] sm:$0xf]
  %v488 = vld [vmem:[%s1 + $0xcc0] sm:$0xf]
  %v489 = vld [vmem:[%s1 + $0xccc] sm:$0xf]
  %v490 = vld [vmem:[%s1 + $0xcd8] sm:$0xf]
  %v491 = vld [vmem:[%s1 + $0xce4] sm:$0xf]
  %v492 = vld [vmem:[%s1 + $0xcf0] sm:$0xf]
  %v493 = vld [vmem:[%s1 + $0xcfc] sm:$0xf]
  %v494 = vld [vmem:[%s1 + $0xd08] sm:$0xf]
  %v495 = vld [vmem:[%s1 + $0xd14] sm:$0xf]
  %v496 = vld [vmem:[%s1 + $0xd20] sm:$0xf]
  %v497 = vld [vmem:[%s1 + $0xd2c] sm:$0xf]
  %v498 = vld [vmem:[%s1 + $0xd38] sm:$0xf]
  %v499 = vld [vmem:[%s1 + $0xd44] sm:$0xf]
  %v500 = vld [vmem:[%s1 + $0xd50] sm:$0xf]
  %v501 = vld [vmem:[%s1 + $0xd5c] sm:$0xf]
  %v502 = vld [vmem:[%s1 + $0xd68] sm:$0xf]
  %v503 = vld [vmem:[%s1 + $0xd74] sm:$0xf]
  %v504 = vld [vmem:[%s1 + $0xd80] sm:$0xf]
  %v505 = vld [vmem:[%s1 + $0xd8c] sm:$0xf]
  %v506 = vld [vmem:[%s1 + $0xd98] sm:$0xf]
  %v507 = vld [vmem:[%s1 + $0xda4] sm:$0xf]
  %v508 = vld [vmem:[%s1 + $0xdb0] sm:$0xf]
  %v509 = vld [vmem:[%s1 + $0xdbc] sm:$0xf]
  %v510 = vld [vmem:[%s1 + $0xdc8] sm:$0xf]
  %v511 = vld [vmem:[%s1 + $0xdd4] sm:$0xf]
  %v512 = vld [vmem:[%s1 + $0xde0] sm:$0xf]
  %v513 = vld [vmem:[%s1 + $0xdec] sm:$0xf]
  %v514 = vld [vmem:[%s1 + $0xdf8] sm:$0xf]
  %v515 = vld [vmem:[%s1 + $0xe04] sm:$0xf]
  %v516 = vld [vmem:[%s1 + $0xe10] sm:$0xf]
  %v517 = vld [vmem:[%s1 + $0xe1c] sm:$0xf]
  %v518 = vld [vmem:[%s1 + $0xe28] sm:$0xf]
  %v519 = vld [vmem:[%s1 + $0xe34] sm:$0xf]
  %v520 = vld [vmem:[%s1 + $0xe40] sm:$0xf]
  %v521 = vld [vmem:[%s1 + $0xe4c] sm:$0xf]
  %v522 = vld [vmem:[%s1 + $0xe58] sm:$0xf]
  %v523 = vld [vmem:[%s1 + $0xe64] sm:$0xf]
  %v524 = vld [vmem:[%s1 + $0xe70] sm:$0xf]
  %v525 = vld [vmem:[%s1 + $0xe7c] sm:$0xf]
  %v526 = vld [vmem:[%s1 + $0xe88] sm:$0xf]
  %v527 = vld [vmem:[%s1 + $0xe94] sm:$0xf]
  %v528 = vld [vmem:[%s1 + $0xea0] sm:$0xf]
  %v529 = vld [vmem:[%s1 + $0xeac] sm:$0xf]
  %v530 = vld [vmem:[%s1 + $0xeb8] sm:$0xf]
  %v531 = vld [vmem:[%s1 + $0xec4] sm:$0xf]
  %v532 = vld [vmem:[%s1 + $0xed0] sm:$0xf]
  %v533 = vld [vmem:[%s1 + $0xedc] sm:$0xf]
  %v534 = vld [vmem:[%s1 + $0xee8] sm:$0xf]
  %v535 = vld [vmem:[%s1 + $0xef4] sm:$0xf]
  %v536 = vld [vmem:[%s1 + $0xf00] sm:$0xf]
  %v537 = vld [vmem:[%s1 + $0xf0c] sm:$0xf]
  %v538 = vld [vmem:[%s1 + $0xf18] sm:$0xf]
  %v539 = vld [vmem:[%s1 + $0xf24] sm:$0xf]
  %v540 = vld [vmem:[%s1 + $0xf30] sm:$0xf]
  %v541 = vld [vmem:[%s1 + $0xf3c] sm:$0xf]
  %v542 = vld [vmem:[%s1 + $0xf48] sm:$0xf]
  %v543 = vld [vmem:[%s1 + $0xf54] sm:$0xf]
  %v544 = vld [vmem:[%s1 + $0xf60] sm:$0xf]
  %v545 = vld [vmem:[%s1 + $0xf6c] sm:$0xf]
  %v546 = vld [vmem:[%s1 + $0xf78] sm:$0xf]
  %v547 = vld [vmem:[%s1 + $0xf84] sm:$0xf]
  %v548 = vld [vmem:[%s1 + $0xf90] sm:$0xf]
  %v549 = vld [vmem:[%s1 + $0xf9c] sm:$0xf]
  %v550 = vld [vmem:[%s1 + $0xfa8] sm:$0xf]
  %v551 = vld [vmem:[%s1 + $0xfb4] sm:$0xf]
  %v750 = vunpack.c.l.b16 %v18
  %v751 = vunpack.c.h.b16 %v18
  %v752 = vunpack.c.l.b16 %v19
  %v753 = vunpack.c.h.b16 %v19
  %v754 = vunpack.c.l.b16 %v20
  %v755 = vunpack.c.h.b16 %v20
  %v756 = vunpack.c.l.b16 %v21
  %v757 = vunpack.c.h.b16 %v21
  %v758 = vunpack.c.l.b16 %v22
  %v759 = vunpack.c.h.b16 %v22
  %v760 = vunpack.c.l.b16 %v23
  %v761 = vunpack.c.h.b16 %v23
  %v762 = vunpack.c.l.b16 %v24
  %v763 = vunpack.c.h.b16 %v24
  %v764 = vunpack.c.l.b16 %v25
  %v765 = vunpack.c.h.b16 %v25
  %v766 = vunpack.c.l.b16 %v26
  %v767 = vunpack.c.h.b16 %v26
  %v768 = vunpack.c.l.b16 %v27
  %v769 = vunpack.c.h.b16 %v27
  %v770 = vunpack.c.l.b16 %v28
  %v771 = vunpack.c.l.b16 %v29
  %v772 = vunpack.c.h.b16 %v29
  %v773 = vunpack.c.l.b16 %v30
  %v774 = vunpack.c.h.b16 %v30
  %v775 = vunpack.c.l.b16 %v31
  %v776 = vunpack.c.h.b16 %v31
  %v777 = vunpack.c.l.b16 %v32
  %v778 = vunpack.c.h.b16 %v32
  %v779 = vunpack.c.l.b16 %v33
  %v780 = vunpack.c.h.b16 %v33
  %v781 = vunpack.c.l.b16 %v34
  %v782 = vunpack.c.h.b16 %v34
  %v783 = vunpack.c.l.b16 %v35
  %v784 = vunpack.c.h.b16 %v35
  %v785 = vunpack.c.l.b16 %v36
  %v786 = vunpack.c.h.b16 %v36
  %v787 = vunpack.c.l.b16 %v37
  %v788 = vunpack.c.h.b16 %v37
  %v789 = vunpack.c.l.b16 %v38
  %v790 = vunpack.c.h.b16 %v38
  %v791 = vunpack.c.l.b16 %v39
  %v792 = vunpack.c.l.b16 %v40
  %v793 = vunpack.c.h.b16 %v40
  %v794 = vunpack.c.l.b16 %v41
  %v795 = vunpack.c.h.b16 %v41
  %v796 = vunpack.c.l.b16 %v42
  %v797 = vunpack.c.h.b16 %v42
  %v798 = vunpack.c.l.b16 %v43
  %v799 = vunpack.c.h.b16 %v43
  %v800 = vunpack.c.l.b16 %v44
  %v801 = vunpack.c.h.b16 %v44
  %v802 = vunpack.c.l.b16 %v45
  %v803 = vunpack.c.h.b16 %v45
  %v804 = vunpack.c.l.b16 %v46
  %v805 = vunpack.c.h.b16 %v46
  %v806 = vunpack.c.l.b16 %v47
  %v807 = vunpack.c.h.b16 %v47
  %v808 = vunpack.c.l.b16 %v48
  %v809 = vunpack.c.h.b16 %v48
  %v810 = vunpack.c.l.b16 %v49
  %v811 = vunpack.c.h.b16 %v49
  %v812 = vunpack.c.l.b16 %v50
  %v813 = vunpack.c.l.b16 %v51
  %v814 = vunpack.c.h.b16 %v51
  %v815 = vunpack.c.l.b16 %v52
  %v816 = vunpack.c.h.b16 %v52
  %v817 = vunpack.c.l.b16 %v53
  %v818 = vunpack.c.h.b16 %v53
  %v819 = vunpack.c.l.b16 %v54
  %v820 = vunpack.c.h.b16 %v54
  %v821 = vunpack.c.l.b16 %v55
  %v822 = vunpack.c.h.b16 %v55
  %v823 = vunpack.c.l.b16 %v56
  %v824 = vunpack.c.h.b16 %v56
  %v825 = vunpack.c.l.b16 %v57
  %v826 = vunpack.c.h.b16 %v57
  %v827 = vunpack.c.l.b16 %v58
  %v828 = vunpack.c.h.b16 %v58
  %v829 = vunpack.c.l.b16 %v59
  %v830 = vunpack.c.h.b16 %v59
  %v831 = vunpack.c.l.b16 %v60
  %v832 = vunpack.c.h.b16 %v60
  %v833 = vunpack.c.l.b16 %v61
  %v834 = vunpack.c.l.b16 %v62
  %v835 = vunpack.c.h.b16 %v62
  %v836 = vunpack.c.l.b16 %v63
  %v837 = vunpack.c.h.b16 %v63
  %v838 = vunpack.c.l.b16 %v64
  %v839 = vunpack.c.h.b16 %v64
  %v840 = vunpack.c.l.b16 %v65
  %v841 = vunpack.c.h.b16 %v65
  %v842 = vunpack.c.l.b16 %v66
  %v843 = vunpack.c.h.b16 %v66
  %v844 = vunpack.c.l.b16 %v67
  %v845 = vunpack.c.h.b16 %v67
  %v846 = vunpack.c.l.b16 %v68
  %v847 = vunpack.c.h.b16 %v68
  %v848 = vunpack.c.l.b16 %v69
  %v849 = vunpack.c.h.b16 %v69
  %v850 = vunpack.c.l.b16 %v70
  %v851 = vunpack.c.h.b16 %v70
  %v852 = vunpack.c.l.b16 %v71
  %v853 = vunpack.c.h.b16 %v71
  %v854 = vunpack.c.l.b16 %v72
  %v855 = vunpack.c.l.b16 %v73
  %v856 = vunpack.c.h.b16 %v73
  %v857 = vunpack.c.l.b16 %v74
  %v858 = vunpack.c.h.b16 %v74
  %v859 = vunpack.c.l.b16 %v75
  %v860 = vunpack.c.h.b16 %v75
  %v861 = vunpack.c.l.b16 %v76
  %v862 = vunpack.c.h.b16 %v76
  %v863 = vunpack.c.l.b16 %v77
  %v864 = vunpack.c.h.b16 %v77
  %v865 = vunpack.c.l.b16 %v78
  %v866 = vunpack.c.h.b16 %v78
  %v867 = vunpack.c.l.b16 %v79
  %v868 = vunpack.c.h.b16 %v79
  %v869 = vunpack.c.l.b16 %v80
  %v870 = vunpack.c.h.b16 %v80
  %v871 = vunpack.c.l.b16 %v81
  %v872 = vunpack.c.h.b16 %v81
  %v873 = vunpack.c.l.b16 %v82
  %v874 = vunpack.c.h.b16 %v82
  %v875 = vunpack.c.l.b16 %v83
  %v876 = vunpack.c.l.b16 %v84
  %v877 = vunpack.c.h.b16 %v84
  %v878 = vunpack.c.l.b16 %v85
  %v879 = vunpack.c.h.b16 %v85
  %v880 = vunpack.c.l.b16 %v86
  %v881 = vunpack.c.h.b16 %v86
  %v882 = vunpack.c.l.b16 %v87
  %v883 = vunpack.c.h.b16 %v87
  %v884 = vunpack.c.l.b16 %v88
  %v885 = vunpack.c.h.b16 %v88
  %v886 = vunpack.c.l.b16 %v89
  %v887 = vunpack.c.h.b16 %v89
  %v888 = vunpack.c.l.b16 %v90
  %v889 = vunpack.c.h.b16 %v90
  %v890 = vunpack.c.l.b16 %v91
  %v891 = vunpack.c.h.b16 %v91
  %v892 = vunpack.c.l.b16 %v92
  %v893 = vunpack.c.h.b16 %v92
  %v894 = vunpack.c.l.b16 %v93
  %v895 = vunpack.c.h.b16 %v93
  %v896 = vunpack.c.l.b16 %v94
  %v897 = vunpack.c.l.b16 %v95
  %v898 = vunpack.c.h.b16 %v95
  %v899 = vunpack.c.l.b16 %v96
  %v900 = vunpack.c.h.b16 %v96
  %v901 = vunpack.c.l.b16 %v97
  %v902 = vunpack.c.h.b16 %v97
  %v903 = vunpack.c.l.b16 %v98
  %v904 = vunpack.c.h.b16 %v98
  %v905 = vunpack.c.l.b16 %v99
  %v906 = vunpack.c.h.b16 %v99
  %v907 = vunpack.c.l.b16 %v100
  %v908 = vunpack.c.h.b16 %v100
  %v909 = vunpack.c.l.b16 %v101
  %v910 = vunpack.c.h.b16 %v101
  %v911 = vunpack.c.l.b16 %v102
  %v912 = vunpack.c.h.b16 %v102
  %v913 = vunpack.c.l.b16 %v103
  %v914 = vunpack.c.h.b16 %v103
  %v915 = vunpack.c.l.b16 %v104
  %v916 = vunpack.c.h.b16 %v104
  %v917 = vunpack.c.l.b16 %v105
  %v918 = vunpack.c.l.b16 %v106
  %v919 = vunpack.c.h.b16 %v106
  %v920 = vunpack.c.l.b16 %v107
  %v921 = vunpack.c.h.b16 %v107
  %v922 = vunpack.c.l.b16 %v108
  %v923 = vunpack.c.h.b16 %v108
  %v924 = vunpack.c.l.b16 %v109
  %v925 = vunpack.c.h.b16 %v109
  %v926 = vunpack.c.l.b16 %v110
  %v927 = vunpack.c.h.b16 %v110
  %v928 = vunpack.c.l.b16 %v111
  %v929 = vunpack.c.h.b16 %v111
  %v930 = vunpack.c.l.b16 %v112
  %v931 = vunpack.c.h.b16 %v112
  %v932 = vunpack.c.l.b16 %v113
  %v933 = vunpack.c.h.b16 %v113
  %v934 = vunpack.c.l.b16 %v114
  %v935 = vunpack.c.h.b16 %v114
  %v936 = vunpack.c.l.b16 %v115
  %v937 = vunpack.c.h.b16 %v115
  %v938 = vunpack.c.l.b16 %v116
  %v939 = vunpack.c.l.b16 %v117
  %v940 = vunpack.c.h.b16 %v117
  %v941 = vunpack.c.l.b16 %v118
  %v942 = vunpack.c.h.b16 %v118
  %v943 = vunpack.c.l.b16 %v119
  %v944 = vunpack.c.h.b16 %v119
  %v945 = vunpack.c.l.b16 %v120
  %v946 = vunpack.c.h.b16 %v120
  %v947 = vunpack.c.l.b16 %v121
  %v948 = vunpack.c.h.b16 %v121
  %v949 = vunpack.c.l.b16 %v122
  %v950 = vunpack.c.h.b16 %v122
  %v951 = vunpack.c.l.b16 %v123
  %v952 = vunpack.c.h.b16 %v123
  %v953 = vunpack.c.l.b16 %v124
  %v954 = vunpack.c.h.b16 %v124
  %v955 = vunpack.c.l.b16 %v125
  %v956 = vunpack.c.h.b16 %v125
  %v957 = vunpack.c.l.b16 %v126
  %v958 = vunpack.c.h.b16 %v126
  %v959 = vunpack.c.l.b16 %v127
  %v960 = vunpack.c.l.b16 %v128
  %v961 = vunpack.c.h.b16 %v128
  %v962 = vunpack.c.l.b16 %v129
  %v963 = vunpack.c.h.b16 %v129
  %v964 = vunpack.c.l.b16 %v130
  %v965 = vunpack.c.h.b16 %v130
  %v966 = vunpack.c.l.b16 %v131
  %v967 = vunpack.c.h.b16 %v131
  %v968 = vunpack.c.l.b16 %v132
  %v969 = vunpack.c.h.b16 %v132
  %v970 = vunpack.c.l.b16 %v133
  %v971 = vunpack.c.h.b16 %v133
  %v972 = vunpack.c.l.b16 %v134
  %v973 = vunpack.c.h.b16 %v134
  %v974 = vunpack.c.l.b16 %v135
  %v975 = vunpack.c.h.b16 %v135
  %v976 = vunpack.c.l.b16 %v136
  %v977 = vunpack.c.h.b16 %v136
  %v978 = vunpack.c.l.b16 %v137
  %v979 = vunpack.c.h.b16 %v137
  %v980 = vunpack.c.l.b16 %v138
  %v981 = vunpack.c.l.b16 %v139
  %v982 = vunpack.c.h.b16 %v139
  %v983 = vunpack.c.l.b16 %v140
  %v984 = vunpack.c.h.b16 %v140
  %v985 = vunpack.c.l.b16 %v141
  %v986 = vunpack.c.h.b16 %v141
  %v987 = vunpack.c.l.b16 %v142
  %v988 = vunpack.c.h.b16 %v142
  %v989 = vunpack.c.l.b16 %v143
  %v990 = vunpack.c.h.b16 %v143
  %v991 = vunpack.c.l.b16 %v144
  %v992 = vunpack.c.h.b16 %v144
  %v993 = vunpack.c.l.b16 %v145
  %v994 = vunpack.c.h.b16 %v145
  %v995 = vunpack.c.l.b16 %v146
  %v996 = vunpack.c.h.b16 %v146
  %v997 = vunpack.c.l.b16 %v147
  %v998 = vunpack.c.h.b16 %v147
  %v999 = vunpack.c.l.b16 %v148
  %v1000 = vunpack.c.h.b16 %v148
  %v1001 = vunpack.c.l.b16 %v149
  %v1002 = vunpack.c.l.b16 %v150
  %v1003 = vunpack.c.h.b16 %v150
  %v1004 = vunpack.c.l.b16 %v151
  %v1005 = vunpack.c.h.b16 %v151
  %v1006 = vunpack.c.l.b16 %v152
  %v1007 = vunpack.c.h.b16 %v152
  %v1008 = vunpack.c.l.b16 %v153
  %v1009 = vunpack.c.h.b16 %v153
  %v1010 = vunpack.c.l.b16 %v154
  %v1011 = vunpack.c.h.b16 %v154
  %v1012 = vunpack.c.l.b16 %v155
  %v1013 = vunpack.c.h.b16 %v155
  %v1014 = vunpack.c.l.b16 %v156
  %v1015 = vunpack.c.h.b16 %v156
  %v1016 = vunpack.c.l.b16 %v157
  %v1017 = vunpack.c.h.b16 %v157
  %v1018 = vunpack.c.l.b16 %v158
  %v1019 = vunpack.c.h.b16 %v158
  %v1020 = vunpack.c.l.b16 %v159
  %v1021 = vunpack.c.h.b16 %v159
  %v1022 = vunpack.c.l.b16 %v160
  %v1023 = vunpack.c.l.b16 %v161
  %v1024 = vunpack.c.h.b16 %v161
  %v1025 = vunpack.c.l.b16 %v162
  %v1026 = vunpack.c.h.b16 %v162
  %v1027 = vunpack.c.l.b16 %v163
  %v1028 = vunpack.c.h.b16 %v163
  %v1029 = vunpack.c.l.b16 %v164
  %v1030 = vunpack.c.h.b16 %v164
  %v1031 = vunpack.c.l.b16 %v165
  %v1032 = vunpack.c.h.b16 %v165
  %v1033 = vunpack.c.l.b16 %v166
  %v1034 = vunpack.c.h.b16 %v166
  %v1035 = vunpack.c.l.b16 %v167
  %v1036 = vunpack.c.h.b16 %v167
  %v1037 = vunpack.c.l.b16 %v168
  %v1038 = vunpack.c.h.b16 %v168
  %v1039 = vunpack.c.l.b16 %v169
  %v1040 = vunpack.c.h.b16 %v169
  %v1041 = vunpack.c.l.b16 %v170
  %v1042 = vunpack.c.h.b16 %v170
  %v1043 = vunpack.c.l.b16 %v171
  %v1044 = vunpack.c.l.b16 %v172
  %v1045 = vunpack.c.h.b16 %v172
  %v1046 = vunpack.c.l.b16 %v173
  %v1047 = vunpack.c.h.b16 %v173
  %v1048 = vunpack.c.l.b16 %v174
  %v1049 = vunpack.c.h.b16 %v174
  %v1050 = vunpack.c.l.b16 %v175
  %v1051 = vunpack.c.h.b16 %v175
  %v1052 = vunpack.c.l.b16 %v176
  %v1053 = vunpack.c.h.b16 %v176
  %v1054 = vunpack.c.l.b16 %v177
  %v1055 = vunpack.c.h.b16 %v177
  %v1056 = vunpack.c.l.b16 %v178
  %v1057 = vunpack.c.h.b16 %v178
  %v1058 = vunpack.c.l.b16 %v179
  %v1059 = vunpack.c.h.b16 %v179
  %v1060 = vunpack.c.l.b16 %v180
  %v1061 = vunpack.c.h.b16 %v180
  %v1062 = vunpack.c.l.b16 %v181
  %v1063 = vunpack.c.h.b16 %v181
  %v1064 = vunpack.c.l.b16 %v182
  %v1065 = vunpack.c.l.b16 %v183
  %v1066 = vunpack.c.h.b16 %v183
  %v1067 = vunpack.c.l.b16 %v184
  %v1068 = vunpack.c.h.b16 %v184
  %v1069 = vunpack.c.l.b16 %v185
  %v1070 = vunpack.c.h.b16 %v185
  %v1071 = vunpack.c.l.b16 %v186
  %v1072 = vunpack.c.h.b16 %v186
  %v1073 = vunpack.c.l.b16 %v187
  %v1074 = vunpack.c.h.b16 %v187
  %v1075 = vunpack.c.l.b16 %v188
  %v1076 = vunpack.c.h.b16 %v188
  %v1077 = vunpack.c.l.b16 %v189
  %v1078 = vunpack.c.h.b16 %v189
  %v1079 = vunpack.c.l.b16 %v190
  %v1080 = vunpack.c.h.b16 %v190
  %v1081 = vunpack.c.l.b16 %v191
  %v1082 = vunpack.c.h.b16 %v191
  %v1083 = vunpack.c.l.b16 %v192
  %v1084 = vunpack.c.h.b16 %v192
  %v1085 = vunpack.c.l.b16 %v193
  %v1086 = vunpack.c.l.b16 %v194
  %v1087 = vunpack.c.h.b16 %v194
  %v1088 = vunpack.c.l.b16 %v195
  %v1089 = vunpack.c.h.b16 %v195
  %v1090 = vunpack.c.l.b16 %v196
  %v1091 = vunpack.c.h.b16 %v196
  %v1092 = vunpack.c.l.b16 %v197
  %v1093 = vunpack.c.h.b16 %v197
  %v1094 = vunpack.c.l.b16 %v198
  %v1095 = vunpack.c.h.b16 %v198
  %v1096 = vunpack.c.l.b16 %v199
  %v1097 = vunpack.c.h.b16 %v199
  %v1098 = vunpack.c.l.b16 %v200
  %v1099 = vunpack.c.h.b16 %v200
  %v1100 = vunpack.c.l.b16 %v201
  %v1101 = vunpack.c.h.b16 %v201
  %v1102 = vunpack.c.l.b16 %v202
  %v1103 = vunpack.c.h.b16 %v202
  %v1104 = vunpack.c.l.b16 %v203
  %v1105 = vunpack.c.h.b16 %v203
  %v1106 = vunpack.c.l.b16 %v204
  %v1107 = vunpack.c.l.b16 %v205
  %v1108 = vunpack.c.h.b16 %v205
  %v1109 = vunpack.c.l.b16 %v206
  %v1110 = vunpack.c.h.b16 %v206
  %v1111 = vunpack.c.l.b16 %v207
  %v1112 = vunpack.c.h.b16 %v207
  %v1113 = vunpack.c.l.b16 %v208
  %v1114 = vunpack.c.h.b16 %v208
  %v1115 = vunpack.c.l.b16 %v209
  %v1116 = vunpack.c.h.b16 %v209
  %v1117 = vunpack.c.l.b16 %v210
  %v1118 = vunpack.c.h.b16 %v210
  %v1119 = vunpack.c.l.b16 %v211
  %v1120 = vunpack.c.h.b16 %v211
  %v1121 = vunpack.c.l.b16 %v212
  %v1122 = vunpack.c.h.b16 %v212
  %v1123 = vunpack.c.l.b16 %v213
  %v1124 = vunpack.c.h.b16 %v213
  %v1125 = vunpack.c.l.b16 %v214
  %v1126 = vunpack.c.h.b16 %v214
  %v1127 = vunpack.c.l.b16 %v215
  %v1128 = vpack.c.b16 %v771, %v750
  %v1129 = vpack.c.b16 %v772, %v751
  %v1130 = vpack.c.b16 %v773, %v752
  %v1131 = vpack.c.b16 %v774, %v753
  %v1132 = vpack.c.b16 %v775, %v754
  %v1133 = vpack.c.b16 %v776, %v755
  %v1134 = vpack.c.b16 %v777, %v756
  %v1135 = vpack.c.b16 %v778, %v757
  %v1136 = vpack.c.b16 %v779, %v758
  %v1137 = vpack.c.b16 %v780, %v759
  %v1138 = vpack.c.b16 %v781, %v760
  %v1139 = vpack.c.b16 %v782, %v761
  %v1140 = vpack.c.b16 %v783, %v762
  %v1141 = vpack.c.b16 %v784, %v763
  %v1142 = vpack.c.b16 %v785, %v764
  %v1143 = vpack.c.b16 %v786, %v765
  %v1144 = vpack.c.b16 %v787, %v766
  %v1145 = vpack.c.b16 %v788, %v767
  %v1146 = vpack.c.b16 %v789, %v768
  %v1147 = vpack.c.b16 %v790, %v769
  %v1148 = vpack.c.b16 %v791, %v770
  %v1149 = vpack.c.b16 %v813, %v792
  %v1150 = vpack.c.b16 %v814, %v793
  %v1151 = vpack.c.b16 %v815, %v794
  %v1152 = vpack.c.b16 %v816, %v795
  %v1153 = vpack.c.b16 %v817, %v796
  %v1154 = vpack.c.b16 %v818, %v797
  %v1155 = vpack.c.b16 %v819, %v798
  %v1156 = vpack.c.b16 %v820, %v799
  %v1157 = vpack.c.b16 %v821, %v800
  %v1158 = vpack.c.b16 %v822, %v801
  %v1159 = vpack.c.b16 %v823, %v802
  %v1160 = vpack.c.b16 %v824, %v803
  %v1161 = vpack.c.b16 %v825, %v804
  %v1162 = vpack.c.b16 %v826, %v805
  %v1163 = vpack.c.b16 %v827, %v806
  %v1164 = vpack.c.b16 %v828, %v807
  %v1165 = vpack.c.b16 %v829, %v808
  %v1166 = vpack.c.b16 %v830, %v809
  %v1167 = vpack.c.b16 %v831, %v810
  %v1168 = vpack.c.b16 %v832, %v811
  %v1169 = vpack.c.b16 %v833, %v812
  %v1170 = vpack.c.b16 %v855, %v834
  %v1171 = vpack.c.b16 %v856, %v835
  %v1172 = vpack.c.b16 %v857, %v836
  %v1173 = vpack.c.b16 %v858, %v837
  %v1174 = vpack.c.b16 %v859, %v838
  %v1175 = vpack.c.b16 %v860, %v839
  %v1176 = vpack.c.b16 %v861, %v840
  %v1177 = vpack.c.b16 %v862, %v841
  %v1178 = vpack.c.b16 %v863, %v842
  %v1179 = vpack.c.b16 %v864, %v843
  %v1180 = vpack.c.b16 %v865, %v844
  %v1181 = vpack.c.b16 %v866, %v845
  %v1182 = vpack.c.b16 %v867, %v846
  %v1183 = vpack.c.b16 %v868, %v847
  %v1184 = vpack.c.b16 %v869, %v848
  %v1185 = vpack.c.b16 %v870, %v849
  %v1186 = vpack.c.b16 %v871, %v850
  %v1187 = vpack.c.b16 %v872, %v851
  %v1188 = vpack.c.b16 %v873, %v852
  %v1189 = vpack.c.b16 %v874, %v853
  %v1190 = vpack.c.b16 %v875, %v854
  %v1191 = vpack.c.b16 %v897, %v876
  %v1192 = vpack.c.b16 %v898, %v877
  %v1193 = vpack.c.b16 %v899, %v878
  %v1194 = vpack.c.b16 %v900, %v879
  %v1195 = vpack.c.b16 %v901, %v880
  %v1196 = vpack.c.b16 %v902, %v881
  %v1197 = vpack.c.b16 %v903, %v882
  %v1198 = vpack.c.b16 %v904, %v883
  %v1199 = vpack.c.b16 %v905, %v884
  %v1200 = vpack.c.b16 %v906, %v885
  %v1201 = vpack.c.b16 %v907, %v886
  %v1202 = vpack.c.b16 %v908, %v887
  %v1203 = vpack.c.b16 %v909, %v888
  %v1204 = vpack.c.b16 %v910, %v889
  %v1205 = vpack.c.b16 %v911, %v890
  %v1206 = vpack.c.b16 %v912, %v891
  %v1207 = vpack.c.b16 %v913, %v892
  %v1208 = vpack.c.b16 %v914, %v893
  %v1209 = vpack.c.b16 %v915, %v894
  %v1210 = vpack.c.b16 %v916, %v895
  %v1211 = vpack.c.b16 %v917, %v896
  %v1212 = vpack.c.b16 %v939, %v918
  %v1213 = vpack.c.b16 %v940, %v919
  %v1214 = vpack.c.b16 %v941, %v920
  %v1215 = vpack.c.b16 %v942, %v921
  %v1216 = vpack.c.b16 %v943, %v922
  %v1217 = vpack.c.b16 %v944, %v923
  %v1218 = vpack.c.b16 %v945, %v924
  %v1219 = vpack.c.b16 %v946, %v925
  %v1220 = vpack.c.b16 %v947, %v926
  %v1221 = vpack.c.b16 %v948, %v927
  %v1222 = vpack.c.b16 %v949, %v928
  %v1223 = vpack.c.b16 %v950, %v929
  %v1224 = vpack.c.b16 %v951, %v930
  %v1225 = vpack.c.b16 %v952, %v931
  %v1226 = vpack.c.b16 %v953, %v932
  %v1227 = vpack.c.b16 %v954, %v933
  %v1228 = vpack.c.b16 %v955, %v934
  %v1229 = vpack.c.b16 %v956, %v935
  %v1230 = vpack.c.b16 %v957, %v936
  %v1231 = vpack.c.b16 %v958, %v937
  %v1232 = vpack.c.b16 %v959, %v938
  %v1233 = vpack.c.b16 %v981, %v960
  %v1234 = vpack.c.b16 %v982, %v961
  %v1235 = vpack.c.b16 %v983, %v962
  %v1236 = vpack.c.b16 %v984, %v963
  %v1237 = vpack.c.b16 %v985, %v964
  %v1238 = vpack.c.b16 %v986, %v965
  %v1239 = vpack.c.b16 %v987, %v966
  %v1240 = vpack.c.b16 %v988, %v967
  %v1241 = vpack.c.b16 %v989, %v968
  %v1242 = vpack.c.b16 %v990, %v969
  %v1243 = vpack.c.b16 %v991, %v970
  %v1244 = vpack.c.b16 %v992, %v971
  %v1245 = vpack.c.b16 %v993, %v972
  %v1246 = vpack.c.b16 %v994, %v973
  %v1247 = vpack.c.b16 %v995, %v974
  %v1248 = vpack.c.b16 %v996, %v975
  %v1249 = vpack.c.b16 %v997, %v976
  %v1250 = vpack.c.b16 %v998, %v977
  %v1251 = vpack.c.b16 %v999, %v978
  %v1252 = vpack.c.b16 %v1000, %v979
  %v1253 = vpack.c.b16 %v1001, %v980
  %v1254 = vpack.c.b16 %v1023, %v1002
  %v1255 = vpack.c.b16 %v1024, %v1003
  %v1256 = vpack.c.b16 %v1025, %v1004
  %v1257 = vpack.c.b16 %v1026, %v1005
  %v1258 = vpack.c.b16 %v1027, %v1006
  %v1259 = vpack.c.b16 %v1028, %v1007
  %v1260 = vpack.c.b16 %v1029, %v1008
  %v1261 = vpack.c.b16 %v1030, %v1009
  %v1262 = vpack.c.b16 %v1031, %v1010
  %v1263 = vpack.c.b16 %v1032, %v1011
  %v1264 = vpack.c.b16 %v1033, %v1012
  %v1265 = vpack.c.b16 %v1034, %v1013
  %v1266 = vpack.c.b16 %v1035, %v1014
  %v1267 = vpack.c.b16 %v1036, %v1015
  %v1268 = vpack.c.b16 %v1037, %v1016
  %v1269 = vpack.c.b16 %v1038, %v1017
  %v1270 = vpack.c.b16 %v1039, %v1018
  %v1271 = vpack.c.b16 %v1040, %v1019
  %v1272 = vpack.c.b16 %v1041, %v1020
  %v1273 = vpack.c.b16 %v1042, %v1021
  %v1274 = vpack.c.b16 %v1043, %v1022
  %v1275 = vpack.c.b16 %v1065, %v1044
  %v1276 = vpack.c.b16 %v1066, %v1045
  %v1277 = vpack.c.b16 %v1067, %v1046
  %v1278 = vpack.c.b16 %v1068, %v1047
  %v1279 = vpack.c.b16 %v1069, %v1048
  %v1280 = vpack.c.b16 %v1070, %v1049
  %v1281 = vpack.c.b16 %v1071, %v1050
  %v1282 = vpack.c.b16 %v1072, %v1051
  %v1283 = vpack.c.b16 %v1073, %v1052
  %v1284 = vpack.c.b16 %v1074, %v1053
  %v1285 = vpack.c.b16 %v1075, %v1054
  %v1286 = vpack.c.b16 %v1076, %v1055
  %v1287 = vpack.c.b16 %v1077, %v1056
  %v1288 = vpack.c.b16 %v1078, %v1057
  %v1289 = vpack.c.b16 %v1079, %v1058
  %v1290 = vpack.c.b16 %v1080, %v1059
  %v1291 = vpack.c.b16 %v1081, %v1060
  %v1292 = vpack.c.b16 %v1082, %v1061
  %v1293 = vpack.c.b16 %v1083, %v1062
  %v1294 = vpack.c.b16 %v1084, %v1063
  %v1295 = vpack.c.b16 %v1085, %v1064
  %v1296 = vpack.c.b16 %v1107, %v1086
  %v1297 = vpack.c.b16 %v1108, %v1087
  %v1298 = vpack.c.b16 %v1109, %v1088
  %v1299 = vpack.c.b16 %v1110, %v1089
  %v1300 = vpack.c.b16 %v1111, %v1090
  %v1301 = vpack.c.b16 %v1112, %v1091
  %v1302 = vpack.c.b16 %v1113, %v1092
  %v1303 = vpack.c.b16 %v1114, %v1093
  %v1304 = vpack.c.b16 %v1115, %v1094
  %v1305 = vpack.c.b16 %v1116, %v1095
  %v1306 = vpack.c.b16 %v1117, %v1096
  %v1307 = vpack.c.b16 %v1118, %v1097
  %v1308 = vpack.c.b16 %v1119, %v1098
  %v1309 = vpack.c.b16 %v1120, %v1099
  %v1310 = vpack.c.b16 %v1121, %v1100
  %v1311 = vpack.c.b16 %v1122, %v1101
  %v1312 = vpack.c.b16 %v1123, %v1102
  %v1313 = vpack.c.b16 %v1124, %v1103
  %v1314 = vpack.c.b16 %v1125, %v1104
  %v1315 = vpack.c.b16 %v1126, %v1105
  %v1316 = vpack.c.b16 %v1127, %v1106
  %v1842 = vunpack.c.l.b16 %v216
  %v1843 = vunpack.c.l.b16 %v217
  %v1844 = vunpack.c.l.b16 %v218
  %v1845 = vunpack.c.l.b16 %v219
  %v1846 = vunpack.c.l.b16 %v220
  %v1847 = vunpack.c.l.b16 %v221
  %v1848 = vunpack.c.l.b16 %v222
  %v1849 = vunpack.c.l.b16 %v223
  %v1850 = vunpack.c.l.b16 %v224
  %v1851 = vunpack.c.l.b16 %v225
  %v1852 = vunpack.c.l.b16 %v226
  %v1853 = vunpack.c.l.b16 %v227
  %v1854 = vunpack.c.l.b16 %v228
  %v1855 = vunpack.c.l.b16 %v229
  %v1856 = vunpack.c.l.b16 %v230
  %v1857 = vunpack.c.l.b16 %v231
  %v1858 = vunpack.c.l.b16 %v232
  %v1859 = vunpack.c.l.b16 %v233
  %v1860 = vunpack.c.l.b16 %v234
  %v1861 = vunpack.c.l.b16 %v235
  %v1862 = vunpack.c.l.b16 %v236
  %v1863 = vunpack.c.l.b16 %v237
  %v1864 = vunpack.c.l.b16 %v238
  %v1865 = vunpack.c.l.b16 %v239
  %v1866 = vunpack.c.l.b16 %v240
  %v1867 = vunpack.c.l.b16 %v241
  %v1868 = vunpack.c.l.b16 %v242
  %v1869 = vunpack.c.l.b16 %v243
  %v1870 = vunpack.c.l.b16 %v244
  %v1871 = vunpack.c.l.b16 %v245
  %v1872 = vunpack.c.l.b16 %v246
  %v1873 = vunpack.c.l.b16 %v247
  %v1874 = vunpack.c.l.b16 %v248
  %v1875 = vunpack.c.l.b16 %v249
  %v1876 = vunpack.c.l.b16 %v250
  %v1877 = vunpack.c.l.b16 %v251
  %v1878 = vunpack.c.l.b16 %v252
  %v1879 = vunpack.c.l.b16 %v253
  %v1880 = vunpack.c.l.b16 %v254
  %v1881 = vunpack.c.l.b16 %v255
  %v1882 = vunpack.c.l.b16 %v256
  %v1883 = vunpack.c.l.b16 %v257
  %v1884 = vunpack.c.l.b16 %v258
  %v1885 = vunpack.c.l.b16 %v259
  %v1886 = vunpack.c.l.b16 %v260
  %v1887 = vunpack.c.l.b16 %v261
  %v1888 = vunpack.c.l.b16 %v262
  %v1889 = vunpack.c.l.b16 %v263
  %v1890 = vunpack.c.l.b16 %v264
  %v1891 = vunpack.c.l.b16 %v265
  %v1892 = vunpack.c.l.b16 %v266
  %v1893 = vunpack.c.l.b16 %v267
  %v1894 = vunpack.c.l.b16 %v268
  %v1895 = vunpack.c.l.b16 %v269
  %v1896 = vunpack.c.l.b16 %v270
  %v1897 = vunpack.c.l.b16 %v271
  %v1898 = vunpack.c.l.b16 %v272
  %v1899 = vunpack.c.l.b16 %v273
  %v1900 = vunpack.c.l.b16 %v274
  %v1901 = vunpack.c.l.b16 %v275
  %v1902 = vunpack.c.l.b16 %v276
  %v1903 = vunpack.c.l.b16 %v277
  %v1904 = vunpack.c.l.b16 %v278
  %v1905 = vunpack.c.l.b16 %v279
  %v1906 = vunpack.c.l.b16 %v280
  %v1907 = vunpack.c.l.b16 %v281
  %v1908 = vunpack.c.l.b16 %v282
  %v1909 = vunpack.c.l.b16 %v283
  %v1910 = vunpack.c.l.b16 %v284
  %v1911 = vunpack.c.l.b16 %v285
  %v1912 = vunpack.c.l.b16 %v286
  %v1913 = vunpack.c.l.b16 %v287
  %v1914 = vunpack.c.l.b16 %v288
  %v1915 = vunpack.c.l.b16 %v289
  %v1916 = vunpack.c.l.b16 %v290
  %v1917 = vunpack.c.l.b16 %v291
  %v1918 = vunpack.c.l.b16 %v292
  %v1919 = vunpack.c.l.b16 %v293
  %v1920 = vunpack.c.l.b16 %v294
  %v1921 = vunpack.c.l.b16 %v295
  %v1922 = vunpack.c.l.b16 %v296
  %v1923 = vunpack.c.l.b16 %v297
  %v1924 = vunpack.c.l.b16 %v298
  %v1925 = vunpack.c.l.b16 %v299
  %v1926 = vunpack.c.l.b16 %v300
  %v1927 = vunpack.c.l.b16 %v301
  %v1928 = vunpack.c.l.b16 %v302
  %v1929 = vunpack.c.l.b16 %v303
  %v1930 = vunpack.c.l.b16 %v304
  %v1931 = vunpack.c.l.b16 %v305
  %v1932 = vunpack.c.l.b16 %v306
  %v1933 = vunpack.c.l.b16 %v307
  %v1934 = vunpack.c.l.b16 %v308
  %v1935 = vunpack.c.l.b16 %v309
  %v1936 = vunpack.c.l.b16 %v310
  %v1937 = vunpack.c.l.b16 %v311
  %v1938 = vunpack.c.l.b16 %v312
  %v1939 = vunpack.c.l.b16 %v313
  %v1940 = vunpack.c.l.b16 %v314
  %v1941 = vunpack.c.l.b16 %v315
  %v1942 = vunpack.c.l.b16 %v316
  %v1943 = vunpack.c.l.b16 %v317
  %v1944 = vunpack.c.l.b16 %v318
  %v1945 = vunpack.c.l.b16 %v319
  %v1946 = vunpack.c.l.b16 %v320
  %v1947 = vunpack.c.l.b16 %v321
  %v1948 = vunpack.c.l.b16 %v322
  %v1949 = vunpack.c.l.b16 %v323
  %v1950 = vunpack.c.l.b16 %v324
  %v1951 = vunpack.c.l.b16 %v325
  %v1952 = vunpack.c.l.b16 %v326
  %v1953 = vunpack.c.l.b16 %v327
  %v1954 = vunpack.c.l.b16 %v328
  %v1955 = vunpack.c.l.b16 %v329
  %v1956 = vunpack.c.l.b16 %v330
  %v1957 = vunpack.c.l.b16 %v331
  %v1958 = vunpack.c.l.b16 %v332
  %v1959 = vunpack.c.l.b16 %v333
  %v1960 = vunpack.c.l.b16 %v334
  %v1961 = vunpack.c.l.b16 %v335
  %v1962 = vunpack.c.l.b16 %v336
  %v1963 = vunpack.c.l.b16 %v337
  %v1964 = vunpack.c.l.b16 %v338
  %v1965 = vunpack.c.l.b16 %v339
  %v1966 = vunpack.c.l.b16 %v340
  %v1967 = vunpack.c.l.b16 %v341
  %v1968 = vunpack.c.l.b16 %v342
  %v1969 = vunpack.c.l.b16 %v343
  %v1970 = vunpack.c.l.b16 %v344
  %v1971 = vunpack.c.l.b16 %v345
  %v1972 = vunpack.c.l.b16 %v346
  %v1973 = vunpack.c.l.b16 %v347
  %v1974 = vunpack.c.l.b16 %v348
  %v1975 = vunpack.c.l.b16 %v349
  %v1976 = vunpack.c.l.b16 %v350
  %v1977 = vunpack.c.l.b16 %v351
  %v1978 = vunpack.c.l.b16 %v352
  %v1979 = vunpack.c.l.b16 %v353
  %v1980 = vunpack.c.l.b16 %v354
  %v1981 = vunpack.c.l.b16 %v355
  %v1982 = vunpack.c.l.b16 %v356
  %v1983 = vunpack.c.l.b16 %v357
  %v1984 = vunpack.c.l.b16 %v358
  %v1985 = vunpack.c.l.b16 %v359
  %v1986 = vunpack.c.l.b16 %v360
  %v1987 = vunpack.c.l.b16 %v361
  %v1988 = vunpack.c.l.b16 %v362
  %v1989 = vunpack.c.l.b16 %v363
  %v1990 = vunpack.c.l.b16 %v364
  %v1991 = vunpack.c.l.b16 %v365
  %v1992 = vunpack.c.l.b16 %v366
  %v1993 = vunpack.c.l.b16 %v367
  %v1994 = vunpack.c.l.b16 %v368
  %v1995 = vunpack.c.l.b16 %v369
  %v1996 = vunpack.c.l.b16 %v370
  %v1997 = vunpack.c.l.b16 %v371
  %v1998 = vunpack.c.l.b16 %v372
  %v1999 = vunpack.c.l.b16 %v373
  %v2000 = vunpack.c.l.b16 %v374
  %v2001 = vunpack.c.l.b16 %v375
  %v2002 = vunpack.c.l.b16 %v376
  %v2003 = vunpack.c.l.b16 %v377
  %v2004 = vunpack.c.l.b16 %v378
  %v2005 = vunpack.c.l.b16 %v379
  %v2006 = vunpack.c.l.b16 %v380
  %v2007 = vunpack.c.l.b16 %v381
  %v2008 = vunpack.c.l.b16 %v382
  %v2009 = vunpack.c.l.b16 %v383
  %v2010 = vunpack.c.l.b16 %v384
  %v2011 = vunpack.c.l.b16 %v385
  %v2012 = vunpack.c.l.b16 %v386
  %v2013 = vunpack.c.l.b16 %v387
  %v2014 = vunpack.c.l.b16 %v388
  %v2015 = vunpack.c.l.b16 %v389
  %v2016 = vunpack.c.l.b16 %v390
  %v2017 = vunpack.c.l.b16 %v391
  %v2018 = vunpack.c.l.b16 %v392
  %v2019 = vunpack.c.l.b16 %v393
  %v2020 = vunpack.c.l.b16 %v394
  %v2021 = vunpack.c.l.b16 %v395
  %v2022 = vunpack.c.l.b16 %v396
  %v2023 = vunpack.c.l.b16 %v397
  %v2024 = vunpack.c.l.b16 %v398
  %v2025 = vunpack.c.l.b16 %v399
  %v2026 = vunpack.c.l.b16 %v400
  %v2027 = vunpack.c.l.b16 %v401
  %v2028 = vunpack.c.l.b16 %v402
  %v2029 = vunpack.c.l.b16 %v403
  %v2030 = vunpack.c.l.b16 %v404
  %v2031 = vunpack.c.l.b16 %v405
  %v2032 = vunpack.c.l.b16 %v406
  %v2033 = vunpack.c.l.b16 %v407
  %v2034 = vunpack.c.l.b16 %v408
  %v2035 = vunpack.c.l.b16 %v409
  %v2036 = vunpack.c.l.b16 %v410
  %v2037 = vunpack.c.l.b16 %v411
  %v2038 = vunpack.c.l.b16 %v412
  %v2039 = vunpack.c.l.b16 %v413
  %v2040 = vunpack.c.l.b16 %v414
  %v2041 = vunpack.c.l.b16 %v415
  %v2042 = vunpack.c.l.b16 %v416
  %v2043 = vunpack.c.l.b16 %v417
  %v2044 = vunpack.c.l.b16 %v418
  %v2045 = vunpack.c.l.b16 %v419
  %v2046 = vunpack.c.l.b16 %v420
  %v2047 = vunpack.c.l.b16 %v421
  %v2048 = vunpack.c.l.b16 %v422
  %v2049 = vunpack.c.l.b16 %v423
  %v2050 = vunpack.c.l.b16 %v424
  %v2051 = vunpack.c.l.b16 %v425
  %v2052 = vunpack.c.l.b16 %v426
  %v2053 = vunpack.c.l.b16 %v427
  %v2054 = vunpack.c.l.b16 %v428
  %v2055 = vunpack.c.l.b16 %v429
  %v2056 = vunpack.c.l.b16 %v430
  %v2057 = vunpack.c.l.b16 %v431
  %v2058 = vunpack.c.l.b16 %v432
  %v2059 = vunpack.c.l.b16 %v433
  %v2060 = vunpack.c.l.b16 %v434
  %v2061 = vunpack.c.l.b16 %v435
  %v2062 = vunpack.c.l.b16 %v436
  %v2063 = vunpack.c.l.b16 %v437
  %v2064 = vunpack.c.l.b16 %v438
  %v2065 = vunpack.c.l.b16 %v439
  %v2066 = vunpack.c.l.b16 %v440
  %v2067 = vunpack.c.l.b16 %v441
  %v2068 = vunpack.c.l.b16 %v442
  %v2069 = vunpack.c.l.b16 %v443
  %v2070 = vunpack.c.l.b16 %v444
  %v2071 = vunpack.c.l.b16 %v445
  %v2072 = vunpack.c.l.b16 %v446
  %v2073 = vunpack.c.l.b16 %v447
  %v2074 = vunpack.c.l.b16 %v448
  %v2075 = vunpack.c.l.b16 %v449
  %v2076 = vunpack.c.l.b16 %v450
  %v2077 = vunpack.c.l.b16 %v451
  %v2078 = vunpack.c.l.b16 %v452
  %v2079 = vunpack.c.l.b16 %v453
  %v2080 = vunpack.c.l.b16 %v454
  %v2081 = vunpack.c.l.b16 %v455
  %v2082 = vunpack.c.l.b16 %v456
  %v2083 = vunpack.c.l.b16 %v457
  %v2084 = vunpack.c.l.b16 %v458
  %v2085 = vunpack.c.l.b16 %v459
  %v2086 = vunpack.c.l.b16 %v460
  %v2087 = vunpack.c.l.b16 %v461
  %v2088 = vunpack.c.l.b16 %v462
  %v2089 = vunpack.c.l.b16 %v463
  %v2090 = vunpack.c.l.b16 %v464
  %v2091 = vunpack.c.l.b16 %v465
  %v2092 = vunpack.c.l.b16 %v466
  %v2093 = vunpack.c.l.b16 %v467
  %v2094 = vunpack.c.l.b16 %v468
  %v2095 = vunpack.c.l.b16 %v469
  %v2096 = vunpack.c.l.b16 %v470
  %v2097 = vunpack.c.l.b16 %v471
  %v2098 = vunpack.c.l.b16 %v472
  %v2099 = vunpack.c.l.b16 %v473
  %v2100 = vunpack.c.l.b16 %v474
  %v2101 = vunpack.c.l.b16 %v475
  %v2102 = vunpack.c.l.b16 %v476
  %v2103 = vunpack.c.l.b16 %v477
  %v2104 = vunpack.c.l.b16 %v478
  %v2105 = vunpack.c.l.b16 %v479
  %v2106 = vunpack.c.l.b16 %v480
  %v2107 = vunpack.c.l.b16 %v481
  %v2108 = vunpack.c.l.b16 %v482
  %v2109 = vunpack.c.l.b16 %v483
  %v2110 = vunpack.c.l.b16 %v484
  %v2111 = vunpack.c.l.b16 %v485
  %v2112 = vunpack.c.l.b16 %v486
  %v2113 = vunpack.c.l.b16 %v487
  %v2114 = vunpack.c.l.b16 %v488
  %v2115 = vunpack.c.l.b16 %v489
  %v2116 = vunpack.c.l.b16 %v490
  %v2117 = vunpack.c.l.b16 %v491
  %v2118 = vunpack.c.l.b16 %v492
  %v2119 = vunpack.c.l.b16 %v493
  %v2120 = vunpack.c.l.b16 %v494
  %v2121 = vunpack.c.l.b16 %v495
  %v2122 = vunpack.c.l.b16 %v496
  %v2123 = vunpack.c.l.b16 %v497
  %v2124 = vunpack.c.l.b16 %v498
  %v2125 = vunpack.c.l.b16 %v499
  %v2126 = vunpack.c.l.b16 %v500
  %v2127 = vunpack.c.l.b16 %v501
  %v2128 = vunpack.c.l.b16 %v502
  %v2129 = vunpack.c.l.b16 %v503
  %v2130 = vunpack.c.l.b16 %v504
  %v2131 = vunpack.c.l.b16 %v505
  %v2132 = vunpack.c.l.b16 %v506
  %v2133 = vunpack.c.l.b16 %v507
  %v2134 = vunpack.c.l.b16 %v508
  %v2135 = vunpack.c.l.b16 %v509
  %v2136 = vunpack.c.l.b16 %v510
  %v2137 = vunpack.c.l.b16 %v511
  %v2138 = vunpack.c.l.b16 %v512
  %v2139 = vunpack.c.l.b16 %v513
  %v2140 = vunpack.c.l.b16 %v514
  %v2141 = vunpack.c.l.b16 %v515
  %v2142 = vunpack.c.l.b16 %v516
  %v2143 = vunpack.c.l.b16 %v517
  %v2144 = vunpack.c.l.b16 %v518
  %v2145 = vunpack.c.l.b16 %v519
  %v2146 = vunpack.c.l.b16 %v520
  %v2147 = vunpack.c.l.b16 %v521
  %v2148 = vunpack.c.l.b16 %v522
  %v2149 = vunpack.c.l.b16 %v523
  %v2150 = vunpack.c.l.b16 %v524
  %v2151 = vunpack.c.l.b16 %v525
  %v2152 = vunpack.c.l.b16 %v526
  %v2153 = vunpack.c.l.b16 %v527
  %v2154 = vunpack.c.l.b16 %v528
  %v2155 = vunpack.c.l.b16 %v529
  %v2156 = vunpack.c.l.b16 %v530
  %v2157 = vunpack.c.l.b16 %v531
  %v2158 = vunpack.c.l.b16 %v532
  %v2159 = vunpack.c.l.b16 %v533
  %v2160 = vunpack.c.l.b16 %v534
  %v2161 = vunpack.c.l.b16 %v535
  %v2162 = vunpack.c.l.b16 %v536
  %v2163 = vunpack.c.l.b16 %v537
  %v2164 = vunpack.c.l.b16 %v538
  %v2165 = vunpack.c.l.b16 %v539
  %v2166 = vunpack.c.l.b16 %v540
  %v2167 = vunpack.c.l.b16 %v541
  %v2168 = vunpack.c.l.b16 %v542
  %v2169 = vunpack.c.l.b16 %v543
  %v2170 = vunpack.c.l.b16 %v544
  %v2171 = vunpack.c.l.b16 %v545
  %v2172 = vunpack.c.l.b16 %v546
  %v2173 = vunpack.c.l.b16 %v547
  %v2174 = vunpack.c.l.b16 %v548
  %v2175 = vunpack.c.l.b16 %v549
  %v2176 = vunpack.c.l.b16 %v550
  %v2177 = vunpack.c.l.b16 %v551
  %v2178 = vpack.c.b16 %v1843, %v1842
  %v2179 = vpack.c.b16 %v1845, %v1844
  %v2180 = vpack.c.b16 %v1847, %v1846
  %v2181 = vpack.c.b16 %v1849, %v1848
  %v2182 = vpack.c.b16 %v1851, %v1850
  %v2183 = vpack.c.b16 %v1853, %v1852
  %v2184 = vpack.c.b16 %v1855, %v1854
  %v2185 = vpack.c.b16 %v1857, %v1856
  %v2186 = vpack.c.b16 %v1859, %v1858
  %v2187 = vpack.c.b16 %v1861, %v1860
  %v2188 = vpack.c.b16 %v1863, %v1862
  %v2189 = vpack.c.b16 %v1865, %v1864
  %v2190 = vpack.c.b16 %v1867, %v1866
  %v2191 = vpack.c.b16 %v1869, %v1868
  %v2192 = vpack.c.b16 %v1871, %v1870
  %v2193 = vpack.c.b16 %v1873, %v1872
  %v2194 = vpack.c.b16 %v1875, %v1874
  %v2195 = vpack.c.b16 %v1877, %v1876
  %v2196 = vpack.c.b16 %v1879, %v1878
  %v2197 = vpack.c.b16 %v1881, %v1880
  %v2198 = vpack.c.b16 %v1883, %v1882
  %v2199 = vpack.c.b16 %v1885, %v1884
  %v2200 = vpack.c.b16 %v1887, %v1886
  %v2201 = vpack.c.b16 %v1889, %v1888
  %v2202 = vpack.c.b16 %v1891, %v1890
  %v2203 = vpack.c.b16 %v1893, %v1892
  %v2204 = vpack.c.b16 %v1895, %v1894
  %v2205 = vpack.c.b16 %v1897, %v1896
  %v2206 = vpack.c.b16 %v1899, %v1898
  %v2207 = vpack.c.b16 %v1901, %v1900
  %v2208 = vpack.c.b16 %v1903, %v1902
  %v2209 = vpack.c.b16 %v1905, %v1904
  %v2210 = vpack.c.b16 %v1907, %v1906
  %v2211 = vpack.c.b16 %v1909, %v1908
  %v2212 = vpack.c.b16 %v1911, %v1910
  %v2213 = vpack.c.b16 %v1913, %v1912
  %v2214 = vpack.c.b16 %v1915, %v1914
  %v2215 = vpack.c.b16 %v1917, %v1916
  %v2216 = vpack.c.b16 %v1919, %v1918
  %v2217 = vpack.c.b16 %v1921, %v1920
  %v2218 = vpack.c.b16 %v1923, %v1922
  %v2219 = vpack.c.b16 %v1925, %v1924
  %v2220 = vpack.c.b16 %v1927, %v1926
  %v2221 = vpack.c.b16 %v1929, %v1928
  %v2222 = vpack.c.b16 %v1931, %v1930
  %v2223 = vpack.c.b16 %v1933, %v1932
  %v2224 = vpack.c.b16 %v1935, %v1934
  %v2225 = vpack.c.b16 %v1937, %v1936
  %v2226 = vpack.c.b16 %v1939, %v1938
  %v2227 = vpack.c.b16 %v1941, %v1940
  %v2228 = vpack.c.b16 %v1943, %v1942
  %v2229 = vpack.c.b16 %v1945, %v1944
  %v2230 = vpack.c.b16 %v1947, %v1946
  %v2231 = vpack.c.b16 %v1949, %v1948
  %v2232 = vpack.c.b16 %v1951, %v1950
  %v2233 = vpack.c.b16 %v1953, %v1952
  %v2234 = vpack.c.b16 %v1955, %v1954
  %v2235 = vpack.c.b16 %v1957, %v1956
  %v2236 = vpack.c.b16 %v1959, %v1958
  %v2237 = vpack.c.b16 %v1961, %v1960
  %v2238 = vpack.c.b16 %v1963, %v1962
  %v2239 = vpack.c.b16 %v1965, %v1964
  %v2240 = vpack.c.b16 %v1967, %v1966
  %v2241 = vpack.c.b16 %v1969, %v1968
  %v2242 = vpack.c.b16 %v1971, %v1970
  %v2243 = vpack.c.b16 %v1973, %v1972
  %v2244 = vpack.c.b16 %v1975, %v1974
  %v2245 = vpack.c.b16 %v1977, %v1976
  %v2246 = vpack.c.b16 %v1979, %v1978
  %v2247 = vpack.c.b16 %v1981, %v1980
  %v2248 = vpack.c.b16 %v1983, %v1982
  %v2249 = vpack.c.b16 %v1985, %v1984
  %v2250 = vpack.c.b16 %v1987, %v1986
  %v2251 = vpack.c.b16 %v1989, %v1988
  %v2252 = vpack.c.b16 %v1991, %v1990
  %v2253 = vpack.c.b16 %v1993, %v1992
  %v2254 = vpack.c.b16 %v1995, %v1994
  %v2255 = vpack.c.b16 %v1997, %v1996
  %v2256 = vpack.c.b16 %v1999, %v1998
  %v2257 = vpack.c.b16 %v2001, %v2000
  %v2258 = vpack.c.b16 %v2003, %v2002
  %v2259 = vpack.c.b16 %v2005, %v2004
  %v2260 = vpack.c.b16 %v2007, %v2006
  %v2261 = vpack.c.b16 %v2009, %v2008
  %v2262 = vpack.c.b16 %v2011, %v2010
  %v2263 = vpack.c.b16 %v2013, %v2012
  %v2264 = vpack.c.b16 %v2015, %v2014
  %v2265 = vpack.c.b16 %v2017, %v2016
  %v2266 = vpack.c.b16 %v2019, %v2018
  %v2267 = vpack.c.b16 %v2021, %v2020
  %v2268 = vpack.c.b16 %v2023, %v2022
  %v2269 = vpack.c.b16 %v2025, %v2024
  %v2270 = vpack.c.b16 %v2027, %v2026
  %v2271 = vpack.c.b16 %v2029, %v2028
  %v2272 = vpack.c.b16 %v2031, %v2030
  %v2273 = vpack.c.b16 %v2033, %v2032
  %v2274 = vpack.c.b16 %v2035, %v2034
  %v2275 = vpack.c.b16 %v2037, %v2036
  %v2276 = vpack.c.b16 %v2039, %v2038
  %v2277 = vpack.c.b16 %v2041, %v2040
  %v2278 = vpack.c.b16 %v2043, %v2042
  %v2279 = vpack.c.b16 %v2045, %v2044
  %v2280 = vpack.c.b16 %v2047, %v2046
  %v2281 = vpack.c.b16 %v2049, %v2048
  %v2282 = vpack.c.b16 %v2051, %v2050
  %v2283 = vpack.c.b16 %v2053, %v2052
  %v2284 = vpack.c.b16 %v2055, %v2054
  %v2285 = vpack.c.b16 %v2057, %v2056
  %v2286 = vpack.c.b16 %v2059, %v2058
  %v2287 = vpack.c.b16 %v2061, %v2060
  %v2288 = vpack.c.b16 %v2063, %v2062
  %v2289 = vpack.c.b16 %v2065, %v2064
  %v2290 = vpack.c.b16 %v2067, %v2066
  %v2291 = vpack.c.b16 %v2069, %v2068
  %v2292 = vpack.c.b16 %v2071, %v2070
  %v2293 = vpack.c.b16 %v2073, %v2072
  %v2294 = vpack.c.b16 %v2075, %v2074
  %v2295 = vpack.c.b16 %v2077, %v2076
  %v2296 = vpack.c.b16 %v2079, %v2078
  %v2297 = vpack.c.b16 %v2081, %v2080
  %v2298 = vpack.c.b16 %v2083, %v2082
  %v2299 = vpack.c.b16 %v2085, %v2084
  %v2300 = vpack.c.b16 %v2087, %v2086
  %v2301 = vpack.c.b16 %v2089, %v2088
  %v2302 = vpack.c.b16 %v2091, %v2090
  %v2303 = vpack.c.b16 %v2093, %v2092
  %v2304 = vpack.c.b16 %v2095, %v2094
  %v2305 = vpack.c.b16 %v2097, %v2096
  %v2306 = vpack.c.b16 %v2099, %v2098
  %v2307 = vpack.c.b16 %v2101, %v2100
  %v2308 = vpack.c.b16 %v2103, %v2102
  %v2309 = vpack.c.b16 %v2105, %v2104
  %v2310 = vpack.c.b16 %v2107, %v2106
  %v2311 = vpack.c.b16 %v2109, %v2108
  %v2312 = vpack.c.b16 %v2111, %v2110
  %v2313 = vpack.c.b16 %v2113, %v2112
  %v2314 = vpack.c.b16 %v2115, %v2114
  %v2315 = vpack.c.b16 %v2117, %v2116
  %v2316 = vpack.c.b16 %v2119, %v2118
  %v2317 = vpack.c.b16 %v2121, %v2120
  %v2318 = vpack.c.b16 %v2123, %v2122
  %v2319 = vpack.c.b16 %v2125, %v2124
  %v2320 = vpack.c.b16 %v2127, %v2126
  %v2321 = vpack.c.b16 %v2129, %v2128
  %v2322 = vpack.c.b16 %v2131, %v2130
  %v2323 = vpack.c.b16 %v2133, %v2132
  %v2324 = vpack.c.b16 %v2135, %v2134
  %v2325 = vpack.c.b16 %v2137, %v2136
  %v2326 = vpack.c.b16 %v2139, %v2138
  %v2327 = vpack.c.b16 %v2141, %v2140
  %v2328 = vpack.c.b16 %v2143, %v2142
  %v2329 = vpack.c.b16 %v2145, %v2144
  %v2330 = vpack.c.b16 %v2147, %v2146
  %v2331 = vpack.c.b16 %v2149, %v2148
  %v2332 = vpack.c.b16 %v2151, %v2150
  %v2333 = vpack.c.b16 %v2153, %v2152
  %v2334 = vpack.c.b16 %v2155, %v2154
  %v2335 = vpack.c.b16 %v2157, %v2156
  %v2336 = vpack.c.b16 %v2159, %v2158
  %v2337 = vpack.c.b16 %v2161, %v2160
  %v2338 = vpack.c.b16 %v2163, %v2162
  %v2339 = vpack.c.b16 %v2165, %v2164
  %v2340 = vpack.c.b16 %v2167, %v2166
  %v2341 = vpack.c.b16 %v2169, %v2168
  %v2342 = vpack.c.b16 %v2171, %v2170
  %v2343 = vpack.c.b16 %v2173, %v2172
  %v2344 = vpack.c.b16 %v2175, %v2174
  %v2345 = vpack.c.b16 %v2177, %v2176
  %2514 = vmatprep.subr.bf16.mxu0 0
  %2515 = vmatpush1.bf16.msra.mxu0 %v2178
  %2516 = vmatprep.subr.bf16.mxu0 0
  %2517 = vmatpush1.bf16.msra.mxu0 %v2179
  %2518 = vmatprep.subr.bf16.mxu0 0
  %2519 = vmatpush1.bf16.msra.mxu0 %v2180
  %2520 = vmatprep.subr.bf16.mxu0 0
  %2521 = vmatpush1.bf16.msra.mxu0 %v2181
  %2522 = vmatprep.subr.bf16.mxu0 0
  %2523 = vmatpush1.bf16.msra.mxu0 %v2182
  %2524 = vmatprep.subr.bf16.mxu0 0
  %2525 = vmatpush1.bf16.msra.mxu0 %v2183
  %2526 = vmatprep.subr.bf16.mxu0 0
  %2527 = vmatpush1.bf16.msra.mxu0 %v2184
  %2528 = vmatprep.subr.bf16.mxu0 0
  %2529 = vmatpush1.bf16.msra.mxu0 %v2185
  %2530 = vmatprep.subr.bf16.mxu0 0
  %2531 = vmatpush1.bf16.msra.mxu0 %v2186
  %2532 = vmatprep.subr.bf16.mxu0 0
  %2533 = vmatpush1.bf16.msra.mxu0 %v2187
  %2534 = vmatprep.subr.bf16.mxu0 0
  %2535 = vmatpush1.bf16.msra.mxu0 %v2188
  %2536 = vmatprep.subr.bf16.mxu0 0
  %2537 = vmatpush1.bf16.msra.mxu0 %v2189
  %2538 = vmatprep.subr.bf16.mxu0 0
  %2539 = vmatpush1.bf16.msra.mxu0 %v2190
  %2540 = vmatprep.subr.bf16.mxu0 0
  %2541 = vmatpush1.bf16.msra.mxu0 %v2191
  %2542 = vmatprep.subr.bf16.mxu0 0
  %2543 = vmatpush1.bf16.msra.mxu0 %v2192
  %2544 = vmatprep.subr.bf16.mxu0 0
  %2545 = vmatpush1.bf16.msra.mxu0 %v2193
  %2546 = vmatprep.mubr.bf16.mxu0 %v1129
  %2547 = vmatmul.mubr.bf16.gmra.mrb[0].mxu0 %v1128
  %v2548 = vpop.f32.mrb[0].mxu0
  %v2549 = vadd.f32 0.0, %v2548
  %v2550 = vpop.f32.mrb[0].mxu0
  %v2551 = vpop.f32.mrb[0].mxu0
  %v2552 = vadd.f32 0.0, %v2551
  %v2553 = vpop.f32.mrb[0].mxu0
  %2554 = vmatprep.mubr.bf16.mxu0 %v1150
  %2555 = vmatmul.mubr.bf16.gmra.mrb[0].mxu0 %v1149
  %v2556 = vpop.f32.mrb[0].mxu0
  %v2557 = vadd.f32 0.0, %v2556
  %v2558 = vpop.f32.mrb[0].mxu0
  %v2559 = vpop.f32.mrb[0].mxu0
  %v2560 = vadd.f32 0.0, %v2559
  %v2561 = vpop.f32.mrb[0].mxu0
  %2562 = vmatprep.mubr.bf16.mxu0 %v1171
  %2563 = vmatmul.mubr.bf16.gmra.mrb[0].mxu0 %v1170
  %v2564 = vpop.f32.mrb[0].mxu0
  %v2565 = vadd.f32 0.0, %v2564
  %v2566 = vpop.f32.mrb[0].mxu0
  %v2567 = vpop.f32.mrb[0].mxu0
  %v2568 = vadd.f32 0.0, %v2567
  %v2569 = vpop.f32.mrb[0].mxu0
  %2570 = vmatprep.mubr.bf16.mxu0 %v1192
  %2571 = vmatmul.mubr.bf16.gmra.mrb[0].mxu0 %v1191
  %v2572 = vpop.f32.mrb[0].mxu0
  %v2573 = vadd.f32 0.0, %v2572
  %v2574 = vpop.f32.mrb[0].mxu0
  %v2575 = vpop.f32.mrb[0].mxu0
  %v2576 = vadd.f32 0.0, %v2575
  %v2577 = vpop.f32.mrb[0].mxu0
  %2578 = vmatprep.mubr.bf16.mxu0 %v1213
  %2579 = vmatmul.mubr.bf16.gmra.mrb[0].mxu0 %v1212
  %v2580 = vpop.f32.mrb[0].mxu0
  %v2581 = vadd.f32 0.0, %v2580
  %v2582 = vpop.f32.mrb[0].mxu0
  %v2583 = vpop.f32.mrb[0].mxu0
  %v2584 = vadd.f32 0.0, %v2583
  %v2585 = vpop.f32.mrb[0].mxu0
  %2586 = vmatprep.mubr.bf16.mxu0 %v1234
  %2587 = vmatmul.mubr.bf16.gmra.mrb[0].mxu0 %v1233
  %v2588 = vpop.f32.mrb[0].mxu0
  %v2589 = vadd.f32 0.0, %v2588
  %v2590 = vpop.f32.mrb[0].mxu0
  %v2591 = vpop.f32.mrb[0].mxu0
  %v2592 = vadd.f32 0.0, %v2591
  %v2593 = vpop.f32.mrb[0].mxu0
  %2594 = vmatprep.mubr.bf16.mxu0 %v1255
  %2595 = vmatmul.mubr.bf16.gmra.mrb[0].mxu0 %v1254
  %v2596 = vpop.f32.mrb[0].mxu0
  %v2597 = vadd.f32 0.0, %v2596
  %v2598 = vpop.f32.mrb[0].mxu0
  %v2599 = vpop.f32.mrb[0].mxu0
  %v2600 = vadd.f32 0.0, %v2599
  %v2601 = vpop.f32.mrb[0].mxu0
  %2602 = vmatprep.mubr.bf16.mxu0 %v1276
  %2603 = vmatmul.mubr.bf16.gmra.mrb[0].mxu0 %v1275
  %v2604 = vpop.f32.mrb[0].mxu0
  %v2605 = vadd.f32 0.0, %v2604
  %v2606 = vpop.f32.mrb[0].mxu0
  %v2607 = vpop.f32.mrb[0].mxu0
  %v2608 = vadd.f32 0.0, %v2607
  %v2609 = vpop.f32.mrb[0].mxu0
  %2610 = vmatprep.mubr.bf16.mxu0 %v1297
  %2611 = vmatmul.mubr.bf16.gmra.mrb[0].mxu0 %v1296
  %v2612 = vpop.f32.mrb[0].mxu0
  %v2613 = vadd.f32 0.0, %v2612
  %v2614 = vpop.f32.mrb[0].mxu0
  %v2615 = vpop.f32.mrb[0].mxu0
  %v2616 = vadd.f32 0.0, %v2615
  %v2617 = vpop.f32.mrb[0].mxu0
  %2618 = vdwg.mxu0
  %2619 = vmatprep.subr.bf16.mxu0 0
  %2620 = vmatpush1.bf16.msra.mxu0 %v2194
  %2621 = vmatprep.subr.bf16.mxu0 0
  %2622 = vmatpush1.bf16.msra.mxu0 %v2195
  %2623 = vmatprep.subr.bf16.mxu0 0
  %2624 = vmatpush1.bf16.msra.mxu0 %v2196
  %2625 = vmatprep.subr.bf16.mxu0 0
  %2626 = vmatpush1.bf16.msra.mxu0 %v2197
  %2627 = vmatprep.subr.bf16.mxu0 0
  %2628 = vmatpush1.bf16.msra.mxu0 %v2198
  %2629 = vmatprep.subr.bf16.mxu0 0
  %2630 = vmatpush1.bf16.msra.mxu0 %v2199
  %2631 = vmatprep.subr.bf16.mxu0 0
  %2632 = vmatpush1.bf16.msra.mxu0 %v2200
  %2633 = vmatprep.subr.bf16.mxu0 0
  %2634 = vmatpush1.bf16.msra.mxu0 %v2201
  %2635 = vmatprep.subr.bf16.mxu0 0
  %2636 = vmatpush1.bf16.msra.mxu0 %v2202
  %2637 = vmatprep.subr.bf16.mxu0 0
  %2638 = vmatpush1.bf16.msra.mxu0 %v2203
  %2639 = vmatprep.subr.bf16.mxu0 0
  %2640 = vmatpush1.bf16.msra.mxu0 %v2204
  %2641 = vmatprep.subr.bf16.mxu0 0
  %2642 = vmatpush1.bf16.msra.mxu0 %v2205
  %2643 = vmatprep.subr.bf16.mxu0 0
  %2644 = vmatpush1.bf16.msra.mxu0 %v2206
  %2645 = vmatprep.subr.bf16.mxu0 0
  %2646 = vmatpush1.bf16.msra.mxu0 %v2207
  %2647 = vmatprep.subr.bf16.mxu0 0
  %2648 = vmatpush1.bf16.msra.mxu0 %v2208
  %2649 = vmatprep.subr.bf16.mxu0 0
  %2650 = vmatpush1.bf16.msra.mxu0 %v2209
  %2651 = vmatprep.mubr.bf16.mxu0 %v1131
  %2652 = vmatmul.mubr.bf16.gmra.mrb[0].mxu0 %v1130
  %v2653 = vpop.f32.mrb[0].mxu0
  %v2654 = vadd.f32 %v2549, %v2653
  %v2655 = vpop.f32.mrb[0].mxu0
  %v2656 = vpop.f32.mrb[0].mxu0
  %v2657 = vadd.f32 %v2552, %v2656
  %v2658 = vpop.f32.mrb[0].mxu0
  %2659 = vmatprep.mubr.bf16.mxu0 %v1152
  %2660 = vmatmul.mubr.bf16.gmra.mrb[0].mxu0 %v1151
  %v2661 = vpop.f32.mrb[0].mxu0
  %v2662 = vadd.f32 %v2557, %v2661
  %v2663 = vpop.f32.mrb[0].mxu0
  %v2664 = vpop.f32.mrb[0].mxu0
  %v2665 = vadd.f32 %v2560, %v2664
  %v2666 = vpop.f32.mrb[0].mxu0
  %2667 = vmatprep.mubr.bf16.mxu0 %v1173
  %2668 = vmatmul.mubr.bf16.gmra.mrb[0].mxu0 %v1172
  %v2669 = vpop.f32.mrb[0].mxu0
  %v2670 = vadd.f32 %v2565, %v2669
  %v2671 = vpop.f32.mrb[0].mxu0
  %v2672 = vpop.f32.mrb[0].mxu0
  %v2673 = vadd.f32 %v2568, %v2672
  %v2674 = vpop.f32.mrb[0].mxu0
  %2675 = vmatprep.mubr.bf16.mxu0 %v1194
  %2676 = vmatmul.mubr.bf16.gmra.mrb[0].mxu0 %v1193
  %v2677 = vpop.f32.mrb[0].mxu0
  %v2678 = vadd.f32 %v2573, %v2677
  %v2679 = vpop.f32.mrb[0].mxu0
  %v2680 = vpop.f32.mrb[0].mxu0
  %v2681 = vadd.f32 %v2576, %v2680
  %v2682 = vpop.f32.mrb[0].mxu0
  %2683 = vmatprep.mubr.bf16.mxu0 %v1215
  %2684 = vmatmul.mubr.bf16.gmra.mrb[0].mxu0 %v1214
  %v2685 = vpop.f32.mrb[0].mxu0
  %v2686 = vadd.f32 %v2581, %v2685
  %v2687 = vpop.f32.mrb[0].mxu0
  %v2688 = vpop.f32.mrb[0].mxu0
  %v2689 = vadd.f32 %v2584, %v2688
  %v2690 = vpop.f32.mrb[0].mxu0
  %2691 = vmatprep.mubr.bf16.mxu0 %v1236
  %2692 = vmatmul.mubr.bf16.gmra.mrb[0].mxu0 %v1235
  %v2693 = vpop.f32.mrb[0].mxu0
  %v2694 = vadd.f32 %v2589, %v2693
  %v2695 = vpop.f32.mrb[0].mxu0
  %v2696 = vpop.f32.mrb[0].mxu0
  %v2697 = vadd.f32 %v2592, %v2696
  %v2698 = vpop.f32.mrb[0].mxu0
  %2699 = vmatprep.mubr.bf16.mxu0 %v1257
  %2700 = vmatmul.mubr.bf16.gmra.mrb[0].mxu0 %v1256
  %v2701 = vpop.f32.mrb[0].mxu0
  %v2702 = vadd.f32 %v2597, %v2701
  %v2703 = vpop.f32.mrb[0].mxu0
  %v2704 = vpop.f32.mrb[0].mxu0
  %v2705 = vadd.f32 %v2600, %v2704
  %v2706 = vpop.f32.mrb[0].mxu0
  %2707 = vmatprep.mubr.bf16.mxu0 %v1278
  %2708 = vmatmul.mubr.bf16.gmra.mrb[0].mxu0 %v1277
  %v2709 = vpop.f32.mrb[0].mxu0
  %v2710 = vadd.f32 %v2605, %v2709
  %v2711 = vpop.f32.mrb[0].mxu0
  %v2712 = vpop.f32.mrb[0].mxu0
  %v2713 = vadd.f32 %v2608, %v2712
  %v2714 = vpop.f32.mrb[0].mxu0
  %2715 = vmatprep.mubr.bf16.mxu0 %v1299
  %2716 = vmatmul.mubr.bf16.gmra.mrb[0].mxu0 %v1298
  %v2717 = vpop.f32.mrb[0].mxu0
  %v2718 = vadd.f32 %v2613, %v2717
  %v2719 = vpop.f32.mrb[0].mxu0
  %v2720 = vpop.f32.mrb[0].mxu0
  %v2721 = vadd.f32 %v2616, %v2720
  %v2722 = vpop.f32.mrb[0].mxu0
  %2723 = vdwg.mxu0
  %2724 = vmatprep.subr.bf16.mxu0 0
  %2725 = vmatpush1.bf16.msra.mxu0 %v2210
  %2726 = vmatprep.subr.bf16.mxu0 0
  %2727 = vmatpush1.bf16.msra.mxu0 %v2211
  %2728 = vmatprep.subr.bf16.mxu0 0
  %2729 = vmatpush1.bf16.msra.mxu0 %v2212
  %2730 = vmatprep.subr.bf16.mxu0 0
  %2731 = vmatpush1.bf16.msra.mxu0 %v2213
  %2732 = vmatprep.subr.bf16.mxu0 0
  %2733 = vmatpush1.bf16.msra.mxu0 %v2214
  %2734 = vmatprep.subr.bf16.mxu0 0
  %2735 = vmatpush1.bf16.msra.mxu0 %v2215
  %2736 = vmatprep.subr.bf16.mxu0 0
  %2737 = vmatpush1.bf16.msra.mxu0 %v2216
  %2738 = vmatprep.subr.bf16.mxu0 0
  %2739 = vmatpush1.bf16.msra.mxu0 %v2217
  %2740 = vmatprep.subr.bf16.mxu0 0
  %2741 = vmatpush1.bf16.msra.mxu0 %v2218
  %2742 = vmatprep.subr.bf16.mxu0 0
  %2743 = vmatpush1.bf16.msra.mxu0 %v2219
  %2744 = vmatprep.subr.bf16.mxu0 0
  %2745 = vmatpush1.bf16.msra.mxu0 %v2220
  %2746 = vmatprep.subr.bf16.mxu0 0
  %2747 = vmatpush1.bf16.msra.mxu0 %v2221
  %2748 = vmatprep.subr.bf16.mxu0 0
  %2749 = vmatpush1.bf16.msra.mxu0 %v2222
  %2750 = vmatprep.subr.bf16.mxu0 0
  %2751 = vmatpush1.bf16.msra.mxu0 %v2223
  %2752 = vmatprep.subr.bf16.mxu0 0
  %2753 = vmatpush1.bf16.msra.mxu0 %v2224
  %2754 = vmatprep.subr.bf16.mxu0 0
  %2755 = vmatpush1.bf16.msra.mxu0 %v2225
  %2756 = vmatprep.mubr.bf16.mxu0 %v1133
  %2757 = vmatmul.mubr.bf16.gmra.mrb[0].mxu0 %v1132
  %v2758 = vpop.f32.mrb[0].mxu0
  %v2759 = vadd.f32 %v2654, %v2758
  %v2760 = vpop.f32.mrb[0].mxu0
  %v2761 = vpop.f32.mrb[0].mxu0
  %v2762 = vadd.f32 %v2657, %v2761
  %v2763 = vpop.f32.mrb[0].mxu0
  %2764 = vmatprep.mubr.bf16.mxu0 %v1154
  %2765 = vmatmul.mubr.bf16.gmra.mrb[0].mxu0 %v1153
  %v2766 = vpop.f32.mrb[0].mxu0
  %v2767 = vadd.f32 %v2662, %v2766
  %v2768 = vpop.f32.mrb[0].mxu0
  %v2769 = vpop.f32.mrb[0].mxu0
  %v2770 = vadd.f32 %v2665, %v2769
  %v2771 = vpop.f32.mrb[0].mxu0
  %2772 = vmatprep.mubr.bf16.mxu0 %v1175
  %2773 = vmatmul.mubr.bf16.gmra.mrb[0].mxu0 %v1174
  %v2774 = vpop.f32.mrb[0].mxu0
  %v2775 = vadd.f32 %v2670, %v2774
  %v2776 = vpop.f32.mrb[0].mxu0
  %v2777 = vpop.f32.mrb[0].mxu0
  %v2778 = vadd.f32 %v2673, %v2777
  %v2779 = vpop.f32.mrb[0].mxu0
  %2780 = vmatprep.mubr.bf16.mxu0 %v1196
  %2781 = vmatmul.mubr.bf16.gmra.mrb[0].mxu0 %v1195
  %v2782 = vpop.f32.mrb[0].mxu0
  %v2783 = vadd.f32 %v2678, %v2782
  %v2784 = vpop.f32.mrb[0].mxu0
  %v2785 = vpop.f32.mrb[0].mxu0
  %v2786 = vadd.f32 %v2681, %v2785
  %v2787 = vpop.f32.mrb[0].mxu0
  %2788 = vmatprep.mubr.bf16.mxu0 %v1217
  %2789 = vmatmul.mubr.bf16.gmra.mrb[0].mxu0 %v1216
  %v2790 = vpop.f32.mrb[0].mxu0
  %v2791 = vadd.f32 %v2686, %v2790
  %v2792 = vpop.f32.mrb[0].mxu0
  %v2793 = vpop.f32.mrb[0].mxu0
  %v2794 = vadd.f32 %v2689, %v2793
  %v2795 = vpop.f32.mrb[0].mxu0
  %2796 = vmatprep.mubr.bf16.mxu0 %v1238
  %2797 = vmatmul.mubr.bf16.gmra.mrb[0].mxu0 %v1237
  %v2798 = vpop.f32.mrb[0].mxu0
  %v2799 = vadd.f32 %v2694, %v2798
  %v2800 = vpop.f32.mrb[0].mxu0
  %v2801 = vpop.f32.mrb[0].mxu0
  %v2802 = vadd.f32 %v2697, %v2801
  %v2803 = vpop.f32.mrb[0].mxu0
  %2804 = vmatprep.mubr.bf16.mxu0 %v1259
  %2805 = vmatmul.mubr.bf16.gmra.mrb[0].mxu0 %v1258
  %v2806 = vpop.f32.mrb[0].mxu0
  %v2807 = vadd.f32 %v2702, %v2806
  %v2808 = vpop.f32.mrb[0].mxu0
  %v2809 = vpop.f32.mrb[0].mxu0
  %v2810 = vadd.f32 %v2705, %v2809
  %v2811 = vpop.f32.mrb[0].mxu0
  %2812 = vmatprep.mubr.bf16.mxu0 %v1280
  %2813 = vmatmul.mubr.bf16.gmra.mrb[0].mxu0 %v1279
  %v2814 = vpop.f32.mrb[0].mxu0
  %v2815 = vadd.f32 %v2710, %v2814
  %v2816 = vpop.f32.mrb[0].mxu0
  %v2817 = vpop.f32.mrb[0].mxu0
  %v2818 = vadd.f32 %v2713, %v2817
  %v2819 = vpop.f32.mrb[0].mxu0
  %2820 = vmatprep.mubr.bf16.mxu0 %v1301
  %2821 = vmatmul.mubr.bf16.gmra.mrb[0].mxu0 %v1300
  %v2822 = vpop.f32.mrb[0].mxu0
  %v2823 = vadd.f32 %v2718, %v2822
  %v2824 = vpop.f32.mrb[0].mxu0
  %v2825 = vpop.f32.mrb[0].mxu0
  %v2826 = vadd.f32 %v2721, %v2825
  %v2827 = vpop.f32.mrb[0].mxu0
  %2828 = vdwg.mxu0
  %2829 = vmatprep.subr.bf16.mxu0 0
  %2830 = vmatpush1.bf16.msra.mxu0 %v2226
  %2831 = vmatprep.subr.bf16.mxu0 0
  %2832 = vmatpush1.bf16.msra.mxu0 %v2227
  %2833 = vmatprep.subr.bf16.mxu0 0
  %2834 = vmatpush1.bf16.msra.mxu0 %v2228
  %2835 = vmatprep.subr.bf16.mxu0 0
  %2836 = vmatpush1.bf16.msra.mxu0 %v2229
  %2837 = vmatprep.subr.bf16.mxu0 0
  %2838 = vmatpush1.bf16.msra.mxu0 %v2230
  %2839 = vmatprep.subr.bf16.mxu0 0
  %2840 = vmatpush1.bf16.msra.mxu0 %v2231
  %2841 = vmatprep.subr.bf16.mxu0 0
  %2842 = vmatpush1.bf16.msra.mxu0 %v2232
  %2843 = vmatprep.subr.bf16.mxu0 0
  %2844 = vmatpush1.bf16.msra.mxu0 %v2233
  %2845 = vmatprep.subr.bf16.mxu0 0
  %2846 = vmatpush1.bf16.msra.mxu0 %v2234
  %2847 = vmatprep.subr.bf16.mxu0 0
  %2848 = vmatpush1.bf16.msra.mxu0 %v2235
  %2849 = vmatprep.subr.bf16.mxu0 0
  %2850 = vmatpush1.bf16.msra.mxu0 %v2236
  %2851 = vmatprep.subr.bf16.mxu0 0
  %2852 = vmatpush1.bf16.msra.mxu0 %v2237
  %2853 = vmatprep.subr.bf16.mxu0 0
  %2854 = vmatpush1.bf16.msra.mxu0 %v2238
  %2855 = vmatprep.subr.bf16.mxu0 0
  %2856 = vmatpush1.bf16.msra.mxu0 %v2239
  %2857 = vmatprep.subr.bf16.mxu0 0
  %2858 = vmatpush1.bf16.msra.mxu0 %v2240
  %2859 = vmatprep.subr.bf16.mxu0 0
  %2860 = vmatpush1.bf16.msra.mxu0 %v2241
  %2861 = vmatprep.mubr.bf16.mxu0 %v1135
  %2862 = vmatmul.mubr.bf16.gmra.mrb[0].mxu0 %v1134
  %v2863 = vpop.f32.mrb[0].mxu0
  %v2864 = vadd.f32 %v2759, %v2863
  %v2865 = vpop.f32.mrb[0].mxu0
  %v2866 = vpop.f32.mrb[0].mxu0
  %v2867 = vadd.f32 %v2762, %v2866
  %v2868 = vpop.f32.mrb[0].mxu0
  %2869 = vmatprep.mubr.bf16.mxu0 %v1156
  %2870 = vmatmul.mubr.bf16.gmra.mrb[0].mxu0 %v1155
  %v2871 = vpop.f32.mrb[0].mxu0
  %v2872 = vadd.f32 %v2767, %v2871
  %v2873 = vpop.f32.mrb[0].mxu0
  %v2874 = vpop.f32.mrb[0].mxu0
  %v2875 = vadd.f32 %v2770, %v2874
  %v2876 = vpop.f32.mrb[0].mxu0
  %2877 = vmatprep.mubr.bf16.mxu0 %v1177
  %2878 = vmatmul.mubr.bf16.gmra.mrb[0].mxu0 %v1176
  %v2879 = vpop.f32.mrb[0].mxu0
  %v2880 = vadd.f32 %v2775, %v2879
  %v2881 = vpop.f32.mrb[0].mxu0
  %v2882 = vpop.f32.mrb[0].mxu0
  %v2883 = vadd.f32 %v2778, %v2882
  %v2884 = vpop.f32.mrb[0].mxu0
  %2885 = vmatprep.mubr.bf16.mxu0 %v1198
  %2886 = vmatmul.mubr.bf16.gmra.mrb[0].mxu0 %v1197
  %v2887 = vpop.f32.mrb[0].mxu0
  %v2888 = vadd.f32 %v2783, %v2887
  %v2889 = vpop.f32.mrb[0].mxu0
  %v2890 = vpop.f32.mrb[0].mxu0
  %v2891 = vadd.f32 %v2786, %v2890
  %v2892 = vpop.f32.mrb[0].mxu0
  %2893 = vmatprep.mubr.bf16.mxu0 %v1219
  %2894 = vmatmul.mubr.bf16.gmra.mrb[0].mxu0 %v1218
  %v2895 = vpop.f32.mrb[0].mxu0
  %v2896 = vadd.f32 %v2791, %v2895
  %v2897 = vpop.f32.mrb[0].mxu0
  %v2898 = vpop.f32.mrb[0].mxu0
  %v2899 = vadd.f32 %v2794, %v2898
  %v2900 = vpop.f32.mrb[0].mxu0
  %2901 = vmatprep.mubr.bf16.mxu0 %v1240
  %2902 = vmatmul.mubr.bf16.gmra.mrb[0].mxu0 %v1239
  %v2903 = vpop.f32.mrb[0].mxu0
  %v2904 = vadd.f32 %v2799, %v2903
  %v2905 = vpop.f32.mrb[0].mxu0
  %v2906 = vpop.f32.mrb[0].mxu0
  %v2907 = vadd.f32 %v2802, %v2906
  %v2908 = vpop.f32.mrb[0].mxu0
  %2909 = vmatprep.mubr.bf16.mxu0 %v1261
  %2910 = vmatmul.mubr.bf16.gmra.mrb[0].mxu0 %v1260
  %v2911 = vpop.f32.mrb[0].mxu0
  %v2912 = vadd.f32 %v2807, %v2911
  %v2913 = vpop.f32.mrb[0].mxu0
  %v2914 = vpop.f32.mrb[0].mxu0
  %v2915 = vadd.f32 %v2810, %v2914
  %v2916 = vpop.f32.mrb[0].mxu0
  %2917 = vmatprep.mubr.bf16.mxu0 %v1282
  %2918 = vmatmul.mubr.bf16.gmra.mrb[0].mxu0 %v1281
  %v2919 = vpop.f32.mrb[0].mxu0
  %v2920 = vadd.f32 %v2815, %v2919
  %v2921 = vpop.f32.mrb[0].mxu0
  %v2922 = vpop.f32.mrb[0].mxu0
  %v2923 = vadd.f32 %v2818, %v2922
  %v2924 = vpop.f32.mrb[0].mxu0
  %2925 = vmatprep.mubr.bf16.mxu0 %v1303
  %2926 = vmatmul.mubr.bf16.gmra.mrb[0].mxu0 %v1302
  %v2927 = vpop.f32.mrb[0].mxu0
  %v2928 = vadd.f32 %v2823, %v2927
  %v2929 = vpop.f32.mrb[0].mxu0
  %v2930 = vpop.f32.mrb[0].mxu0
  %v2931 = vadd.f32 %v2826, %v2930
  %v2932 = vpop.f32.mrb[0].mxu0
  %2933 = vdwg.mxu0
  %2934 = vmatprep.subr.bf16.mxu0 0
  %2935 = vmatpush1.bf16.msra.mxu0 %v2242
  %2936 = vmatprep.subr.bf16.mxu0 0
  %2937 = vmatpush1.bf16.msra.mxu0 %v2243
  %2938 = vmatprep.subr.bf16.mxu0 0
  %2939 = vmatpush1.bf16.msra.mxu0 %v2244
  %2940 = vmatprep.subr.bf16.mxu0 0
  %2941 = vmatpush1.bf16.msra.mxu0 %v2245
  %2942 = vmatprep.subr.bf16.mxu0 0
  %2943 = vmatpush1.bf16.msra.mxu0 %v2246
  %2944 = vmatprep.subr.bf16.mxu0 0
  %2945 = vmatpush1.bf16.msra.mxu0 %v2247
  %2946 = vmatprep.subr.bf16.mxu0 0
  %2947 = vmatpush1.bf16.msra.mxu0 %v2248
  %2948 = vmatprep.subr.bf16.mxu0 0
  %2949 = vmatpush1.bf16.msra.mxu0 %v2249
  %2950 = vmatprep.subr.bf16.mxu0 0
  %2951 = vmatpush1.bf16.msra.mxu0 %v2250
  %2952 = vmatprep.subr.bf16.mxu0 0
  %2953 = vmatpush1.bf16.msra.mxu0 %v2251
  %2954 = vmatprep.subr.bf16.mxu0 0
  %2955 = vmatpush1.bf16.msra.mxu0 %v2252
  %2956 = vmatprep.subr.bf16.mxu0 0
  %2957 = vmatpush1.bf16.msra.mxu0 %v2253
  %2958 = vmatprep.subr.bf16.mxu0 0
  %2959 = vmatpush1.bf16.msra.mxu0 %v2254
  %2960 = vmatprep.subr.bf16.mxu0 0
  %2961 = vmatpush1.bf16.msra.mxu0 %v2255
  %2962 = vmatprep.subr.bf16.mxu0 0
  %2963 = vmatpush1.bf16.msra.mxu0 %v2256
  %2964 = vmatprep.subr.bf16.mxu0 0
  %2965 = vmatpush1.bf16.msra.mxu0 %v2257
  %2966 = vmatprep.mubr.bf16.mxu0 %v1137
  %2967 = vmatmul.mubr.bf16.gmra.mrb[0].mxu0 %v1136
  %v2968 = vpop.f32.mrb[0].mxu0
  %v2969 = vadd.f32 %v2864, %v2968
  %v2970 = vpop.f32.mrb[0].mxu0
  %v2971 = vpop.f32.mrb[0].mxu0
  %v2972 = vadd.f32 %v2867, %v2971
  %v2973 = vpop.f32.mrb[0].mxu0
  %2974 = vmatprep.mubr.bf16.mxu0 %v1158
  %2975 = vmatmul.mubr.bf16.gmra.mrb[0].mxu0 %v1157
  %v2976 = vpop.f32.mrb[0].mxu0
  %v2977 = vadd.f32 %v2872, %v2976
  %v2978 = vpop.f32.mrb[0].mxu0
  %v2979 = vpop.f32.mrb[0].mxu0
  %v2980 = vadd.f32 %v2875, %v2979
  %v2981 = vpop.f32.mrb[0].mxu0
  %2982 = vmatprep.mubr.bf16.mxu0 %v1179
  %2983 = vmatmul.mubr.bf16.gmra.mrb[0].mxu0 %v1178
  %v2984 = vpop.f32.mrb[0].mxu0
  %v2985 = vadd.f32 %v2880, %v2984
  %v2986 = vpop.f32.mrb[0].mxu0
  %v2987 = vpop.f32.mrb[0].mxu0
  %v2988 = vadd.f32 %v2883, %v2987
  %v2989 = vpop.f32.mrb[0].mxu0
  %2990 = vmatprep.mubr.bf16.mxu0 %v1200
  %2991 = vmatmul.mubr.bf16.gmra.mrb[0].mxu0 %v1199
  %v2992 = vpop.f32.mrb[0].mxu0
  %v2993 = vadd.f32 %v2888, %v2992
  %v2994 = vpop.f32.mrb[0].mxu0
  %v2995 = vpop.f32.mrb[0].mxu0
  %v2996 = vadd.f32 %v2891, %v2995
  %v2997 = vpop.f32.mrb[0].mxu0
  %2998 = vmatprep.mubr.bf16.mxu0 %v1221
  %2999 = vmatmul.mubr.bf16.gmra.mrb[0].mxu0 %v1220
  %v3000 = vpop.f32.mrb[0].mxu0
  %v3001 = vadd.f32 %v2896, %v3000
  %v3002 = vpop.f32.mrb[0].mxu0
  %v3003 = vpop.f32.mrb[0].mxu0
  %v3004 = vadd.f32 %v2899, %v3003
  %v3005 = vpop.f32.mrb[0].mxu0
  %3006 = vmatprep.mubr.bf16.mxu0 %v1242
  %3007 = vmatmul.mubr.bf16.gmra.mrb[0].mxu0 %v1241
  %v3008 = vpop.f32.mrb[0].mxu0
  %v3009 = vadd.f32 %v2904, %v3008
  %v3010 = vpop.f32.mrb[0].mxu0
  %v3011 = vpop.f32.mrb[0].mxu0
  %v3012 = vadd.f32 %v2907, %v3011
  %v3013 = vpop.f32.mrb[0].mxu0
  %3014 = vmatprep.mubr.bf16.mxu0 %v1263
  %3015 = vmatmul.mubr.bf16.gmra.mrb[0].mxu0 %v1262
  %v3016 = vpop.f32.mrb[0].mxu0
  %v3017 = vadd.f32 %v2912, %v3016
  %v3018 = vpop.f32.mrb[0].mxu0
  %v3019 = vpop.f32.mrb[0].mxu0
  %v3020 = vadd.f32 %v2915, %v3019
  %v3021 = vpop.f32.mrb[0].mxu0
  %3022 = vmatprep.mubr.bf16.mxu0 %v1284
  %3023 = vmatmul.mubr.bf16.gmra.mrb[0].mxu0 %v1283
  %v3024 = vpop.f32.mrb[0].mxu0
  %v3025 = vadd.f32 %v2920, %v3024
  %v3026 = vpop.f32.mrb[0].mxu0
  %v3027 = vpop.f32.mrb[0].mxu0
  %v3028 = vadd.f32 %v2923, %v3027
  %v3029 = vpop.f32.mrb[0].mxu0
  %3030 = vmatprep.mubr.bf16.mxu0 %v1305
  %3031 = vmatmul.mubr.bf16.gmra.mrb[0].mxu0 %v1304
  %v3032 = vpop.f32.mrb[0].mxu0
  %v3033 = vadd.f32 %v2928, %v3032
  %v3034 = vpop.f32.mrb[0].mxu0
  %v3035 = vpop.f32.mrb[0].mxu0
  %v3036 = vadd.f32 %v2931, %v3035
  %v3037 = vpop.f32.mrb[0].mxu0
  %3038 = vdwg.mxu0
  %3039 = vmatprep.subr.bf16.mxu0 0
  %3040 = vmatpush1.bf16.msra.mxu0 %v2258
  %3041 = vmatprep.subr.bf16.mxu0 0
  %3042 = vmatpush1.bf16.msra.mxu0 %v2259
  %3043 = vmatprep.subr.bf16.mxu0 0
  %3044 = vmatpush1.bf16.msra.mxu0 %v2260
  %3045 = vmatprep.subr.bf16.mxu0 0
  %3046 = vmatpush1.bf16.msra.mxu0 %v2261
  %3047 = vmatprep.subr.bf16.mxu0 0
  %3048 = vmatpush1.bf16.msra.mxu0 %v2262
  %3049 = vmatprep.subr.bf16.mxu0 0
  %3050 = vmatpush1.bf16.msra.mxu0 %v2263
  %3051 = vmatprep.subr.bf16.mxu0 0
  %3052 = vmatpush1.bf16.msra.mxu0 %v2264
  %3053 = vmatprep.subr.bf16.mxu0 0
  %3054 = vmatpush1.bf16.msra.mxu0 %v2265
  %3055 = vmatprep.subr.bf16.mxu0 0
  %3056 = vmatpush1.bf16.msra.mxu0 %v2266
  %3057 = vmatprep.subr.bf16.mxu0 0
  %3058 = vmatpush1.bf16.msra.mxu0 %v2267
  %3059 = vmatprep.subr.bf16.mxu0 0
  %3060 = vmatpush1.bf16.msra.mxu0 %v2268
  %3061 = vmatprep.subr.bf16.mxu0 0
  %3062 = vmatpush1.bf16.msra.mxu0 %v2269
  %3063 = vmatprep.subr.bf16.mxu0 0
  %3064 = vmatpush1.bf16.msra.mxu0 %v2270
  %3065 = vmatprep.subr.bf16.mxu0 0
  %3066 = vmatpush1.bf16.msra.mxu0 %v2271
  %3067 = vmatprep.subr.bf16.mxu0 0
  %3068 = vmatpush1.bf16.msra.mxu0 %v2272
  %3069 = vmatprep.subr.bf16.mxu0 0
  %3070 = vmatpush1.bf16.msra.mxu0 %v2273
  %3071 = vmatprep.mubr.bf16.mxu0 %v1139
  %3072 = vmatmul.mubr.bf16.gmra.mrb[0].mxu0 %v1138
  %v3073 = vpop.f32.mrb[0].mxu0
  %v3074 = vadd.f32 %v2969, %v3073
  %v3075 = vpop.f32.mrb[0].mxu0
  %v3076 = vpop.f32.mrb[0].mxu0
  %v3077 = vadd.f32 %v2972, %v3076
  %v3078 = vpop.f32.mrb[0].mxu0
  %3079 = vmatprep.mubr.bf16.mxu0 %v1160
  %3080 = vmatmul.mubr.bf16.gmra.mrb[0].mxu0 %v1159
  %v3081 = vpop.f32.mrb[0].mxu0
  %v3082 = vadd.f32 %v2977, %v3081
  %v3083 = vpop.f32.mrb[0].mxu0
  %v3084 = vpop.f32.mrb[0].mxu0
  %v3085 = vadd.f32 %v2980, %v3084
  %v3086 = vpop.f32.mrb[0].mxu0
  %3087 = vmatprep.mubr.bf16.mxu0 %v1181
  %3088 = vmatmul.mubr.bf16.gmra.mrb[0].mxu0 %v1180
  %v3089 = vpop.f32.mrb[0].mxu0
  %v3090 = vadd.f32 %v2985, %v3089
  %v3091 = vpop.f32.mrb[0].mxu0
  %v3092 = vpop.f32.mrb[0].mxu0
  %v3093 = vadd.f32 %v2988, %v3092
  %v3094 = vpop.f32.mrb[0].mxu0
  %3095 = vmatprep.mubr.bf16.mxu0 %v1202
  %3096 = vmatmul.mubr.bf16.gmra.mrb[0].mxu0 %v1201
  %v3097 = vpop.f32.mrb[0].mxu0
  %v3098 = vadd.f32 %v2993, %v3097
  %v3099 = vpop.f32.mrb[0].mxu0
  %v3100 = vpop.f32.mrb[0].mxu0
  %v3101 = vadd.f32 %v2996, %v3100
  %v3102 = vpop.f32.mrb[0].mxu0
  %3103 = vmatprep.mubr.bf16.mxu0 %v1223
  %3104 = vmatmul.mubr.bf16.gmra.mrb[0].mxu0 %v1222
  %v3105 = vpop.f32.mrb[0].mxu0
  %v3106 = vadd.f32 %v3001, %v3105
  %v3107 = vpop.f32.mrb[0].mxu0
  %v3108 = vpop.f32.mrb[0].mxu0
  %v3109 = vadd.f32 %v3004, %v3108
  %v3110 = vpop.f32.mrb[0].mxu0
  %3111 = vmatprep.mubr.bf16.mxu0 %v1244
  %3112 = vmatmul.mubr.bf16.gmra.mrb[0].mxu0 %v1243
  %v3113 = vpop.f32.mrb[0].mxu0
  %v3114 = vadd.f32 %v3009, %v3113
  %v3115 = vpop.f32.mrb[0].mxu0
  %v3116 = vpop.f32.mrb[0].mxu0
  %v3117 = vadd.f32 %v3012, %v3116
  %v3118 = vpop.f32.mrb[0].mxu0
  %3119 = vmatprep.mubr.bf16.mxu0 %v1265
  %3120 = vmatmul.mubr.bf16.gmra.mrb[0].mxu0 %v1264
  %v3121 = vpop.f32.mrb[0].mxu0
  %v3122 = vadd.f32 %v3017, %v3121
  %v3123 = vpop.f32.mrb[0].mxu0
  %v3124 = vpop.f32.mrb[0].mxu0
  %v3125 = vadd.f32 %v3020, %v3124
  %v3126 = vpop.f32.mrb[0].mxu0
  %3127 = vmatprep.mubr.bf16.mxu0 %v1286
  %3128 = vmatmul.mubr.bf16.gmra.mrb[0].mxu0 %v1285
  %v3129 = vpop.f32.mrb[0].mxu0
  %v3130 = vadd.f32 %v3025, %v3129
  %v3131 = vpop.f32.mrb[0].mxu0
  %v3132 = vpop.f32.mrb[0].mxu0
  %v3133 = vadd.f32 %v3028, %v3132
  %v3134 = vpop.f32.mrb[0].mxu0
  %3135 = vmatprep.mubr.bf16.mxu0 %v1307
  %3136 = vmatmul.mubr.bf16.gmra.mrb[0].mxu0 %v1306
  %v3137 = vpop.f32.mrb[0].mxu0
  %v3138 = vadd.f32 %v3033, %v3137
  %v3139 = vpop.f32.mrb[0].mxu0
  %v3140 = vpop.f32.mrb[0].mxu0
  %v3141 = vadd.f32 %v3036, %v3140
  %v3142 = vpop.f32.mrb[0].mxu0
  %3143 = vdwg.mxu0
  %3144 = vmatprep.subr.bf16.mxu0 0
  %3145 = vmatpush1.bf16.msra.mxu0 %v2274
  %3146 = vmatprep.subr.bf16.mxu0 0
  %3147 = vmatpush1.bf16.msra.mxu0 %v2275
  %3148 = vmatprep.subr.bf16.mxu0 0
  %3149 = vmatpush1.bf16.msra.mxu0 %v2276
  %3150 = vmatprep.subr.bf16.mxu0 0
  %3151 = vmatpush1.bf16.msra.mxu0 %v2277
  %3152 = vmatprep.subr.bf16.mxu0 0
  %3153 = vmatpush1.bf16.msra.mxu0 %v2278
  %3154 = vmatprep.subr.bf16.mxu0 0
  %3155 = vmatpush1.bf16.msra.mxu0 %v2279
  %3156 = vmatprep.subr.bf16.mxu0 0
  %3157 = vmatpush1.bf16.msra.mxu0 %v2280
  %3158 = vmatprep.subr.bf16.mxu0 0
  %3159 = vmatpush1.bf16.msra.mxu0 %v2281
  %3160 = vmatprep.subr.bf16.mxu0 0
  %3161 = vmatpush1.bf16.msra.mxu0 %v2282
  %3162 = vmatprep.subr.bf16.mxu0 0
  %3163 = vmatpush1.bf16.msra.mxu0 %v2283
  %3164 = vmatprep.subr.bf16.mxu0 0
  %3165 = vmatpush1.bf16.msra.mxu0 %v2284
  %3166 = vmatprep.subr.bf16.mxu0 0
  %3167 = vmatpush1.bf16.msra.mxu0 %v2285
  %3168 = vmatprep.subr.bf16.mxu0 0
  %3169 = vmatpush1.bf16.msra.mxu0 %v2286
  %3170 = vmatprep.subr.bf16.mxu0 0
  %3171 = vmatpush1.bf16.msra.mxu0 %v2287
  %3172 = vmatprep.subr.bf16.mxu0 0
  %3173 = vmatpush1.bf16.msra.mxu0 %v2288
  %3174 = vmatprep.subr.bf16.mxu0 0
  %3175 = vmatpush1.bf16.msra.mxu0 %v2289
  %3176 = vmatprep.mubr.bf16.mxu0 %v1141
  %3177 = vmatmul.mubr.bf16.gmra.mrb[0].mxu0 %v1140
  %v3178 = vpop.f32.mrb[0].mxu0
  %v3179 = vadd.f32 %v3074, %v3178
  %v3180 = vpop.f32.mrb[0].mxu0
  %v3181 = vpop.f32.mrb[0].mxu0
  %v3182 = vadd.f32 %v3077, %v3181
  %v3183 = vpop.f32.mrb[0].mxu0
  %3184 = vmatprep.mubr.bf16.mxu0 %v1162
  %3185 = vmatmul.mubr.bf16.gmra.mrb[0].mxu0 %v1161
  %v3186 = vpop.f32.mrb[0].mxu0
  %v3187 = vadd.f32 %v3082, %v3186
  %v3188 = vpop.f32.mrb[0].mxu0
  %v3189 = vpop.f32.mrb[0].mxu0
  %v3190 = vadd.f32 %v3085, %v3189
  %v3191 = vpop.f32.mrb[0].mxu0
  %3192 = vmatprep.mubr.bf16.mxu0 %v1183
  %3193 = vmatmul.mubr.bf16.gmra.mrb[0].mxu0 %v1182
  %v3194 = vpop.f32.mrb[0].mxu0
  %v3195 = vadd.f32 %v3090, %v3194
  %v3196 = vpop.f32.mrb[0].mxu0
  %v3197 = vpop.f32.mrb[0].mxu0
  %v3198 = vadd.f32 %v3093, %v3197
  %v3199 = vpop.f32.mrb[0].mxu0
  %3200 = vmatprep.mubr.bf16.mxu0 %v1204
  %3201 = vmatmul.mubr.bf16.gmra.mrb[0].mxu0 %v1203
  %v3202 = vpop.f32.mrb[0].mxu0
  %v3203 = vadd.f32 %v3098, %v3202
  %v3204 = vpop.f32.mrb[0].mxu0
  %v3205 = vpop.f32.mrb[0].mxu0
  %v3206 = vadd.f32 %v3101, %v3205
  %v3207 = vpop.f32.mrb[0].mxu0
  %3208 = vmatprep.mubr.bf16.mxu0 %v1225
  %3209 = vmatmul.mubr.bf16.gmra.mrb[0].mxu0 %v1224
  %v3210 = vpop.f32.mrb[0].mxu0
  %v3211 = vadd.f32 %v3106, %v3210
  %v3212 = vpop.f32.mrb[0].mxu0
  %v3213 = vpop.f32.mrb[0].mxu0
  %v3214 = vadd.f32 %v3109, %v3213
  %v3215 = vpop.f32.mrb[0].mxu0
  %3216 = vmatprep.mubr.bf16.mxu0 %v1246
  %3217 = vmatmul.mubr.bf16.gmra.mrb[0].mxu0 %v1245
  %v3218 = vpop.f32.mrb[0].mxu0
  %v3219 = vadd.f32 %v3114, %v3218
  %v3220 = vpop.f32.mrb[0].mxu0
  %v3221 = vpop.f32.mrb[0].mxu0
  %v3222 = vadd.f32 %v3117, %v3221
  %v3223 = vpop.f32.mrb[0].mxu0
  %3224 = vmatprep.mubr.bf16.mxu0 %v1267
  %3225 = vmatmul.mubr.bf16.gmra.mrb[0].mxu0 %v1266
  %v3226 = vpop.f32.mrb[0].mxu0
  %v3227 = vadd.f32 %v3122, %v3226
  %v3228 = vpop.f32.mrb[0].mxu0
  %v3229 = vpop.f32.mrb[0].mxu0
  %v3230 = vadd.f32 %v3125, %v3229
  %v3231 = vpop.f32.mrb[0].mxu0
  %3232 = vmatprep.mubr.bf16.mxu0 %v1288
  %3233 = vmatmul.mubr.bf16.gmra.mrb[0].mxu0 %v1287
  %v3234 = vpop.f32.mrb[0].mxu0
  %v3235 = vadd.f32 %v3130, %v3234
  %v3236 = vpop.f32.mrb[0].mxu0
  %v3237 = vpop.f32.mrb[0].mxu0
  %v3238 = vadd.f32 %v3133, %v3237
  %v3239 = vpop.f32.mrb[0].mxu0
  %3240 = vmatprep.mubr.bf16.mxu0 %v1309
  %3241 = vmatmul.mubr.bf16.gmra.mrb[0].mxu0 %v1308
  %v3242 = vpop.f32.mrb[0].mxu0
  %v3243 = vadd.f32 %v3138, %v3242
  %v3244 = vpop.f32.mrb[0].mxu0
  %v3245 = vpop.f32.mrb[0].mxu0
  %v3246 = vadd.f32 %v3141, %v3245
  %v3247 = vpop.f32.mrb[0].mxu0
  %3248 = vdwg.mxu0
  %3249 = vmatprep.subr.bf16.mxu0 0
  %3250 = vmatpush1.bf16.msra.mxu0 %v2290
  %3251 = vmatprep.subr.bf16.mxu0 0
  %3252 = vmatpush1.bf16.msra.mxu0 %v2291
  %3253 = vmatprep.subr.bf16.mxu0 0
  %3254 = vmatpush1.bf16.msra.mxu0 %v2292
  %3255 = vmatprep.subr.bf16.mxu0 0
  %3256 = vmatpush1.bf16.msra.mxu0 %v2293
  %3257 = vmatprep.subr.bf16.mxu0 0
  %3258 = vmatpush1.bf16.msra.mxu0 %v2294
  %3259 = vmatprep.subr.bf16.mxu0 0
  %3260 = vmatpush1.bf16.msra.mxu0 %v2295
  %3261 = vmatprep.subr.bf16.mxu0 0
  %3262 = vmatpush1.bf16.msra.mxu0 %v2296
  %3263 = vmatprep.subr.bf16.mxu0 0
  %3264 = vmatpush1.bf16.msra.mxu0 %v2297
  %3265 = vmatprep.subr.bf16.mxu0 0
  %3266 = vmatpush1.bf16.msra.mxu0 %v2298
  %3267 = vmatprep.subr.bf16.mxu0 0
  %3268 = vmatpush1.bf16.msra.mxu0 %v2299
  %3269 = vmatprep.subr.bf16.mxu0 0
  %3270 = vmatpush1.bf16.msra.mxu0 %v2300
  %3271 = vmatprep.subr.bf16.mxu0 0
  %3272 = vmatpush1.bf16.msra.mxu0 %v2301
  %3273 = vmatprep.subr.bf16.mxu0 0
  %3274 = vmatpush1.bf16.msra.mxu0 %v2302
  %3275 = vmatprep.subr.bf16.mxu0 0
  %3276 = vmatpush1.bf16.msra.mxu0 %v2303
  %3277 = vmatprep.subr.bf16.mxu0 0
  %3278 = vmatpush1.bf16.msra.mxu0 %v2304
  %3279 = vmatprep.subr.bf16.mxu0 0
  %3280 = vmatpush1.bf16.msra.mxu0 %v2305
  %3281 = vmatprep.mubr.bf16.mxu0 %v1143
  %3282 = vmatmul.mubr.bf16.gmra.mrb[0].mxu0 %v1142
  %v3283 = vpop.f32.mrb[0].mxu0
  %v3284 = vadd.f32 %v3179, %v3283
  %v3285 = vpop.f32.mrb[0].mxu0
  %v3286 = vpop.f32.mrb[0].mxu0
  %v3287 = vadd.f32 %v3182, %v3286
  %v3288 = vpop.f32.mrb[0].mxu0
  %3289 = vmatprep.mubr.bf16.mxu0 %v1164
  %3290 = vmatmul.mubr.bf16.gmra.mrb[0].mxu0 %v1163
  %v3291 = vpop.f32.mrb[0].mxu0
  %v3292 = vadd.f32 %v3187, %v3291
  %v3293 = vpop.f32.mrb[0].mxu0
  %v3294 = vpop.f32.mrb[0].mxu0
  %v3295 = vadd.f32 %v3190, %v3294
  %v3296 = vpop.f32.mrb[0].mxu0
  %3297 = vmatprep.mubr.bf16.mxu0 %v1185
  %3298 = vmatmul.mubr.bf16.gmra.mrb[0].mxu0 %v1184
  %v3299 = vpop.f32.mrb[0].mxu0
  %v3300 = vadd.f32 %v3195, %v3299
  %v3301 = vpop.f32.mrb[0].mxu0
  %v3302 = vpop.f32.mrb[0].mxu0
  %v3303 = vadd.f32 %v3198, %v3302
  %v3304 = vpop.f32.mrb[0].mxu0
  %3305 = vmatprep.mubr.bf16.mxu0 %v1206
  %3306 = vmatmul.mubr.bf16.gmra.mrb[0].mxu0 %v1205
  %v3307 = vpop.f32.mrb[0].mxu0
  %v3308 = vadd.f32 %v3203, %v3307
  %v3309 = vpop.f32.mrb[0].mxu0
  %v3310 = vpop.f32.mrb[0].mxu0
  %v3311 = vadd.f32 %v3206, %v3310
  %v3312 = vpop.f32.mrb[0].mxu0
  %3313 = vmatprep.mubr.bf16.mxu0 %v1227
  %3314 = vmatmul.mubr.bf16.gmra.mrb[0].mxu0 %v1226
  %v3315 = vpop.f32.mrb[0].mxu0
  %v3316 = vadd.f32 %v3211, %v3315
  %v3317 = vpop.f32.mrb[0].mxu0
  %v3318 = vpop.f32.mrb[0].mxu0
  %v3319 = vadd.f32 %v3214, %v3318
  %v3320 = vpop.f32.mrb[0].mxu0
  %3321 = vmatprep.mubr.bf16.mxu0 %v1248
  %3322 = vmatmul.mubr.bf16.gmra.mrb[0].mxu0 %v1247
  %v3323 = vpop.f32.mrb[0].mxu0
  %v3324 = vadd.f32 %v3219, %v3323
  %v3325 = vpop.f32.mrb[0].mxu0
  %v3326 = vpop.f32.mrb[0].mxu0
  %v3327 = vadd.f32 %v3222, %v3326
  %v3328 = vpop.f32.mrb[0].mxu0
  %3329 = vmatprep.mubr.bf16.mxu0 %v1269
  %3330 = vmatmul.mubr.bf16.gmra.mrb[0].mxu0 %v1268
  %v3331 = vpop.f32.mrb[0].mxu0
  %v3332 = vadd.f32 %v3227, %v3331
  %v3333 = vpop.f32.mrb[0].mxu0
  %v3334 = vpop.f32.mrb[0].mxu0
  %v3335 = vadd.f32 %v3230, %v3334
  %v3336 = vpop.f32.mrb[0].mxu0
  %3337 = vmatprep.mubr.bf16.mxu0 %v1290
  %3338 = vmatmul.mubr.bf16.gmra.mrb[0].mxu0 %v1289
  %v3339 = vpop.f32.mrb[0].mxu0
  %v3340 = vadd.f32 %v3235, %v3339
  %v3341 = vpop.f32.mrb[0].mxu0
  %v3342 = vpop.f32.mrb[0].mxu0
  %v3343 = vadd.f32 %v3238, %v3342
  %v3344 = vpop.f32.mrb[0].mxu0
  %3345 = vmatprep.mubr.bf16.mxu0 %v1311
  %3346 = vmatmul.mubr.bf16.gmra.mrb[0].mxu0 %v1310
  %v3347 = vpop.f32.mrb[0].mxu0
  %v3348 = vadd.f32 %v3243, %v3347
  %v3349 = vpop.f32.mrb[0].mxu0
  %v3350 = vpop.f32.mrb[0].mxu0
  %v3351 = vadd.f32 %v3246, %v3350
  %v3352 = vpop.f32.mrb[0].mxu0
  %3353 = vdwg.mxu0
  %3354 = vmatprep.subr.bf16.mxu0 0
  %3355 = vmatpush1.bf16.msra.mxu0 %v2306
  %3356 = vmatprep.subr.bf16.mxu0 0
  %3357 = vmatpush1.bf16.msra.mxu0 %v2307
  %3358 = vmatprep.subr.bf16.mxu0 0
  %3359 = vmatpush1.bf16.msra.mxu0 %v2308
  %3360 = vmatprep.subr.bf16.mxu0 0
  %3361 = vmatpush1.bf16.msra.mxu0 %v2309
  %3362 = vmatprep.subr.bf16.mxu0 0
  %3363 = vmatpush1.bf16.msra.mxu0 %v2310
  %3364 = vmatprep.subr.bf16.mxu0 0
  %3365 = vmatpush1.bf16.msra.mxu0 %v2311
  %3366 = vmatprep.subr.bf16.mxu0 0
  %3367 = vmatpush1.bf16.msra.mxu0 %v2312
  %3368 = vmatprep.subr.bf16.mxu0 0
  %3369 = vmatpush1.bf16.msra.mxu0 %v2313
  %3370 = vmatprep.subr.bf16.mxu0 0
  %3371 = vmatpush1.bf16.msra.mxu0 %v2314
  %3372 = vmatprep.subr.bf16.mxu0 0
  %3373 = vmatpush1.bf16.msra.mxu0 %v2315
  %3374 = vmatprep.subr.bf16.mxu0 0
  %3375 = vmatpush1.bf16.msra.mxu0 %v2316
  %3376 = vmatprep.subr.bf16.mxu0 0
  %3377 = vmatpush1.bf16.msra.mxu0 %v2317
  %3378 = vmatprep.subr.bf16.mxu0 0
  %3379 = vmatpush1.bf16.msra.mxu0 %v2318
  %3380 = vmatprep.subr.bf16.mxu0 0
  %3381 = vmatpush1.bf16.msra.mxu0 %v2319
  %3382 = vmatprep.subr.bf16.mxu0 0
  %3383 = vmatpush1.bf16.msra.mxu0 %v2320
  %3384 = vmatprep.subr.bf16.mxu0 0
  %3385 = vmatpush1.bf16.msra.mxu0 %v2321
  %3386 = vmatprep.mubr.bf16.mxu0 %v1145
  %3387 = vmatmul.mubr.bf16.gmra.mrb[0].mxu0 %v1144
  %v3388 = vpop.f32.mrb[0].mxu0
  %v3389 = vadd.f32 %v3284, %v3388
  %v3390 = vpop.f32.mrb[0].mxu0
  %v3391 = vpop.f32.mrb[0].mxu0
  %v3392 = vadd.f32 %v3287, %v3391
  %v3393 = vpop.f32.mrb[0].mxu0
  %3394 = vmatprep.mubr.bf16.mxu0 %v1166
  %3395 = vmatmul.mubr.bf16.gmra.mrb[0].mxu0 %v1165
  %v3396 = vpop.f32.mrb[0].mxu0
  %v3397 = vadd.f32 %v3292, %v3396
  %v3398 = vpop.f32.mrb[0].mxu0
  %v3399 = vpop.f32.mrb[0].mxu0
  %v3400 = vadd.f32 %v3295, %v3399
  %v3401 = vpop.f32.mrb[0].mxu0
  %3402 = vmatprep.mubr.bf16.mxu0 %v1187
  %3403 = vmatmul.mubr.bf16.gmra.mrb[0].mxu0 %v1186
  %v3404 = vpop.f32.mrb[0].mxu0
  %v3405 = vadd.f32 %v3300, %v3404
  %v3406 = vpop.f32.mrb[0].mxu0
  %v3407 = vpop.f32.mrb[0].mxu0
  %v3408 = vadd.f32 %v3303, %v3407
  %v3409 = vpop.f32.mrb[0].mxu0
  %3410 = vmatprep.mubr.bf16.mxu0 %v1208
  %3411 = vmatmul.mubr.bf16.gmra.mrb[0].mxu0 %v1207
  %v3412 = vpop.f32.mrb[0].mxu0
  %v3413 = vadd.f32 %v3308, %v3412
  %v3414 = vpop.f32.mrb[0].mxu0
  %v3415 = vpop.f32.mrb[0].mxu0
  %v3416 = vadd.f32 %v3311, %v3415
  %v3417 = vpop.f32.mrb[0].mxu0
  %3418 = vmatprep.mubr.bf16.mxu0 %v1229
  %3419 = vmatmul.mubr.bf16.gmra.mrb[0].mxu0 %v1228
  %v3420 = vpop.f32.mrb[0].mxu0
  %v3421 = vadd.f32 %v3316, %v3420
  %v3422 = vpop.f32.mrb[0].mxu0
  %v3423 = vpop.f32.mrb[0].mxu0
  %v3424 = vadd.f32 %v3319, %v3423
  %v3425 = vpop.f32.mrb[0].mxu0
  %3426 = vmatprep.mubr.bf16.mxu0 %v1250
  %3427 = vmatmul.mubr.bf16.gmra.mrb[0].mxu0 %v1249
  %v3428 = vpop.f32.mrb[0].mxu0
  %v3429 = vadd.f32 %v3324, %v3428
  %v3430 = vpop.f32.mrb[0].mxu0
  %v3431 = vpop.f32.mrb[0].mxu0
  %v3432 = vadd.f32 %v3327, %v3431
  %v3433 = vpop.f32.mrb[0].mxu0
  %3434 = vmatprep.mubr.bf16.mxu0 %v1271
  %3435 = vmatmul.mubr.bf16.gmra.mrb[0].mxu0 %v1270
  %v3436 = vpop.f32.mrb[0].mxu0
  %v3437 = vadd.f32 %v3332, %v3436
  %v3438 = vpop.f32.mrb[0].mxu0
  %v3439 = vpop.f32.mrb[0].mxu0
  %v3440 = vadd.f32 %v3335, %v3439
  %v3441 = vpop.f32.mrb[0].mxu0
  %3442 = vmatprep.mubr.bf16.mxu0 %v1292
  %3443 = vmatmul.mubr.bf16.gmra.mrb[0].mxu0 %v1291
  %v3444 = vpop.f32.mrb[0].mxu0
  %v3445 = vadd.f32 %v3340, %v3444
  %v3446 = vpop.f32.mrb[0].mxu0
  %v3447 = vpop.f32.mrb[0].mxu0
  %v3448 = vadd.f32 %v3343, %v3447
  %v3449 = vpop.f32.mrb[0].mxu0
  %3450 = vmatprep.mubr.bf16.mxu0 %v1313
  %3451 = vmatmul.mubr.bf16.gmra.mrb[0].mxu0 %v1312
  %v3452 = vpop.f32.mrb[0].mxu0
  %v3453 = vadd.f32 %v3348, %v3452
  %v3454 = vpop.f32.mrb[0].mxu0
  %v3455 = vpop.f32.mrb[0].mxu0
  %v3456 = vadd.f32 %v3351, %v3455
  %v3457 = vpop.f32.mrb[0].mxu0
  %3458 = vdwg.mxu0
  %3459 = vmatprep.subr.bf16.mxu0 0
  %3460 = vmatpush1.bf16.msra.mxu0 %v2322
  %3461 = vmatprep.subr.bf16.mxu0 0
  %3462 = vmatpush1.bf16.msra.mxu0 %v2323
  %3463 = vmatprep.subr.bf16.mxu0 0
  %3464 = vmatpush1.bf16.msra.mxu0 %v2324
  %3465 = vmatprep.subr.bf16.mxu0 0
  %3466 = vmatpush1.bf16.msra.mxu0 %v2325
  %3467 = vmatprep.subr.bf16.mxu0 0
  %3468 = vmatpush1.bf16.msra.mxu0 %v2326
  %3469 = vmatprep.subr.bf16.mxu0 0
  %3470 = vmatpush1.bf16.msra.mxu0 %v2327
  %3471 = vmatprep.subr.bf16.mxu0 0
  %3472 = vmatpush1.bf16.msra.mxu0 %v2328
  %3473 = vmatprep.subr.bf16.mxu0 0
  %3474 = vmatpush1.bf16.msra.mxu0 %v2329
  %3475 = vmatprep.subr.bf16.mxu0 0
  %3476 = vmatpush1.bf16.msra.mxu0 %v2330
  %3477 = vmatprep.subr.bf16.mxu0 0
  %3478 = vmatpush1.bf16.msra.mxu0 %v2331
  %3479 = vmatprep.subr.bf16.mxu0 0
  %3480 = vmatpush1.bf16.msra.mxu0 %v2332
  %3481 = vmatprep.subr.bf16.mxu0 0
  %3482 = vmatpush1.bf16.msra.mxu0 %v2333
  %3483 = vmatprep.subr.bf16.mxu0 0
  %3484 = vmatpush1.bf16.msra.mxu0 %v2334
  %3485 = vmatprep.subr.bf16.mxu0 0
  %3486 = vmatpush1.bf16.msra.mxu0 %v2335
  %3487 = vmatprep.subr.bf16.mxu0 0
  %3488 = vmatpush1.bf16.msra.mxu0 %v2336
  %3489 = vmatprep.subr.bf16.mxu0 0
  %3490 = vmatpush1.bf16.msra.mxu0 %v2337
  %3491 = vmatprep.mubr.bf16.mxu0 %v1147
  %3492 = vmatmul.mubr.bf16.gmra.mrb[0].mxu0 %v1146
  %v3493 = vpop.f32.mrb[0].mxu0
  %v3494 = vadd.f32 %v3389, %v3493
  %v3495 = vpop.f32.mrb[0].mxu0
  %v3496 = vpop.f32.mrb[0].mxu0
  %v3497 = vadd.f32 %v3392, %v3496
  %v3498 = vpop.f32.mrb[0].mxu0
  %3499 = vmatprep.mubr.bf16.mxu0 %v1168
  %3500 = vmatmul.mubr.bf16.gmra.mrb[0].mxu0 %v1167
  %v3501 = vpop.f32.mrb[0].mxu0
  %v3502 = vadd.f32 %v3397, %v3501
  %v3503 = vpop.f32.mrb[0].mxu0
  %v3504 = vpop.f32.mrb[0].mxu0
  %v3505 = vadd.f32 %v3400, %v3504
  %v3506 = vpop.f32.mrb[0].mxu0
  %3507 = vmatprep.mubr.bf16.mxu0 %v1189
  %3508 = vmatmul.mubr.bf16.gmra.mrb[0].mxu0 %v1188
  %v3509 = vpop.f32.mrb[0].mxu0
  %v3510 = vadd.f32 %v3405, %v3509
  %v3511 = vpop.f32.mrb[0].mxu0
  %v3512 = vpop.f32.mrb[0].mxu0
  %v3513 = vadd.f32 %v3408, %v3512
  %v3514 = vpop.f32.mrb[0].mxu0
  %3515 = vmatprep.mubr.bf16.mxu0 %v1210
  %3516 = vmatmul.mubr.bf16.gmra.mrb[0].mxu0 %v1209
  %v3517 = vpop.f32.mrb[0].mxu0
  %v3518 = vadd.f32 %v3413, %v3517
  %v3519 = vpop.f32.mrb[0].mxu0
  %v3520 = vpop.f32.mrb[0].mxu0
  %v3521 = vadd.f32 %v3416, %v3520
  %v3522 = vpop.f32.mrb[0].mxu0
  %3523 = vmatprep.mubr.bf16.mxu0 %v1231
  %3524 = vmatmul.mubr.bf16.gmra.mrb[0].mxu0 %v1230
  %v3525 = vpop.f32.mrb[0].mxu0
  %v3526 = vadd.f32 %v3421, %v3525
  %v3527 = vpop.f32.mrb[0].mxu0
  %v3528 = vpop.f32.mrb[0].mxu0
  %v3529 = vadd.f32 %v3424, %v3528
  %v3530 = vpop.f32.mrb[0].mxu0
  %3531 = vmatprep.mubr.bf16.mxu0 %v1252
  %3532 = vmatmul.mubr.bf16.gmra.mrb[0].mxu0 %v1251
  %v3533 = vpop.f32.mrb[0].mxu0
  %v3534 = vadd.f32 %v3429, %v3533
  %v3535 = vpop.f32.mrb[0].mxu0
  %v3536 = vpop.f32.mrb[0].mxu0
  %v3537 = vadd.f32 %v3432, %v3536
  %v3538 = vpop.f32.mrb[0].mxu0
  %3539 = vmatprep.mubr.bf16.mxu0 %v1273
  %3540 = vmatmul.mubr.bf16.gmra.mrb[0].mxu0 %v1272
  %v3541 = vpop.f32.mrb[0].mxu0
  %v3542 = vadd.f32 %v3437, %v3541
  %v3543 = vpop.f32.mrb[0].mxu0
  %v3544 = vpop.f32.mrb[0].mxu0
  %v3545 = vadd.f32 %v3440, %v3544
  %v3546 = vpop.f32.mrb[0].mxu0
  %3547 = vmatprep.mubr.bf16.mxu0 %v1294
  %3548 = vmatmul.mubr.bf16.gmra.mrb[0].mxu0 %v1293
  %v3549 = vpop.f32.mrb[0].mxu0
  %v3550 = vadd.f32 %v3445, %v3549
  %v3551 = vpop.f32.mrb[0].mxu0
  %v3552 = vpop.f32.mrb[0].mxu0
  %v3553 = vadd.f32 %v3448, %v3552
  %v3554 = vpop.f32.mrb[0].mxu0
  %3555 = vmatprep.mubr.bf16.mxu0 %v1315
  %3556 = vmatmul.mubr.bf16.gmra.mrb[0].mxu0 %v1314
  %v3557 = vpop.f32.mrb[0].mxu0
  %v3558 = vadd.f32 %v3453, %v3557
  %v3559 = vpop.f32.mrb[0].mxu0
  %v3560 = vpop.f32.mrb[0].mxu0
  %v3561 = vadd.f32 %v3456, %v3560
  %v3562 = vpop.f32.mrb[0].mxu0
  %3563 = vdwg.mxu0
  %3564 = vmatprep.subr.bf16.mxu0 0
  %3565 = vmatpush1.bf16.msra.mxu0 %v2338
  %3566 = vmatprep.subr.bf16.mxu0 0
  %3567 = vmatpush1.bf16.msra.mxu0 %v2339
  %3568 = vmatprep.subr.bf16.mxu0 0
  %3569 = vmatpush1.bf16.msra.mxu0 %v2340
  %3570 = vmatprep.subr.bf16.mxu0 0
  %3571 = vmatpush1.bf16.msra.mxu0 %v2341
  %3572 = vmatprep.subr.bf16.mxu0 0
  %3573 = vmatpush1.bf16.msra.mxu0 %v2342
  %3574 = vmatprep.subr.bf16.mxu0 0
  %3575 = vmatpush1.bf16.msra.mxu0 %v2343
  %3576 = vmatprep.subr.bf16.mxu0 0
  %3577 = vmatpush1.bf16.msra.mxu0 %v2344
  %3578 = vmatprep.subr.bf16.mxu0 0
  %3579 = vmatpush1.bf16.msra.mxu0 %v2345
  %3580 = vmatprep.subr.bf16.mxu0 0
  %3581 = vmatpush1.bf16.msra.mxu0 0
  %3582 = vmatprep.subr.bf16.mxu0 0
  %3583 = vmatpush1.bf16.msra.mxu0 0
  %3584 = vmatprep.subr.bf16.mxu0 0
  %3585 = vmatpush1.bf16.msra.mxu0 0
  %3586 = vmatprep.subr.bf16.mxu0 0
  %3587 = vmatpush1.bf16.msra.mxu0 0
  %3588 = vmatprep.subr.bf16.mxu0 0
  %3589 = vmatpush1.bf16.msra.mxu0 0
  %3590 = vmatprep.subr.bf16.mxu0 0
  %3591 = vmatpush1.bf16.msra.mxu0 0
  %3592 = vmatprep.subr.bf16.mxu0 0
  %3593 = vmatpush1.bf16.msra.mxu0 0
  %3594 = vmatprep.subr.bf16.mxu0 0
  %3595 = vmatpush1.bf16.msra.mxu0 0
  %3596 = vmatprep.mubr.bf16.mxu0 0
  %3597 = vmatmul.mubr.bf16.gmra.mrb[0].mxu0 %v1148
  %v3598 = vpop.f32.mrb[0].mxu0
  %v3599 = vadd.f32 %v3494, %v3598
  %v3600 = vpop.f32.mrb[0].mxu0
  %v3601 = vpop.f32.mrb[0].mxu0
  %v3602 = vadd.f32 %v3497, %v3601
  %v3603 = vpop.f32.mrb[0].mxu0
  %3604 = vmatprep.mubr.bf16.mxu0 0
  %3605 = vmatmul.mubr.bf16.gmra.mrb[0].mxu0 %v1169
  %v3606 = vpop.f32.mrb[0].mxu0
  %v3607 = vadd.f32 %v3502, %v3606
  %v3608 = vpop.f32.mrb[0].mxu0
  %v3609 = vpop.f32.mrb[0].mxu0
  %v3610 = vadd.f32 %v3505, %v3609
  %v3611 = vpop.f32.mrb[0].mxu0
  %3612 = vmatprep.mubr.bf16.mxu0 0
  %3613 = vmatmul.mubr.bf16.gmra.mrb[0].mxu0 %v1190
  %v3614 = vpop.f32.mrb[0].mxu0
  %v3615 = vadd.f32 %v3510, %v3614
  %v3616 = vpop.f32.mrb[0].mxu0
  %v3617 = vpop.f32.mrb[0].mxu0
  %v3618 = vadd.f32 %v3513, %v3617
  %v3619 = vpop.f32.mrb[0].mxu0
  %3620 = vmatprep.mubr.bf16.mxu0 0
  %3621 = vmatmul.mubr.bf16.gmra.mrb[0].mxu0 %v1211
  %v3622 = vpop.f32.mrb[0].mxu0
  %v3623 = vadd.f32 %v3518, %v3622
  %v3624 = vpop.f32.mrb[0].mxu0
  %v3625 = vpop.f32.mrb[0].mxu0
  %v3626 = vadd.f32 %v3521, %v3625
  %v3627 = vpop.f32.mrb[0].mxu0
  %3628 = vmatprep.mubr.bf16.mxu0 0
  %3629 = vmatmul.mubr.bf16.gmra.mrb[0].mxu0 %v1232
  %v3630 = vpop.f32.mrb[0].mxu0
  %v3631 = vadd.f32 %v3526, %v3630
  %v3632 = vpop.f32.mrb[0].mxu0
  %v3633 = vpop.f32.mrb[0].mxu0
  %v3634 = vadd.f32 %v3529, %v3633
  %v3635 = vpop.f32.mrb[0].mxu0
  %3636 = vmatprep.mubr.bf16.mxu0 0
  %3637 = vmatmul.mubr.bf16.gmra.mrb[0].mxu0 %v1253
  %v3638 = vpop.f32.mrb[0].mxu0
  %v3639 = vadd.f32 %v3534, %v3638
  %v3640 = vpop.f32.mrb[0].mxu0
  %v3641 = vpop.f32.mrb[0].mxu0
  %v3642 = vadd.f32 %v3537, %v3641
  %v3643 = vpop.f32.mrb[0].mxu0
  %3644 = vmatprep.mubr.bf16.mxu0 0
  %3645 = vmatmul.mubr.bf16.gmra.mrb[0].mxu0 %v1274
  %v3646 = vpop.f32.mrb[0].mxu0
  %v3647 = vadd.f32 %v3542, %v3646
  %v3648 = vpop.f32.mrb[0].mxu0
  %v3649 = vpop.f32.mrb[0].mxu0
  %v3650 = vadd.f32 %v3545, %v3649
  %v3651 = vpop.f32.mrb[0].mxu0
  %3652 = vmatprep.mubr.bf16.mxu0 0
  %3653 = vmatmul.mubr.bf16.gmra.mrb[0].mxu0 %v1295
  %v3654 = vpop.f32.mrb[0].mxu0
  %v3655 = vadd.f32 %v3550, %v3654
  %v3656 = vpop.f32.mrb[0].mxu0
  %v3657 = vpop.f32.mrb[0].mxu0
  %v3658 = vadd.f32 %v3553, %v3657
  %v3659 = vpop.f32.mrb[0].mxu0
  %3660 = vmatprep.mubr.bf16.mxu0 0
  %3661 = vmatmul.mubr.bf16.gmra.mrb[0].mxu0 %v1316
  %v3662 = vpop.f32.mrb[0].mxu0
  %v3663 = vadd.f32 %v3558, %v3662
  %v3664 = vpop.f32.mrb[0].mxu0
  %v3665 = vpop.f32.mrb[0].mxu0
  %v3666 = vadd.f32 %v3561, %v3665
  %v3667 = vpop.f32.mrb[0].mxu0
  %3668 = vdwg.mxu0
  %v3669 = vadd.f32 %v3599, %v3602
  %v3670 = vadd.f32 %v3669, %v3607
  %v3671 = vadd.f32 %v3670, %v3610
  %v3672 = vadd.f32 %v3671, %v3615
  %v3673 = vadd.f32 %v3672, %v3618
  %v3674 = vadd.f32 %v3673, %v3623
  %v3675 = vadd.f32 %v3674, %v3626
  %v3676 = vadd.f32 %v3675, %v3631
  %v3677 = vadd.f32 %v3676, %v3634
  %v3678 = vadd.f32 %v3677, %v3639
  %v3679 = vadd.f32 %v3678, %v3642
  %v3680 = vadd.f32 %v3679, %v3647
  %v3681 = vadd.f32 %v3680, %v3650
  %v3682 = vadd.f32 %v3681, %v3655
  %v3683 = vadd.f32 %v3682, %v3658
  %v3684 = vadd.f32 %v3683, %v3663
  %v3685 = vadd.f32 %v3684, %v3666
  %v3686 = vrot.slane %v3685, 4
  %v3687 = vadd.f32 %v3685, %v3686
  %v3688 = vrot.slane %v3687, 2
  %v3689 = vadd.f32 %v3687, %v3688
  %v3690 = vrot.slane %v3689, 1
  %v3691 = vadd.f32 %v3689, %v3690
  %v3692 = vmul.f32 %v3691, 0.0069444445
  %v3693 = vsub.f32 %v3599, %v3692
  %v3694 = vsub.f32 %v3602, %v3692
  %v3695 = vsub.f32 %v3607, %v3692
  %v3696 = vsub.f32 %v3610, %v3692
  %v3697 = vsub.f32 %v3615, %v3692
  %v3698 = vsub.f32 %v3618, %v3692
  %v3699 = vsub.f32 %v3623, %v3692
  %v3700 = vsub.f32 %v3626, %v3692
  %v3701 = vsub.f32 %v3631, %v3692
  %v3702 = vsub.f32 %v3634, %v3692
  %v3703 = vsub.f32 %v3639, %v3692
  %v3704 = vsub.f32 %v3642, %v3692
  %v3705 = vsub.f32 %v3647, %v3692
  %v3706 = vsub.f32 %v3650, %v3692
  %v3707 = vsub.f32 %v3655, %v3692
  %v3708 = vsub.f32 %v3658, %v3692
  %v3709 = vsub.f32 %v3663, %v3692
  %v3710 = vsub.f32 %v3666, %v3692
  %v3711 = vmul.f32 %v3693, %v3693
  %v3712 = vmul.f32 %v3694, %v3694
  %v3713 = vmul.f32 %v3695, %v3695
  %v3714 = vmul.f32 %v3696, %v3696
  %v3715 = vmul.f32 %v3697, %v3697
  %v3716 = vmul.f32 %v3698, %v3698
  %v3717 = vmul.f32 %v3699, %v3699
  %v3718 = vmul.f32 %v3700, %v3700
  %v3719 = vmul.f32 %v3701, %v3701
  %v3720 = vmul.f32 %v3702, %v3702
  %v3721 = vmul.f32 %v3703, %v3703
  %v3722 = vmul.f32 %v3704, %v3704
  %v3723 = vmul.f32 %v3705, %v3705
  %v3724 = vmul.f32 %v3706, %v3706
  %v3725 = vmul.f32 %v3707, %v3707
  %v3726 = vmul.f32 %v3708, %v3708
  %v3727 = vmul.f32 %v3709, %v3709
  %v3728 = vmul.f32 %v3710, %v3710
  %v3729 = vadd.f32 %v3711, %v3712
  %v3730 = vadd.f32 %v3729, %v3713
  %v3731 = vadd.f32 %v3730, %v3714
  %v3732 = vadd.f32 %v3731, %v3715
  %v3733 = vadd.f32 %v3732, %v3716
  %v3734 = vadd.f32 %v3733, %v3717
  %v3735 = vadd.f32 %v3734, %v3718
  %v3736 = vadd.f32 %v3735, %v3719
  %v3737 = vadd.f32 %v3736, %v3720
  %v3738 = vadd.f32 %v3737, %v3721
  %v3739 = vadd.f32 %v3738, %v3722
  %v3740 = vadd.f32 %v3739, %v3723
  %v3741 = vadd.f32 %v3740, %v3724
  %v3742 = vadd.f32 %v3741, %v3725
  %v3743 = vadd.f32 %v3742, %v3726
  %v3744 = vadd.f32 %v3743, %v3727
  %v3745 = vadd.f32 %v3744, %v3728
  %v3746 = vrot.slane %v3745, 4
  %v3747 = vadd.f32 %v3745, %v3746
  %v3748 = vrot.slane %v3747, 2
  %v3749 = vadd.f32 %v3747, %v3748
  %v3750 = vrot.slane %v3749, 1
  %v3751 = vadd.f32 %v3749, %v3750
  %v3752 = vmul.f32 %v3751, 0.0069444445
  %v3753 = vadd.f32 %v3752, 0.001
  %v3754 = vrsqrt.pop %v3753
  %v3755 = vld [vmem:[%s2] sm:$0x1]
  %v3756 = vmul.f32 %v3754, %v3755
  %v3757 = vlaneseq
  %v3758 = vshrl.u32 %v3757, 7
  %v3759 = vsub.s32 0, %v3758
  %v3760 = vrot.slane %v3756, %v3759
  %v3761 = vmul.f32 %v3693, %v3760
  %v3762 = vmul.f32 %v3694, %v3760
  %v3763 = vmul.f32 %v3695, %v3760
  %v3764 = vmul.f32 %v3696, %v3760
  %v3765 = vmul.f32 %v3697, %v3760
  %v3766 = vmul.f32 %v3698, %v3760
  %v3767 = vmul.f32 %v3699, %v3760
  %v3768 = vmul.f32 %v3700, %v3760
  %v3769 = vmul.f32 %v3701, %v3760
  %v3770 = vmul.f32 %v3702, %v3760
  %v3771 = vmul.f32 %v3703, %v3760
  %v3772 = vmul.f32 %v3704, %v3760
  %v3773 = vmul.f32 %v3705, %v3760
  %v3774 = vmul.f32 %v3706, %v3760
  %v3775 = vmul.f32 %v3707, %v3760
  %v3776 = vmul.f32 %v3708, %v3760
  %v3777 = vmul.f32 %v3709, %v3760
  %v3778 = vmul.f32 %v3710, %v3760
  %v3779 = vld [vmem:[%s3] sm:$0x1]
  %v3781 = vlaneseq
  %v3782 = vshrl.u32 %v3781, 7
  %v3783 = vsub.s32 0, %v3782
  %v3784 = vrot.slane %v3779, %v3783
  %v3786 = vadd.f32 %v3761, %v3784
  %v3787 = vadd.f32 %v3762, %v3784
  %v3788 = vadd.f32 %v3763, %v3784
  %v3789 = vadd.f32 %v3764, %v3784
  %v3790 = vadd.f32 %v3765, %v3784
  %v3791 = vadd.f32 %v3766, %v3784
  %v3792 = vadd.f32 %v3767, %v3784
  %v3793 = vadd.f32 %v3768, %v3784
  %v3794 = vadd.f32 %v3769, %v3784
  %v3795 = vadd.f32 %v3770, %v3784
  %v3796 = vadd.f32 %v3771, %v3784
  %v3797 = vadd.f32 %v3772, %v3784
  %v3798 = vadd.f32 %v3773, %v3784
  %v3799 = vadd.f32 %v3774, %v3784
  %v3800 = vadd.f32 %v3775, %v3784
  %v3801 = vadd.f32 %v3776, %v3784
  %v3802 = vadd.f32 %v3777, %v3784
  %v3803 = vadd.f32 %v3778, %v3784
  %3804 = vst [vmem:[%s4] sm:$0xff] %v3786
  %3805 = vst [vmem:[%s4 + $0x18] sm:$0xff] %v3787
  %3806 = vst [vmem:[%s4 + $0x30] sm:$0xff] %v3788
  %3807 = vst [vmem:[%s4 + $0x48] sm:$0xff] %v3789
  %3808 = vst [vmem:[%s4 + $0x60] sm:$0xff] %v3790
  %3809 = vst [vmem:[%s4 + $0x78] sm:$0xff] %v3791
  %3810 = vst [vmem:[%s4 + $0x90] sm:$0xff] %v3792
  %3811 = vst [vmem:[%s4 + $0xa8] sm:$0xff] %v3793
  %3812 = vst [vmem:[%s4 + $0xc0] sm:$0xff] %v3794
  %3813 = vst [vmem:[%s4 + $0xd8] sm:$0xff] %v3795
  %3814 = vst [vmem:[%s4 + $0xf0] sm:$0xff] %v3796
  %3815 = vst [vmem:[%s4 + $0x108] sm:$0xff] %v3797
  %3816 = vst [vmem:[%s4 + $0x120] sm:$0xff] %v3798
  %3817 = vst [vmem:[%s4 + $0x138] sm:$0xff] %v3799
  %3818 = vst [vmem:[%s4 + $0x150] sm:$0xff] %v3800
  %3819 = vst [vmem:[%s4 + $0x168] sm:$0xff] %v3801
  %3820 = vst [vmem:[%s4 + $0x180] sm:$0xff] %v3802
  %3821 = vst [vmem:[%s4 + $0x198] sm:$0xff] %v3803
  %v3822 = vld [vmem:[%s0] sm:$0xff]
  %v3823 = vld [vmem:[%s0 + $0x8] sm:$0xff]
  %v3824 = vld [vmem:[%s0 + $0x10] sm:$0xff]
  %v3825 = vld [vmem:[%s0 + $0x18] sm:$0xff]
  %v3826 = vld [vmem:[%s0 + $0x20] sm:$0xff]
  %v3827 = vld [vmem:[%s0 + $0x28] sm:$0xff]
  %v3828 = vld [vmem:[%s0 + $0x30] sm:$0xff]
  %v3829 = vld [vmem:[%s0 + $0x38] sm:$0xff]
  %v3830 = vld [vmem:[%s0 + $0x40] sm:$0xff]
  %v3831 = vld [vmem:[%s0 + $0x48] sm:$0xff]
  %v3832 = vld [vmem:[%s0 + $0x50] sm:$0xf]
  %v3833 = vld [vmem:[%s0 + $0x54] sm:$0xff]
  %v3834 = vld [vmem:[%s0 + $0x5c] sm:$0xff]
  %v3835 = vld [vmem:[%s0 + $0x64] sm:$0xff]
  %v3836 = vld [vmem:[%s0 + $0x6c] sm:$0xff]
  %v3837 = vld [vmem:[%s0 + $0x74] sm:$0xff]
  %v3838 = vld [vmem:[%s0 + $0x7c] sm:$0xff]
  %v3839 = vld [vmem:[%s0 + $0x84] sm:$0xff]
  %v3840 = vld [vmem:[%s0 + $0x8c] sm:$0xff]
  %v3841 = vld [vmem:[%s0 + $0x94] sm:$0xff]
  %v3842 = vld [vmem:[%s0 + $0x9c] sm:$0xff]
  %v3843 = vld [vmem:[%s0 + $0xa4] sm:$0xf]
  %v3844 = vld [vmem:[%s0 + $0xa8] sm:$0xff]
  %v3845 = vld [vmem:[%s0 + $0xb0] sm:$0xff]
  %v3846 = vld [vmem:[%s0 + $0xb8] sm:$0xff]
  %v3847 = vld [vmem:[%s0 + $0xc0] sm:$0xff]
  %v3848 = vld [vmem:[%s0 + $0xc8] sm:$0xff]
  %v3849 = vld [vmem:[%s0 + $0xd0] sm:$0xff]
  %v3850 = vld [vmem:[%s0 + $0xd8] sm:$0xff]
  %v3851 = vld [vmem:[%s0 + $0xe0] sm:$0xff]
  %v3852 = vld [vmem:[%s0 + $0xe8] sm:$0xff]
  %v3853 = vld [vmem:[%s0 + $0xf0] sm:$0xff]
  %v3854 = vld [vmem:[%s0 + $0xf8] sm:$0xf]
  %v3855 = vld [vmem:[%s0 + $0xfc] sm:$0xff]
  %v3856 = vld [vmem:[%s0 + $0x104] sm:$0xff]
  %v3857 = vld [vmem:[%s0 + $0x10c] sm:$0xff]
  %v3858 = vld [vmem:[%s0 + $0x114] sm:$0xff]
  %v3859 = vld [vmem:[%s0 + $0x11c] sm:$0xff]
  %v3860 = vld [vmem:[%s0 + $0x124] sm:$0xff]
  %v3861 = vld [vmem:[%s0 + $0x12c] sm:$0xff]
  %v3862 = vld [vmem:[%s0 + $0x134] sm:$0xff]
  %v3863 = vld [vmem:[%s0 + $0x13c] sm:$0xff]
  %v3864 = vld [vmem:[%s0 + $0x144] sm:$0xff]
  %v3865 = vld [vmem:[%s0 + $0x14c] sm:$0xf]
  %v3866 = vld [vmem:[%s0 + $0x150] sm:$0xff]
  %v3867 = vld [vmem:[%s0 + $0x158] sm:$0xff]
  %v3868 = vld [vmem:[%s0 + $0x160] sm:$0xff]
  %v3869 = vld [vmem:[%s0 + $0x168] sm:$0xff]
  %v3870 = vld [vmem:[%s0 + $0x170] sm:$0xff]
  %v3871 = vld [vmem:[%s0 + $0x178] sm:$0xff]
  %v3872 = vld [vmem:[%s0 + $0x180] sm:$0xff]
  %v3873 = vld [vmem:[%s0 + $0x188] sm:$0xff]
  %v3874 = vld [vmem:[%s0 + $0x190] sm:$0xff]
  %v3875 = vld [vmem:[%s0 + $0x198] sm:$0xff]
  %v3876 = vld [vmem:[%s0 + $0x1a0] sm:$0xf]
  %v3877 = vld [vmem:[%s0 + $0x1a4] sm:$0xff]
  %v3878 = vld [vmem:[%s0 + $0x1ac] sm:$0xff]
  %v3879 = vld [vmem:[%s0 + $0x1b4] sm:$0xff]
  %v3880 = vld [vmem:[%s0 + $0x1bc] sm:$0xff]
  %v3881 = vld [vmem:[%s0 + $0x1c4] sm:$0xff]
  %v3882 = vld [vmem:[%s0 + $0x1cc] sm:$0xff]
  %v3883 = vld [vmem:[%s0 + $0x1d4] sm:$0xff]
  %v3884 = vld [vmem:[%s0 + $0x1dc] sm:$0xff]
  %v3885 = vld [vmem:[%s0 + $0x1e4] sm:$0xff]
  %v3886 = vld [vmem:[%s0 + $0x1ec] sm:$0xff]
  %v3887 = vld [vmem:[%s0 + $0x1f4] sm:$0xf]
  %v3888 = vld [vmem:[%s0 + $0x1f8] sm:$0xff]
  %v3889 = vld [vmem:[%s0 + $0x200] sm:$0xff]
  %v3890 = vld [vmem:[%s0 + $0x208] sm:$0xff]
  %v3891 = vld [vmem:[%s0 + $0x210] sm:$0xff]
  %v3892 = vld [vmem:[%s0 + $0x218] sm:$0xff]
  %v3893 = vld [vmem:[%s0 + $0x220] sm:$0xff]
  %v3894 = vld [vmem:[%s0 + $0x228] sm:$0xff]
  %v3895 = vld [vmem:[%s0 + $0x230] sm:$0xff]
  %v3896 = vld [vmem:[%s0 + $0x238] sm:$0xff]
  %v3897 = vld [vmem:[%s0 + $0x240] sm:$0xff]
  %v3898 = vld [vmem:[%s0 + $0x248] sm:$0xf]
  %v3899 = vld [vmem:[%s0 + $0x24c] sm:$0xff]
  %v3900 = vld [vmem:[%s0 + $0x254] sm:$0xff]
  %v3901 = vld [vmem:[%s0 + $0x25c] sm:$0xff]
  %v3902 = vld [vmem:[%s0 + $0x264] sm:$0xff]
  %v3903 = vld [vmem:[%s0 + $0x26c] sm:$0xff]
  %v3904 = vld [vmem:[%s0 + $0x274] sm:$0xff]
  %v3905 = vld [vmem:[%s0 + $0x27c] sm:$0xff]
  %v3906 = vld [vmem:[%s0 + $0x284] sm:$0xff]
  %v3907 = vld [vmem:[%s0 + $0x28c] sm:$0xff]
  %v3908 = vld [vmem:[%s0 + $0x294] sm:$0xff]
  %v3909 = vld [vmem:[%s0 + $0x29c] sm:$0xf]
  %v3910 = vld [vmem:[%s0 + $0x2a0] sm:$0xff]
  %v3911 = vld [vmem:[%s0 + $0x2a8] sm:$0xff]
  %v3912 = vld [vmem:[%s0 + $0x2b0] sm:$0xff]
  %v3913 = vld [vmem:[%s0 + $0x2b8] sm:$0xff]
  %v3914 = vld [vmem:[%s0 + $0x2c0] sm:$0xff]
  %v3915 = vld [vmem:[%s0 + $0x2c8] sm:$0xff]
  %v3916 = vld [vmem:[%s0 + $0x2d0] sm:$0xff]
  %v3917 = vld [vmem:[%s0 + $0x2d8] sm:$0xff]
  %v3918 = vld [vmem:[%s0 + $0x2e0] sm:$0xff]
  %v3919 = vld [vmem:[%s0 + $0x2e8] sm:$0xff]
  %v3920 = vld [vmem:[%s0 + $0x2f0] sm:$0xf]
  %v3921 = vld [vmem:[%s0 + $0x2f4] sm:$0xff]
  %v3922 = vld [vmem:[%s0 + $0x2fc] sm:$0xff]
  %v3923 = vld [vmem:[%s0 + $0x304] sm:$0xff]
  %v3924 = vld [vmem:[%s0 + $0x30c] sm:$0xff]
  %v3925 = vld [vmem:[%s0 + $0x314] sm:$0xff]
  %v3926 = vld [vmem:[%s0 + $0x31c] sm:$0xff]
  %v3927 = vld [vmem:[%s0 + $0x324] sm:$0xff]
  %v3928 = vld [vmem:[%s0 + $0x32c] sm:$0xff]
  %v3929 = vld [vmem:[%s0 + $0x334] sm:$0xff]
  %v3930 = vld [vmem:[%s0 + $0x33c] sm:$0xff]
  %v3931 = vld [vmem:[%s0 + $0x344] sm:$0xf]
  %v3932 = vld [vmem:[%s0 + $0x348] sm:$0xff]
  %v3933 = vld [vmem:[%s0 + $0x350] sm:$0xff]
  %v3934 = vld [vmem:[%s0 + $0x358] sm:$0xff]
  %v3935 = vld [vmem:[%s0 + $0x360] sm:$0xff]
  %v3936 = vld [vmem:[%s0 + $0x368] sm:$0xff]
  %v3937 = vld [vmem:[%s0 + $0x370] sm:$0xff]
  %v3938 = vld [vmem:[%s0 + $0x378] sm:$0xff]
  %v3939 = vld [vmem:[%s0 + $0x380] sm:$0xff]
  %v3940 = vld [vmem:[%s0 + $0x388] sm:$0xff]
  %v3941 = vld [vmem:[%s0 + $0x390] sm:$0xff]
  %v3942 = vld [vmem:[%s0 + $0x398] sm:$0xf]
  %v3943 = vld [vmem:[%s0 + $0x39c] sm:$0xff]
  %v3944 = vld [vmem:[%s0 + $0x3a4] sm:$0xff]
  %v3945 = vld [vmem:[%s0 + $0x3ac] sm:$0xff]
  %v3946 = vld [vmem:[%s0 + $0x3b4] sm:$0xff]
  %v3947 = vld [vmem:[%s0 + $0x3bc] sm:$0xff]
  %v3948 = vld [vmem:[%s0 + $0x3c4] sm:$0xff]
  %v3949 = vld [vmem:[%s0 + $0x3cc] sm:$0xff]
  %v3950 = vld [vmem:[%s0 + $0x3d4] sm:$0xff]
  %v3951 = vld [vmem:[%s0 + $0x3dc] sm:$0xff]
  %v3952 = vld [vmem:[%s0 + $0x3e4] sm:$0xff]
  %v3953 = vld [vmem:[%s0 + $0x3ec] sm:$0xf]
  %v3954 = vld [vmem:[%s0 + $0x3f0] sm:$0xff]
  %v3955 = vld [vmem:[%s0 + $0x3f8] sm:$0xff]
  %v3956 = vld [vmem:[%s0 + $0x400] sm:$0xff]
  %v3957 = vld [vmem:[%s0 + $0x408] sm:$0xff]
  %v3958 = vld [vmem:[%s0 + $0x410] sm:$0xff]
  %v3959 = vld [vmem:[%s0 + $0x418] sm:$0xff]
  %v3960 = vld [vmem:[%s0 + $0x420] sm:$0xff]
  %v3961 = vld [vmem:[%s0 + $0x428] sm:$0xff]
  %v3962 = vld [vmem:[%s0 + $0x430] sm:$0xff]
  %v3963 = vld [vmem:[%s0 + $0x438] sm:$0xff]
  %v3964 = vld [vmem:[%s0 + $0x440] sm:$0xf]
  %v3965 = vld [vmem:[%s0 + $0x444] sm:$0xff]
  %v3966 = vld [vmem:[%s0 + $0x44c] sm:$0xff]
  %v3967 = vld [vmem:[%s0 + $0x454] sm:$0xff]
  %v3968 = vld [vmem:[%s0 + $0x45c] sm:$0xff]
  %v3969 = vld [vmem:[%s0 + $0x464] sm:$0xff]
  %v3970 = vld [vmem:[%s0 + $0x46c] sm:$0xff]
  %v3971 = vld [vmem:[%s0 + $0x474] sm:$0xff]
  %v3972 = vld [vmem:[%s0 + $0x47c] sm:$0xff]
  %v3973 = vld [vmem:[%s0 + $0x484] sm:$0xff]
  %v3974 = vld [vmem:[%s0 + $0x48c] sm:$0xff]
  %v3975 = vld [vmem:[%s0 + $0x494] sm:$0xf]
  %v3976 = vld [vmem:[%s0 + $0x498] sm:$0xff]
  %v3977 = vld [vmem:[%s0 + $0x4a0] sm:$0xff]
  %v3978 = vld [vmem:[%s0 + $0x4a8] sm:$0xff]
  %v3979 = vld [vmem:[%s0 + $0x4b0] sm:$0xff]
  %v3980 = vld [vmem:[%s0 + $0x4b8] sm:$0xff]
  %v3981 = vld [vmem:[%s0 + $0x4c0] sm:$0xff]
  %v3982 = vld [vmem:[%s0 + $0x4c8] sm:$0xff]
  %v3983 = vld [vmem:[%s0 + $0x4d0] sm:$0xff]
  %v3984 = vld [vmem:[%s0 + $0x4d8] sm:$0xff]
  %v3985 = vld [vmem:[%s0 + $0x4e0] sm:$0xff]
  %v3986 = vld [vmem:[%s0 + $0x4e8] sm:$0xf]
  %v3987 = vld [vmem:[%s0 + $0x4ec] sm:$0xff]
  %v3988 = vld [vmem:[%s0 + $0x4f4] sm:$0xff]
  %v3989 = vld [vmem:[%s0 + $0x4fc] sm:$0xff]
  %v3990 = vld [vmem:[%s0 + $0x504] sm:$0xff]
  %v3991 = vld [vmem:[%s0 + $0x50c] sm:$0xff]
  %v3992 = vld [vmem:[%s0 + $0x514] sm:$0xff]
  %v3993 = vld [vmem:[%s0 + $0x51c] sm:$0xff]
  %v3994 = vld [vmem:[%s0 + $0x524] sm:$0xff]
  %v3995 = vld [vmem:[%s0 + $0x52c] sm:$0xff]
  %v3996 = vld [vmem:[%s0 + $0x534] sm:$0xff]
  %v3997 = vld [vmem:[%s0 + $0x53c] sm:$0xf]
  %v3998 = vld [vmem:[%s0 + $0x540] sm:$0xff]
  %v3999 = vld [vmem:[%s0 + $0x548] sm:$0xff]
  %v4000 = vld [vmem:[%s0 + $0x550] sm:$0xff]
  %v4001 = vld [vmem:[%s0 + $0x558] sm:$0xff]
  %v4002 = vld [vmem:[%s0 + $0x560] sm:$0xff]
  %v4003 = vld [vmem:[%s0 + $0x568] sm:$0xff]
  %v4004 = vld [vmem:[%s0 + $0x570] sm:$0xff]
  %v4005 = vld [vmem:[%s0 + $0x578] sm:$0xff]
  %v4006 = vld [vmem:[%s0 + $0x580] sm:$0xff]
  %v4007 = vld [vmem:[%s0 + $0x588] sm:$0xff]
  %v4008 = vld [vmem:[%s0 + $0x590] sm:$0xf]
  %v4009 = vld [vmem:[%s0 + $0x594] sm:$0xff]
  %v4010 = vld [vmem:[%s0 + $0x59c] sm:$0xff]
  %v4011 = vld [vmem:[%s0 + $0x5a4] sm:$0xff]
  %v4012 = vld [vmem:[%s0 + $0x5ac] sm:$0xff]
  %v4013 = vld [vmem:[%s0 + $0x5b4] sm:$0xff]
  %v4014 = vld [vmem:[%s0 + $0x5bc] sm:$0xff]
  %v4015 = vld [vmem:[%s0 + $0x5c4] sm:$0xff]
  %v4016 = vld [vmem:[%s0 + $0x5cc] sm:$0xff]
  %v4017 = vld [vmem:[%s0 + $0x5d4] sm:$0xff]
  %v4018 = vld [vmem:[%s0 + $0x5dc] sm:$0xff]
  %v4019 = vld [vmem:[%s0 + $0x5e4] sm:$0xf]
  %v4020 = vld [vmem:[%s1 + $0x4] sm:$0xf]
  %v4021 = vld [vmem:[%s1 + $0x10] sm:$0xf]
  %v4022 = vld [vmem:[%s1 + $0x1c] sm:$0xf]
  %v4023 = vld [vmem:[%s1 + $0x28] sm:$0xf]
  %v4024 = vld [vmem:[%s1 + $0x34] sm:$0xf]
  %v4025 = vld [vmem:[%s1 + $0x40] sm:$0xf]
  %v4026 = vld [vmem:[%s1 + $0x4c] sm:$0xf]
  %v4027 = vld [vmem:[%s1 + $0x58] sm:$0xf]
  %v4028 = vld [vmem:[%s1 + $0x64] sm:$0xf]
  %v4029 = vld [vmem:[%s1 + $0x70] sm:$0xf]
  %v4030 = vld [vmem:[%s1 + $0x7c] sm:$0xf]
  %v4031 = vld [vmem:[%s1 + $0x88] sm:$0xf]
  %v4032 = vld [vmem:[%s1 + $0x94] sm:$0xf]
  %v4033 = vld [vmem:[%s1 + $0xa0] sm:$0xf]
  %v4034 = vld [vmem:[%s1 + $0xac] sm:$0xf]
  %v4035 = vld [vmem:[%s1 + $0xb8] sm:$0xf]
  %v4036 = vld [vmem:[%s1 + $0xc4] sm:$0xf]
  %v4037 = vld [vmem:[%s1 + $0xd0] sm:$0xf]
  %v4038 = vld [vmem:[%s1 + $0xdc] sm:$0xf]
  %v4039 = vld [vmem:[%s1 + $0xe8] sm:$0xf]
  %v4040 = vld [vmem:[%s1 + $0xf4] sm:$0xf]
  %v4041 = vld [vmem:[%s1 + $0x100] sm:$0xf]
  %v4042 = vld [vmem:[%s1 + $0x10c] sm:$0xf]
  %v4043 = vld [vmem:[%s1 + $0x118] sm:$0xf]
  %v4044 = vld [vmem:[%s1 + $0x124] sm:$0xf]
  %v4045 = vld [vmem:[%s1 + $0x130] sm:$0xf]
  %v4046 = vld [vmem:[%s1 + $0x13c] sm:$0xf]
  %v4047 = vld [vmem:[%s1 + $0x148] sm:$0xf]
  %v4048 = vld [vmem:[%s1 + $0x154] sm:$0xf]
  %v4049 = vld [vmem:[%s1 + $0x160] sm:$0xf]
  %v4050 = vld [vmem:[%s1 + $0x16c] sm:$0xf]
  %v4051 = vld [vmem:[%s1 + $0x178] sm:$0xf]
  %v4052 = vld [vmem:[%s1 + $0x184] sm:$0xf]
  %v4053 = vld [vmem:[%s1 + $0x190] sm:$0xf]
  %v4054 = vld [vmem:[%s1 + $0x19c] sm:$0xf]
  %v4055 = vld [vmem:[%s1 + $0x1a8] sm:$0xf]
  %v4056 = vld [vmem:[%s1 + $0x1b4] sm:$0xf]
  %v4057 = vld [vmem:[%s1 + $0x1c0] sm:$0xf]
  %v4058 = vld [vmem:[%s1 + $0x1cc] sm:$0xf]
  %v4059 = vld [vmem:[%s1 + $0x1d8] sm:$0xf]
  %v4060 = vld [vmem:[%s1 + $0x1e4] sm:$0xf]
  %v4061 = vld [vmem:[%s1 + $0x1f0] sm:$0xf]
  %v4062 = vld [vmem:[%s1 + $0x1fc] sm:$0xf]
  %v4063 = vld [vmem:[%s1 + $0x208] sm:$0xf]
  %v4064 = vld [vmem:[%s1 + $0x214] sm:$0xf]
  %v4065 = vld [vmem:[%s1 + $0x220] sm:$0xf]
  %v4066 = vld [vmem:[%s1 + $0x22c] sm:$0xf]
  %v4067 = vld [vmem:[%s1 + $0x238] sm:$0xf]
  %v4068 = vld [vmem:[%s1 + $0x244] sm:$0xf]
  %v4069 = vld [vmem:[%s1 + $0x250] sm:$0xf]
  %v4070 = vld [vmem:[%s1 + $0x25c] sm:$0xf]
  %v4071 = vld [vmem:[%s1 + $0x268] sm:$0xf]
  %v4072 = vld [vmem:[%s1 + $0x274] sm:$0xf]
  %v4073 = vld [vmem:[%s1 + $0x280] sm:$0xf]
  %v4074 = vld [vmem:[%s1 + $0x28c] sm:$0xf]
  %v4075 = vld [vmem:[%s1 + $0x298] sm:$0xf]
  %v4076 = vld [vmem:[%s1 + $0x2a4] sm:$0xf]
  %v4077 = vld [vmem:[%s1 + $0x2b0] sm:$0xf]
  %v4078 = vld [vmem:[%s1 + $0x2bc] sm:$0xf]
  %v4079 = vld [vmem:[%s1 + $0x2c8] sm:$0xf]
  %v4080 = vld [vmem:[%s1 + $0x2d4] sm:$0xf]
  %v4081 = vld [vmem:[%s1 + $0x2e0] sm:$0xf]
  %v4082 = vld [vmem:[%s1 + $0x2ec] sm:$0xf]
  %v4083 = vld [vmem:[%s1 + $0x2f8] sm:$0xf]
  %v4084 = vld [vmem:[%s1 + $0x304] sm:$0xf]
  %v4085 = vld [vmem:[%s1 + $0x310] sm:$0xf]
  %v4086 = vld [vmem:[%s1 + $0x31c] sm:$0xf]
  %v4087 = vld [vmem:[%s1 + $0x328] sm:$0xf]
  %v4088 = vld [vmem:[%s1 + $0x334] sm:$0xf]
  %v4089 = vld [vmem:[%s1 + $0x340] sm:$0xf]
  %v4090 = vld [vmem:[%s1 + $0x34c] sm:$0xf]
  %v4091 = vld [vmem:[%s1 + $0x358] sm:$0xf]
  %v4092 = vld [vmem:[%s1 + $0x364] sm:$0xf]
  %v4093 = vld [vmem:[%s1 + $0x370] sm:$0xf]
  %v4094 = vld [vmem:[%s1 + $0x37c] sm:$0xf]
  %v4095 = vld [vmem:[%s1 + $0x388] sm:$0xf]
  %v4096 = vld [vmem:[%s1 + $0x394] sm:$0xf]
  %v4097 = vld [vmem:[%s1 + $0x3a0] sm:$0xf]
  %v4098 = vld [vmem:[%s1 + $0x3ac] sm:$0xf]
  %v4099 = vld [vmem:[%s1 + $0x3b8] sm:$0xf]
  %v4100 = vld [vmem:[%s1 + $0x3c4] sm:$0xf]
  %v4101 = vld [vmem:[%s1 + $0x3d0] sm:$0xf]
  %v4102 = vld [vmem:[%s1 + $0x3dc] sm:$0xf]
  %v4103 = vld [vmem:[%s1 + $0x3e8] sm:$0xf]
  %v4104 = vld [vmem:[%s1 + $0x3f4] sm:$0xf]
  %v4105 = vld [vmem:[%s1 + $0x400] sm:$0xf]
  %v4106 = vld [vmem:[%s1 + $0x40c] sm:$0xf]
  %v4107 = vld [vmem:[%s1 + $0x418] sm:$0xf]
  %v4108 = vld [vmem:[%s1 + $0x424] sm:$0xf]
  %v4109 = vld [vmem:[%s1 + $0x430] sm:$0xf]
  %v4110 = vld [vmem:[%s1 + $0x43c] sm:$0xf]
  %v4111 = vld [vmem:[%s1 + $0x448] sm:$0xf]
  %v4112 = vld [vmem:[%s1 + $0x454] sm:$0xf]
  %v4113 = vld [vmem:[%s1 + $0x460] sm:$0xf]
  %v4114 = vld [vmem:[%s1 + $0x46c] sm:$0xf]
  %v4115 = vld [vmem:[%s1 + $0x478] sm:$0xf]
  %v4116 = vld [vmem:[%s1 + $0x484] sm:$0xf]
  %v4117 = vld [vmem:[%s1 + $0x490] sm:$0xf]
  %v4118 = vld [vmem:[%s1 + $0x49c] sm:$0xf]
  %v4119 = vld [vmem:[%s1 + $0x4a8] sm:$0xf]
  %v4120 = vld [vmem:[%s1 + $0x4b4] sm:$0xf]
  %v4121 = vld [vmem:[%s1 + $0x4c0] sm:$0xf]
  %v4122 = vld [vmem:[%s1 + $0x4cc] sm:$0xf]
  %v4123 = vld [vmem:[%s1 + $0x4d8] sm:$0xf]
  %v4124 = vld [vmem:[%s1 + $0x4e4] sm:$0xf]
  %v4125 = vld [vmem:[%s1 + $0x4f0] sm:$0xf]
  %v4126 = vld [vmem:[%s1 + $0x4fc] sm:$0xf]
  %v4127 = vld [vmem:[%s1 + $0x508] sm:$0xf]
  %v4128 = vld [vmem:[%s1 + $0x514] sm:$0xf]
  %v4129 = vld [vmem:[%s1 + $0x520] sm:$0xf]
  %v4130 = vld [vmem:[%s1 + $0x52c] sm:$0xf]
  %v4131 = vld [vmem:[%s1 + $0x538] sm:$0xf]
  %v4132 = vld [vmem:[%s1 + $0x544] sm:$0xf]
  %v4133 = vld [vmem:[%s1 + $0x550] sm:$0xf]
  %v4134 = vld [vmem:[%s1 + $0x55c] sm:$0xf]
  %v4135 = vld [vmem:[%s1 + $0x568] sm:$0xf]
  %v4136 = vld [vmem:[%s1 + $0x574] sm:$0xf]
  %v4137 = vld [vmem:[%s1 + $0x580] sm:$0xf]
  %v4138 = vld [vmem:[%s1 + $0x58c] sm:$0xf]
  %v4139 = vld [vmem:[%s1 + $0x598] sm:$0xf]
  %v4140 = vld [vmem:[%s1 + $0x5a4] sm:$0xf]
  %v4141 = vld [vmem:[%s1 + $0x5b0] sm:$0xf]
  %v4142 = vld [vmem:[%s1 + $0x5bc] sm:$0xf]
  %v4143 = vld [vmem:[%s1 + $0x5c8] sm:$0xf]
  %v4144 = vld [vmem:[%s1 + $0x5d4] sm:$0xf]
  %v4145 = vld [vmem:[%s1 + $0x5e0] sm:$0xf]
  %v4146 = vld [vmem:[%s1 + $0x5ec] sm:$0xf]
  %v4147 = vld [vmem:[%s1 + $0x5f8] sm:$0xf]
  %v4148 = vld [vmem:[%s1 + $0x604] sm:$0xf]
  %v4149 = vld [vmem:[%s1 + $0x610] sm:$0xf]
  %v4150 = vld [vmem:[%s1 + $0x61c] sm:$0xf]
  %v4151 = vld [vmem:[%s1 + $0x628] sm:$0xf]
  %v4152 = vld [vmem:[%s1 + $0x634] sm:$0xf]
  %v4153 = vld [vmem:[%s1 + $0x640] sm:$0xf]
  %v4154 = vld [vmem:[%s1 + $0x64c] sm:$0xf]
  %v4155 = vld [vmem:[%s1 + $0x658] sm:$0xf]
  %v4156 = vld [vmem:[%s1 + $0x664] sm:$0xf]
  %v4157 = vld [vmem:[%s1 + $0x670] sm:$0xf]
  %v4158 = vld [vmem:[%s1 + $0x67c] sm:$0xf]
  %v4159 = vld [vmem:[%s1 + $0x688] sm:$0xf]
  %v4160 = vld [vmem:[%s1 + $0x694] sm:$0xf]
  %v4161 = vld [vmem:[%s1 + $0x6a0] sm:$0xf]
  %v4162 = vld [vmem:[%s1 + $0x6ac] sm:$0xf]
  %v4163 = vld [vmem:[%s1 + $0x6b8] sm:$0xf]
  %v4164 = vld [vmem:[%s1 + $0x6c4] sm:$0xf]
  %v4165 = vld [vmem:[%s1 + $0x6d0] sm:$0xf]
  %v4166 = vld [vmem:[%s1 + $0x6dc] sm:$0xf]
  %v4167 = vld [vmem:[%s1 + $0x6e8] sm:$0xf]
  %v4168 = vld [vmem:[%s1 + $0x6f4] sm:$0xf]
  %v4169 = vld [vmem:[%s1 + $0x700] sm:$0xf]
  %v4170 = vld [vmem:[%s1 + $0x70c] sm:$0xf]
  %v4171 = vld [vmem:[%s1 + $0x718] sm:$0xf]
  %v4172 = vld [vmem:[%s1 + $0x724] sm:$0xf]
  %v4173 = vld [vmem:[%s1 + $0x730] sm:$0xf]
  %v4174 = vld [vmem:[%s1 + $0x73c] sm:$0xf]
  %v4175 = vld [vmem:[%s1 + $0x748] sm:$0xf]
  %v4176 = vld [vmem:[%s1 + $0x754] sm:$0xf]
  %v4177 = vld [vmem:[%s1 + $0x760] sm:$0xf]
  %v4178 = vld [vmem:[%s1 + $0x76c] sm:$0xf]
  %v4179 = vld [vmem:[%s1 + $0x778] sm:$0xf]
  %v4180 = vld [vmem:[%s1 + $0x784] sm:$0xf]
  %v4181 = vld [vmem:[%s1 + $0x790] sm:$0xf]
  %v4182 = vld [vmem:[%s1 + $0x79c] sm:$0xf]
  %v4183 = vld [vmem:[%s1 + $0x7a8] sm:$0xf]
  %v4184 = vld [vmem:[%s1 + $0x7b4] sm:$0xf]
  %v4185 = vld [vmem:[%s1 + $0x7c0] sm:$0xf]
  %v4186 = vld [vmem:[%s1 + $0x7cc] sm:$0xf]
  %v4187 = vld [vmem:[%s1 + $0x7d8] sm:$0xf]
  %v4188 = vld [vmem:[%s1 + $0x7e4] sm:$0xf]
  %v4189 = vld [vmem:[%s1 + $0x7f0] sm:$0xf]
  %v4190 = vld [vmem:[%s1 + $0x7fc] sm:$0xf]
  %v4191 = vld [vmem:[%s1 + $0x808] sm:$0xf]
  %v4192 = vld [vmem:[%s1 + $0x814] sm:$0xf]
  %v4193 = vld [vmem:[%s1 + $0x820] sm:$0xf]
  %v4194 = vld [vmem:[%s1 + $0x82c] sm:$0xf]
  %v4195 = vld [vmem:[%s1 + $0x838] sm:$0xf]
  %v4196 = vld [vmem:[%s1 + $0x844] sm:$0xf]
  %v4197 = vld [vmem:[%s1 + $0x850] sm:$0xf]
  %v4198 = vld [vmem:[%s1 + $0x85c] sm:$0xf]
  %v4199 = vld [vmem:[%s1 + $0x868] sm:$0xf]
  %v4200 = vld [vmem:[%s1 + $0x874] sm:$0xf]
  %v4201 = vld [vmem:[%s1 + $0x880] sm:$0xf]
  %v4202 = vld [vmem:[%s1 + $0x88c] sm:$0xf]
  %v4203 = vld [vmem:[%s1 + $0x898] sm:$0xf]
  %v4204 = vld [vmem:[%s1 + $0x8a4] sm:$0xf]
  %v4205 = vld [vmem:[%s1 + $0x8b0] sm:$0xf]
  %v4206 = vld [vmem:[%s1 + $0x8bc] sm:$0xf]
  %v4207 = vld [vmem:[%s1 + $0x8c8] sm:$0xf]
  %v4208 = vld [vmem:[%s1 + $0x8d4] sm:$0xf]
  %v4209 = vld [vmem:[%s1 + $0x8e0] sm:$0xf]
  %v4210 = vld [vmem:[%s1 + $0x8ec] sm:$0xf]
  %v4211 = vld [vmem:[%s1 + $0x8f8] sm:$0xf]
  %v4212 = vld [vmem:[%s1 + $0x904] sm:$0xf]
  %v4213 = vld [vmem:[%s1 + $0x910] sm:$0xf]
  %v4214 = vld [vmem:[%s1 + $0x91c] sm:$0xf]
  %v4215 = vld [vmem:[%s1 + $0x928] sm:$0xf]
  %v4216 = vld [vmem:[%s1 + $0x934] sm:$0xf]
  %v4217 = vld [vmem:[%s1 + $0x940] sm:$0xf]
  %v4218 = vld [vmem:[%s1 + $0x94c] sm:$0xf]
  %v4219 = vld [vmem:[%s1 + $0x958] sm:$0xf]
  %v4220 = vld [vmem:[%s1 + $0x964] sm:$0xf]
  %v4221 = vld [vmem:[%s1 + $0x970] sm:$0xf]
  %v4222 = vld [vmem:[%s1 + $0x97c] sm:$0xf]
  %v4223 = vld [vmem:[%s1 + $0x988] sm:$0xf]
  %v4224 = vld [vmem:[%s1 + $0x994] sm:$0xf]
  %v4225 = vld [vmem:[%s1 + $0x9a0] sm:$0xf]
  %v4226 = vld [vmem:[%s1 + $0x9ac] sm:$0xf]
  %v4227 = vld [vmem:[%s1 + $0x9b8] sm:$0xf]
  %v4228 = vld [vmem:[%s1 + $0x9c4] sm:$0xf]
  %v4229 = vld [vmem:[%s1 + $0x9d0] sm:$0xf]
  %v4230 = vld [vmem:[%s1 + $0x9dc] sm:$0xf]
  %v4231 = vld [vmem:[%s1 + $0x9e8] sm:$0xf]
  %v4232 = vld [vmem:[%s1 + $0x9f4] sm:$0xf]
  %v4233 = vld [vmem:[%s1 + $0xa00] sm:$0xf]
  %v4234 = vld [vmem:[%s1 + $0xa0c] sm:$0xf]
  %v4235 = vld [vmem:[%s1 + $0xa18] sm:$0xf]
  %v4236 = vld [vmem:[%s1 + $0xa24] sm:$0xf]
  %v4237 = vld [vmem:[%s1 + $0xa30] sm:$0xf]
  %v4238 = vld [vmem:[%s1 + $0xa3c] sm:$0xf]
  %v4239 = vld [vmem:[%s1 + $0xa48] sm:$0xf]
  %v4240 = vld [vmem:[%s1 + $0xa54] sm:$0xf]
  %v4241 = vld [vmem:[%s1 + $0xa60] sm:$0xf]
  %v4242 = vld [vmem:[%s1 + $0xa6c] sm:$0xf]
  %v4243 = vld [vmem:[%s1 + $0xa78] sm:$0xf]
  %v4244 = vld [vmem:[%s1 + $0xa84] sm:$0xf]
  %v4245 = vld [vmem:[%s1 + $0xa90] sm:$0xf]
  %v4246 = vld [vmem:[%s1 + $0xa9c] sm:$0xf]
  %v4247 = vld [vmem:[%s1 + $0xaa8] sm:$0xf]
  %v4248 = vld [vmem:[%s1 + $0xab4] sm:$0xf]
  %v4249 = vld [vmem:[%s1 + $0xac0] sm:$0xf]
  %v4250 = vld [vmem:[%s1 + $0xacc] sm:$0xf]
  %v4251 = vld [vmem:[%s1 + $0xad8] sm:$0xf]
  %v4252 = vld [vmem:[%s1 + $0xae4] sm:$0xf]
  %v4253 = vld [vmem:[%s1 + $0xaf0] sm:$0xf]
  %v4254 = vld [vmem:[%s1 + $0xafc] sm:$0xf]
  %v4255 = vld [vmem:[%s1 + $0xb08] sm:$0xf]
  %v4256 = vld [vmem:[%s1 + $0xb14] sm:$0xf]
  %v4257 = vld [vmem:[%s1 + $0xb20] sm:$0xf]
  %v4258 = vld [vmem:[%s1 + $0xb2c] sm:$0xf]
  %v4259 = vld [vmem:[%s1 + $0xb38] sm:$0xf]
  %v4260 = vld [vmem:[%s1 + $0xb44] sm:$0xf]
  %v4261 = vld [vmem:[%s1 + $0xb50] sm:$0xf]
  %v4262 = vld [vmem:[%s1 + $0xb5c] sm:$0xf]
  %v4263 = vld [vmem:[%s1 + $0xb68] sm:$0xf]
  %v4264 = vld [vmem:[%s1 + $0xb74] sm:$0xf]
  %v4265 = vld [vmem:[%s1 + $0xb80] sm:$0xf]
  %v4266 = vld [vmem:[%s1 + $0xb8c] sm:$0xf]
  %v4267 = vld [vmem:[%s1 + $0xb98] sm:$0xf]
  %v4268 = vld [vmem:[%s1 + $0xba4] sm:$0xf]
  %v4269 = vld [vmem:[%s1 + $0xbb0] sm:$0xf]
  %v4270 = vld [vmem:[%s1 + $0xbbc] sm:$0xf]
  %v4271 = vld [vmem:[%s1 + $0xbc8] sm:$0xf]
  %v4272 = vld [vmem:[%s1 + $0xbd4] sm:$0xf]
  %v4273 = vld [vmem:[%s1 + $0xbe0] sm:$0xf]
  %v4274 = vld [vmem:[%s1 + $0xbec] sm:$0xf]
  %v4275 = vld [vmem:[%s1 + $0xbf8] sm:$0xf]
  %v4276 = vld [vmem:[%s1 + $0xc04] sm:$0xf]
  %v4277 = vld [vmem:[%s1 + $0xc10] sm:$0xf]
  %v4278 = vld [vmem:[%s1 + $0xc1c] sm:$0xf]
  %v4279 = vld [vmem:[%s1 + $0xc28] sm:$0xf]
  %v4280 = vld [vmem:[%s1 + $0xc34] sm:$0xf]
  %v4281 = vld [vmem:[%s1 + $0xc40] sm:$0xf]
  %v4282 = vld [vmem:[%s1 + $0xc4c] sm:$0xf]
  %v4283 = vld [vmem:[%s1 + $0xc58] sm:$0xf]
  %v4284 = vld [vmem:[%s1 + $0xc64] sm:$0xf]
  %v4285 = vld [vmem:[%s1 + $0xc70] sm:$0xf]
  %v4286 = vld [vmem:[%s1 + $0xc7c] sm:$0xf]
  %v4287 = vld [vmem:[%s1 + $0xc88] sm:$0xf]
  %v4288 = vld [vmem:[%s1 + $0xc94] sm:$0xf]
  %v4289 = vld [vmem:[%s1 + $0xca0] sm:$0xf]
  %v4290 = vld [vmem:[%s1 + $0xcac] sm:$0xf]
  %v4291 = vld [vmem:[%s1 + $0xcb8] sm:$0xf]
  %v4292 = vld [vmem:[%s1 + $0xcc4] sm:$0xf]
  %v4293 = vld [vmem:[%s1 + $0xcd0] sm:$0xf]
  %v4294 = vld [vmem:[%s1 + $0xcdc] sm:$0xf]
  %v4295 = vld [vmem:[%s1 + $0xce8] sm:$0xf]
  %v4296 = vld [vmem:[%s1 + $0xcf4] sm:$0xf]
  %v4297 = vld [vmem:[%s1 + $0xd00] sm:$0xf]
  %v4298 = vld [vmem:[%s1 + $0xd0c] sm:$0xf]
  %v4299 = vld [vmem:[%s1 + $0xd18] sm:$0xf]
  %v4300 = vld [vmem:[%s1 + $0xd24] sm:$0xf]
  %v4301 = vld [vmem:[%s1 + $0xd30] sm:$0xf]
  %v4302 = vld [vmem:[%s1 + $0xd3c] sm:$0xf]
  %v4303 = vld [vmem:[%s1 + $0xd48] sm:$0xf]
  %v4304 = vld [vmem:[%s1 + $0xd54] sm:$0xf]
  %v4305 = vld [vmem:[%s1 + $0xd60] sm:$0xf]
  %v4306 = vld [vmem:[%s1 + $0xd6c] sm:$0xf]
  %v4307 = vld [vmem:[%s1 + $0xd78] sm:$0xf]
  %v4308 = vld [vmem:[%s1 + $0xd84] sm:$0xf]
  %v4309 = vld [vmem:[%s1 + $0xd90] sm:$0xf]
  %v4310 = vld [vmem:[%s1 + $0xd9c] sm:$0xf]
  %v4311 = vld [vmem:[%s1 + $0xda8] sm:$0xf]
  %v4312 = vld [vmem:[%s1 + $0xdb4] sm:$0xf]
  %v4313 = vld [vmem:[%s1 + $0xdc0] sm:$0xf]
  %v4314 = vld [vmem:[%s1 + $0xdcc] sm:$0xf]
  %v4315 = vld [vmem:[%s1 + $0xdd8] sm:$0xf]
  %v4316 = vld [vmem:[%s1 + $0xde4] sm:$0xf]
  %v4317 = vld [vmem:[%s1 + $0xdf0] sm:$0xf]
  %v4318 = vld [vmem:[%s1 + $0xdfc] sm:$0xf]
  %v4319 = vld [vmem:[%s1 + $0xe08] sm:$0xf]
  %v4320 = vld [vmem:[%s1 + $0xe14] sm:$0xf]
  %v4321 = vld [vmem:[%s1 + $0xe20] sm:$0xf]
  %v4322 = vld [vmem:[%s1 + $0xe2c] sm:$0xf]
  %v4323 = vld [vmem:[%s1 + $0xe38] sm:$0xf]
  %v4324 = vld [vmem:[%s1 + $0xe44] sm:$0xf]
  %v4325 = vld [vmem:[%s1 + $0xe50] sm:$0xf]
  %v4326 = vld [vmem:[%s1 + $0xe5c] sm:$0xf]
  %v4327 = vld [vmem:[%s1 + $0xe68] sm:$0xf]
  %v4328 = vld [vmem:[%s1 + $0xe74] sm:$0xf]
  %v4329 = vld [vmem:[%s1 + $0xe80] sm:$0xf]
  %v4330 = vld [vmem:[%s1 + $0xe8c] sm:$0xf]
  %v4331 = vld [vmem:[%s1 + $0xe98] sm:$0xf]
  %v4332 = vld [vmem:[%s1 + $0xea4] sm:$0xf]
  %v4333 = vld [vmem:[%s1 + $0xeb0] sm:$0xf]
  %v4334 = vld [vmem:[%s1 + $0xebc] sm:$0xf]
  %v4335 = vld [vmem:[%s1 + $0xec8] sm:$0xf]
  %v4336 = vld [vmem:[%s1 + $0xed4] sm:$0xf]
  %v4337 = vld [vmem:[%s1 + $0xee0] sm:$0xf]
  %v4338 = vld [vmem:[%s1 + $0xeec] sm:$0xf]
  %v4339 = vld [vmem:[%s1 + $0xef8] sm:$0xf]
  %v4340 = vld [vmem:[%s1 + $0xf04] sm:$0xf]
  %v4341 = vld [vmem:[%s1 + $0xf10] sm:$0xf]
  %v4342 = vld [vmem:[%s1 + $0xf1c] sm:$0xf]
  %v4343 = vld [vmem:[%s1 + $0xf28] sm:$0xf]
  %v4344 = vld [vmem:[%s1 + $0xf34] sm:$0xf]
  %v4345 = vld [vmem:[%s1 + $0xf40] sm:$0xf]
  %v4346 = vld [vmem:[%s1 + $0xf4c] sm:$0xf]
  %v4347 = vld [vmem:[%s1 + $0xf58] sm:$0xf]
  %v4348 = vld [vmem:[%s1 + $0xf64] sm:$0xf]
  %v4349 = vld [vmem:[%s1 + $0xf70] sm:$0xf]
  %v4350 = vld [vmem:[%s1 + $0xf7c] sm:$0xf]
  %v4351 = vld [vmem:[%s1 + $0xf88] sm:$0xf]
  %v4352 = vld [vmem:[%s1 + $0xf94] sm:$0xf]
  %v4353 = vld [vmem:[%s1 + $0xfa0] sm:$0xf]
  %v4354 = vld [vmem:[%s1 + $0xfac] sm:$0xf]
  %v4355 = vld [vmem:[%s1 + $0xfb8] sm:$0xf]
  %v4554 = vunpack.c.l.b16 %v3822
  %v4555 = vunpack.c.h.b16 %v3822
  %v4556 = vunpack.c.l.b16 %v3823
  %v4557 = vunpack.c.h.b16 %v3823
  %v4558 = vunpack.c.l.b16 %v3824
  %v4559 = vunpack.c.h.b16 %v3824
  %v4560 = vunpack.c.l.b16 %v3825
  %v4561 = vunpack.c.h.b16 %v3825
  %v4562 = vunpack.c.l.b16 %v3826
  %v4563 = vunpack.c.h.b16 %v3826
  %v4564 = vunpack.c.l.b16 %v3827
  %v4565 = vunpack.c.h.b16 %v3827
  %v4566 = vunpack.c.l.b16 %v3828
  %v4567 = vunpack.c.h.b16 %v3828
  %v4568 = vunpack.c.l.b16 %v3829
  %v4569 = vunpack.c.h.b16 %v3829
  %v4570 = vunpack.c.l.b16 %v3830
  %v4571 = vunpack.c.h.b16 %v3830
  %v4572 = vunpack.c.l.b16 %v3831
  %v4573 = vunpack.c.h.b16 %v3831
  %v4574 = vunpack.c.l.b16 %v3832
  %v4575 = vunpack.c.l.b16 %v3833
  %v4576 = vunpack.c.h.b16 %v3833
  %v4577 = vunpack.c.l.b16 %v3834
  %v4578 = vunpack.c.h.b16 %v3834
  %v4579 = vunpack.c.l.b16 %v3835
  %v4580 = vunpack.c.h.b16 %v3835
  %v4581 = vunpack.c.l.b16 %v3836
  %v4582 = vunpack.c.h.b16 %v3836
  %v4583 = vunpack.c.l.b16 %v3837
  %v4584 = vunpack.c.h.b16 %v3837
  %v4585 = vunpack.c.l.b16 %v3838
  %v4586 = vunpack.c.h.b16 %v3838
  %v4587 = vunpack.c.l.b16 %v3839
  %v4588 = vunpack.c.h.b16 %v3839
  %v4589 = vunpack.c.l.b16 %v3840
  %v4590 = vunpack.c.h.b16 %v3840
  %v4591 = vunpack.c.l.b16 %v3841
  %v4592 = vunpack.c.h.b16 %v3841
  %v4593 = vunpack.c.l.b16 %v3842
  %v4594 = vunpack.c.h.b16 %v3842
  %v4595 = vunpack.c.l.b16 %v3843
  %v4596 = vunpack.c.l.b16 %v3844
  %v4597 = vunpack.c.h.b16 %v3844
  %v4598 = vunpack.c.l.b16 %v3845
  %v4599 = vunpack.c.h.b16 %v3845
  %v4600 = vunpack.c.l.b16 %v3846
  %v4601 = vunpack.c.h.b16 %v3846
  %v4602 = vunpack.c.l.b16 %v3847
  %v4603 = vunpack.c.h.b16 %v3847
  %v4604 = vunpack.c.l.b16 %v3848
  %v4605 = vunpack.c.h.b16 %v3848
  %v4606 = vunpack.c.l.b16 %v3849
  %v4607 = vunpack.c.h.b16 %v3849
  %v4608 = vunpack.c.l.b16 %v3850
  %v4609 = vunpack.c.h.b16 %v3850
  %v4610 = vunpack.c.l.b16 %v3851
  %v4611 = vunpack.c.h.b16 %v3851
  %v4612 = vunpack.c.l.b16 %v3852
  %v4613 = vunpack.c.h.b16 %v3852
  %v4614 = vunpack.c.l.b16 %v3853
  %v4615 = vunpack.c.h.b16 %v3853
  %v4616 = vunpack.c.l.b16 %v3854
  %v4617 = vunpack.c.l.b16 %v3855
  %v4618 = vunpack.c.h.b16 %v3855
  %v4619 = vunpack.c.l.b16 %v3856
  %v4620 = vunpack.c.h.b16 %v3856
  %v4621 = vunpack.c.l.b16 %v3857
  %v4622 = vunpack.c.h.b16 %v3857
  %v4623 = vunpack.c.l.b16 %v3858
  %v4624 = vunpack.c.h.b16 %v3858
  %v4625 = vunpack.c.l.b16 %v3859
  %v4626 = vunpack.c.h.b16 %v3859
  %v4627 = vunpack.c.l.b16 %v3860
  %v4628 = vunpack.c.h.b16 %v3860
  %v4629 = vunpack.c.l.b16 %v3861
  %v4630 = vunpack.c.h.b16 %v3861
  %v4631 = vunpack.c.l.b16 %v3862
  %v4632 = vunpack.c.h.b16 %v3862
  %v4633 = vunpack.c.l.b16 %v3863
  %v4634 = vunpack.c.h.b16 %v3863
  %v4635 = vunpack.c.l.b16 %v3864
  %v4636 = vunpack.c.h.b16 %v3864
  %v4637 = vunpack.c.l.b16 %v3865
  %v4638 = vunpack.c.l.b16 %v3866
  %v4639 = vunpack.c.h.b16 %v3866
  %v4640 = vunpack.c.l.b16 %v3867
  %v4641 = vunpack.c.h.b16 %v3867
  %v4642 = vunpack.c.l.b16 %v3868
  %v4643 = vunpack.c.h.b16 %v3868
  %v4644 = vunpack.c.l.b16 %v3869
  %v4645 = vunpack.c.h.b16 %v3869
  %v4646 = vunpack.c.l.b16 %v3870
  %v4647 = vunpack.c.h.b16 %v3870
  %v4648 = vunpack.c.l.b16 %v3871
  %v4649 = vunpack.c.h.b16 %v3871
  %v4650 = vunpack.c.l.b16 %v3872
  %v4651 = vunpack.c.h.b16 %v3872
  %v4652 = vunpack.c.l.b16 %v3873
  %v4653 = vunpack.c.h.b16 %v3873
  %v4654 = vunpack.c.l.b16 %v3874
  %v4655 = vunpack.c.h.b16 %v3874
  %v4656 = vunpack.c.l.b16 %v3875
  %v4657 = vunpack.c.h.b16 %v3875
  %v4658 = vunpack.c.l.b16 %v3876
  %v4659 = vunpack.c.l.b16 %v3877
  %v4660 = vunpack.c.h.b16 %v3877
  %v4661 = vunpack.c.l.b16 %v3878
  %v4662 = vunpack.c.h.b16 %v3878
  %v4663 = vunpack.c.l.b16 %v3879
  %v4664 = vunpack.c.h.b16 %v3879
  %v4665 = vunpack.c.l.b16 %v3880
  %v4666 = vunpack.c.h.b16 %v3880
  %v4667 = vunpack.c.l.b16 %v3881
  %v4668 = vunpack.c.h.b16 %v3881
  %v4669 = vunpack.c.l.b16 %v3882
  %v4670 = vunpack.c.h.b16 %v3882
  %v4671 = vunpack.c.l.b16 %v3883
  %v4672 = vunpack.c.h.b16 %v3883
  %v4673 = vunpack.c.l.b16 %v3884
  %v4674 = vunpack.c.h.b16 %v3884
  %v4675 = vunpack.c.l.b16 %v3885
  %v4676 = vunpack.c.h.b16 %v3885
  %v4677 = vunpack.c.l.b16 %v3886
  %v4678 = vunpack.c.h.b16 %v3886
  %v4679 = vunpack.c.l.b16 %v3887
  %v4680 = vunpack.c.l.b16 %v3888
  %v4681 = vunpack.c.h.b16 %v3888
  %v4682 = vunpack.c.l.b16 %v3889
  %v4683 = vunpack.c.h.b16 %v3889
  %v4684 = vunpack.c.l.b16 %v3890
  %v4685 = vunpack.c.h.b16 %v3890
  %v4686 = vunpack.c.l.b16 %v3891
  %v4687 = vunpack.c.h.b16 %v3891
  %v4688 = vunpack.c.l.b16 %v3892
  %v4689 = vunpack.c.h.b16 %v3892
  %v4690 = vunpack.c.l.b16 %v3893
  %v4691 = vunpack.c.h.b16 %v3893
  %v4692 = vunpack.c.l.b16 %v3894
  %v4693 = vunpack.c.h.b16 %v3894
  %v4694 = vunpack.c.l.b16 %v3895
  %v4695 = vunpack.c.h.b16 %v3895
  %v4696 = vunpack.c.l.b16 %v3896
  %v4697 = vunpack.c.h.b16 %v3896
  %v4698 = vunpack.c.l.b16 %v3897
  %v4699 = vunpack.c.h.b16 %v3897
  %v4700 = vunpack.c.l.b16 %v3898
  %v4701 = vunpack.c.l.b16 %v3899
  %v4702 = vunpack.c.h.b16 %v3899
  %v4703 = vunpack.c.l.b16 %v3900
  %v4704 = vunpack.c.h.b16 %v3900
  %v4705 = vunpack.c.l.b16 %v3901
  %v4706 = vunpack.c.h.b16 %v3901
  %v4707 = vunpack.c.l.b16 %v3902
  %v4708 = vunpack.c.h.b16 %v3902
  %v4709 = vunpack.c.l.b16 %v3903
  %v4710 = vunpack.c.h.b16 %v3903
  %v4711 = vunpack.c.l.b16 %v3904
  %v4712 = vunpack.c.h.b16 %v3904
  %v4713 = vunpack.c.l.b16 %v3905
  %v4714 = vunpack.c.h.b16 %v3905
  %v4715 = vunpack.c.l.b16 %v3906
  %v4716 = vunpack.c.h.b16 %v3906
  %v4717 = vunpack.c.l.b16 %v3907
  %v4718 = vunpack.c.h.b16 %v3907
  %v4719 = vunpack.c.l.b16 %v3908
  %v4720 = vunpack.c.h.b16 %v3908
  %v4721 = vunpack.c.l.b16 %v3909
  %v4722 = vunpack.c.l.b16 %v3910
  %v4723 = vunpack.c.h.b16 %v3910
  %v4724 = vunpack.c.l.b16 %v3911
  %v4725 = vunpack.c.h.b16 %v3911
  %v4726 = vunpack.c.l.b16 %v3912
  %v4727 = vunpack.c.h.b16 %v3912
  %v4728 = vunpack.c.l.b16 %v3913
  %v4729 = vunpack.c.h.b16 %v3913
  %v4730 = vunpack.c.l.b16 %v3914
  %v4731 = vunpack.c.h.b16 %v3914
  %v4732 = vunpack.c.l.b16 %v3915
  %v4733 = vunpack.c.h.b16 %v3915
  %v4734 = vunpack.c.l.b16 %v3916
  %v4735 = vunpack.c.h.b16 %v3916
  %v4736 = vunpack.c.l.b16 %v3917
  %v4737 = vunpack.c.h.b16 %v3917
  %v4738 = vunpack.c.l.b16 %v3918
  %v4739 = vunpack.c.h.b16 %v3918
  %v4740 = vunpack.c.l.b16 %v3919
  %v4741 = vunpack.c.h.b16 %v3919
  %v4742 = vunpack.c.l.b16 %v3920
  %v4743 = vunpack.c.l.b16 %v3921
  %v4744 = vunpack.c.h.b16 %v3921
  %v4745 = vunpack.c.l.b16 %v3922
  %v4746 = vunpack.c.h.b16 %v3922
  %v4747 = vunpack.c.l.b16 %v3923
  %v4748 = vunpack.c.h.b16 %v3923
  %v4749 = vunpack.c.l.b16 %v3924
  %v4750 = vunpack.c.h.b16 %v3924
  %v4751 = vunpack.c.l.b16 %v3925
  %v4752 = vunpack.c.h.b16 %v3925
  %v4753 = vunpack.c.l.b16 %v3926
  %v4754 = vunpack.c.h.b16 %v3926
  %v4755 = vunpack.c.l.b16 %v3927
  %v4756 = vunpack.c.h.b16 %v3927
  %v4757 = vunpack.c.l.b16 %v3928
  %v4758 = vunpack.c.h.b16 %v3928
  %v4759 = vunpack.c.l.b16 %v3929
  %v4760 = vunpack.c.h.b16 %v3929
  %v4761 = vunpack.c.l.b16 %v3930
  %v4762 = vunpack.c.h.b16 %v3930
  %v4763 = vunpack.c.l.b16 %v3931
  %v4764 = vunpack.c.l.b16 %v3932
  %v4765 = vunpack.c.h.b16 %v3932
  %v4766 = vunpack.c.l.b16 %v3933
  %v4767 = vunpack.c.h.b16 %v3933
  %v4768 = vunpack.c.l.b16 %v3934
  %v4769 = vunpack.c.h.b16 %v3934
  %v4770 = vunpack.c.l.b16 %v3935
  %v4771 = vunpack.c.h.b16 %v3935
  %v4772 = vunpack.c.l.b16 %v3936
  %v4773 = vunpack.c.h.b16 %v3936
  %v4774 = vunpack.c.l.b16 %v3937
  %v4775 = vunpack.c.h.b16 %v3937
  %v4776 = vunpack.c.l.b16 %v3938
  %v4777 = vunpack.c.h.b16 %v3938
  %v4778 = vunpack.c.l.b16 %v3939
  %v4779 = vunpack.c.h.b16 %v3939
  %v4780 = vunpack.c.l.b16 %v3940
  %v4781 = vunpack.c.h.b16 %v3940
  %v4782 = vunpack.c.l.b16 %v3941
  %v4783 = vunpack.c.h.b16 %v3941
  %v4784 = vunpack.c.l.b16 %v3942
  %v4785 = vunpack.c.l.b16 %v3943
  %v4786 = vunpack.c.h.b16 %v3943
  %v4787 = vunpack.c.l.b16 %v3944
  %v4788 = vunpack.c.h.b16 %v3944
  %v4789 = vunpack.c.l.b16 %v3945
  %v4790 = vunpack.c.h.b16 %v3945
  %v4791 = vunpack.c.l.b16 %v3946
  %v4792 = vunpack.c.h.b16 %v3946
  %v4793 = vunpack.c.l.b16 %v3947
  %v4794 = vunpack.c.h.b16 %v3947
  %v4795 = vunpack.c.l.b16 %v3948
  %v4796 = vunpack.c.h.b16 %v3948
  %v4797 = vunpack.c.l.b16 %v3949
  %v4798 = vunpack.c.h.b16 %v3949
  %v4799 = vunpack.c.l.b16 %v3950
  %v4800 = vunpack.c.h.b16 %v3950
  %v4801 = vunpack.c.l.b16 %v3951
  %v4802 = vunpack.c.h.b16 %v3951
  %v4803 = vunpack.c.l.b16 %v3952
  %v4804 = vunpack.c.h.b16 %v3952
  %v4805 = vunpack.c.l.b16 %v3953
  %v4806 = vunpack.c.l.b16 %v3954
  %v4807 = vunpack.c.h.b16 %v3954
  %v4808 = vunpack.c.l.b16 %v3955
  %v4809 = vunpack.c.h.b16 %v3955
  %v4810 = vunpack.c.l.b16 %v3956
  %v4811 = vunpack.c.h.b16 %v3956
  %v4812 = vunpack.c.l.b16 %v3957
  %v4813 = vunpack.c.h.b16 %v3957
  %v4814 = vunpack.c.l.b16 %v3958
  %v4815 = vunpack.c.h.b16 %v3958
  %v4816 = vunpack.c.l.b16 %v3959
  %v4817 = vunpack.c.h.b16 %v3959
  %v4818 = vunpack.c.l.b16 %v3960
  %v4819 = vunpack.c.h.b16 %v3960
  %v4820 = vunpack.c.l.b16 %v3961
  %v4821 = vunpack.c.h.b16 %v3961
  %v4822 = vunpack.c.l.b16 %v3962
  %v4823 = vunpack.c.h.b16 %v3962
  %v4824 = vunpack.c.l.b16 %v3963
  %v4825 = vunpack.c.h.b16 %v3963
  %v4826 = vunpack.c.l.b16 %v3964
  %v4827 = vunpack.c.l.b16 %v3965
  %v4828 = vunpack.c.h.b16 %v3965
  %v4829 = vunpack.c.l.b16 %v3966
  %v4830 = vunpack.c.h.b16 %v3966
  %v4831 = vunpack.c.l.b16 %v3967
  %v4832 = vunpack.c.h.b16 %v3967
  %v4833 = vunpack.c.l.b16 %v3968
  %v4834 = vunpack.c.h.b16 %v3968
  %v4835 = vunpack.c.l.b16 %v3969
  %v4836 = vunpack.c.h.b16 %v3969
  %v4837 = vunpack.c.l.b16 %v3970
  %v4838 = vunpack.c.h.b16 %v3970
  %v4839 = vunpack.c.l.b16 %v3971
  %v4840 = vunpack.c.h.b16 %v3971
  %v4841 = vunpack.c.l.b16 %v3972
  %v4842 = vunpack.c.h.b16 %v3972
  %v4843 = vunpack.c.l.b16 %v3973
  %v4844 = vunpack.c.h.b16 %v3973
  %v4845 = vunpack.c.l.b16 %v3974
  %v4846 = vunpack.c.h.b16 %v3974
  %v4847 = vunpack.c.l.b16 %v3975
  %v4848 = vunpack.c.l.b16 %v3976
  %v4849 = vunpack.c.h.b16 %v3976
  %v4850 = vunpack.c.l.b16 %v3977
  %v4851 = vunpack.c.h.b16 %v3977
  %v4852 = vunpack.c.l.b16 %v3978
  %v4853 = vunpack.c.h.b16 %v3978
  %v4854 = vunpack.c.l.b16 %v3979
  %v4855 = vunpack.c.h.b16 %v3979
  %v4856 = vunpack.c.l.b16 %v3980
  %v4857 = vunpack.c.h.b16 %v3980
  %v4858 = vunpack.c.l.b16 %v3981
  %v4859 = vunpack.c.h.b16 %v3981
  %v4860 = vunpack.c.l.b16 %v3982
  %v4861 = vunpack.c.h.b16 %v3982
  %v4862 = vunpack.c.l.b16 %v3983
  %v4863 = vunpack.c.h.b16 %v3983
  %v4864 = vunpack.c.l.b16 %v3984
  %v4865 = vunpack.c.h.b16 %v3984
  %v4866 = vunpack.c.l.b16 %v3985
  %v4867 = vunpack.c.h.b16 %v3985
  %v4868 = vunpack.c.l.b16 %v3986
  %v4869 = vunpack.c.l.b16 %v3987
  %v4870 = vunpack.c.h.b16 %v3987
  %v4871 = vunpack.c.l.b16 %v3988
  %v4872 = vunpack.c.h.b16 %v3988
  %v4873 = vunpack.c.l.b16 %v3989
  %v4874 = vunpack.c.h.b16 %v3989
  %v4875 = vunpack.c.l.b16 %v3990
  %v4876 = vunpack.c.h.b16 %v3990
  %v4877 = vunpack.c.l.b16 %v3991
  %v4878 = vunpack.c.h.b16 %v3991
  %v4879 = vunpack.c.l.b16 %v3992
  %v4880 = vunpack.c.h.b16 %v3992
  %v4881 = vunpack.c.l.b16 %v3993
  %v4882 = vunpack.c.h.b16 %v3993
  %v4883 = vunpack.c.l.b16 %v3994
  %v4884 = vunpack.c.h.b16 %v3994
  %v4885 = vunpack.c.l.b16 %v3995
  %v4886 = vunpack.c.h.b16 %v3995
  %v4887 = vunpack.c.l.b16 %v3996
  %v4888 = vunpack.c.h.b16 %v3996
  %v4889 = vunpack.c.l.b16 %v3997
  %v4890 = vunpack.c.l.b16 %v3998
  %v4891 = vunpack.c.h.b16 %v3998
  %v4892 = vunpack.c.l.b16 %v3999
  %v4893 = vunpack.c.h.b16 %v3999
  %v4894 = vunpack.c.l.b16 %v4000
  %v4895 = vunpack.c.h.b16 %v4000
  %v4896 = vunpack.c.l.b16 %v4001
  %v4897 = vunpack.c.h.b16 %v4001
  %v4898 = vunpack.c.l.b16 %v4002
  %v4899 = vunpack.c.h.b16 %v4002
  %v4900 = vunpack.c.l.b16 %v4003
  %v4901 = vunpack.c.h.b16 %v4003
  %v4902 = vunpack.c.l.b16 %v4004
  %v4903 = vunpack.c.h.b16 %v4004
  %v4904 = vunpack.c.l.b16 %v4005
  %v4905 = vunpack.c.h.b16 %v4005
  %v4906 = vunpack.c.l.b16 %v4006
  %v4907 = vunpack.c.h.b16 %v4006
  %v4908 = vunpack.c.l.b16 %v4007
  %v4909 = vunpack.c.h.b16 %v4007
  %v4910 = vunpack.c.l.b16 %v4008
  %v4911 = vunpack.c.l.b16 %v4009
  %v4912 = vunpack.c.h.b16 %v4009
  %v4913 = vunpack.c.l.b16 %v4010
  %v4914 = vunpack.c.h.b16 %v4010
  %v4915 = vunpack.c.l.b16 %v4011
  %v4916 = vunpack.c.h.b16 %v4011
  %v4917 = vunpack.c.l.b16 %v4012
  %v4918 = vunpack.c.h.b16 %v4012
  %v4919 = vunpack.c.l.b16 %v4013
  %v4920 = vunpack.c.h.b16 %v4013
  %v4921 = vunpack.c.l.b16 %v4014
  %v4922 = vunpack.c.h.b16 %v4014
  %v4923 = vunpack.c.l.b16 %v4015
  %v4924 = vunpack.c.h.b16 %v4015
  %v4925 = vunpack.c.l.b16 %v4016
  %v4926 = vunpack.c.h.b16 %v4016
  %v4927 = vunpack.c.l.b16 %v4017
  %v4928 = vunpack.c.h.b16 %v4017
  %v4929 = vunpack.c.l.b16 %v4018
  %v4930 = vunpack.c.h.b16 %v4018
  %v4931 = vunpack.c.l.b16 %v4019
  %v4932 = vpack.c.b16 %v4575, %v4554
  %v4933 = vpack.c.b16 %v4576, %v4555
  %v4934 = vpack.c.b16 %v4577, %v4556
  %v4935 = vpack.c.b16 %v4578, %v4557
  %v4936 = vpack.c.b16 %v4579, %v4558
  %v4937 = vpack.c.b16 %v4580, %v4559
  %v4938 = vpack.c.b16 %v4581, %v4560
  %v4939 = vpack.c.b16 %v4582, %v4561
  %v4940 = vpack.c.b16 %v4583, %v4562
  %v4941 = vpack.c.b16 %v4584, %v4563
  %v4942 = vpack.c.b16 %v4585, %v4564
  %v4943 = vpack.c.b16 %v4586, %v4565
  %v4944 = vpack.c.b16 %v4587, %v4566
  %v4945 = vpack.c.b16 %v4588, %v4567
  %v4946 = vpack.c.b16 %v4589, %v4568
  %v4947 = vpack.c.b16 %v4590, %v4569
  %v4948 = vpack.c.b16 %v4591, %v4570
  %v4949 = vpack.c.b16 %v4592, %v4571
  %v4950 = vpack.c.b16 %v4593, %v4572
  %v4951 = vpack.c.b16 %v4594, %v4573
  %v4952 = vpack.c.b16 %v4595, %v4574
  %v4953 = vpack.c.b16 %v4617, %v4596
  %v4954 = vpack.c.b16 %v4618, %v4597
  %v4955 = vpack.c.b16 %v4619, %v4598
  %v4956 = vpack.c.b16 %v4620, %v4599
  %v4957 = vpack.c.b16 %v4621, %v4600
  %v4958 = vpack.c.b16 %v4622, %v4601
  %v4959 = vpack.c.b16 %v4623, %v4602
  %v4960 = vpack.c.b16 %v4624, %v4603
  %v4961 = vpack.c.b16 %v4625, %v4604
  %v4962 = vpack.c.b16 %v4626, %v4605
  %v4963 = vpack.c.b16 %v4627, %v4606
  %v4964 = vpack.c.b16 %v4628, %v4607
  %v4965 = vpack.c.b16 %v4629, %v4608
  %v4966 = vpack.c.b16 %v4630, %v4609
  %v4967 = vpack.c.b16 %v4631, %v4610
  %v4968 = vpack.c.b16 %v4632, %v4611
  %v4969 = vpack.c.b16 %v4633, %v4612
  %v4970 = vpack.c.b16 %v4634, %v4613
  %v4971 = vpack.c.b16 %v4635, %v4614
  %v4972 = vpack.c.b16 %v4636, %v4615
  %v4973 = vpack.c.b16 %v4637, %v4616
  %v4974 = vpack.c.b16 %v4659, %v4638
  %v4975 = vpack.c.b16 %v4660, %v4639
  %v4976 = vpack.c.b16 %v4661, %v4640
  %v4977 = vpack.c.b16 %v4662, %v4641
  %v4978 = vpack.c.b16 %v4663, %v4642
  %v4979 = vpack.c.b16 %v4664, %v4643
  %v4980 = vpack.c.b16 %v4665, %v4644
  %v4981 = vpack.c.b16 %v4666, %v4645
  %v4982 = vpack.c.b16 %v4667, %v4646
  %v4983 = vpack.c.b16 %v4668, %v4647
  %v4984 = vpack.c.b16 %v4669, %v4648
  %v4985 = vpack.c.b16 %v4670, %v4649
  %v4986 = vpack.c.b16 %v4671, %v4650
  %v4987 = vpack.c.b16 %v4672, %v4651
  %v4988 = vpack.c.b16 %v4673, %v4652
  %v4989 = vpack.c.b16 %v4674, %v4653
  %v4990 = vpack.c.b16 %v4675, %v4654
  %v4991 = vpack.c.b16 %v4676, %v4655
  %v4992 = vpack.c.b16 %v4677, %v4656
  %v4993 = vpack.c.b16 %v4678, %v4657
  %v4994 = vpack.c.b16 %v4679, %v4658
  %v4995 = vpack.c.b16 %v4701, %v4680
  %v4996 = vpack.c.b16 %v4702, %v4681
  %v4997 = vpack.c.b16 %v4703, %v4682
  %v4998 = vpack.c.b16 %v4704, %v4683
  %v4999 = vpack.c.b16 %v4705, %v4684
  %v5000 = vpack.c.b16 %v4706, %v4685
  %v5001 = vpack.c.b16 %v4707, %v4686
  %v5002 = vpack.c.b16 %v4708, %v4687
  %v5003 = vpack.c.b16 %v4709, %v4688
  %v5004 = vpack.c.b16 %v4710, %v4689
  %v5005 = vpack.c.b16 %v4711, %v4690
  %v5006 = vpack.c.b16 %v4712, %v4691
  %v5007 = vpack.c.b16 %v4713, %v4692
  %v5008 = vpack.c.b16 %v4714, %v4693
  %v5009 = vpack.c.b16 %v4715, %v4694
  %v5010 = vpack.c.b16 %v4716, %v4695
  %v5011 = vpack.c.b16 %v4717, %v4696
  %v5012 = vpack.c.b16 %v4718, %v4697
  %v5013 = vpack.c.b16 %v4719, %v4698
  %v5014 = vpack.c.b16 %v4720, %v4699
  %v5015 = vpack.c.b16 %v4721, %v4700
  %v5016 = vpack.c.b16 %v4743, %v4722
  %v5017 = vpack.c.b16 %v4744, %v4723
  %v5018 = vpack.c.b16 %v4745, %v4724
  %v5019 = vpack.c.b16 %v4746, %v4725
  %v5020 = vpack.c.b16 %v4747, %v4726
  %v5021 = vpack.c.b16 %v4748, %v4727
  %v5022 = vpack.c.b16 %v4749, %v4728
  %v5023 = vpack.c.b16 %v4750, %v4729
  %v5024 = vpack.c.b16 %v4751, %v4730
  %v5025 = vpack.c.b16 %v4752, %v4731
  %v5026 = vpack.c.b16 %v4753, %v4732
  %v5027 = vpack.c.b16 %v4754, %v4733
  %v5028 = vpack.c.b16 %v4755, %v4734
  %v5029 = vpack.c.b16 %v4756, %v4735
  %v5030 = vpack.c.b16 %v4757, %v4736
  %v5031 = vpack.c.b16 %v4758, %v4737
  %v5032 = vpack.c.b16 %v4759, %v4738
  %v5033 = vpack.c.b16 %v4760, %v4739
  %v5034 = vpack.c.b16 %v4761, %v4740
  %v5035 = vpack.c.b16 %v4762, %v4741
  %v5036 = vpack.c.b16 %v4763, %v4742
  %v5037 = vpack.c.b16 %v4785, %v4764
  %v5038 = vpack.c.b16 %v4786, %v4765
  %v5039 = vpack.c.b16 %v4787, %v4766
  %v5040 = vpack.c.b16 %v4788, %v4767
  %v5041 = vpack.c.b16 %v4789, %v4768
  %v5042 = vpack.c.b16 %v4790, %v4769
  %v5043 = vpack.c.b16 %v4791, %v4770
  %v5044 = vpack.c.b16 %v4792, %v4771
  %v5045 = vpack.c.b16 %v4793, %v4772
  %v5046 = vpack.c.b16 %v4794, %v4773
  %v5047 = vpack.c.b16 %v4795, %v4774
  %v5048 = vpack.c.b16 %v4796, %v4775
  %v5049 = vpack.c.b16 %v4797, %v4776
  %v5050 = vpack.c.b16 %v4798, %v4777
  %v5051 = vpack.c.b16 %v4799, %v4778
  %v5052 = vpack.c.b16 %v4800, %v4779
  %v5053 = vpack.c.b16 %v4801, %v4780
  %v5054 = vpack.c.b16 %v4802, %v4781
  %v5055 = vpack.c.b16 %v4803, %v4782
  %v5056 = vpack.c.b16 %v4804, %v4783
  %v5057 = vpack.c.b16 %v4805, %v4784
  %v5058 = vpack.c.b16 %v4827, %v4806
  %v5059 = vpack.c.b16 %v4828, %v4807
  %v5060 = vpack.c.b16 %v4829, %v4808
  %v5061 = vpack.c.b16 %v4830, %v4809
  %v5062 = vpack.c.b16 %v4831, %v4810
  %v5063 = vpack.c.b16 %v4832, %v4811
  %v5064 = vpack.c.b16 %v4833, %v4812
  %v5065 = vpack.c.b16 %v4834, %v4813
  %v5066 = vpack.c.b16 %v4835, %v4814
  %v5067 = vpack.c.b16 %v4836, %v4815
  %v5068 = vpack.c.b16 %v4837, %v4816
  %v5069 = vpack.c.b16 %v4838, %v4817
  %v5070 = vpack.c.b16 %v4839, %v4818
  %v5071 = vpack.c.b16 %v4840, %v4819
  %v5072 = vpack.c.b16 %v4841, %v4820
  %v5073 = vpack.c.b16 %v4842, %v4821
  %v5074 = vpack.c.b16 %v4843, %v4822
  %v5075 = vpack.c.b16 %v4844, %v4823
  %v5076 = vpack.c.b16 %v4845, %v4824
  %v5077 = vpack.c.b16 %v4846, %v4825
  %v5078 = vpack.c.b16 %v4847, %v4826
  %v5079 = vpack.c.b16 %v4869, %v4848
  %v5080 = vpack.c.b16 %v4870, %v4849
  %v5081 = vpack.c.b16 %v4871, %v4850
  %v5082 = vpack.c.b16 %v4872, %v4851
  %v5083 = vpack.c.b16 %v4873, %v4852
  %v5084 = vpack.c.b16 %v4874, %v4853
  %v5085 = vpack.c.b16 %v4875, %v4854
  %v5086 = vpack.c.b16 %v4876, %v4855
  %v5087 = vpack.c.b16 %v4877, %v4856
  %v5088 = vpack.c.b16 %v4878, %v4857
  %v5089 = vpack.c.b16 %v4879, %v4858
  %v5090 = vpack.c.b16 %v4880, %v4859
  %v5091 = vpack.c.b16 %v4881, %v4860
  %v5092 = vpack.c.b16 %v4882, %v4861
  %v5093 = vpack.c.b16 %v4883, %v4862
  %v5094 = vpack.c.b16 %v4884, %v4863
  %v5095 = vpack.c.b16 %v4885, %v4864
  %v5096 = vpack.c.b16 %v4886, %v4865
  %v5097 = vpack.c.b16 %v4887, %v4866
  %v5098 = vpack.c.b16 %v4888, %v4867
  %v5099 = vpack.c.b16 %v4889, %v4868
  %v5100 = vpack.c.b16 %v4911, %v4890
  %v5101 = vpack.c.b16 %v4912, %v4891
  %v5102 = vpack.c.b16 %v4913, %v4892
  %v5103 = vpack.c.b16 %v4914, %v4893
  %v5104 = vpack.c.b16 %v4915, %v4894
  %v5105 = vpack.c.b16 %v4916, %v4895
  %v5106 = vpack.c.b16 %v4917, %v4896
  %v5107 = vpack.c.b16 %v4918, %v4897
  %v5108 = vpack.c.b16 %v4919, %v4898
  %v5109 = vpack.c.b16 %v4920, %v4899
  %v5110 = vpack.c.b16 %v4921, %v4900
  %v5111 = vpack.c.b16 %v4922, %v4901
  %v5112 = vpack.c.b16 %v4923, %v4902
  %v5113 = vpack.c.b16 %v4924, %v4903
  %v5114 = vpack.c.b16 %v4925, %v4904
  %v5115 = vpack.c.b16 %v4926, %v4905
  %v5116 = vpack.c.b16 %v4927, %v4906
  %v5117 = vpack.c.b16 %v4928, %v4907
  %v5118 = vpack.c.b16 %v4929, %v4908
  %v5119 = vpack.c.b16 %v4930, %v4909
  %v5120 = vpack.c.b16 %v4931, %v4910
  %v5646 = vunpack.c.l.b16 %v4020
  %v5647 = vunpack.c.l.b16 %v4021
  %v5648 = vunpack.c.l.b16 %v4022
  %v5649 = vunpack.c.l.b16 %v4023
  %v5650 = vunpack.c.l.b16 %v4024
  %v5651 = vunpack.c.l.b16 %v4025
  %v5652 = vunpack.c.l.b16 %v4026
  %v5653 = vunpack.c.l.b16 %v4027
  %v5654 = vunpack.c.l.b16 %v4028
  %v5655 = vunpack.c.l.b16 %v4029
  %v5656 = vunpack.c.l.b16 %v4030
  %v5657 = vunpack.c.l.b16 %v4031
  %v5658 = vunpack.c.l.b16 %v4032
  %v5659 = vunpack.c.l.b16 %v4033
  %v5660 = vunpack.c.l.b16 %v4034
  %v5661 = vunpack.c.l.b16 %v4035
  %v5662 = vunpack.c.l.b16 %v4036
  %v5663 = vunpack.c.l.b16 %v4037
  %v5664 = vunpack.c.l.b16 %v4038
  %v5665 = vunpack.c.l.b16 %v4039
  %v5666 = vunpack.c.l.b16 %v4040
  %v5667 = vunpack.c.l.b16 %v4041
  %v5668 = vunpack.c.l.b16 %v4042
  %v5669 = vunpack.c.l.b16 %v4043
  %v5670 = vunpack.c.l.b16 %v4044
  %v5671 = vunpack.c.l.b16 %v4045
  %v5672 = vunpack.c.l.b16 %v4046
  %v5673 = vunpack.c.l.b16 %v4047
  %v5674 = vunpack.c.l.b16 %v4048
  %v5675 = vunpack.c.l.b16 %v4049
  %v5676 = vunpack.c.l.b16 %v4050
  %v5677 = vunpack.c.l.b16 %v4051
  %v5678 = vunpack.c.l.b16 %v4052
  %v5679 = vunpack.c.l.b16 %v4053
  %v5680 = vunpack.c.l.b16 %v4054
  %v5681 = vunpack.c.l.b16 %v4055
  %v5682 = vunpack.c.l.b16 %v4056
  %v5683 = vunpack.c.l.b16 %v4057
  %v5684 = vunpack.c.l.b16 %v4058
  %v5685 = vunpack.c.l.b16 %v4059
  %v5686 = vunpack.c.l.b16 %v4060
  %v5687 = vunpack.c.l.b16 %v4061
  %v5688 = vunpack.c.l.b16 %v4062
  %v5689 = vunpack.c.l.b16 %v4063
  %v5690 = vunpack.c.l.b16 %v4064
  %v5691 = vunpack.c.l.b16 %v4065
  %v5692 = vunpack.c.l.b16 %v4066
  %v5693 = vunpack.c.l.b16 %v4067
  %v5694 = vunpack.c.l.b16 %v4068
  %v5695 = vunpack.c.l.b16 %v4069
  %v5696 = vunpack.c.l.b16 %v4070
  %v5697 = vunpack.c.l.b16 %v4071
  %v5698 = vunpack.c.l.b16 %v4072
  %v5699 = vunpack.c.l.b16 %v4073
  %v5700 = vunpack.c.l.b16 %v4074
  %v5701 = vunpack.c.l.b16 %v4075
  %v5702 = vunpack.c.l.b16 %v4076
  %v5703 = vunpack.c.l.b16 %v4077
  %v5704 = vunpack.c.l.b16 %v4078
  %v5705 = vunpack.c.l.b16 %v4079
  %v5706 = vunpack.c.l.b16 %v4080
  %v5707 = vunpack.c.l.b16 %v4081
  %v5708 = vunpack.c.l.b16 %v4082
  %v5709 = vunpack.c.l.b16 %v4083
  %v5710 = vunpack.c.l.b16 %v4084
  %v5711 = vunpack.c.l.b16 %v4085
  %v5712 = vunpack.c.l.b16 %v4086
  %v5713 = vunpack.c.l.b16 %v4087
  %v5714 = vunpack.c.l.b16 %v4088
  %v5715 = vunpack.c.l.b16 %v4089
  %v5716 = vunpack.c.l.b16 %v4090
  %v5717 = vunpack.c.l.b16 %v4091
  %v5718 = vunpack.c.l.b16 %v4092
  %v5719 = vunpack.c.l.b16 %v4093
  %v5720 = vunpack.c.l.b16 %v4094
  %v5721 = vunpack.c.l.b16 %v4095
  %v5722 = vunpack.c.l.b16 %v4096
  %v5723 = vunpack.c.l.b16 %v4097
  %v5724 = vunpack.c.l.b16 %v4098
  %v5725 = vunpack.c.l.b16 %v4099
  %v5726 = vunpack.c.l.b16 %v4100
  %v5727 = vunpack.c.l.b16 %v4101
  %v5728 = vunpack.c.l.b16 %v4102
  %v5729 = vunpack.c.l.b16 %v4103
  %v5730 = vunpack.c.l.b16 %v4104
  %v5731 = vunpack.c.l.b16 %v4105
  %v5732 = vunpack.c.l.b16 %v4106
  %v5733 = vunpack.c.l.b16 %v4107
  %v5734 = vunpack.c.l.b16 %v4108
  %v5735 = vunpack.c.l.b16 %v4109
  %v5736 = vunpack.c.l.b16 %v4110
  %v5737 = vunpack.c.l.b16 %v4111
  %v5738 = vunpack.c.l.b16 %v4112
  %v5739 = vunpack.c.l.b16 %v4113
  %v5740 = vunpack.c.l.b16 %v4114
  %v5741 = vunpack.c.l.b16 %v4115
  %v5742 = vunpack.c.l.b16 %v4116
  %v5743 = vunpack.c.l.b16 %v4117
  %v5744 = vunpack.c.l.b16 %v4118
  %v5745 = vunpack.c.l.b16 %v4119
  %v5746 = vunpack.c.l.b16 %v4120
  %v5747 = vunpack.c.l.b16 %v4121
  %v5748 = vunpack.c.l.b16 %v4122
  %v5749 = vunpack.c.l.b16 %v4123
  %v5750 = vunpack.c.l.b16 %v4124
  %v5751 = vunpack.c.l.b16 %v4125
  %v5752 = vunpack.c.l.b16 %v4126
  %v5753 = vunpack.c.l.b16 %v4127
  %v5754 = vunpack.c.l.b16 %v4128
  %v5755 = vunpack.c.l.b16 %v4129
  %v5756 = vunpack.c.l.b16 %v4130
  %v5757 = vunpack.c.l.b16 %v4131
  %v5758 = vunpack.c.l.b16 %v4132
  %v5759 = vunpack.c.l.b16 %v4133
  %v5760 = vunpack.c.l.b16 %v4134
  %v5761 = vunpack.c.l.b16 %v4135
  %v5762 = vunpack.c.l.b16 %v4136
  %v5763 = vunpack.c.l.b16 %v4137
  %v5764 = vunpack.c.l.b16 %v4138
  %v5765 = vunpack.c.l.b16 %v4139
  %v5766 = vunpack.c.l.b16 %v4140
  %v5767 = vunpack.c.l.b16 %v4141
  %v5768 = vunpack.c.l.b16 %v4142
  %v5769 = vunpack.c.l.b16 %v4143
  %v5770 = vunpack.c.l.b16 %v4144
  %v5771 = vunpack.c.l.b16 %v4145
  %v5772 = vunpack.c.l.b16 %v4146
  %v5773 = vunpack.c.l.b16 %v4147
  %v5774 = vunpack.c.l.b16 %v4148
  %v5775 = vunpack.c.l.b16 %v4149
  %v5776 = vunpack.c.l.b16 %v4150
  %v5777 = vunpack.c.l.b16 %v4151
  %v5778 = vunpack.c.l.b16 %v4152
  %v5779 = vunpack.c.l.b16 %v4153
  %v5780 = vunpack.c.l.b16 %v4154
  %v5781 = vunpack.c.l.b16 %v4155
  %v5782 = vunpack.c.l.b16 %v4156
  %v5783 = vunpack.c.l.b16 %v4157
  %v5784 = vunpack.c.l.b16 %v4158
  %v5785 = vunpack.c.l.b16 %v4159
  %v5786 = vunpack.c.l.b16 %v4160
  %v5787 = vunpack.c.l.b16 %v4161
  %v5788 = vunpack.c.l.b16 %v4162
  %v5789 = vunpack.c.l.b16 %v4163
  %v5790 = vunpack.c.l.b16 %v4164
  %v5791 = vunpack.c.l.b16 %v4165
  %v5792 = vunpack.c.l.b16 %v4166
  %v5793 = vunpack.c.l.b16 %v4167
  %v5794 = vunpack.c.l.b16 %v4168
  %v5795 = vunpack.c.l.b16 %v4169
  %v5796 = vunpack.c.l.b16 %v4170
  %v5797 = vunpack.c.l.b16 %v4171
  %v5798 = vunpack.c.l.b16 %v4172
  %v5799 = vunpack.c.l.b16 %v4173
  %v5800 = vunpack.c.l.b16 %v4174
  %v5801 = vunpack.c.l.b16 %v4175
  %v5802 = vunpack.c.l.b16 %v4176
  %v5803 = vunpack.c.l.b16 %v4177
  %v5804 = vunpack.c.l.b16 %v4178
  %v5805 = vunpack.c.l.b16 %v4179
  %v5806 = vunpack.c.l.b16 %v4180
  %v5807 = vunpack.c.l.b16 %v4181
  %v5808 = vunpack.c.l.b16 %v4182
  %v5809 = vunpack.c.l.b16 %v4183
  %v5810 = vunpack.c.l.b16 %v4184
  %v5811 = vunpack.c.l.b16 %v4185
  %v5812 = vunpack.c.l.b16 %v4186
  %v5813 = vunpack.c.l.b16 %v4187
  %v5814 = vunpack.c.l.b16 %v4188
  %v5815 = vunpack.c.l.b16 %v4189
  %v5816 = vunpack.c.l.b16 %v4190
  %v5817 = vunpack.c.l.b16 %v4191
  %v5818 = vunpack.c.l.b16 %v4192
  %v5819 = vunpack.c.l.b16 %v4193
  %v5820 = vunpack.c.l.b16 %v4194
  %v5821 = vunpack.c.l.b16 %v4195
  %v5822 = vunpack.c.l.b16 %v4196
  %v5823 = vunpack.c.l.b16 %v4197
  %v5824 = vunpack.c.l.b16 %v4198
  %v5825 = vunpack.c.l.b16 %v4199
  %v5826 = vunpack.c.l.b16 %v4200
  %v5827 = vunpack.c.l.b16 %v4201
  %v5828 = vunpack.c.l.b16 %v4202
  %v5829 = vunpack.c.l.b16 %v4203
  %v5830 = vunpack.c.l.b16 %v4204
  %v5831 = vunpack.c.l.b16 %v4205
  %v5832 = vunpack.c.l.b16 %v4206
  %v5833 = vunpack.c.l.b16 %v4207
  %v5834 = vunpack.c.l.b16 %v4208
  %v5835 = vunpack.c.l.b16 %v4209
  %v5836 = vunpack.c.l.b16 %v4210
  %v5837 = vunpack.c.l.b16 %v4211
  %v5838 = vunpack.c.l.b16 %v4212
  %v5839 = vunpack.c.l.b16 %v4213
  %v5840 = vunpack.c.l.b16 %v4214
  %v5841 = vunpack.c.l.b16 %v4215
  %v5842 = vunpack.c.l.b16 %v4216
  %v5843 = vunpack.c.l.b16 %v4217
  %v5844 = vunpack.c.l.b16 %v4218
  %v5845 = vunpack.c.l.b16 %v4219
  %v5846 = vunpack.c.l.b16 %v4220
  %v5847 = vunpack.c.l.b16 %v4221
  %v5848 = vunpack.c.l.b16 %v4222
  %v5849 = vunpack.c.l.b16 %v4223
  %v5850 = vunpack.c.l.b16 %v4224
  %v5851 = vunpack.c.l.b16 %v4225
  %v5852 = vunpack.c.l.b16 %v4226
  %v5853 = vunpack.c.l.b16 %v4227
  %v5854 = vunpack.c.l.b16 %v4228
  %v5855 = vunpack.c.l.b16 %v4229
  %v5856 = vunpack.c.l.b16 %v4230
  %v5857 = vunpack.c.l.b16 %v4231
  %v5858 = vunpack.c.l.b16 %v4232
  %v5859 = vunpack.c.l.b16 %v4233
  %v5860 = vunpack.c.l.b16 %v4234
  %v5861 = vunpack.c.l.b16 %v4235
  %v5862 = vunpack.c.l.b16 %v4236
  %v5863 = vunpack.c.l.b16 %v4237
  %v5864 = vunpack.c.l.b16 %v4238
  %v5865 = vunpack.c.l.b16 %v4239
  %v5866 = vunpack.c.l.b16 %v4240
  %v5867 = vunpack.c.l.b16 %v4241
  %v5868 = vunpack.c.l.b16 %v4242
  %v5869 = vunpack.c.l.b16 %v4243
  %v5870 = vunpack.c.l.b16 %v4244
  %v5871 = vunpack.c.l.b16 %v4245
  %v5872 = vunpack.c.l.b16 %v4246
  %v5873 = vunpack.c.l.b16 %v4247
  %v5874 = vunpack.c.l.b16 %v4248
  %v5875 = vunpack.c.l.b16 %v4249
  %v5876 = vunpack.c.l.b16 %v4250
  %v5877 = vunpack.c.l.b16 %v4251
  %v5878 = vunpack.c.l.b16 %v4252
  %v5879 = vunpack.c.l.b16 %v4253
  %v5880 = vunpack.c.l.b16 %v4254
  %v5881 = vunpack.c.l.b16 %v4255
  %v5882 = vunpack.c.l.b16 %v4256
  %v5883 = vunpack.c.l.b16 %v4257
  %v5884 = vunpack.c.l.b16 %v4258
  %v5885 = vunpack.c.l.b16 %v4259
  %v5886 = vunpack.c.l.b16 %v4260
  %v5887 = vunpack.c.l.b16 %v4261
  %v5888 = vunpack.c.l.b16 %v4262
  %v5889 = vunpack.c.l.b16 %v4263
  %v5890 = vunpack.c.l.b16 %v4264
  %v5891 = vunpack.c.l.b16 %v4265
  %v5892 = vunpack.c.l.b16 %v4266
  %v5893 = vunpack.c.l.b16 %v4267
  %v5894 = vunpack.c.l.b16 %v4268
  %v5895 = vunpack.c.l.b16 %v4269
  %v5896 = vunpack.c.l.b16 %v4270
  %v5897 = vunpack.c.l.b16 %v4271
  %v5898 = vunpack.c.l.b16 %v4272
  %v5899 = vunpack.c.l.b16 %v4273
  %v5900 = vunpack.c.l.b16 %v4274
  %v5901 = vunpack.c.l.b16 %v4275
  %v5902 = vunpack.c.l.b16 %v4276
  %v5903 = vunpack.c.l.b16 %v4277
  %v5904 = vunpack.c.l.b16 %v4278
  %v5905 = vunpack.c.l.b16 %v4279
  %v5906 = vunpack.c.l.b16 %v4280
  %v5907 = vunpack.c.l.b16 %v4281
  %v5908 = vunpack.c.l.b16 %v4282
  %v5909 = vunpack.c.l.b16 %v4283
  %v5910 = vunpack.c.l.b16 %v4284
  %v5911 = vunpack.c.l.b16 %v4285
  %v5912 = vunpack.c.l.b16 %v4286
  %v5913 = vunpack.c.l.b16 %v4287
  %v5914 = vunpack.c.l.b16 %v4288
  %v5915 = vunpack.c.l.b16 %v4289
  %v5916 = vunpack.c.l.b16 %v4290
  %v5917 = vunpack.c.l.b16 %v4291
  %v5918 = vunpack.c.l.b16 %v4292
  %v5919 = vunpack.c.l.b16 %v4293
  %v5920 = vunpack.c.l.b16 %v4294
  %v5921 = vunpack.c.l.b16 %v4295
  %v5922 = vunpack.c.l.b16 %v4296
  %v5923 = vunpack.c.l.b16 %v4297
  %v5924 = vunpack.c.l.b16 %v4298
  %v5925 = vunpack.c.l.b16 %v4299
  %v5926 = vunpack.c.l.b16 %v4300
  %v5927 = vunpack.c.l.b16 %v4301
  %v5928 = vunpack.c.l.b16 %v4302
  %v5929 = vunpack.c.l.b16 %v4303
  %v5930 = vunpack.c.l.b16 %v4304
  %v5931 = vunpack.c.l.b16 %v4305
  %v5932 = vunpack.c.l.b16 %v4306
  %v5933 = vunpack.c.l.b16 %v4307
  %v5934 = vunpack.c.l.b16 %v4308
  %v5935 = vunpack.c.l.b16 %v4309
  %v5936 = vunpack.c.l.b16 %v4310
  %v5937 = vunpack.c.l.b16 %v4311
  %v5938 = vunpack.c.l.b16 %v4312
  %v5939 = vunpack.c.l.b16 %v4313
  %v5940 = vunpack.c.l.b16 %v4314
  %v5941 = vunpack.c.l.b16 %v4315
  %v5942 = vunpack.c.l.b16 %v4316
  %v5943 = vunpack.c.l.b16 %v4317
  %v5944 = vunpack.c.l.b16 %v4318
  %v5945 = vunpack.c.l.b16 %v4319
  %v5946 = vunpack.c.l.b16 %v4320
  %v5947 = vunpack.c.l.b16 %v4321
  %v5948 = vunpack.c.l.b16 %v4322
  %v5949 = vunpack.c.l.b16 %v4323
  %v5950 = vunpack.c.l.b16 %v4324
  %v5951 = vunpack.c.l.b16 %v4325
  %v5952 = vunpack.c.l.b16 %v4326
  %v5953 = vunpack.c.l.b16 %v4327
  %v5954 = vunpack.c.l.b16 %v4328
  %v5955 = vunpack.c.l.b16 %v4329
  %v5956 = vunpack.c.l.b16 %v4330
  %v5957 = vunpack.c.l.b16 %v4331
  %v5958 = vunpack.c.l.b16 %v4332
  %v5959 = vunpack.c.l.b16 %v4333
  %v5960 = vunpack.c.l.b16 %v4334
  %v5961 = vunpack.c.l.b16 %v4335
  %v5962 = vunpack.c.l.b16 %v4336
  %v5963 = vunpack.c.l.b16 %v4337
  %v5964 = vunpack.c.l.b16 %v4338
  %v5965 = vunpack.c.l.b16 %v4339
  %v5966 = vunpack.c.l.b16 %v4340
  %v5967 = vunpack.c.l.b16 %v4341
  %v5968 = vunpack.c.l.b16 %v4342
  %v5969 = vunpack.c.l.b16 %v4343
  %v5970 = vunpack.c.l.b16 %v4344
  %v5971 = vunpack.c.l.b16 %v4345
  %v5972 = vunpack.c.l.b16 %v4346
  %v5973 = vunpack.c.l.b16 %v4347
  %v5974 = vunpack.c.l.b16 %v4348
  %v5975 = vunpack.c.l.b16 %v4349
  %v5976 = vunpack.c.l.b16 %v4350
  %v5977 = vunpack.c.l.b16 %v4351
  %v5978 = vunpack.c.l.b16 %v4352
  %v5979 = vunpack.c.l.b16 %v4353
  %v5980 = vunpack.c.l.b16 %v4354
  %v5981 = vunpack.c.l.b16 %v4355
  %v5982 = vpack.c.b16 %v5647, %v5646
  %v5983 = vpack.c.b16 %v5649, %v5648
  %v5984 = vpack.c.b16 %v5651, %v5650
  %v5985 = vpack.c.b16 %v5653, %v5652
  %v5986 = vpack.c.b16 %v5655, %v5654
  %v5987 = vpack.c.b16 %v5657, %v5656
  %v5988 = vpack.c.b16 %v5659, %v5658
  %v5989 = vpack.c.b16 %v5661, %v5660
  %v5990 = vpack.c.b16 %v5663, %v5662
  %v5991 = vpack.c.b16 %v5665, %v5664
  %v5992 = vpack.c.b16 %v5667, %v5666
  %v5993 = vpack.c.b16 %v5669, %v5668
  %v5994 = vpack.c.b16 %v5671, %v5670
  %v5995 = vpack.c.b16 %v5673, %v5672
  %v5996 = vpack.c.b16 %v5675, %v5674
  %v5997 = vpack.c.b16 %v5677, %v5676
  %v5998 = vpack.c.b16 %v5679, %v5678
  %v5999 = vpack.c.b16 %v5681, %v5680
  %v6000 = vpack.c.b16 %v5683, %v5682
  %v6001 = vpack.c.b16 %v5685, %v5684
  %v6002 = vpack.c.b16 %v5687, %v5686
  %v6003 = vpack.c.b16 %v5689, %v5688
  %v6004 = vpack.c.b16 %v5691, %v5690
  %v6005 = vpack.c.b16 %v5693, %v5692
  %v6006 = vpack.c.b16 %v5695, %v5694
  %v6007 = vpack.c.b16 %v5697, %v5696
  %v6008 = vpack.c.b16 %v5699, %v5698
  %v6009 = vpack.c.b16 %v5701, %v5700
  %v6010 = vpack.c.b16 %v5703, %v5702
  %v6011 = vpack.c.b16 %v5705, %v5704
  %v6012 = vpack.c.b16 %v5707, %v5706
  %v6013 = vpack.c.b16 %v5709, %v5708
  %v6014 = vpack.c.b16 %v5711, %v5710
  %v6015 = vpack.c.b16 %v5713, %v5712
  %v6016 = vpack.c.b16 %v5715, %v5714
  %v6017 = vpack.c.b16 %v5717, %v5716
  %v6018 = vpack.c.b16 %v5719, %v5718
  %v6019 = vpack.c.b16 %v5721, %v5720
  %v6020 = vpack.c.b16 %v5723, %v5722
  %v6021 = vpack.c.b16 %v5725, %v5724
  %v6022 = vpack.c.b16 %v5727, %v5726
  %v6023 = vpack.c.b16 %v5729, %v5728
  %v6024 = vpack.c.b16 %v5731, %v5730
  %v6025 = vpack.c.b16 %v5733, %v5732
  %v6026 = vpack.c.b16 %v5735, %v5734
  %v6027 = vpack.c.b16 %v5737, %v5736
  %v6028 = vpack.c.b16 %v5739, %v5738
  %v6029 = vpack.c.b16 %v5741, %v5740
  %v6030 = vpack.c.b16 %v5743, %v5742
  %v6031 = vpack.c.b16 %v5745, %v5744
  %v6032 = vpack.c.b16 %v5747, %v5746
  %v6033 = vpack.c.b16 %v5749, %v5748
  %v6034 = vpack.c.b16 %v5751, %v5750
  %v6035 = vpack.c.b16 %v5753, %v5752
  %v6036 = vpack.c.b16 %v5755, %v5754
  %v6037 = vpack.c.b16 %v5757, %v5756
  %v6038 = vpack.c.b16 %v5759, %v5758
  %v6039 = vpack.c.b16 %v5761, %v5760
  %v6040 = vpack.c.b16 %v5763, %v5762
  %v6041 = vpack.c.b16 %v5765, %v5764
  %v6042 = vpack.c.b16 %v5767, %v5766
  %v6043 = vpack.c.b16 %v5769, %v5768
  %v6044 = vpack.c.b16 %v5771, %v5770
  %v6045 = vpack.c.b16 %v5773, %v5772
  %v6046 = vpack.c.b16 %v5775, %v5774
  %v6047 = vpack.c.b16 %v5777, %v5776
  %v6048 = vpack.c.b16 %v5779, %v5778
  %v6049 = vpack.c.b16 %v5781, %v5780
  %v6050 = vpack.c.b16 %v5783, %v5782
  %v6051 = vpack.c.b16 %v5785, %v5784
  %v6052 = vpack.c.b16 %v5787, %v5786
  %v6053 = vpack.c.b16 %v5789, %v5788
  %v6054 = vpack.c.b16 %v5791, %v5790
  %v6055 = vpack.c.b16 %v5793, %v5792
  %v6056 = vpack.c.b16 %v5795, %v5794
  %v6057 = vpack.c.b16 %v5797, %v5796
  %v6058 = vpack.c.b16 %v5799, %v5798
  %v6059 = vpack.c.b16 %v5801, %v5800
  %v6060 = vpack.c.b16 %v5803, %v5802
  %v6061 = vpack.c.b16 %v5805, %v5804
  %v6062 = vpack.c.b16 %v5807, %v5806
  %v6063 = vpack.c.b16 %v5809, %v5808
  %v6064 = vpack.c.b16 %v5811, %v5810
  %v6065 = vpack.c.b16 %v5813, %v5812
  %v6066 = vpack.c.b16 %v5815, %v5814
  %v6067 = vpack.c.b16 %v5817, %v5816
  %v6068 = vpack.c.b16 %v5819, %v5818
  %v6069 = vpack.c.b16 %v5821, %v5820
  %v6070 = vpack.c.b16 %v5823, %v5822
  %v6071 = vpack.c.b16 %v5825, %v5824
  %v6072 = vpack.c.b16 %v5827, %v5826
  %v6073 = vpack.c.b16 %v5829, %v5828
  %v6074 = vpack.c.b16 %v5831, %v5830
  %v6075 = vpack.c.b16 %v5833, %v5832
  %v6076 = vpack.c.b16 %v5835, %v5834
  %v6077 = vpack.c.b16 %v5837, %v5836
  %v6078 = vpack.c.b16 %v5839, %v5838
  %v6079 = vpack.c.b16 %v5841, %v5840
  %v6080 = vpack.c.b16 %v5843, %v5842
  %v6081 = vpack.c.b16 %v5845, %v5844
  %v6082 = vpack.c.b16 %v5847, %v5846
  %v6083 = vpack.c.b16 %v5849, %v5848
  %v6084 = vpack.c.b16 %v5851, %v5850
  %v6085 = vpack.c.b16 %v5853, %v5852
  %v6086 = vpack.c.b16 %v5855, %v5854
  %v6087 = vpack.c.b16 %v5857, %v5856
  %v6088 = vpack.c.b16 %v5859, %v5858
  %v6089 = vpack.c.b16 %v5861, %v5860
  %v6090 = vpack.c.b16 %v5863, %v5862
  %v6091 = vpack.c.b16 %v5865, %v5864
  %v6092 = vpack.c.b16 %v5867, %v5866
  %v6093 = vpack.c.b16 %v5869, %v5868
  %v6094 = vpack.c.b16 %v5871, %v5870
  %v6095 = vpack.c.b16 %v5873, %v5872
  %v6096 = vpack.c.b16 %v5875, %v5874
  %v6097 = vpack.c.b16 %v5877, %v5876
  %v6098 = vpack.c.b16 %v5879, %v5878
  %v6099 = vpack.c.b16 %v5881, %v5880
  %v6100 = vpack.c.b16 %v5883, %v5882
  %v6101 = vpack.c.b16 %v5885, %v5884
  %v6102 = vpack.c.b16 %v5887, %v5886
  %v6103 = vpack.c.b16 %v5889, %v5888
  %v6104 = vpack.c.b16 %v5891, %v5890
  %v6105 = vpack.c.b16 %v5893, %v5892
  %v6106 = vpack.c.b16 %v5895, %v5894
  %v6107 = vpack.c.b16 %v5897, %v5896
  %v6108 = vpack.c.b16 %v5899, %v5898
  %v6109 = vpack.c.b16 %v5901, %v5900
  %v6110 = vpack.c.b16 %v5903, %v5902
  %v6111 = vpack.c.b16 %v5905, %v5904
  %v6112 = vpack.c.b16 %v5907, %v5906
  %v6113 = vpack.c.b16 %v5909, %v5908
  %v6114 = vpack.c.b16 %v5911, %v5910
  %v6115 = vpack.c.b16 %v5913, %v5912
  %v6116 = vpack.c.b16 %v5915, %v5914
  %v6117 = vpack.c.b16 %v5917, %v5916
  %v6118 = vpack.c.b16 %v5919, %v5918
  %v6119 = vpack.c.b16 %v5921, %v5920
  %v6120 = vpack.c.b16 %v5923, %v5922
  %v6121 = vpack.c.b16 %v5925, %v5924
  %v6122 = vpack.c.b16 %v5927, %v5926
  %v6123 = vpack.c.b16 %v5929, %v5928
  %v6124 = vpack.c.b16 %v5931, %v5930
  %v6125 = vpack.c.b16 %v5933, %v5932
  %v6126 = vpack.c.b16 %v5935, %v5934
  %v6127 = vpack.c.b16 %v5937, %v5936
  %v6128 = vpack.c.b16 %v5939, %v5938
  %v6129 = vpack.c.b16 %v5941, %v5940
  %v6130 = vpack.c.b16 %v5943, %v5942
  %v6131 = vpack.c.b16 %v5945, %v5944
  %v6132 = vpack.c.b16 %v5947, %v5946
  %v6133 = vpack.c.b16 %v5949, %v5948
  %v6134 = vpack.c.b16 %v5951, %v5950
  %v6135 = vpack.c.b16 %v5953, %v5952
  %v6136 = vpack.c.b16 %v5955, %v5954
  %v6137 = vpack.c.b16 %v5957, %v5956
  %v6138 = vpack.c.b16 %v5959, %v5958
  %v6139 = vpack.c.b16 %v5961, %v5960
  %v6140 = vpack.c.b16 %v5963, %v5962
  %v6141 = vpack.c.b16 %v5965, %v5964
  %v6142 = vpack.c.b16 %v5967, %v5966
  %v6143 = vpack.c.b16 %v5969, %v5968
  %v6144 = vpack.c.b16 %v5971, %v5970
  %v6145 = vpack.c.b16 %v5973, %v5972
  %v6146 = vpack.c.b16 %v5975, %v5974
  %v6147 = vpack.c.b16 %v5977, %v5976
  %v6148 = vpack.c.b16 %v5979, %v5978
  %v6149 = vpack.c.b16 %v5981, %v5980
  %6318 = vmatprep.subr.bf16.mxu0 0
  %6319 = vmatpush1.bf16.msra.mxu0 %v5982
  %6320 = vmatprep.subr.bf16.mxu0 0
  %6321 = vmatpush1.bf16.msra.mxu0 %v5983
  %6322 = vmatprep.subr.bf16.mxu0 0
  %6323 = vmatpush1.bf16.msra.mxu0 %v5984
  %6324 = vmatprep.subr.bf16.mxu0 0
  %6325 = vmatpush1.bf16.msra.mxu0 %v5985
  %6326 = vmatprep.subr.bf16.mxu0 0
  %6327 = vmatpush1.bf16.msra.mxu0 %v5986
  %6328 = vmatprep.subr.bf16.mxu0 0
  %6329 = vmatpush1.bf16.msra.mxu0 %v5987
  %6330 = vmatprep.subr.bf16.mxu0 0
  %6331 = vmatpush1.bf16.msra.mxu0 %v5988
  %6332 = vmatprep.subr.bf16.mxu0 0
  %6333 = vmatpush1.bf16.msra.mxu0 %v5989
  %6334 = vmatprep.subr.bf16.mxu0 0
  %6335 = vmatpush1.bf16.msra.mxu0 %v5990
  %6336 = vmatprep.subr.bf16.mxu0 0
  %6337 = vmatpush1.bf16.msra.mxu0 %v5991
  %6338 = vmatprep.subr.bf16.mxu0 0
  %6339 = vmatpush1.bf16.msra.mxu0 %v5992
  %6340 = vmatprep.subr.bf16.mxu0 0
  %6341 = vmatpush1.bf16.msra.mxu0 %v5993
  %6342 = vmatprep.subr.bf16.mxu0 0
  %6343 = vmatpush1.bf16.msra.mxu0 %v5994
  %6344 = vmatprep.subr.bf16.mxu0 0
  %6345 = vmatpush1.bf16.msra.mxu0 %v5995
  %6346 = vmatprep.subr.bf16.mxu0 0
  %6347 = vmatpush1.bf16.msra.mxu0 %v5996
  %6348 = vmatprep.subr.bf16.mxu0 0
  %6349 = vmatpush1.bf16.msra.mxu0 %v5997
  %6350 = vmatprep.mubr.bf16.mxu0 %v4933
  %6351 = vmatmul.mubr.bf16.gmra.mrb[0].mxu0 %v4932
  %v6352 = vpop.f32.mrb[0].mxu0
  %v6353 = vadd.f32 0.0, %v6352
  %v6354 = vpop.f32.mrb[0].mxu0
  %v6355 = vpop.f32.mrb[0].mxu0
  %v6356 = vadd.f32 0.0, %v6355
  %v6357 = vpop.f32.mrb[0].mxu0
  %6358 = vmatprep.mubr.bf16.mxu0 %v4954
  %6359 = vmatmul.mubr.bf16.gmra.mrb[0].mxu0 %v4953
  %v6360 = vpop.f32.mrb[0].mxu0
  %v6361 = vadd.f32 0.0, %v6360
  %v6362 = vpop.f32.mrb[0].mxu0
  %v6363 = vpop.f32.mrb[0].mxu0
  %v6364 = vadd.f32 0.0, %v6363
  %v6365 = vpop.f32.mrb[0].mxu0
  %6366 = vmatprep.mubr.bf16.mxu0 %v4975
  %6367 = vmatmul.mubr.bf16.gmra.mrb[0].mxu0 %v4974
  %v6368 = vpop.f32.mrb[0].mxu0
  %v6369 = vadd.f32 0.0, %v6368
  %v6370 = vpop.f32.mrb[0].mxu0
  %v6371 = vpop.f32.mrb[0].mxu0
  %v6372 = vadd.f32 0.0, %v6371
  %v6373 = vpop.f32.mrb[0].mxu0
  %6374 = vmatprep.mubr.bf16.mxu0 %v4996
  %6375 = vmatmul.mubr.bf16.gmra.mrb[0].mxu0 %v4995
  %v6376 = vpop.f32.mrb[0].mxu0
  %v6377 = vadd.f32 0.0, %v6376
  %v6378 = vpop.f32.mrb[0].mxu0
  %v6379 = vpop.f32.mrb[0].mxu0
  %v6380 = vadd.f32 0.0, %v6379
  %v6381 = vpop.f32.mrb[0].mxu0
  %6382 = vmatprep.mubr.bf16.mxu0 %v5017
  %6383 = vmatmul.mubr.bf16.gmra.mrb[0].mxu0 %v5016
  %v6384 = vpop.f32.mrb[0].mxu0
  %v6385 = vadd.f32 0.0, %v6384
  %v6386 = vpop.f32.mrb[0].mxu0
  %v6387 = vpop.f32.mrb[0].mxu0
  %v6388 = vadd.f32 0.0, %v6387
  %v6389 = vpop.f32.mrb[0].mxu0
  %6390 = vmatprep.mubr.bf16.mxu0 %v5038
  %6391 = vmatmul.mubr.bf16.gmra.mrb[0].mxu0 %v5037
  %v6392 = vpop.f32.mrb[0].mxu0
  %v6393 = vadd.f32 0.0, %v6392
  %v6394 = vpop.f32.mrb[0].mxu0
  %v6395 = vpop.f32.mrb[0].mxu0
  %v6396 = vadd.f32 0.0, %v6395
  %v6397 = vpop.f32.mrb[0].mxu0
  %6398 = vmatprep.mubr.bf16.mxu0 %v5059
  %6399 = vmatmul.mubr.bf16.gmra.mrb[0].mxu0 %v5058
  %v6400 = vpop.f32.mrb[0].mxu0
  %v6401 = vadd.f32 0.0, %v6400
  %v6402 = vpop.f32.mrb[0].mxu0
  %v6403 = vpop.f32.mrb[0].mxu0
  %v6404 = vadd.f32 0.0, %v6403
  %v6405 = vpop.f32.mrb[0].mxu0
  %6406 = vmatprep.mubr.bf16.mxu0 %v5080
  %6407 = vmatmul.mubr.bf16.gmra.mrb[0].mxu0 %v5079
  %v6408 = vpop.f32.mrb[0].mxu0
  %v6409 = vadd.f32 0.0, %v6408
  %v6410 = vpop.f32.mrb[0].mxu0
  %v6411 = vpop.f32.mrb[0].mxu0
  %v6412 = vadd.f32 0.0, %v6411
  %v6413 = vpop.f32.mrb[0].mxu0
  %6414 = vmatprep.mubr.bf16.mxu0 %v5101
  %6415 = vmatmul.mubr.bf16.gmra.mrb[0].mxu0 %v5100
  %v6416 = vpop.f32.mrb[0].mxu0
  %v6417 = vadd.f32 0.0, %v6416
  %v6418 = vpop.f32.mrb[0].mxu0
  %v6419 = vpop.f32.mrb[0].mxu0
  %v6420 = vadd.f32 0.0, %v6419
  %v6421 = vpop.f32.mrb[0].mxu0
  %6422 = vdwg.mxu0
  %6423 = vmatprep.subr.bf16.mxu0 0
  %6424 = vmatpush1.bf16.msra.mxu0 %v5998
  %6425 = vmatprep.subr.bf16.mxu0 0
  %6426 = vmatpush1.bf16.msra.mxu0 %v5999
  %6427 = vmatprep.subr.bf16.mxu0 0
  %6428 = vmatpush1.bf16.msra.mxu0 %v6000
  %6429 = vmatprep.subr.bf16.mxu0 0
  %6430 = vmatpush1.bf16.msra.mxu0 %v6001
  %6431 = vmatprep.subr.bf16.mxu0 0
  %6432 = vmatpush1.bf16.msra.mxu0 %v6002
  %6433 = vmatprep.subr.bf16.mxu0 0
  %6434 = vmatpush1.bf16.msra.mxu0 %v6003
  %6435 = vmatprep.subr.bf16.mxu0 0
  %6436 = vmatpush1.bf16.msra.mxu0 %v6004
  %6437 = vmatprep.subr.bf16.mxu0 0
  %6438 = vmatpush1.bf16.msra.mxu0 %v6005
  %6439 = vmatprep.subr.bf16.mxu0 0
  %6440 = vmatpush1.bf16.msra.mxu0 %v6006
  %6441 = vmatprep.subr.bf16.mxu0 0
  %6442 = vmatpush1.bf16.msra.mxu0 %v6007
  %6443 = vmatprep.subr.bf16.mxu0 0
  %6444 = vmatpush1.bf16.msra.mxu0 %v6008
  %6445 = vmatprep.subr.bf16.mxu0 0
  %6446 = vmatpush1.bf16.msra.mxu0 %v6009
  %6447 = vmatprep.subr.bf16.mxu0 0
  %6448 = vmatpush1.bf16.msra.mxu0 %v6010
  %6449 = vmatprep.subr.bf16.mxu0 0
  %6450 = vmatpush1.bf16.msra.mxu0 %v6011
  %6451 = vmatprep.subr.bf16.mxu0 0
  %6452 = vmatpush1.bf16.msra.mxu0 %v6012
  %6453 = vmatprep.subr.bf16.mxu0 0
  %6454 = vmatpush1.bf16.msra.mxu0 %v6013
  %6455 = vmatprep.mubr.bf16.mxu0 %v4935
  %6456 = vmatmul.mubr.bf16.gmra.mrb[0].mxu0 %v4934
  %v6457 = vpop.f32.mrb[0].mxu0
  %v6458 = vadd.f32 %v6353, %v6457
  %v6459 = vpop.f32.mrb[0].mxu0
  %v6460 = vpop.f32.mrb[0].mxu0
  %v6461 = vadd.f32 %v6356, %v6460
  %v6462 = vpop.f32.mrb[0].mxu0
  %6463 = vmatprep.mubr.bf16.mxu0 %v4956
  %6464 = vmatmul.mubr.bf16.gmra.mrb[0].mxu0 %v4955
  %v6465 = vpop.f32.mrb[0].mxu0
  %v6466 = vadd.f32 %v6361, %v6465
  %v6467 = vpop.f32.mrb[0].mxu0
  %v6468 = vpop.f32.mrb[0].mxu0
  %v6469 = vadd.f32 %v6364, %v6468
  %v6470 = vpop.f32.mrb[0].mxu0
  %6471 = vmatprep.mubr.bf16.mxu0 %v4977
  %6472 = vmatmul.mubr.bf16.gmra.mrb[0].mxu0 %v4976
  %v6473 = vpop.f32.mrb[0].mxu0
  %v6474 = vadd.f32 %v6369, %v6473
  %v6475 = vpop.f32.mrb[0].mxu0
  %v6476 = vpop.f32.mrb[0].mxu0
  %v6477 = vadd.f32 %v6372, %v6476
  %v6478 = vpop.f32.mrb[0].mxu0
  %6479 = vmatprep.mubr.bf16.mxu0 %v4998
  %6480 = vmatmul.mubr.bf16.gmra.mrb[0].mxu0 %v4997
  %v6481 = vpop.f32.mrb[0].mxu0
  %v6482 = vadd.f32 %v6377, %v6481
  %v6483 = vpop.f32.mrb[0].mxu0
  %v6484 = vpop.f32.mrb[0].mxu0
  %v6485 = vadd.f32 %v6380, %v6484
  %v6486 = vpop.f32.mrb[0].mxu0
  %6487 = vmatprep.mubr.bf16.mxu0 %v5019
  %6488 = vmatmul.mubr.bf16.gmra.mrb[0].mxu0 %v5018
  %v6489 = vpop.f32.mrb[0].mxu0
  %v6490 = vadd.f32 %v6385, %v6489
  %v6491 = vpop.f32.mrb[0].mxu0
  %v6492 = vpop.f32.mrb[0].mxu0
  %v6493 = vadd.f32 %v6388, %v6492
  %v6494 = vpop.f32.mrb[0].mxu0
  %6495 = vmatprep.mubr.bf16.mxu0 %v5040
  %6496 = vmatmul.mubr.bf16.gmra.mrb[0].mxu0 %v5039
  %v6497 = vpop.f32.mrb[0].mxu0
  %v6498 = vadd.f32 %v6393, %v6497
  %v6499 = vpop.f32.mrb[0].mxu0
  %v6500 = vpop.f32.mrb[0].mxu0
  %v6501 = vadd.f32 %v6396, %v6500
  %v6502 = vpop.f32.mrb[0].mxu0
  %6503 = vmatprep.mubr.bf16.mxu0 %v5061
  %6504 = vmatmul.mubr.bf16.gmra.mrb[0].mxu0 %v5060
  %v6505 = vpop.f32.mrb[0].mxu0
  %v6506 = vadd.f32 %v6401, %v6505
  %v6507 = vpop.f32.mrb[0].mxu0
  %v6508 = vpop.f32.mrb[0].mxu0
  %v6509 = vadd.f32 %v6404, %v6508
  %v6510 = vpop.f32.mrb[0].mxu0
  %6511 = vmatprep.mubr.bf16.mxu0 %v5082
  %6512 = vmatmul.mubr.bf16.gmra.mrb[0].mxu0 %v5081
  %v6513 = vpop.f32.mrb[0].mxu0
  %v6514 = vadd.f32 %v6409, %v6513
  %v6515 = vpop.f32.mrb[0].mxu0
  %v6516 = vpop.f32.mrb[0].mxu0
  %v6517 = vadd.f32 %v6412, %v6516
  %v6518 = vpop.f32.mrb[0].mxu0
  %6519 = vmatprep.mubr.bf16.mxu0 %v5103
  %6520 = vmatmul.mubr.bf16.gmra.mrb[0].mxu0 %v5102
  %v6521 = vpop.f32.mrb[0].mxu0
  %v6522 = vadd.f32 %v6417, %v6521
  %v6523 = vpop.f32.mrb[0].mxu0
  %v6524 = vpop.f32.mrb[0].mxu0
  %v6525 = vadd.f32 %v6420, %v6524
  %v6526 = vpop.f32.mrb[0].mxu0
  %6527 = vdwg.mxu0
  %6528 = vmatprep.subr.bf16.mxu0 0
  %6529 = vmatpush1.bf16.msra.mxu0 %v6014
  %6530 = vmatprep.subr.bf16.mxu0 0
  %6531 = vmatpush1.bf16.msra.mxu0 %v6015
  %6532 = vmatprep.subr.bf16.mxu0 0
  %6533 = vmatpush1.bf16.msra.mxu0 %v6016
  %6534 = vmatprep.subr.bf16.mxu0 0
  %6535 = vmatpush1.bf16.msra.mxu0 %v6017
  %6536 = vmatprep.subr.bf16.mxu0 0
  %6537 = vmatpush1.bf16.msra.mxu0 %v6018
  %6538 = vmatprep.subr.bf16.mxu0 0
  %6539 = vmatpush1.bf16.msra.mxu0 %v6019
  %6540 = vmatprep.subr.bf16.mxu0 0
  %6541 = vmatpush1.bf16.msra.mxu0 %v6020
  %6542 = vmatprep.subr.bf16.mxu0 0
  %6543 = vmatpush1.bf16.msra.mxu0 %v6021
  %6544 = vmatprep.subr.bf16.mxu0 0
  %6545 = vmatpush1.bf16.msra.mxu0 %v6022
  %6546 = vmatprep.subr.bf16.mxu0 0
  %6547 = vmatpush1.bf16.msra.mxu0 %v6023
  %6548 = vmatprep.subr.bf16.mxu0 0
  %6549 = vmatpush1.bf16.msra.mxu0 %v6024
  %6550 = vmatprep.subr.bf16.mxu0 0
  %6551 = vmatpush1.bf16.msra.mxu0 %v6025
  %6552 = vmatprep.subr.bf16.mxu0 0
  %6553 = vmatpush1.bf16.msra.mxu0 %v6026
  %6554 = vmatprep.subr.bf16.mxu0 0
  %6555 = vmatpush1.bf16.msra.mxu0 %v6027
  %6556 = vmatprep.subr.bf16.mxu0 0
  %6557 = vmatpush1.bf16.msra.mxu0 %v6028
  %6558 = vmatprep.subr.bf16.mxu0 0
  %6559 = vmatpush1.bf16.msra.mxu0 %v6029
  %6560 = vmatprep.mubr.bf16.mxu0 %v4937
  %6561 = vmatmul.mubr.bf16.gmra.mrb[0].mxu0 %v4936
  %v6562 = vpop.f32.mrb[0].mxu0
  %v6563 = vadd.f32 %v6458, %v6562
  %v6564 = vpop.f32.mrb[0].mxu0
  %v6565 = vpop.f32.mrb[0].mxu0
  %v6566 = vadd.f32 %v6461, %v6565
  %v6567 = vpop.f32.mrb[0].mxu0
  %6568 = vmatprep.mubr.bf16.mxu0 %v4958
  %6569 = vmatmul.mubr.bf16.gmra.mrb[0].mxu0 %v4957
  %v6570 = vpop.f32.mrb[0].mxu0
  %v6571 = vadd.f32 %v6466, %v6570
  %v6572 = vpop.f32.mrb[0].mxu0
  %v6573 = vpop.f32.mrb[0].mxu0
  %v6574 = vadd.f32 %v6469, %v6573
  %v6575 = vpop.f32.mrb[0].mxu0
  %6576 = vmatprep.mubr.bf16.mxu0 %v4979
  %6577 = vmatmul.mubr.bf16.gmra.mrb[0].mxu0 %v4978
  %v6578 = vpop.f32.mrb[0].mxu0
  %v6579 = vadd.f32 %v6474, %v6578
  %v6580 = vpop.f32.mrb[0].mxu0
  %v6581 = vpop.f32.mrb[0].mxu0
  %v6582 = vadd.f32 %v6477, %v6581
  %v6583 = vpop.f32.mrb[0].mxu0
  %6584 = vmatprep.mubr.bf16.mxu0 %v5000
  %6585 = vmatmul.mubr.bf16.gmra.mrb[0].mxu0 %v4999
  %v6586 = vpop.f32.mrb[0].mxu0
  %v6587 = vadd.f32 %v6482, %v6586
  %v6588 = vpop.f32.mrb[0].mxu0
  %v6589 = vpop.f32.mrb[0].mxu0
  %v6590 = vadd.f32 %v6485, %v6589
  %v6591 = vpop.f32.mrb[0].mxu0
  %6592 = vmatprep.mubr.bf16.mxu0 %v5021
  %6593 = vmatmul.mubr.bf16.gmra.mrb[0].mxu0 %v5020
  %v6594 = vpop.f32.mrb[0].mxu0
  %v6595 = vadd.f32 %v6490, %v6594
  %v6596 = vpop.f32.mrb[0].mxu0
  %v6597 = vpop.f32.mrb[0].mxu0
  %v6598 = vadd.f32 %v6493, %v6597
  %v6599 = vpop.f32.mrb[0].mxu0
  %6600 = vmatprep.mubr.bf16.mxu0 %v5042
  %6601 = vmatmul.mubr.bf16.gmra.mrb[0].mxu0 %v5041
  %v6602 = vpop.f32.mrb[0].mxu0
  %v6603 = vadd.f32 %v6498, %v6602
  %v6604 = vpop.f32.mrb[0].mxu0
  %v6605 = vpop.f32.mrb[0].mxu0
  %v6606 = vadd.f32 %v6501, %v6605
  %v6607 = vpop.f32.mrb[0].mxu0
  %6608 = vmatprep.mubr.bf16.mxu0 %v5063
  %6609 = vmatmul.mubr.bf16.gmra.mrb[0].mxu0 %v5062
  %v6610 = vpop.f32.mrb[0].mxu0
  %v6611 = vadd.f32 %v6506, %v6610
  %v6612 = vpop.f32.mrb[0].mxu0
  %v6613 = vpop.f32.mrb[0].mxu0
  %v6614 = vadd.f32 %v6509, %v6613
  %v6615 = vpop.f32.mrb[0].mxu0
  %6616 = vmatprep.mubr.bf16.mxu0 %v5084
  %6617 = vmatmul.mubr.bf16.gmra.mrb[0].mxu0 %v5083
  %v6618 = vpop.f32.mrb[0].mxu0
  %v6619 = vadd.f32 %v6514, %v6618
  %v6620 = vpop.f32.mrb[0].mxu0
  %v6621 = vpop.f32.mrb[0].mxu0
  %v6622 = vadd.f32 %v6517, %v6621
  %v6623 = vpop.f32.mrb[0].mxu0
  %6624 = vmatprep.mubr.bf16.mxu0 %v5105
  %6625 = vmatmul.mubr.bf16.gmra.mrb[0].mxu0 %v5104
  %v6626 = vpop.f32.mrb[0].mxu0
  %v6627 = vadd.f32 %v6522, %v6626
  %v6628 = vpop.f32.mrb[0].mxu0
  %v6629 = vpop.f32.mrb[0].mxu0
  %v6630 = vadd.f32 %v6525, %v6629
  %v6631 = vpop.f32.mrb[0].mxu0
  %6632 = vdwg.mxu0
  %6633 = vmatprep.subr.bf16.mxu0 0
  %6634 = vmatpush1.bf16.msra.mxu0 %v6030
  %6635 = vmatprep.subr.bf16.mxu0 0
  %6636 = vmatpush1.bf16.msra.mxu0 %v6031
  %6637 = vmatprep.subr.bf16.mxu0 0
  %6638 = vmatpush1.bf16.msra.mxu0 %v6032
  %6639 = vmatprep.subr.bf16.mxu0 0
  %6640 = vmatpush1.bf16.msra.mxu0 %v6033
  %6641 = vmatprep.subr.bf16.mxu0 0
  %6642 = vmatpush1.bf16.msra.mxu0 %v6034
  %6643 = vmatprep.subr.bf16.mxu0 0
  %6644 = vmatpush1.bf16.msra.mxu0 %v6035
  %6645 = vmatprep.subr.bf16.mxu0 0
  %6646 = vmatpush1.bf16.msra.mxu0 %v6036
  %6647 = vmatprep.subr.bf16.mxu0 0
  %6648 = vmatpush1.bf16.msra.mxu0 %v6037
  %6649 = vmatprep.subr.bf16.mxu0 0
  %6650 = vmatpush1.bf16.msra.mxu0 %v6038
  %6651 = vmatprep.subr.bf16.mxu0 0
  %6652 = vmatpush1.bf16.msra.mxu0 %v6039
  %6653 = vmatprep.subr.bf16.mxu0 0
  %6654 = vmatpush1.bf16.msra.mxu0 %v6040
  %6655 = vmatprep.subr.bf16.mxu0 0
  %6656 = vmatpush1.bf16.msra.mxu0 %v6041
  %6657 = vmatprep.subr.bf16.mxu0 0
  %6658 = vmatpush1.bf16.msra.mxu0 %v6042
  %6659 = vmatprep.subr.bf16.mxu0 0
  %6660 = vmatpush1.bf16.msra.mxu0 %v6043
  %6661 = vmatprep.subr.bf16.mxu0 0
  %6662 = vmatpush1.bf16.msra.mxu0 %v6044
  %6663 = vmatprep.subr.bf16.mxu0 0
  %6664 = vmatpush1.bf16.msra.mxu0 %v6045
  %6665 = vmatprep.mubr.bf16.mxu0 %v4939
  %6666 = vmatmul.mubr.bf16.gmra.mrb[0].mxu0 %v4938
  %v6667 = vpop.f32.mrb[0].mxu0
  %v6668 = vadd.f32 %v6563, %v6667
  %v6669 = vpop.f32.mrb[0].mxu0
  %v6670 = vpop.f32.mrb[0].mxu0
  %v6671 = vadd.f32 %v6566, %v6670
  %v6672 = vpop.f32.mrb[0].mxu0
  %6673 = vmatprep.mubr.bf16.mxu0 %v4960
  %6674 = vmatmul.mubr.bf16.gmra.mrb[0].mxu0 %v4959
  %v6675 = vpop.f32.mrb[0].mxu0
  %v6676 = vadd.f32 %v6571, %v6675
  %v6677 = vpop.f32.mrb[0].mxu0
  %v6678 = vpop.f32.mrb[0].mxu0
  %v6679 = vadd.f32 %v6574, %v6678
  %v6680 = vpop.f32.mrb[0].mxu0
  %6681 = vmatprep.mubr.bf16.mxu0 %v4981
  %6682 = vmatmul.mubr.bf16.gmra.mrb[0].mxu0 %v4980
  %v6683 = vpop.f32.mrb[0].mxu0
  %v6684 = vadd.f32 %v6579, %v6683
  %v6685 = vpop.f32.mrb[0].mxu0
  %v6686 = vpop.f32.mrb[0].mxu0
  %v6687 = vadd.f32 %v6582, %v6686
  %v6688 = vpop.f32.mrb[0].mxu0
  %6689 = vmatprep.mubr.bf16.mxu0 %v5002
  %6690 = vmatmul.mubr.bf16.gmra.mrb[0].mxu0 %v5001
  %v6691 = vpop.f32.mrb[0].mxu0
  %v6692 = vadd.f32 %v6587, %v6691
  %v6693 = vpop.f32.mrb[0].mxu0
  %v6694 = vpop.f32.mrb[0].mxu0
  %v6695 = vadd.f32 %v6590, %v6694
  %v6696 = vpop.f32.mrb[0].mxu0
  %6697 = vmatprep.mubr.bf16.mxu0 %v5023
  %6698 = vmatmul.mubr.bf16.gmra.mrb[0].mxu0 %v5022
  %v6699 = vpop.f32.mrb[0].mxu0
  %v6700 = vadd.f32 %v6595, %v6699
  %v6701 = vpop.f32.mrb[0].mxu0
  %v6702 = vpop.f32.mrb[0].mxu0
  %v6703 = vadd.f32 %v6598, %v6702
  %v6704 = vpop.f32.mrb[0].mxu0
  %6705 = vmatprep.mubr.bf16.mxu0 %v5044
  %6706 = vmatmul.mubr.bf16.gmra.mrb[0].mxu0 %v5043
  %v6707 = vpop.f32.mrb[0].mxu0
  %v6708 = vadd.f32 %v6603, %v6707
  %v6709 = vpop.f32.mrb[0].mxu0
  %v6710 = vpop.f32.mrb[0].mxu0
  %v6711 = vadd.f32 %v6606, %v6710
  %v6712 = vpop.f32.mrb[0].mxu0
  %6713 = vmatprep.mubr.bf16.mxu0 %v5065
  %6714 = vmatmul.mubr.bf16.gmra.mrb[0].mxu0 %v5064
  %v6715 = vpop.f32.mrb[0].mxu0
  %v6716 = vadd.f32 %v6611, %v6715
  %v6717 = vpop.f32.mrb[0].mxu0
  %v6718 = vpop.f32.mrb[0].mxu0
  %v6719 = vadd.f32 %v6614, %v6718
  %v6720 = vpop.f32.mrb[0].mxu0
  %6721 = vmatprep.mubr.bf16.mxu0 %v5086
  %6722 = vmatmul.mubr.bf16.gmra.mrb[0].mxu0 %v5085
  %v6723 = vpop.f32.mrb[0].mxu0
  %v6724 = vadd.f32 %v6619, %v6723
  %v6725 = vpop.f32.mrb[0].mxu0
  %v6726 = vpop.f32.mrb[0].mxu0
  %v6727 = vadd.f32 %v6622, %v6726
  %v6728 = vpop.f32.mrb[0].mxu0
  %6729 = vmatprep.mubr.bf16.mxu0 %v5107
  %6730 = vmatmul.mubr.bf16.gmra.mrb[0].mxu0 %v5106
  %v6731 = vpop.f32.mrb[0].mxu0
  %v6732 = vadd.f32 %v6627, %v6731
  %v6733 = vpop.f32.mrb[0].mxu0
  %v6734 = vpop.f32.mrb[0].mxu0
  %v6735 = vadd.f32 %v6630, %v6734
  %v6736 = vpop.f32.mrb[0].mxu0
  %6737 = vdwg.mxu0
  %6738 = vmatprep.subr.bf16.mxu0 0
  %6739 = vmatpush1.bf16.msra.mxu0 %v6046
  %6740 = vmatprep.subr.bf16.mxu0 0
  %6741 = vmatpush1.bf16.msra.mxu0 %v6047
  %6742 = vmatprep.subr.bf16.mxu0 0
  %6743 = vmatpush1.bf16.msra.mxu0 %v6048
  %6744 = vmatprep.subr.bf16.mxu0 0
  %6745 = vmatpush1.bf16.msra.mxu0 %v6049
  %6746 = vmatprep.subr.bf16.mxu0 0
  %6747 = vmatpush1.bf16.msra.mxu0 %v6050
  %6748 = vmatprep.subr.bf16.mxu0 0
  %6749 = vmatpush1.bf16.msra.mxu0 %v6051
  %6750 = vmatprep.subr.bf16.mxu0 0
  %6751 = vmatpush1.bf16.msra.mxu0 %v6052
  %6752 = vmatprep.subr.bf16.mxu0 0
  %6753 = vmatpush1.bf16.msra.mxu0 %v6053
  %6754 = vmatprep.subr.bf16.mxu0 0
  %6755 = vmatpush1.bf16.msra.mxu0 %v6054
  %6756 = vmatprep.subr.bf16.mxu0 0
  %6757 = vmatpush1.bf16.msra.mxu0 %v6055
  %6758 = vmatprep.subr.bf16.mxu0 0
  %6759 = vmatpush1.bf16.msra.mxu0 %v6056
  %6760 = vmatprep.subr.bf16.mxu0 0
  %6761 = vmatpush1.bf16.msra.mxu0 %v6057
  %6762 = vmatprep.subr.bf16.mxu0 0
  %6763 = vmatpush1.bf16.msra.mxu0 %v6058
  %6764 = vmatprep.subr.bf16.mxu0 0
  %6765 = vmatpush1.bf16.msra.mxu0 %v6059
  %6766 = vmatprep.subr.bf16.mxu0 0
  %6767 = vmatpush1.bf16.msra.mxu0 %v6060
  %6768 = vmatprep.subr.bf16.mxu0 0
  %6769 = vmatpush1.bf16.msra.mxu0 %v6061
  %6770 = vmatprep.mubr.bf16.mxu0 %v4941
  %6771 = vmatmul.mubr.bf16.gmra.mrb[0].mxu0 %v4940
  %v6772 = vpop.f32.mrb[0].mxu0
  %v6773 = vadd.f32 %v6668, %v6772
  %v6774 = vpop.f32.mrb[0].mxu0
  %v6775 = vpop.f32.mrb[0].mxu0
  %v6776 = vadd.f32 %v6671, %v6775
  %v6777 = vpop.f32.mrb[0].mxu0
  %6778 = vmatprep.mubr.bf16.mxu0 %v4962
  %6779 = vmatmul.mubr.bf16.gmra.mrb[0].mxu0 %v4961
  %v6780 = vpop.f32.mrb[0].mxu0
  %v6781 = vadd.f32 %v6676, %v6780
  %v6782 = vpop.f32.mrb[0].mxu0
  %v6783 = vpop.f32.mrb[0].mxu0
  %v6784 = vadd.f32 %v6679, %v6783
  %v6785 = vpop.f32.mrb[0].mxu0
  %6786 = vmatprep.mubr.bf16.mxu0 %v4983
  %6787 = vmatmul.mubr.bf16.gmra.mrb[0].mxu0 %v4982
  %v6788 = vpop.f32.mrb[0].mxu0
  %v6789 = vadd.f32 %v6684, %v6788
  %v6790 = vpop.f32.mrb[0].mxu0
  %v6791 = vpop.f32.mrb[0].mxu0
  %v6792 = vadd.f32 %v6687, %v6791
  %v6793 = vpop.f32.mrb[0].mxu0
  %6794 = vmatprep.mubr.bf16.mxu0 %v5004
  %6795 = vmatmul.mubr.bf16.gmra.mrb[0].mxu0 %v5003
  %v6796 = vpop.f32.mrb[0].mxu0
  %v6797 = vadd.f32 %v6692, %v6796
  %v6798 = vpop.f32.mrb[0].mxu0
  %v6799 = vpop.f32.mrb[0].mxu0
  %v6800 = vadd.f32 %v6695, %v6799
  %v6801 = vpop.f32.mrb[0].mxu0
  %6802 = vmatprep.mubr.bf16.mxu0 %v5025
  %6803 = vmatmul.mubr.bf16.gmra.mrb[0].mxu0 %v5024
  %v6804 = vpop.f32.mrb[0].mxu0
  %v6805 = vadd.f32 %v6700, %v6804
  %v6806 = vpop.f32.mrb[0].mxu0
  %v6807 = vpop.f32.mrb[0].mxu0
  %v6808 = vadd.f32 %v6703, %v6807
  %v6809 = vpop.f32.mrb[0].mxu0
  %6810 = vmatprep.mubr.bf16.mxu0 %v5046
  %6811 = vmatmul.mubr.bf16.gmra.mrb[0].mxu0 %v5045
  %v6812 = vpop.f32.mrb[0].mxu0
  %v6813 = vadd.f32 %v6708, %v6812
  %v6814 = vpop.f32.mrb[0].mxu0
  %v6815 = vpop.f32.mrb[0].mxu0
  %v6816 = vadd.f32 %v6711, %v6815
  %v6817 = vpop.f32.mrb[0].mxu0
  %6818 = vmatprep.mubr.bf16.mxu0 %v5067
  %6819 = vmatmul.mubr.bf16.gmra.mrb[0].mxu0 %v5066
  %v6820 = vpop.f32.mrb[0].mxu0
  %v6821 = vadd.f32 %v6716, %v6820
  %v6822 = vpop.f32.mrb[0].mxu0
  %v6823 = vpop.f32.mrb[0].mxu0
  %v6824 = vadd.f32 %v6719, %v6823
  %v6825 = vpop.f32.mrb[0].mxu0
  %6826 = vmatprep.mubr.bf16.mxu0 %v5088
  %6827 = vmatmul.mubr.bf16.gmra.mrb[0].mxu0 %v5087
  %v6828 = vpop.f32.mrb[0].mxu0
  %v6829 = vadd.f32 %v6724, %v6828
  %v6830 = vpop.f32.mrb[0].mxu0
  %v6831 = vpop.f32.mrb[0].mxu0
  %v6832 = vadd.f32 %v6727, %v6831
  %v6833 = vpop.f32.mrb[0].mxu0
  %6834 = vmatprep.mubr.bf16.mxu0 %v5109
  %6835 = vmatmul.mubr.bf16.gmra.mrb[0].mxu0 %v5108
  %v6836 = vpop.f32.mrb[0].mxu0
  %v6837 = vadd.f32 %v6732, %v6836
  %v6838 = vpop.f32.mrb[0].mxu0
  %v6839 = vpop.f32.mrb[0].mxu0
  %v6840 = vadd.f32 %v6735, %v6839
  %v6841 = vpop.f32.mrb[0].mxu0
  %6842 = vdwg.mxu0
  %6843 = vmatprep.subr.bf16.mxu0 0
  %6844 = vmatpush1.bf16.msra.mxu0 %v6062
  %6845 = vmatprep.subr.bf16.mxu0 0
  %6846 = vmatpush1.bf16.msra.mxu0 %v6063
  %6847 = vmatprep.subr.bf16.mxu0 0
  %6848 = vmatpush1.bf16.msra.mxu0 %v6064
  %6849 = vmatprep.subr.bf16.mxu0 0
  %6850 = vmatpush1.bf16.msra.mxu0 %v6065
  %6851 = vmatprep.subr.bf16.mxu0 0
  %6852 = vmatpush1.bf16.msra.mxu0 %v6066
  %6853 = vmatprep.subr.bf16.mxu0 0
  %6854 = vmatpush1.bf16.msra.mxu0 %v6067
  %6855 = vmatprep.subr.bf16.mxu0 0
  %6856 = vmatpush1.bf16.msra.mxu0 %v6068
  %6857 = vmatprep.subr.bf16.mxu0 0
  %6858 = vmatpush1.bf16.msra.mxu0 %v6069
  %6859 = vmatprep.subr.bf16.mxu0 0
  %6860 = vmatpush1.bf16.msra.mxu0 %v6070
  %6861 = vmatprep.subr.bf16.mxu0 0
  %6862 = vmatpush1.bf16.msra.mxu0 %v6071
  %6863 = vmatprep.subr.bf16.mxu0 0
  %6864 = vmatpush1.bf16.msra.mxu0 %v6072
  %6865 = vmatprep.subr.bf16.mxu0 0
  %6866 = vmatpush1.bf16.msra.mxu0 %v6073
  %6867 = vmatprep.subr.bf16.mxu0 0
  %6868 = vmatpush1.bf16.msra.mxu0 %v6074
  %6869 = vmatprep.subr.bf16.mxu0 0
  %6870 = vmatpush1.bf16.msra.mxu0 %v6075
  %6871 = vmatprep.subr.bf16.mxu0 0
  %6872 = vmatpush1.bf16.msra.mxu0 %v6076
  %6873 = vmatprep.subr.bf16.mxu0 0
  %6874 = vmatpush1.bf16.msra.mxu0 %v6077
  %6875 = vmatprep.mubr.bf16.mxu0 %v4943
  %6876 = vmatmul.mubr.bf16.gmra.mrb[0].mxu0 %v4942
  %v6877 = vpop.f32.mrb[0].mxu0
  %v6878 = vadd.f32 %v6773, %v6877
  %v6879 = vpop.f32.mrb[0].mxu0
  %v6880 = vpop.f32.mrb[0].mxu0
  %v6881 = vadd.f32 %v6776, %v6880
  %v6882 = vpop.f32.mrb[0].mxu0
  %6883 = vmatprep.mubr.bf16.mxu0 %v4964
  %6884 = vmatmul.mubr.bf16.gmra.mrb[0].mxu0 %v4963
  %v6885 = vpop.f32.mrb[0].mxu0
  %v6886 = vadd.f32 %v6781, %v6885
  %v6887 = vpop.f32.mrb[0].mxu0
  %v6888 = vpop.f32.mrb[0].mxu0
  %v6889 = vadd.f32 %v6784, %v6888
  %v6890 = vpop.f32.mrb[0].mxu0
  %6891 = vmatprep.mubr.bf16.mxu0 %v4985
  %6892 = vmatmul.mubr.bf16.gmra.mrb[0].mxu0 %v4984
  %v6893 = vpop.f32.mrb[0].mxu0
  %v6894 = vadd.f32 %v6789, %v6893
  %v6895 = vpop.f32.mrb[0].mxu0
  %v6896 = vpop.f32.mrb[0].mxu0
  %v6897 = vadd.f32 %v6792, %v6896
  %v6898 = vpop.f32.mrb[0].mxu0
  %6899 = vmatprep.mubr.bf16.mxu0 %v5006
  %6900 = vmatmul.mubr.bf16.gmra.mrb[0].mxu0 %v5005
  %v6901 = vpop.f32.mrb[0].mxu0
  %v6902 = vadd.f32 %v6797, %v6901
  %v6903 = vpop.f32.mrb[0].mxu0
  %v6904 = vpop.f32.mrb[0].mxu0
  %v6905 = vadd.f32 %v6800, %v6904
  %v6906 = vpop.f32.mrb[0].mxu0
  %6907 = vmatprep.mubr.bf16.mxu0 %v5027
  %6908 = vmatmul.mubr.bf16.gmra.mrb[0].mxu0 %v5026
  %v6909 = vpop.f32.mrb[0].mxu0
  %v6910 = vadd.f32 %v6805, %v6909
  %v6911 = vpop.f32.mrb[0].mxu0
  %v6912 = vpop.f32.mrb[0].mxu0
  %v6913 = vadd.f32 %v6808, %v6912
  %v6914 = vpop.f32.mrb[0].mxu0
  %6915 = vmatprep.mubr.bf16.mxu0 %v5048
  %6916 = vmatmul.mubr.bf16.gmra.mrb[0].mxu0 %v5047
  %v6917 = vpop.f32.mrb[0].mxu0
  %v6918 = vadd.f32 %v6813, %v6917
  %v6919 = vpop.f32.mrb[0].mxu0
  %v6920 = vpop.f32.mrb[0].mxu0
  %v6921 = vadd.f32 %v6816, %v6920
  %v6922 = vpop.f32.mrb[0].mxu0
  %6923 = vmatprep.mubr.bf16.mxu0 %v5069
  %6924 = vmatmul.mubr.bf16.gmra.mrb[0].mxu0 %v5068
  %v6925 = vpop.f32.mrb[0].mxu0
  %v6926 = vadd.f32 %v6821, %v6925
  %v6927 = vpop.f32.mrb[0].mxu0
  %v6928 = vpop.f32.mrb[0].mxu0
  %v6929 = vadd.f32 %v6824, %v6928
  %v6930 = vpop.f32.mrb[0].mxu0
  %6931 = vmatprep.mubr.bf16.mxu0 %v5090
  %6932 = vmatmul.mubr.bf16.gmra.mrb[0].mxu0 %v5089
  %v6933 = vpop.f32.mrb[0].mxu0
  %v6934 = vadd.f32 %v6829, %v6933
  %v6935 = vpop.f32.mrb[0].mxu0
  %v6936 = vpop.f32.mrb[0].mxu0
  %v6937 = vadd.f32 %v6832, %v6936
  %v6938 = vpop.f32.mrb[0].mxu0
  %6939 = vmatprep.mubr.bf16.mxu0 %v5111
  %6940 = vmatmul.mubr.bf16.gmra.mrb[0].mxu0 %v5110
  %v6941 = vpop.f32.mrb[0].mxu0
  %v6942 = vadd.f32 %v6837, %v6941
  %v6943 = vpop.f32.mrb[0].mxu0
  %v6944 = vpop.f32.mrb[0].mxu0
  %v6945 = vadd.f32 %v6840, %v6944
  %v6946 = vpop.f32.mrb[0].mxu0
  %6947 = vdwg.mxu0
  %6948 = vmatprep.subr.bf16.mxu0 0
  %6949 = vmatpush1.bf16.msra.mxu0 %v6078
  %6950 = vmatprep.subr.bf16.mxu0 0
  %6951 = vmatpush1.bf16.msra.mxu0 %v6079
  %6952 = vmatprep.subr.bf16.mxu0 0
  %6953 = vmatpush1.bf16.msra.mxu0 %v6080
  %6954 = vmatprep.subr.bf16.mxu0 0
  %6955 = vmatpush1.bf16.msra.mxu0 %v6081
  %6956 = vmatprep.subr.bf16.mxu0 0
  %6957 = vmatpush1.bf16.msra.mxu0 %v6082
  %6958 = vmatprep.subr.bf16.mxu0 0
  %6959 = vmatpush1.bf16.msra.mxu0 %v6083
  %6960 = vmatprep.subr.bf16.mxu0 0
  %6961 = vmatpush1.bf16.msra.mxu0 %v6084
  %6962 = vmatprep.subr.bf16.mxu0 0
  %6963 = vmatpush1.bf16.msra.mxu0 %v6085
  %6964 = vmatprep.subr.bf16.mxu0 0
  %6965 = vmatpush1.bf16.msra.mxu0 %v6086
  %6966 = vmatprep.subr.bf16.mxu0 0
  %6967 = vmatpush1.bf16.msra.mxu0 %v6087
  %6968 = vmatprep.subr.bf16.mxu0 0
  %6969 = vmatpush1.bf16.msra.mxu0 %v6088
  %6970 = vmatprep.subr.bf16.mxu0 0
  %6971 = vmatpush1.bf16.msra.mxu0 %v6089
  %6972 = vmatprep.subr.bf16.mxu0 0
  %6973 = vmatpush1.bf16.msra.mxu0 %v6090
  %6974 = vmatprep.subr.bf16.mxu0 0
  %6975 = vmatpush1.bf16.msra.mxu0 %v6091
  %6976 = vmatprep.subr.bf16.mxu0 0
  %6977 = vmatpush1.bf16.msra.mxu0 %v6092
  %6978 = vmatprep.subr.bf16.mxu0 0
  %6979 = vmatpush1.bf16.msra.mxu0 %v6093
  %6980 = vmatprep.mubr.bf16.mxu0 %v4945
  %6981 = vmatmul.mubr.bf16.gmra.mrb[0].mxu0 %v4944
  %v6982 = vpop.f32.mrb[0].mxu0
  %v6983 = vadd.f32 %v6878, %v6982
  %v6984 = vpop.f32.mrb[0].mxu0
  %v6985 = vpop.f32.mrb[0].mxu0
  %v6986 = vadd.f32 %v6881, %v6985
  %v6987 = vpop.f32.mrb[0].mxu0
  %6988 = vmatprep.mubr.bf16.mxu0 %v4966
  %6989 = vmatmul.mubr.bf16.gmra.mrb[0].mxu0 %v4965
  %v6990 = vpop.f32.mrb[0].mxu0
  %v6991 = vadd.f32 %v6886, %v6990
  %v6992 = vpop.f32.mrb[0].mxu0
  %v6993 = vpop.f32.mrb[0].mxu0
  %v6994 = vadd.f32 %v6889, %v6993
  %v6995 = vpop.f32.mrb[0].mxu0
  %6996 = vmatprep.mubr.bf16.mxu0 %v4987
  %6997 = vmatmul.mubr.bf16.gmra.mrb[0].mxu0 %v4986
  %v6998 = vpop.f32.mrb[0].mxu0
  %v6999 = vadd.f32 %v6894, %v6998
  %v7000 = vpop.f32.mrb[0].mxu0
  %v7001 = vpop.f32.mrb[0].mxu0
  %v7002 = vadd.f32 %v6897, %v7001
  %v7003 = vpop.f32.mrb[0].mxu0
  %7004 = vmatprep.mubr.bf16.mxu0 %v5008
  %7005 = vmatmul.mubr.bf16.gmra.mrb[0].mxu0 %v5007
  %v7006 = vpop.f32.mrb[0].mxu0
  %v7007 = vadd.f32 %v6902, %v7006
  %v7008 = vpop.f32.mrb[0].mxu0
  %v7009 = vpop.f32.mrb[0].mxu0
  %v7010 = vadd.f32 %v6905, %v7009
  %v7011 = vpop.f32.mrb[0].mxu0
  %7012 = vmatprep.mubr.bf16.mxu0 %v5029
  %7013 = vmatmul.mubr.bf16.gmra.mrb[0].mxu0 %v5028
  %v7014 = vpop.f32.mrb[0].mxu0
  %v7015 = vadd.f32 %v6910, %v7014
  %v7016 = vpop.f32.mrb[0].mxu0
  %v7017 = vpop.f32.mrb[0].mxu0
  %v7018 = vadd.f32 %v6913, %v7017
  %v7019 = vpop.f32.mrb[0].mxu0
  %7020 = vmatprep.mubr.bf16.mxu0 %v5050
  %7021 = vmatmul.mubr.bf16.gmra.mrb[0].mxu0 %v5049
  %v7022 = vpop.f32.mrb[0].mxu0
  %v7023 = vadd.f32 %v6918, %v7022
  %v7024 = vpop.f32.mrb[0].mxu0
  %v7025 = vpop.f32.mrb[0].mxu0
  %v7026 = vadd.f32 %v6921, %v7025
  %v7027 = vpop.f32.mrb[0].mxu0
  %7028 = vmatprep.mubr.bf16.mxu0 %v5071
  %7029 = vmatmul.mubr.bf16.gmra.mrb[0].mxu0 %v5070
  %v7030 = vpop.f32.mrb[0].mxu0
  %v7031 = vadd.f32 %v6926, %v7030
  %v7032 = vpop.f32.mrb[0].mxu0
  %v7033 = vpop.f32.mrb[0].mxu0
  %v7034 = vadd.f32 %v6929, %v7033
  %v7035 = vpop.f32.mrb[0].mxu0
  %7036 = vmatprep.mubr.bf16.mxu0 %v5092
  %7037 = vmatmul.mubr.bf16.gmra.mrb[0].mxu0 %v5091
  %v7038 = vpop.f32.mrb[0].mxu0
  %v7039 = vadd.f32 %v6934, %v7038
  %v7040 = vpop.f32.mrb[0].mxu0
  %v7041 = vpop.f32.mrb[0].mxu0
  %v7042 = vadd.f32 %v6937, %v7041
  %v7043 = vpop.f32.mrb[0].mxu0
  %7044 = vmatprep.mubr.bf16.mxu0 %v5113
  %7045 = vmatmul.mubr.bf16.gmra.mrb[0].mxu0 %v5112
  %v7046 = vpop.f32.mrb[0].mxu0
  %v7047 = vadd.f32 %v6942, %v7046
  %v7048 = vpop.f32.mrb[0].mxu0
  %v7049 = vpop.f32.mrb[0].mxu0
  %v7050 = vadd.f32 %v6945, %v7049
  %v7051 = vpop.f32.mrb[0].mxu0
  %7052 = vdwg.mxu0
  %7053 = vmatprep.subr.bf16.mxu0 0
  %7054 = vmatpush1.bf16.msra.mxu0 %v6094
  %7055 = vmatprep.subr.bf16.mxu0 0
  %7056 = vmatpush1.bf16.msra.mxu0 %v6095
  %7057 = vmatprep.subr.bf16.mxu0 0
  %7058 = vmatpush1.bf16.msra.mxu0 %v6096
  %7059 = vmatprep.subr.bf16.mxu0 0
  %7060 = vmatpush1.bf16.msra.mxu0 %v6097
  %7061 = vmatprep.subr.bf16.mxu0 0
  %7062 = vmatpush1.bf16.msra.mxu0 %v6098
  %7063 = vmatprep.subr.bf16.mxu0 0
  %7064 = vmatpush1.bf16.msra.mxu0 %v6099
  %7065 = vmatprep.subr.bf16.mxu0 0
  %7066 = vmatpush1.bf16.msra.mxu0 %v6100
  %7067 = vmatprep.subr.bf16.mxu0 0
  %7068 = vmatpush1.bf16.msra.mxu0 %v6101
  %7069 = vmatprep.subr.bf16.mxu0 0
  %7070 = vmatpush1.bf16.msra.mxu0 %v6102
  %7071 = vmatprep.subr.bf16.mxu0 0
  %7072 = vmatpush1.bf16.msra.mxu0 %v6103
  %7073 = vmatprep.subr.bf16.mxu0 0
  %7074 = vmatpush1.bf16.msra.mxu0 %v6104
  %7075 = vmatprep.subr.bf16.mxu0 0
  %7076 = vmatpush1.bf16.msra.mxu0 %v6105
  %7077 = vmatprep.subr.bf16.mxu0 0
  %7078 = vmatpush1.bf16.msra.mxu0 %v6106
  %7079 = vmatprep.subr.bf16.mxu0 0
  %7080 = vmatpush1.bf16.msra.mxu0 %v6107
  %7081 = vmatprep.subr.bf16.mxu0 0
  %7082 = vmatpush1.bf16.msra.mxu0 %v6108
  %7083 = vmatprep.subr.bf16.mxu0 0
  %7084 = vmatpush1.bf16.msra.mxu0 %v6109
  %7085 = vmatprep.mubr.bf16.mxu0 %v4947
  %7086 = vmatmul.mubr.bf16.gmra.mrb[0].mxu0 %v4946
  %v7087 = vpop.f32.mrb[0].mxu0
  %v7088 = vadd.f32 %v6983, %v7087
  %v7089 = vpop.f32.mrb[0].mxu0
  %v7090 = vpop.f32.mrb[0].mxu0
  %v7091 = vadd.f32 %v6986, %v7090
  %v7092 = vpop.f32.mrb[0].mxu0
  %7093 = vmatprep.mubr.bf16.mxu0 %v4968
  %7094 = vmatmul.mubr.bf16.gmra.mrb[0].mxu0 %v4967
  %v7095 = vpop.f32.mrb[0].mxu0
  %v7096 = vadd.f32 %v6991, %v7095
  %v7097 = vpop.f32.mrb[0].mxu0
  %v7098 = vpop.f32.mrb[0].mxu0
  %v7099 = vadd.f32 %v6994, %v7098
  %v7100 = vpop.f32.mrb[0].mxu0
  %7101 = vmatprep.mubr.bf16.mxu0 %v4989
  %7102 = vmatmul.mubr.bf16.gmra.mrb[0].mxu0 %v4988
  %v7103 = vpop.f32.mrb[0].mxu0
  %v7104 = vadd.f32 %v6999, %v7103
  %v7105 = vpop.f32.mrb[0].mxu0
  %v7106 = vpop.f32.mrb[0].mxu0
  %v7107 = vadd.f32 %v7002, %v7106
  %v7108 = vpop.f32.mrb[0].mxu0
  %7109 = vmatprep.mubr.bf16.mxu0 %v5010
  %7110 = vmatmul.mubr.bf16.gmra.mrb[0].mxu0 %v5009
  %v7111 = vpop.f32.mrb[0].mxu0
  %v7112 = vadd.f32 %v7007, %v7111
  %v7113 = vpop.f32.mrb[0].mxu0
  %v7114 = vpop.f32.mrb[0].mxu0
  %v7115 = vadd.f32 %v7010, %v7114
  %v7116 = vpop.f32.mrb[0].mxu0
  %7117 = vmatprep.mubr.bf16.mxu0 %v5031
  %7118 = vmatmul.mubr.bf16.gmra.mrb[0].mxu0 %v5030
  %v7119 = vpop.f32.mrb[0].mxu0
  %v7120 = vadd.f32 %v7015, %v7119
  %v7121 = vpop.f32.mrb[0].mxu0
  %v7122 = vpop.f32.mrb[0].mxu0
  %v7123 = vadd.f32 %v7018, %v7122
  %v7124 = vpop.f32.mrb[0].mxu0
  %7125 = vmatprep.mubr.bf16.mxu0 %v5052
  %7126 = vmatmul.mubr.bf16.gmra.mrb[0].mxu0 %v5051
  %v7127 = vpop.f32.mrb[0].mxu0
  %v7128 = vadd.f32 %v7023, %v7127
  %v7129 = vpop.f32.mrb[0].mxu0
  %v7130 = vpop.f32.mrb[0].mxu0
  %v7131 = vadd.f32 %v7026, %v7130
  %v7132 = vpop.f32.mrb[0].mxu0
  %7133 = vmatprep.mubr.bf16.mxu0 %v5073
  %7134 = vmatmul.mubr.bf16.gmra.mrb[0].mxu0 %v5072
  %v7135 = vpop.f32.mrb[0].mxu0
  %v7136 = vadd.f32 %v7031, %v7135
  %v7137 = vpop.f32.mrb[0].mxu0
  %v7138 = vpop.f32.mrb[0].mxu0
  %v7139 = vadd.f32 %v7034, %v7138
  %v7140 = vpop.f32.mrb[0].mxu0
  %7141 = vmatprep.mubr.bf16.mxu0 %v5094
  %7142 = vmatmul.mubr.bf16.gmra.mrb[0].mxu0 %v5093
  %v7143 = vpop.f32.mrb[0].mxu0
  %v7144 = vadd.f32 %v7039, %v7143
  %v7145 = vpop.f32.mrb[0].mxu0
  %v7146 = vpop.f32.mrb[0].mxu0
  %v7147 = vadd.f32 %v7042, %v7146
  %v7148 = vpop.f32.mrb[0].mxu0
  %7149 = vmatprep.mubr.bf16.mxu0 %v5115
  %7150 = vmatmul.mubr.bf16.gmra.mrb[0].mxu0 %v5114
  %v7151 = vpop.f32.mrb[0].mxu0
  %v7152 = vadd.f32 %v7047, %v7151
  %v7153 = vpop.f32.mrb[0].mxu0
  %v7154 = vpop.f32.mrb[0].mxu0
  %v7155 = vadd.f32 %v7050, %v7154
  %v7156 = vpop.f32.mrb[0].mxu0
  %7157 = vdwg.mxu0
  %7158 = vmatprep.subr.bf16.mxu0 0
  %7159 = vmatpush1.bf16.msra.mxu0 %v6110
  %7160 = vmatprep.subr.bf16.mxu0 0
  %7161 = vmatpush1.bf16.msra.mxu0 %v6111
  %7162 = vmatprep.subr.bf16.mxu0 0
  %7163 = vmatpush1.bf16.msra.mxu0 %v6112
  %7164 = vmatprep.subr.bf16.mxu0 0
  %7165 = vmatpush1.bf16.msra.mxu0 %v6113
  %7166 = vmatprep.subr.bf16.mxu0 0
  %7167 = vmatpush1.bf16.msra.mxu0 %v6114
  %7168 = vmatprep.subr.bf16.mxu0 0
  %7169 = vmatpush1.bf16.msra.mxu0 %v6115
  %7170 = vmatprep.subr.bf16.mxu0 0
  %7171 = vmatpush1.bf16.msra.mxu0 %v6116
  %7172 = vmatprep.subr.bf16.mxu0 0
  %7173 = vmatpush1.bf16.msra.mxu0 %v6117
  %7174 = vmatprep.subr.bf16.mxu0 0
  %7175 = vmatpush1.bf16.msra.mxu0 %v6118
  %7176 = vmatprep.subr.bf16.mxu0 0
  %7177 = vmatpush1.bf16.msra.mxu0 %v6119
  %7178 = vmatprep.subr.bf16.mxu0 0
  %7179 = vmatpush1.bf16.msra.mxu0 %v6120
  %7180 = vmatprep.subr.bf16.mxu0 0
  %7181 = vmatpush1.bf16.msra.mxu0 %v6121
  %7182 = vmatprep.subr.bf16.mxu0 0
  %7183 = vmatpush1.bf16.msra.mxu0 %v6122
  %7184 = vmatprep.subr.bf16.mxu0 0
  %7185 = vmatpush1.bf16.msra.mxu0 %v6123
  %7186 = vmatprep.subr.bf16.mxu0 0
  %7187 = vmatpush1.bf16.msra.mxu0 %v6124
  %7188 = vmatprep.subr.bf16.mxu0 0
  %7189 = vmatpush1.bf16.msra.mxu0 %v6125
  %7190 = vmatprep.mubr.bf16.mxu0 %v4949
  %7191 = vmatmul.mubr.bf16.gmra.mrb[0].mxu0 %v4948
  %v7192 = vpop.f32.mrb[0].mxu0
  %v7193 = vadd.f32 %v7088, %v7192
  %v7194 = vpop.f32.mrb[0].mxu0
  %v7195 = vpop.f32.mrb[0].mxu0
  %v7196 = vadd.f32 %v7091, %v7195
  %v7197 = vpop.f32.mrb[0].mxu0
  %7198 = vmatprep.mubr.bf16.mxu0 %v4970
  %7199 = vmatmul.mubr.bf16.gmra.mrb[0].mxu0 %v4969
  %v7200 = vpop.f32.mrb[0].mxu0
  %v7201 = vadd.f32 %v7096, %v7200
  %v7202 = vpop.f32.mrb[0].mxu0
  %v7203 = vpop.f32.mrb[0].mxu0
  %v7204 = vadd.f32 %v7099, %v7203
  %v7205 = vpop.f32.mrb[0].mxu0
  %7206 = vmatprep.mubr.bf16.mxu0 %v4991
  %7207 = vmatmul.mubr.bf16.gmra.mrb[0].mxu0 %v4990
  %v7208 = vpop.f32.mrb[0].mxu0
  %v7209 = vadd.f32 %v7104, %v7208
  %v7210 = vpop.f32.mrb[0].mxu0
  %v7211 = vpop.f32.mrb[0].mxu0
  %v7212 = vadd.f32 %v7107, %v7211
  %v7213 = vpop.f32.mrb[0].mxu0
  %7214 = vmatprep.mubr.bf16.mxu0 %v5012
  %7215 = vmatmul.mubr.bf16.gmra.mrb[0].mxu0 %v5011
  %v7216 = vpop.f32.mrb[0].mxu0
  %v7217 = vadd.f32 %v7112, %v7216
  %v7218 = vpop.f32.mrb[0].mxu0
  %v7219 = vpop.f32.mrb[0].mxu0
  %v7220 = vadd.f32 %v7115, %v7219
  %v7221 = vpop.f32.mrb[0].mxu0
  %7222 = vmatprep.mubr.bf16.mxu0 %v5033
  %7223 = vmatmul.mubr.bf16.gmra.mrb[0].mxu0 %v5032
  %v7224 = vpop.f32.mrb[0].mxu0
  %v7225 = vadd.f32 %v7120, %v7224
  %v7226 = vpop.f32.mrb[0].mxu0
  %v7227 = vpop.f32.mrb[0].mxu0
  %v7228 = vadd.f32 %v7123, %v7227
  %v7229 = vpop.f32.mrb[0].mxu0
  %7230 = vmatprep.mubr.bf16.mxu0 %v5054
  %7231 = vmatmul.mubr.bf16.gmra.mrb[0].mxu0 %v5053
  %v7232 = vpop.f32.mrb[0].mxu0
  %v7233 = vadd.f32 %v7128, %v7232
  %v7234 = vpop.f32.mrb[0].mxu0
  %v7235 = vpop.f32.mrb[0].mxu0
  %v7236 = vadd.f32 %v7131, %v7235
  %v7237 = vpop.f32.mrb[0].mxu0
  %7238 = vmatprep.mubr.bf16.mxu0 %v5075
  %7239 = vmatmul.mubr.bf16.gmra.mrb[0].mxu0 %v5074
  %v7240 = vpop.f32.mrb[0].mxu0
  %v7241 = vadd.f32 %v7136, %v7240
  %v7242 = vpop.f32.mrb[0].mxu0
  %v7243 = vpop.f32.mrb[0].mxu0
  %v7244 = vadd.f32 %v7139, %v7243
  %v7245 = vpop.f32.mrb[0].mxu0
  %7246 = vmatprep.mubr.bf16.mxu0 %v5096
  %7247 = vmatmul.mubr.bf16.gmra.mrb[0].mxu0 %v5095
  %v7248 = vpop.f32.mrb[0].mxu0
  %v7249 = vadd.f32 %v7144, %v7248
  %v7250 = vpop.f32.mrb[0].mxu0
  %v7251 = vpop.f32.mrb[0].mxu0
  %v7252 = vadd.f32 %v7147, %v7251
  %v7253 = vpop.f32.mrb[0].mxu0
  %7254 = vmatprep.mubr.bf16.mxu0 %v5117
  %7255 = vmatmul.mubr.bf16.gmra.mrb[0].mxu0 %v5116
  %v7256 = vpop.f32.mrb[0].mxu0
  %v7257 = vadd.f32 %v7152, %v7256
  %v7258 = vpop.f32.mrb[0].mxu0
  %v7259 = vpop.f32.mrb[0].mxu0
  %v7260 = vadd.f32 %v7155, %v7259
  %v7261 = vpop.f32.mrb[0].mxu0
  %7262 = vdwg.mxu0
  %7263 = vmatprep.subr.bf16.mxu0 0
  %7264 = vmatpush1.bf16.msra.mxu0 %v6126
  %7265 = vmatprep.subr.bf16.mxu0 0
  %7266 = vmatpush1.bf16.msra.mxu0 %v6127
  %7267 = vmatprep.subr.bf16.mxu0 0
  %7268 = vmatpush1.bf16.msra.mxu0 %v6128
  %7269 = vmatprep.subr.bf16.mxu0 0
  %7270 = vmatpush1.bf16.msra.mxu0 %v6129
  %7271 = vmatprep.subr.bf16.mxu0 0
  %7272 = vmatpush1.bf16.msra.mxu0 %v6130
  %7273 = vmatprep.subr.bf16.mxu0 0
  %7274 = vmatpush1.bf16.msra.mxu0 %v6131
  %7275 = vmatprep.subr.bf16.mxu0 0
  %7276 = vmatpush1.bf16.msra.mxu0 %v6132
  %7277 = vmatprep.subr.bf16.mxu0 0
  %7278 = vmatpush1.bf16.msra.mxu0 %v6133
  %7279 = vmatprep.subr.bf16.mxu0 0
  %7280 = vmatpush1.bf16.msra.mxu0 %v6134
  %7281 = vmatprep.subr.bf16.mxu0 0
  %7282 = vmatpush1.bf16.msra.mxu0 %v6135
  %7283 = vmatprep.subr.bf16.mxu0 0
  %7284 = vmatpush1.bf16.msra.mxu0 %v6136
  %7285 = vmatprep.subr.bf16.mxu0 0
  %7286 = vmatpush1.bf16.msra.mxu0 %v6137
  %7287 = vmatprep.subr.bf16.mxu0 0
  %7288 = vmatpush1.bf16.msra.mxu0 %v6138
  %7289 = vmatprep.subr.bf16.mxu0 0
  %7290 = vmatpush1.bf16.msra.mxu0 %v6139
  %7291 = vmatprep.subr.bf16.mxu0 0
  %7292 = vmatpush1.bf16.msra.mxu0 %v6140
  %7293 = vmatprep.subr.bf16.mxu0 0
  %7294 = vmatpush1.bf16.msra.mxu0 %v6141
  %7295 = vmatprep.mubr.bf16.mxu0 %v4951
  %7296 = vmatmul.mubr.bf16.gmra.mrb[0].mxu0 %v4950
  %v7297 = vpop.f32.mrb[0].mxu0
  %v7298 = vadd.f32 %v7193, %v7297
  %v7299 = vpop.f32.mrb[0].mxu0
  %v7300 = vpop.f32.mrb[0].mxu0
  %v7301 = vadd.f32 %v7196, %v7300
  %v7302 = vpop.f32.mrb[0].mxu0
  %7303 = vmatprep.mubr.bf16.mxu0 %v4972
  %7304 = vmatmul.mubr.bf16.gmra.mrb[0].mxu0 %v4971
  %v7305 = vpop.f32.mrb[0].mxu0
  %v7306 = vadd.f32 %v7201, %v7305
  %v7307 = vpop.f32.mrb[0].mxu0
  %v7308 = vpop.f32.mrb[0].mxu0
  %v7309 = vadd.f32 %v7204, %v7308
  %v7310 = vpop.f32.mrb[0].mxu0
  %7311 = vmatprep.mubr.bf16.mxu0 %v4993
  %7312 = vmatmul.mubr.bf16.gmra.mrb[0].mxu0 %v4992
  %v7313 = vpop.f32.mrb[0].mxu0
  %v7314 = vadd.f32 %v7209, %v7313
  %v7315 = vpop.f32.mrb[0].mxu0
  %v7316 = vpop.f32.mrb[0].mxu0
  %v7317 = vadd.f32 %v7212, %v7316
  %v7318 = vpop.f32.mrb[0].mxu0
  %7319 = vmatprep.mubr.bf16.mxu0 %v5014
  %7320 = vmatmul.mubr.bf16.gmra.mrb[0].mxu0 %v5013
  %v7321 = vpop.f32.mrb[0].mxu0
  %v7322 = vadd.f32 %v7217, %v7321
  %v7323 = vpop.f32.mrb[0].mxu0
  %v7324 = vpop.f32.mrb[0].mxu0
  %v7325 = vadd.f32 %v7220, %v7324
  %v7326 = vpop.f32.mrb[0].mxu0
  %7327 = vmatprep.mubr.bf16.mxu0 %v5035
  %7328 = vmatmul.mubr.bf16.gmra.mrb[0].mxu0 %v5034
  %v7329 = vpop.f32.mrb[0].mxu0
  %v7330 = vadd.f32 %v7225, %v7329
  %v7331 = vpop.f32.mrb[0].mxu0
  %v7332 = vpop.f32.mrb[0].mxu0
  %v7333 = vadd.f32 %v7228, %v7332
  %v7334 = vpop.f32.mrb[0].mxu0
  %7335 = vmatprep.mubr.bf16.mxu0 %v5056
  %7336 = vmatmul.mubr.bf16.gmra.mrb[0].mxu0 %v5055
  %v7337 = vpop.f32.mrb[0].mxu0
  %v7338 = vadd.f32 %v7233, %v7337
  %v7339 = vpop.f32.mrb[0].mxu0
  %v7340 = vpop.f32.mrb[0].mxu0
  %v7341 = vadd.f32 %v7236, %v7340
  %v7342 = vpop.f32.mrb[0].mxu0
  %7343 = vmatprep.mubr.bf16.mxu0 %v5077
  %7344 = vmatmul.mubr.bf16.gmra.mrb[0].mxu0 %v5076
  %v7345 = vpop.f32.mrb[0].mxu0
  %v7346 = vadd.f32 %v7241, %v7345
  %v7347 = vpop.f32.mrb[0].mxu0
  %v7348 = vpop.f32.mrb[0].mxu0
  %v7349 = vadd.f32 %v7244, %v7348
  %v7350 = vpop.f32.mrb[0].mxu0
  %7351 = vmatprep.mubr.bf16.mxu0 %v5098
  %7352 = vmatmul.mubr.bf16.gmra.mrb[0].mxu0 %v5097
  %v7353 = vpop.f32.mrb[0].mxu0
  %v7354 = vadd.f32 %v7249, %v7353
  %v7355 = vpop.f32.mrb[0].mxu0
  %v7356 = vpop.f32.mrb[0].mxu0
  %v7357 = vadd.f32 %v7252, %v7356
  %v7358 = vpop.f32.mrb[0].mxu0
  %7359 = vmatprep.mubr.bf16.mxu0 %v5119
  %7360 = vmatmul.mubr.bf16.gmra.mrb[0].mxu0 %v5118
  %v7361 = vpop.f32.mrb[0].mxu0
  %v7362 = vadd.f32 %v7257, %v7361
  %v7363 = vpop.f32.mrb[0].mxu0
  %v7364 = vpop.f32.mrb[0].mxu0
  %v7365 = vadd.f32 %v7260, %v7364
  %v7366 = vpop.f32.mrb[0].mxu0
  %7367 = vdwg.mxu0
  %7368 = vmatprep.subr.bf16.mxu0 0
  %7369 = vmatpush1.bf16.msra.mxu0 %v6142
  %7370 = vmatprep.subr.bf16.mxu0 0
  %7371 = vmatpush1.bf16.msra.mxu0 %v6143
  %7372 = vmatprep.subr.bf16.mxu0 0
  %7373 = vmatpush1.bf16.msra.mxu0 %v6144
  %7374 = vmatprep.subr.bf16.mxu0 0
  %7375 = vmatpush1.bf16.msra.mxu0 %v6145
  %7376 = vmatprep.subr.bf16.mxu0 0
  %7377 = vmatpush1.bf16.msra.mxu0 %v6146
  %7378 = vmatprep.subr.bf16.mxu0 0
  %7379 = vmatpush1.bf16.msra.mxu0 %v6147
  %7380 = vmatprep.subr.bf16.mxu0 0
  %7381 = vmatpush1.bf16.msra.mxu0 %v6148
  %7382 = vmatprep.subr.bf16.mxu0 0
  %7383 = vmatpush1.bf16.msra.mxu0 %v6149
  %7384 = vmatprep.subr.bf16.mxu0 0
  %7385 = vmatpush1.bf16.msra.mxu0 0
  %7386 = vmatprep.subr.bf16.mxu0 0
  %7387 = vmatpush1.bf16.msra.mxu0 0
  %7388 = vmatprep.subr.bf16.mxu0 0
  %7389 = vmatpush1.bf16.msra.mxu0 0
  %7390 = vmatprep.subr.bf16.mxu0 0
  %7391 = vmatpush1.bf16.msra.mxu0 0
  %7392 = vmatprep.subr.bf16.mxu0 0
  %7393 = vmatpush1.bf16.msra.mxu0 0
  %7394 = vmatprep.subr.bf16.mxu0 0
  %7395 = vmatpush1.bf16.msra.mxu0 0
  %7396 = vmatprep.subr.bf16.mxu0 0
  %7397 = vmatpush1.bf16.msra.mxu0 0
  %7398 = vmatprep.subr.bf16.mxu0 0
  %7399 = vmatpush1.bf16.msra.mxu0 0
  %7400 = vmatprep.mubr.bf16.mxu0 0
  %7401 = vmatmul.mubr.bf16.gmra.mrb[0].mxu0 %v4952
  %v7402 = vpop.f32.mrb[0].mxu0
  %v7403 = vadd.f32 %v7298, %v7402
  %v7404 = vpop.f32.mrb[0].mxu0
  %v7405 = vpop.f32.mrb[0].mxu0
  %v7406 = vadd.f32 %v7301, %v7405
  %v7407 = vpop.f32.mrb[0].mxu0
  %7408 = vmatprep.mubr.bf16.mxu0 0
  %7409 = vmatmul.mubr.bf16.gmra.mrb[0].mxu0 %v4973
  %v7410 = vpop.f32.mrb[0].mxu0
  %v7411 = vadd.f32 %v7306, %v7410
  %v7412 = vpop.f32.mrb[0].mxu0
  %v7413 = vpop.f32.mrb[0].mxu0
  %v7414 = vadd.f32 %v7309, %v7413
  %v7415 = vpop.f32.mrb[0].mxu0
  %7416 = vmatprep.mubr.bf16.mxu0 0
  %7417 = vmatmul.mubr.bf16.gmra.mrb[0].mxu0 %v4994
  %v7418 = vpop.f32.mrb[0].mxu0
  %v7419 = vadd.f32 %v7314, %v7418
  %v7420 = vpop.f32.mrb[0].mxu0
  %v7421 = vpop.f32.mrb[0].mxu0
  %v7422 = vadd.f32 %v7317, %v7421
  %v7423 = vpop.f32.mrb[0].mxu0
  %7424 = vmatprep.mubr.bf16.mxu0 0
  %7425 = vmatmul.mubr.bf16.gmra.mrb[0].mxu0 %v5015
  %v7426 = vpop.f32.mrb[0].mxu0
  %v7427 = vadd.f32 %v7322, %v7426
  %v7428 = vpop.f32.mrb[0].mxu0
  %v7429 = vpop.f32.mrb[0].mxu0
  %v7430 = vadd.f32 %v7325, %v7429
  %v7431 = vpop.f32.mrb[0].mxu0
  %7432 = vmatprep.mubr.bf16.mxu0 0
  %7433 = vmatmul.mubr.bf16.gmra.mrb[0].mxu0 %v5036
  %v7434 = vpop.f32.mrb[0].mxu0
  %v7435 = vadd.f32 %v7330, %v7434
  %v7436 = vpop.f32.mrb[0].mxu0
  %v7437 = vpop.f32.mrb[0].mxu0
  %v7438 = vadd.f32 %v7333, %v7437
  %v7439 = vpop.f32.mrb[0].mxu0
  %7440 = vmatprep.mubr.bf16.mxu0 0
  %7441 = vmatmul.mubr.bf16.gmra.mrb[0].mxu0 %v5057
  %v7442 = vpop.f32.mrb[0].mxu0
  %v7443 = vadd.f32 %v7338, %v7442
  %v7444 = vpop.f32.mrb[0].mxu0
  %v7445 = vpop.f32.mrb[0].mxu0
  %v7446 = vadd.f32 %v7341, %v7445
  %v7447 = vpop.f32.mrb[0].mxu0
  %7448 = vmatprep.mubr.bf16.mxu0 0
  %7449 = vmatmul.mubr.bf16.gmra.mrb[0].mxu0 %v5078
  %v7450 = vpop.f32.mrb[0].mxu0
  %v7451 = vadd.f32 %v7346, %v7450
  %v7452 = vpop.f32.mrb[0].mxu0
  %v7453 = vpop.f32.mrb[0].mxu0
  %v7454 = vadd.f32 %v7349, %v7453
  %v7455 = vpop.f32.mrb[0].mxu0
  %7456 = vmatprep.mubr.bf16.mxu0 0
  %7457 = vmatmul.mubr.bf16.gmra.mrb[0].mxu0 %v5099
  %v7458 = vpop.f32.mrb[0].mxu0
  %v7459 = vadd.f32 %v7354, %v7458
  %v7460 = vpop.f32.mrb[0].mxu0
  %v7461 = vpop.f32.mrb[0].mxu0
  %v7462 = vadd.f32 %v7357, %v7461
  %v7463 = vpop.f32.mrb[0].mxu0
  %7464 = vmatprep.mubr.bf16.mxu0 0
  %7465 = vmatmul.mubr.bf16.gmra.mrb[0].mxu0 %v5120
  %v7466 = vpop.f32.mrb[0].mxu0
  %v7467 = vadd.f32 %v7362, %v7466
  %v7468 = vpop.f32.mrb[0].mxu0
  %v7469 = vpop.f32.mrb[0].mxu0
  %v7470 = vadd.f32 %v7365, %v7469
  %v7471 = vpop.f32.mrb[0].mxu0
  %7472 = vdwg.mxu0
  %v7473 = vadd.f32 %v7403, %v7406
  %v7474 = vadd.f32 %v7473, %v7411
  %v7475 = vadd.f32 %v7474, %v7414
  %v7476 = vadd.f32 %v7475, %v7419
  %v7477 = vadd.f32 %v7476, %v7422
  %v7478 = vadd.f32 %v7477, %v7427
  %v7479 = vadd.f32 %v7478, %v7430
  %v7480 = vadd.f32 %v7479, %v7435
  %v7481 = vadd.f32 %v7480, %v7438
  %v7482 = vadd.f32 %v7481, %v7443
  %v7483 = vadd.f32 %v7482, %v7446
  %v7484 = vadd.f32 %v7483, %v7451
  %v7485 = vadd.f32 %v7484, %v7454
  %v7486 = vadd.f32 %v7485, %v7459
  %v7487 = vadd.f32 %v7486, %v7462
  %v7488 = vadd.f32 %v7487, %v7467
  %v7489 = vadd.f32 %v7488, %v7470
  %v7490 = vrot.slane %v7489, 4
  %v7491 = vadd.f32 %v7489, %v7490
  %v7492 = vrot.slane %v7491, 2
  %v7493 = vadd.f32 %v7491, %v7492
  %v7494 = vrot.slane %v7493, 1
  %v7495 = vadd.f32 %v7493, %v7494
  %v7496 = vmul.f32 %v7495, 0.0069444445
  %v7497 = vsub.f32 %v7403, %v7496
  %v7498 = vsub.f32 %v7406, %v7496
  %v7499 = vsub.f32 %v7411, %v7496
  %v7500 = vsub.f32 %v7414, %v7496
  %v7501 = vsub.f32 %v7419, %v7496
  %v7502 = vsub.f32 %v7422, %v7496
  %v7503 = vsub.f32 %v7427, %v7496
  %v7504 = vsub.f32 %v7430, %v7496
  %v7505 = vsub.f32 %v7435, %v7496
  %v7506 = vsub.f32 %v7438, %v7496
  %v7507 = vsub.f32 %v7443, %v7496
  %v7508 = vsub.f32 %v7446, %v7496
  %v7509 = vsub.f32 %v7451, %v7496
  %v7510 = vsub.f32 %v7454, %v7496
  %v7511 = vsub.f32 %v7459, %v7496
  %v7512 = vsub.f32 %v7462, %v7496
  %v7513 = vsub.f32 %v7467, %v7496
  %v7514 = vsub.f32 %v7470, %v7496
  %v7515 = vmul.f32 %v7497, %v7497
  %v7516 = vmul.f32 %v7498, %v7498
  %v7517 = vmul.f32 %v7499, %v7499
  %v7518 = vmul.f32 %v7500, %v7500
  %v7519 = vmul.f32 %v7501, %v7501
  %v7520 = vmul.f32 %v7502, %v7502
  %v7521 = vmul.f32 %v7503, %v7503
  %v7522 = vmul.f32 %v7504, %v7504
  %v7523 = vmul.f32 %v7505, %v7505
  %v7524 = vmul.f32 %v7506, %v7506
  %v7525 = vmul.f32 %v7507, %v7507
  %v7526 = vmul.f32 %v7508, %v7508
  %v7527 = vmul.f32 %v7509, %v7509
  %v7528 = vmul.f32 %v7510, %v7510
  %v7529 = vmul.f32 %v7511, %v7511
  %v7530 = vmul.f32 %v7512, %v7512
  %v7531 = vmul.f32 %v7513, %v7513
  %v7532 = vmul.f32 %v7514, %v7514
  %v7533 = vadd.f32 %v7515, %v7516
  %v7534 = vadd.f32 %v7533, %v7517
  %v7535 = vadd.f32 %v7534, %v7518
  %v7536 = vadd.f32 %v7535, %v7519
  %v7537 = vadd.f32 %v7536, %v7520
  %v7538 = vadd.f32 %v7537, %v7521
  %v7539 = vadd.f32 %v7538, %v7522
  %v7540 = vadd.f32 %v7539, %v7523
  %v7541 = vadd.f32 %v7540, %v7524
  %v7542 = vadd.f32 %v7541, %v7525
  %v7543 = vadd.f32 %v7542, %v7526
  %v7544 = vadd.f32 %v7543, %v7527
  %v7545 = vadd.f32 %v7544, %v7528
  %v7546 = vadd.f32 %v7545, %v7529
  %v7547 = vadd.f32 %v7546, %v7530
  %v7548 = vadd.f32 %v7547, %v7531
  %v7549 = vadd.f32 %v7548, %v7532
  %v7550 = vrot.slane %v7549, 4
  %v7551 = vadd.f32 %v7549, %v7550
  %v7552 = vrot.slane %v7551, 2
  %v7553 = vadd.f32 %v7551, %v7552
  %v7554 = vrot.slane %v7553, 1
  %v7555 = vadd.f32 %v7553, %v7554
  %v7556 = vmul.f32 %v7555, 0.0069444445
  %v7557 = vadd.f32 %v7556, 0.001
  %v7558 = vrsqrt.pop %v7557
  %v7559 = vld [vmem:[%s2 + $0x1] sm:$0x1]
  %v7560 = vmul.f32 %v7558, %v7559
  %v7561 = vlaneseq
  %v7562 = vshrl.u32 %v7561, 7
  %v7563 = vsub.s32 0, %v7562
  %v7564 = vrot.slane %v7560, %v7563
  %v7565 = vmul.f32 %v7497, %v7564
  %v7566 = vmul.f32 %v7498, %v7564
  %v7567 = vmul.f32 %v7499, %v7564
  %v7568 = vmul.f32 %v7500, %v7564
  %v7569 = vmul.f32 %v7501, %v7564
  %v7570 = vmul.f32 %v7502, %v7564
  %v7571 = vmul.f32 %v7503, %v7564
  %v7572 = vmul.f32 %v7504, %v7564
  %v7573 = vmul.f32 %v7505, %v7564
  %v7574 = vmul.f32 %v7506, %v7564
  %v7575 = vmul.f32 %v7507, %v7564
  %v7576 = vmul.f32 %v7508, %v7564
  %v7577 = vmul.f32 %v7509, %v7564
  %v7578 = vmul.f32 %v7510, %v7564
  %v7579 = vmul.f32 %v7511, %v7564
  %v7580 = vmul.f32 %v7512, %v7564
  %v7581 = vmul.f32 %v7513, %v7564
  %v7582 = vmul.f32 %v7514, %v7564
  %v7583 = vld [vmem:[%s3 + $0x1] sm:$0x1]
  %v7585 = vlaneseq
  %v7586 = vshrl.u32 %v7585, 7
  %v7587 = vsub.s32 0, %v7586
  %v7588 = vrot.slane %v7583, %v7587
  %v7590 = vadd.f32 %v7565, %v7588
  %v7591 = vadd.f32 %v7566, %v7588
  %v7592 = vadd.f32 %v7567, %v7588
  %v7593 = vadd.f32 %v7568, %v7588
  %v7594 = vadd.f32 %v7569, %v7588
  %v7595 = vadd.f32 %v7570, %v7588
  %v7596 = vadd.f32 %v7571, %v7588
  %v7597 = vadd.f32 %v7572, %v7588
  %v7598 = vadd.f32 %v7573, %v7588
  %v7599 = vadd.f32 %v7574, %v7588
  %v7600 = vadd.f32 %v7575, %v7588
  %v7601 = vadd.f32 %v7576, %v7588
  %v7602 = vadd.f32 %v7577, %v7588
  %v7603 = vadd.f32 %v7578, %v7588
  %v7604 = vadd.f32 %v7579, %v7588
  %v7605 = vadd.f32 %v7580, %v7588
  %v7606 = vadd.f32 %v7581, %v7588
  %v7607 = vadd.f32 %v7582, %v7588
  %7608 = vst [vmem:[%s4 + $0x8] sm:$0xff] %v7590
  %7609 = vst [vmem:[%s4 + $0x20] sm:$0xff] %v7591
  %7610 = vst [vmem:[%s4 + $0x38] sm:$0xff] %v7592
  %7611 = vst [vmem:[%s4 + $0x50] sm:$0xff] %v7593
  %7612 = vst [vmem:[%s4 + $0x68] sm:$0xff] %v7594
  %7613 = vst [vmem:[%s4 + $0x80] sm:$0xff] %v7595
  %7614 = vst [vmem:[%s4 + $0x98] sm:$0xff] %v7596
  %7615 = vst [vmem:[%s4 + $0xb0] sm:$0xff] %v7597
  %7616 = vst [vmem:[%s4 + $0xc8] sm:$0xff] %v7598
  %7617 = vst [vmem:[%s4 + $0xe0] sm:$0xff] %v7599
  %7618 = vst [vmem:[%s4 + $0xf8] sm:$0xff] %v7600
  %7619 = vst [vmem:[%s4 + $0x110] sm:$0xff] %v7601
  %7620 = vst [vmem:[%s4 + $0x128] sm:$0xff] %v7602
  %7621 = vst [vmem:[%s4 + $0x140] sm:$0xff] %v7603
  %7622 = vst [vmem:[%s4 + $0x158] sm:$0xff] %v7604
  %7623 = vst [vmem:[%s4 + $0x170] sm:$0xff] %v7605
  %7624 = vst [vmem:[%s4 + $0x188] sm:$0xff] %v7606
  %7625 = vst [vmem:[%s4 + $0x1a0] sm:$0xff] %v7607
  %v7626 = vld [vmem:[%s0] sm:$0xff]
  %v7627 = vld [vmem:[%s0 + $0x8] sm:$0xff]
  %v7628 = vld [vmem:[%s0 + $0x10] sm:$0xff]
  %v7629 = vld [vmem:[%s0 + $0x18] sm:$0xff]
  %v7630 = vld [vmem:[%s0 + $0x20] sm:$0xff]
  %v7631 = vld [vmem:[%s0 + $0x28] sm:$0xff]
  %v7632 = vld [vmem:[%s0 + $0x30] sm:$0xff]
  %v7633 = vld [vmem:[%s0 + $0x38] sm:$0xff]
  %v7634 = vld [vmem:[%s0 + $0x40] sm:$0xff]
  %v7635 = vld [vmem:[%s0 + $0x48] sm:$0xff]
  %v7636 = vld [vmem:[%s0 + $0x50] sm:$0xf]
  %v7637 = vld [vmem:[%s0 + $0x54] sm:$0xff]
  %v7638 = vld [vmem:[%s0 + $0x5c] sm:$0xff]
  %v7639 = vld [vmem:[%s0 + $0x64] sm:$0xff]
  %v7640 = vld [vmem:[%s0 + $0x6c] sm:$0xff]
  %v7641 = vld [vmem:[%s0 + $0x74] sm:$0xff]
  %v7642 = vld [vmem:[%s0 + $0x7c] sm:$0xff]
  %v7643 = vld [vmem:[%s0 + $0x84] sm:$0xff]
  %v7644 = vld [vmem:[%s0 + $0x8c] sm:$0xff]
  %v7645 = vld [vmem:[%s0 + $0x94] sm:$0xff]
  %v7646 = vld [vmem:[%s0 + $0x9c] sm:$0xff]
  %v7647 = vld [vmem:[%s0 + $0xa4] sm:$0xf]
  %v7648 = vld [vmem:[%s0 + $0xa8] sm:$0xff]
  %v7649 = vld [vmem:[%s0 + $0xb0] sm:$0xff]
  %v7650 = vld [vmem:[%s0 + $0xb8] sm:$0xff]
  %v7651 = vld [vmem:[%s0 + $0xc0] sm:$0xff]
  %v7652 = vld [vmem:[%s0 + $0xc8] sm:$0xff]
  %v7653 = vld [vmem:[%s0 + $0xd0] sm:$0xff]
  %v7654 = vld [vmem:[%s0 + $0xd8] sm:$0xff]
  %v7655 = vld [vmem:[%s0 + $0xe0] sm:$0xff]
  %v7656 = vld [vmem:[%s0 + $0xe8] sm:$0xff]
  %v7657 = vld [vmem:[%s0 + $0xf0] sm:$0xff]
  %v7658 = vld [vmem:[%s0 + $0xf8] sm:$0xf]
  %v7659 = vld [vmem:[%s0 + $0xfc] sm:$0xff]
  %v7660 = vld [vmem:[%s0 + $0x104] sm:$0xff]
  %v7661 = vld [vmem:[%s0 + $0x10c] sm:$0xff]
  %v7662 = vld [vmem:[%s0 + $0x114] sm:$0xff]
  %v7663 = vld [vmem:[%s0 + $0x11c] sm:$0xff]
  %v7664 = vld [vmem:[%s0 + $0x124] sm:$0xff]
  %v7665 = vld [vmem:[%s0 + $0x12c] sm:$0xff]
  %v7666 = vld [vmem:[%s0 + $0x134] sm:$0xff]
  %v7667 = vld [vmem:[%s0 + $0x13c] sm:$0xff]
  %v7668 = vld [vmem:[%s0 + $0x144] sm:$0xff]
  %v7669 = vld [vmem:[%s0 + $0x14c] sm:$0xf]
  %v7670 = vld [vmem:[%s0 + $0x150] sm:$0xff]
  %v7671 = vld [vmem:[%s0 + $0x158] sm:$0xff]
  %v7672 = vld [vmem:[%s0 + $0x160] sm:$0xff]
  %v7673 = vld [vmem:[%s0 + $0x168] sm:$0xff]
  %v7674 = vld [vmem:[%s0 + $0x170] sm:$0xff]
  %v7675 = vld [vmem:[%s0 + $0x178] sm:$0xff]
  %v7676 = vld [vmem:[%s0 + $0x180] sm:$0xff]
  %v7677 = vld [vmem:[%s0 + $0x188] sm:$0xff]
  %v7678 = vld [vmem:[%s0 + $0x190] sm:$0xff]
  %v7679 = vld [vmem:[%s0 + $0x198] sm:$0xff]
  %v7680 = vld [vmem:[%s0 + $0x1a0] sm:$0xf]
  %v7681 = vld [vmem:[%s0 + $0x1a4] sm:$0xff]
  %v7682 = vld [vmem:[%s0 + $0x1ac] sm:$0xff]
  %v7683 = vld [vmem:[%s0 + $0x1b4] sm:$0xff]
  %v7684 = vld [vmem:[%s0 + $0x1bc] sm:$0xff]
  %v7685 = vld [vmem:[%s0 + $0x1c4] sm:$0xff]
  %v7686 = vld [vmem:[%s0 + $0x1cc] sm:$0xff]
  %v7687 = vld [vmem:[%s0 + $0x1d4] sm:$0xff]
  %v7688 = vld [vmem:[%s0 + $0x1dc] sm:$0xff]
  %v7689 = vld [vmem:[%s0 + $0x1e4] sm:$0xff]
  %v7690 = vld [vmem:[%s0 + $0x1ec] sm:$0xff]
  %v7691 = vld [vmem:[%s0 + $0x1f4] sm:$0xf]
  %v7692 = vld [vmem:[%s0 + $0x1f8] sm:$0xff]
  %v7693 = vld [vmem:[%s0 + $0x200] sm:$0xff]
  %v7694 = vld [vmem:[%s0 + $0x208] sm:$0xff]
  %v7695 = vld [vmem:[%s0 + $0x210] sm:$0xff]
  %v7696 = vld [vmem:[%s0 + $0x218] sm:$0xff]
  %v7697 = vld [vmem:[%s0 + $0x220] sm:$0xff]
  %v7698 = vld [vmem:[%s0 + $0x228] sm:$0xff]
  %v7699 = vld [vmem:[%s0 + $0x230] sm:$0xff]
  %v7700 = vld [vmem:[%s0 + $0x238] sm:$0xff]
  %v7701 = vld [vmem:[%s0 + $0x240] sm:$0xff]
  %v7702 = vld [vmem:[%s0 + $0x248] sm:$0xf]
  %v7703 = vld [vmem:[%s0 + $0x24c] sm:$0xff]
  %v7704 = vld [vmem:[%s0 + $0x254] sm:$0xff]
  %v7705 = vld [vmem:[%s0 + $0x25c] sm:$0xff]
  %v7706 = vld [vmem:[%s0 + $0x264] sm:$0xff]
  %v7707 = vld [vmem:[%s0 + $0x26c] sm:$0xff]
  %v7708 = vld [vmem:[%s0 + $0x274] sm:$0xff]
  %v7709 = vld [vmem:[%s0 + $0x27c] sm:$0xff]
  %v7710 = vld [vmem:[%s0 + $0x284] sm:$0xff]
  %v7711 = vld [vmem:[%s0 + $0x28c] sm:$0xff]
  %v7712 = vld [vmem:[%s0 + $0x294] sm:$0xff]
  %v7713 = vld [vmem:[%s0 + $0x29c] sm:$0xf]
  %v7714 = vld [vmem:[%s0 + $0x2a0] sm:$0xff]
  %v7715 = vld [vmem:[%s0 + $0x2a8] sm:$0xff]
  %v7716 = vld [vmem:[%s0 + $0x2b0] sm:$0xff]
  %v7717 = vld [vmem:[%s0 + $0x2b8] sm:$0xff]
  %v7718 = vld [vmem:[%s0 + $0x2c0] sm:$0xff]
  %v7719 = vld [vmem:[%s0 + $0x2c8] sm:$0xff]
  %v7720 = vld [vmem:[%s0 + $0x2d0] sm:$0xff]
  %v7721 = vld [vmem:[%s0 + $0x2d8] sm:$0xff]
  %v7722 = vld [vmem:[%s0 + $0x2e0] sm:$0xff]
  %v7723 = vld [vmem:[%s0 + $0x2e8] sm:$0xff]
  %v7724 = vld [vmem:[%s0 + $0x2f0] sm:$0xf]
  %v7725 = vld [vmem:[%s0 + $0x2f4] sm:$0xff]
  %v7726 = vld [vmem:[%s0 + $0x2fc] sm:$0xff]
  %v7727 = vld [vmem:[%s0 + $0x304] sm:$0xff]
  %v7728 = vld [vmem:[%s0 + $0x30c] sm:$0xff]
  %v7729 = vld [vmem:[%s0 + $0x314] sm:$0xff]
  %v7730 = vld [vmem:[%s0 + $0x31c] sm:$0xff]
  %v7731 = vld [vmem:[%s0 + $0x324] sm:$0xff]
  %v7732 = vld [vmem:[%s0 + $0x32c] sm:$0xff]
  %v7733 = vld [vmem:[%s0 + $0x334] sm:$0xff]
  %v7734 = vld [vmem:[%s0 + $0x33c] sm:$0xff]
  %v7735 = vld [vmem:[%s0 + $0x344] sm:$0xf]
  %v7736 = vld [vmem:[%s0 + $0x348] sm:$0xff]
  %v7737 = vld [vmem:[%s0 + $0x350] sm:$0xff]
  %v7738 = vld [vmem:[%s0 + $0x358] sm:$0xff]
  %v7739 = vld [vmem:[%s0 + $0x360] sm:$0xff]
  %v7740 = vld [vmem:[%s0 + $0x368] sm:$0xff]
  %v7741 = vld [vmem:[%s0 + $0x370] sm:$0xff]
  %v7742 = vld [vmem:[%s0 + $0x378] sm:$0xff]
  %v7743 = vld [vmem:[%s0 + $0x380] sm:$0xff]
  %v7744 = vld [vmem:[%s0 + $0x388] sm:$0xff]
  %v7745 = vld [vmem:[%s0 + $0x390] sm:$0xff]
  %v7746 = vld [vmem:[%s0 + $0x398] sm:$0xf]
  %v7747 = vld [vmem:[%s0 + $0x39c] sm:$0xff]
  %v7748 = vld [vmem:[%s0 + $0x3a4] sm:$0xff]
  %v7749 = vld [vmem:[%s0 + $0x3ac] sm:$0xff]
  %v7750 = vld [vmem:[%s0 + $0x3b4] sm:$0xff]
  %v7751 = vld [vmem:[%s0 + $0x3bc] sm:$0xff]
  %v7752 = vld [vmem:[%s0 + $0x3c4] sm:$0xff]
  %v7753 = vld [vmem:[%s0 + $0x3cc] sm:$0xff]
  %v7754 = vld [vmem:[%s0 + $0x3d4] sm:$0xff]
  %v7755 = vld [vmem:[%s0 + $0x3dc] sm:$0xff]
  %v7756 = vld [vmem:[%s0 + $0x3e4] sm:$0xff]
  %v7757 = vld [vmem:[%s0 + $0x3ec] sm:$0xf]
  %v7758 = vld [vmem:[%s0 + $0x3f0] sm:$0xff]
  %v7759 = vld [vmem:[%s0 + $0x3f8] sm:$0xff]
  %v7760 = vld [vmem:[%s0 + $0x400] sm:$0xff]
  %v7761 = vld [vmem:[%s0 + $0x408] sm:$0xff]
  %v7762 = vld [vmem:[%s0 + $0x410] sm:$0xff]
  %v7763 = vld [vmem:[%s0 + $0x418] sm:$0xff]
  %v7764 = vld [vmem:[%s0 + $0x420] sm:$0xff]
  %v7765 = vld [vmem:[%s0 + $0x428] sm:$0xff]
  %v7766 = vld [vmem:[%s0 + $0x430] sm:$0xff]
  %v7767 = vld [vmem:[%s0 + $0x438] sm:$0xff]
  %v7768 = vld [vmem:[%s0 + $0x440] sm:$0xf]
  %v7769 = vld [vmem:[%s0 + $0x444] sm:$0xff]
  %v7770 = vld [vmem:[%s0 + $0x44c] sm:$0xff]
  %v7771 = vld [vmem:[%s0 + $0x454] sm:$0xff]
  %v7772 = vld [vmem:[%s0 + $0x45c] sm:$0xff]
  %v7773 = vld [vmem:[%s0 + $0x464] sm:$0xff]
  %v7774 = vld [vmem:[%s0 + $0x46c] sm:$0xff]
  %v7775 = vld [vmem:[%s0 + $0x474] sm:$0xff]
  %v7776 = vld [vmem:[%s0 + $0x47c] sm:$0xff]
  %v7777 = vld [vmem:[%s0 + $0x484] sm:$0xff]
  %v7778 = vld [vmem:[%s0 + $0x48c] sm:$0xff]
  %v7779 = vld [vmem:[%s0 + $0x494] sm:$0xf]
  %v7780 = vld [vmem:[%s0 + $0x498] sm:$0xff]
  %v7781 = vld [vmem:[%s0 + $0x4a0] sm:$0xff]
  %v7782 = vld [vmem:[%s0 + $0x4a8] sm:$0xff]
  %v7783 = vld [vmem:[%s0 + $0x4b0] sm:$0xff]
  %v7784 = vld [vmem:[%s0 + $0x4b8] sm:$0xff]
  %v7785 = vld [vmem:[%s0 + $0x4c0] sm:$0xff]
  %v7786 = vld [vmem:[%s0 + $0x4c8] sm:$0xff]
  %v7787 = vld [vmem:[%s0 + $0x4d0] sm:$0xff]
  %v7788 = vld [vmem:[%s0 + $0x4d8] sm:$0xff]
  %v7789 = vld [vmem:[%s0 + $0x4e0] sm:$0xff]
  %v7790 = vld [vmem:[%s0 + $0x4e8] sm:$0xf]
  %v7791 = vld [vmem:[%s0 + $0x4ec] sm:$0xff]
  %v7792 = vld [vmem:[%s0 + $0x4f4] sm:$0xff]
  %v7793 = vld [vmem:[%s0 + $0x4fc] sm:$0xff]
  %v7794 = vld [vmem:[%s0 + $0x504] sm:$0xff]
  %v7795 = vld [vmem:[%s0 + $0x50c] sm:$0xff]
  %v7796 = vld [vmem:[%s0 + $0x514] sm:$0xff]
  %v7797 = vld [vmem:[%s0 + $0x51c] sm:$0xff]
  %v7798 = vld [vmem:[%s0 + $0x524] sm:$0xff]
  %v7799 = vld [vmem:[%s0 + $0x52c] sm:$0xff]
  %v7800 = vld [vmem:[%s0 + $0x534] sm:$0xff]
  %v7801 = vld [vmem:[%s0 + $0x53c] sm:$0xf]
  %v7802 = vld [vmem:[%s0 + $0x540] sm:$0xff]
  %v7803 = vld [vmem:[%s0 + $0x548] sm:$0xff]
  %v7804 = vld [vmem:[%s0 + $0x550] sm:$0xff]
  %v7805 = vld [vmem:[%s0 + $0x558] sm:$0xff]
  %v7806 = vld [vmem:[%s0 + $0x560] sm:$0xff]
  %v7807 = vld [vmem:[%s0 + $0x568] sm:$0xff]
  %v7808 = vld [vmem:[%s0 + $0x570] sm:$0xff]
  %v7809 = vld [vmem:[%s0 + $0x578] sm:$0xff]
  %v7810 = vld [vmem:[%s0 + $0x580] sm:$0xff]
  %v7811 = vld [vmem:[%s0 + $0x588] sm:$0xff]
  %v7812 = vld [vmem:[%s0 + $0x590] sm:$0xf]
  %v7813 = vld [vmem:[%s0 + $0x594] sm:$0xff]
  %v7814 = vld [vmem:[%s0 + $0x59c] sm:$0xff]
  %v7815 = vld [vmem:[%s0 + $0x5a4] sm:$0xff]
  %v7816 = vld [vmem:[%s0 + $0x5ac] sm:$0xff]
  %v7817 = vld [vmem:[%s0 + $0x5b4] sm:$0xff]
  %v7818 = vld [vmem:[%s0 + $0x5bc] sm:$0xff]
  %v7819 = vld [vmem:[%s0 + $0x5c4] sm:$0xff]
  %v7820 = vld [vmem:[%s0 + $0x5cc] sm:$0xff]
  %v7821 = vld [vmem:[%s0 + $0x5d4] sm:$0xff]
  %v7822 = vld [vmem:[%s0 + $0x5dc] sm:$0xff]
  %v7823 = vld [vmem:[%s0 + $0x5e4] sm:$0xf]
  %v7824 = vld [vmem:[%s1 + $0x8] sm:$0xf]
  %v7825 = vld [vmem:[%s1 + $0x14] sm:$0xf]
  %v7826 = vld [vmem:[%s1 + $0x20] sm:$0xf]
  %v7827 = vld [vmem:[%s1 + $0x2c] sm:$0xf]
  %v7828 = vld [vmem:[%s1 + $0x38] sm:$0xf]
  %v7829 = vld [vmem:[%s1 + $0x44] sm:$0xf]
  %v7830 = vld [vmem:[%s1 + $0x50] sm:$0xf]
  %v7831 = vld [vmem:[%s1 + $0x5c] sm:$0xf]
  %v7832 = vld [vmem:[%s1 + $0x68] sm:$0xf]
  %v7833 = vld [vmem:[%s1 + $0x74] sm:$0xf]
  %v7834 = vld [vmem:[%s1 + $0x80] sm:$0xf]
  %v7835 = vld [vmem:[%s1 + $0x8c] sm:$0xf]
  %v7836 = vld [vmem:[%s1 + $0x98] sm:$0xf]
  %v7837 = vld [vmem:[%s1 + $0xa4] sm:$0xf]
  %v7838 = vld [vmem:[%s1 + $0xb0] sm:$0xf]
  %v7839 = vld [vmem:[%s1 + $0xbc] sm:$0xf]
  %v7840 = vld [vmem:[%s1 + $0xc8] sm:$0xf]
  %v7841 = vld [vmem:[%s1 + $0xd4] sm:$0xf]
  %v7842 = vld [vmem:[%s1 + $0xe0] sm:$0xf]
  %v7843 = vld [vmem:[%s1 + $0xec] sm:$0xf]
  %v7844 = vld [vmem:[%s1 + $0xf8] sm:$0xf]
  %v7845 = vld [vmem:[%s1 + $0x104] sm:$0xf]
  %v7846 = vld [vmem:[%s1 + $0x110] sm:$0xf]
  %v7847 = vld [vmem:[%s1 + $0x11c] sm:$0xf]
  %v7848 = vld [vmem:[%s1 + $0x128] sm:$0xf]
  %v7849 = vld [vmem:[%s1 + $0x134] sm:$0xf]
  %v7850 = vld [vmem:[%s1 + $0x140] sm:$0xf]
  %v7851 = vld [vmem:[%s1 + $0x14c] sm:$0xf]
  %v7852 = vld [vmem:[%s1 + $0x158] sm:$0xf]
  %v7853 = vld [vmem:[%s1 + $0x164] sm:$0xf]
  %v7854 = vld [vmem:[%s1 + $0x170] sm:$0xf]
  %v7855 = vld [vmem:[%s1 + $0x17c] sm:$0xf]
  %v7856 = vld [vmem:[%s1 + $0x188] sm:$0xf]
  %v7857 = vld [vmem:[%s1 + $0x194] sm:$0xf]
  %v7858 = vld [vmem:[%s1 + $0x1a0] sm:$0xf]
  %v7859 = vld [vmem:[%s1 + $0x1ac] sm:$0xf]
  %v7860 = vld [vmem:[%s1 + $0x1b8] sm:$0xf]
  %v7861 = vld [vmem:[%s1 + $0x1c4] sm:$0xf]
  %v7862 = vld [vmem:[%s1 + $0x1d0] sm:$0xf]
  %v7863 = vld [vmem:[%s1 + $0x1dc] sm:$0xf]
  %v7864 = vld [vmem:[%s1 + $0x1e8] sm:$0xf]
  %v7865 = vld [vmem:[%s1 + $0x1f4] sm:$0xf]
  %v7866 = vld [vmem:[%s1 + $0x200] sm:$0xf]
  %v7867 = vld [vmem:[%s1 + $0x20c] sm:$0xf]
  %v7868 = vld [vmem:[%s1 + $0x218] sm:$0xf]
  %v7869 = vld [vmem:[%s1 + $0x224] sm:$0xf]
  %v7870 = vld [vmem:[%s1 + $0x230] sm:$0xf]
  %v7871 = vld [vmem:[%s1 + $0x23c] sm:$0xf]
  %v7872 = vld [vmem:[%s1 + $0x248] sm:$0xf]
  %v7873 = vld [vmem:[%s1 + $0x254] sm:$0xf]
  %v7874 = vld [vmem:[%s1 + $0x260] sm:$0xf]
  %v7875 = vld [vmem:[%s1 + $0x26c] sm:$0xf]
  %v7876 = vld [vmem:[%s1 + $0x278] sm:$0xf]
  %v7877 = vld [vmem:[%s1 + $0x284] sm:$0xf]
  %v7878 = vld [vmem:[%s1 + $0x290] sm:$0xf]
  %v7879 = vld [vmem:[%s1 + $0x29c] sm:$0xf]
  %v7880 = vld [vmem:[%s1 + $0x2a8] sm:$0xf]
  %v7881 = vld [vmem:[%s1 + $0x2b4] sm:$0xf]
  %v7882 = vld [vmem:[%s1 + $0x2c0] sm:$0xf]
  %v7883 = vld [vmem:[%s1 + $0x2cc] sm:$0xf]
  %v7884 = vld [vmem:[%s1 + $0x2d8] sm:$0xf]
  %v7885 = vld [vmem:[%s1 + $0x2e4] sm:$0xf]
  %v7886 = vld [vmem:[%s1 + $0x2f0] sm:$0xf]
  %v7887 = vld [vmem:[%s1 + $0x2fc] sm:$0xf]
  %v7888 = vld [vmem:[%s1 + $0x308] sm:$0xf]
  %v7889 = vld [vmem:[%s1 + $0x314] sm:$0xf]
  %v7890 = vld [vmem:[%s1 + $0x320] sm:$0xf]
  %v7891 = vld [vmem:[%s1 + $0x32c] sm:$0xf]
  %v7892 = vld [vmem:[%s1 + $0x338] sm:$0xf]
  %v7893 = vld [vmem:[%s1 + $0x344] sm:$0xf]
  %v7894 = vld [vmem:[%s1 + $0x350] sm:$0xf]
  %v7895 = vld [vmem:[%s1 + $0x35c] sm:$0xf]
  %v7896 = vld [vmem:[%s1 + $0x368] sm:$0xf]
  %v7897 = vld [vmem:[%s1 + $0x374] sm:$0xf]
  %v7898 = vld [vmem:[%s1 + $0x380] sm:$0xf]
  %v7899 = vld [vmem:[%s1 + $0x38c] sm:$0xf]
  %v7900 = vld [vmem:[%s1 + $0x398] sm:$0xf]
  %v7901 = vld [vmem:[%s1 + $0x3a4] sm:$0xf]
  %v7902 = vld [vmem:[%s1 + $0x3b0] sm:$0xf]
  %v7903 = vld [vmem:[%s1 + $0x3bc] sm:$0xf]
  %v7904 = vld [vmem:[%s1 + $0x3c8] sm:$0xf]
  %v7905 = vld [vmem:[%s1 + $0x3d4] sm:$0xf]
  %v7906 = vld [vmem:[%s1 + $0x3e0] sm:$0xf]
  %v7907 = vld [vmem:[%s1 + $0x3ec] sm:$0xf]
  %v7908 = vld [vmem:[%s1 + $0x3f8] sm:$0xf]
  %v7909 = vld [vmem:[%s1 + $0x404] sm:$0xf]
  %v7910 = vld [vmem:[%s1 + $0x410] sm:$0xf]
  %v7911 = vld [vmem:[%s1 + $0x41c] sm:$0xf]
  %v7912 = vld [vmem:[%s1 + $0x428] sm:$0xf]
  %v7913 = vld [vmem:[%s1 + $0x434] sm:$0xf]
  %v7914 = vld [vmem:[%s1 + $0x440] sm:$0xf]
  %v7915 = vld [vmem:[%s1 + $0x44c] sm:$0xf]
  %v7916 = vld [vmem:[%s1 + $0x458] sm:$0xf]
  %v7917 = vld [vmem:[%s1 + $0x464] sm:$0xf]
  %v7918 = vld [vmem:[%s1 + $0x470] sm:$0xf]
  %v7919 = vld [vmem:[%s1 + $0x47c] sm:$0xf]
  %v7920 = vld [vmem:[%s1 + $0x488] sm:$0xf]
  %v7921 = vld [vmem:[%s1 + $0x494] sm:$0xf]
  %v7922 = vld [vmem:[%s1 + $0x4a0] sm:$0xf]
  %v7923 = vld [vmem:[%s1 + $0x4ac] sm:$0xf]
  %v7924 = vld [vmem:[%s1 + $0x4b8] sm:$0xf]
  %v7925 = vld [vmem:[%s1 + $0x4c4] sm:$0xf]
  %v7926 = vld [vmem:[%s1 + $0x4d0] sm:$0xf]
  %v7927 = vld [vmem:[%s1 + $0x4dc] sm:$0xf]
  %v7928 = vld [vmem:[%s1 + $0x4e8] sm:$0xf]
  %v7929 = vld [vmem:[%s1 + $0x4f4] sm:$0xf]
  %v7930 = vld [vmem:[%s1 + $0x500] sm:$0xf]
  %v7931 = vld [vmem:[%s1 + $0x50c] sm:$0xf]
  %v7932 = vld [vmem:[%s1 + $0x518] sm:$0xf]
  %v7933 = vld [vmem:[%s1 + $0x524] sm:$0xf]
  %v7934 = vld [vmem:[%s1 + $0x530] sm:$0xf]
  %v7935 = vld [vmem:[%s1 + $0x53c] sm:$0xf]
  %v7936 = vld [vmem:[%s1 + $0x548] sm:$0xf]
  %v7937 = vld [vmem:[%s1 + $0x554] sm:$0xf]
  %v7938 = vld [vmem:[%s1 + $0x560] sm:$0xf]
  %v7939 = vld [vmem:[%s1 + $0x56c] sm:$0xf]
  %v7940 = vld [vmem:[%s1 + $0x578] sm:$0xf]
  %v7941 = vld [vmem:[%s1 + $0x584] sm:$0xf]
  %v7942 = vld [vmem:[%s1 + $0x590] sm:$0xf]
  %v7943 = vld [vmem:[%s1 + $0x59c] sm:$0xf]
  %v7944 = vld [vmem:[%s1 + $0x5a8] sm:$0xf]
  %v7945 = vld [vmem:[%s1 + $0x5b4] sm:$0xf]
  %v7946 = vld [vmem:[%s1 + $0x5c0] sm:$0xf]
  %v7947 = vld [vmem:[%s1 + $0x5cc] sm:$0xf]
  %v7948 = vld [vmem:[%s1 + $0x5d8] sm:$0xf]
  %v7949 = vld [vmem:[%s1 + $0x5e4] sm:$0xf]
  %v7950 = vld [vmem:[%s1 + $0x5f0] sm:$0xf]
  %v7951 = vld [vmem:[%s1 + $0x5fc] sm:$0xf]
  %v7952 = vld [vmem:[%s1 + $0x608] sm:$0xf]
  %v7953 = vld [vmem:[%s1 + $0x614] sm:$0xf]
  %v7954 = vld [vmem:[%s1 + $0x620] sm:$0xf]
  %v7955 = vld [vmem:[%s1 + $0x62c] sm:$0xf]
  %v7956 = vld [vmem:[%s1 + $0x638] sm:$0xf]
  %v7957 = vld [vmem:[%s1 + $0x644] sm:$0xf]
  %v7958 = vld [vmem:[%s1 + $0x650] sm:$0xf]
  %v7959 = vld [vmem:[%s1 + $0x65c] sm:$0xf]
  %v7960 = vld [vmem:[%s1 + $0x668] sm:$0xf]
  %v7961 = vld [vmem:[%s1 + $0x674] sm:$0xf]
  %v7962 = vld [vmem:[%s1 + $0x680] sm:$0xf]
  %v7963 = vld [vmem:[%s1 + $0x68c] sm:$0xf]
  %v7964 = vld [vmem:[%s1 + $0x698] sm:$0xf]
  %v7965 = vld [vmem:[%s1 + $0x6a4] sm:$0xf]
  %v7966 = vld [vmem:[%s1 + $0x6b0] sm:$0xf]
  %v7967 = vld [vmem:[%s1 + $0x6bc] sm:$0xf]
  %v7968 = vld [vmem:[%s1 + $0x6c8] sm:$0xf]
  %v7969 = vld [vmem:[%s1 + $0x6d4] sm:$0xf]
  %v7970 = vld [vmem:[%s1 + $0x6e0] sm:$0xf]
  %v7971 = vld [vmem:[%s1 + $0x6ec] sm:$0xf]
  %v7972 = vld [vmem:[%s1 + $0x6f8] sm:$0xf]
  %v7973 = vld [vmem:[%s1 + $0x704] sm:$0xf]
  %v7974 = vld [vmem:[%s1 + $0x710] sm:$0xf]
  %v7975 = vld [vmem:[%s1 + $0x71c] sm:$0xf]
  %v7976 = vld [vmem:[%s1 + $0x728] sm:$0xf]
  %v7977 = vld [vmem:[%s1 + $0x734] sm:$0xf]
  %v7978 = vld [vmem:[%s1 + $0x740] sm:$0xf]
  %v7979 = vld [vmem:[%s1 + $0x74c] sm:$0xf]
  %v7980 = vld [vmem:[%s1 + $0x758] sm:$0xf]
  %v7981 = vld [vmem:[%s1 + $0x764] sm:$0xf]
  %v7982 = vld [vmem:[%s1 + $0x770] sm:$0xf]
  %v7983 = vld [vmem:[%s1 + $0x77c] sm:$0xf]
  %v7984 = vld [vmem:[%s1 + $0x788] sm:$0xf]
  %v7985 = vld [vmem:[%s1 + $0x794] sm:$0xf]
  %v7986 = vld [vmem:[%s1 + $0x7a0] sm:$0xf]
  %v7987 = vld [vmem:[%s1 + $0x7ac] sm:$0xf]
  %v7988 = vld [vmem:[%s1 + $0x7b8] sm:$0xf]
  %v7989 = vld [vmem:[%s1 + $0x7c4] sm:$0xf]
  %v7990 = vld [vmem:[%s1 + $0x7d0] sm:$0xf]
  %v7991 = vld [vmem:[%s1 + $0x7dc] sm:$0xf]
  %v7992 = vld [vmem:[%s1 + $0x7e8] sm:$0xf]
  %v7993 = vld [vmem:[%s1 + $0x7f4] sm:$0xf]
  %v7994 = vld [vmem:[%s1 + $0x800] sm:$0xf]
  %v7995 = vld [vmem:[%s1 + $0x80c] sm:$0xf]
  %v7996 = vld [vmem:[%s1 + $0x818] sm:$0xf]
  %v7997 = vld [vmem:[%s1 + $0x824] sm:$0xf]
  %v7998 = vld [vmem:[%s1 + $0x830] sm:$0xf]
  %v7999 = vld [vmem:[%s1 + $0x83c] sm:$0xf]
  %v8000 = vld [vmem:[%s1 + $0x848] sm:$0xf]
  %v8001 = vld [vmem:[%s1 + $0x854] sm:$0xf]
  %v8002 = vld [vmem:[%s1 + $0x860] sm:$0xf]
  %v8003 = vld [vmem:[%s1 + $0x86c] sm:$0xf]
  %v8004 = vld [vmem:[%s1 + $0x878] sm:$0xf]
  %v8005 = vld [vmem:[%s1 + $0x884] sm:$0xf]
  %v8006 = vld [vmem:[%s1 + $0x890] sm:$0xf]
  %v8007 = vld [vmem:[%s1 + $0x89c] sm:$0xf]
  %v8008 = vld [vmem:[%s1 + $0x8a8] sm:$0xf]
  %v8009 = vld [vmem:[%s1 + $0x8b4] sm:$0xf]
  %v8010 = vld [vmem:[%s1 + $0x8c0] sm:$0xf]
  %v8011 = vld [vmem:[%s1 + $0x8cc] sm:$0xf]
  %v8012 = vld [vmem:[%s1 + $0x8d8] sm:$0xf]
  %v8013 = vld [vmem:[%s1 + $0x8e4] sm:$0xf]
  %v8014 = vld [vmem:[%s1 + $0x8f0] sm:$0xf]
  %v8015 = vld [vmem:[%s1 + $0x8fc] sm:$0xf]
  %v8016 = vld [vmem:[%s1 + $0x908] sm:$0xf]
  %v8017 = vld [vmem:[%s1 + $0x914] sm:$0xf]
  %v8018 = vld [vmem:[%s1 + $0x920] sm:$0xf]
  %v8019 = vld [vmem:[%s1 + $0x92c] sm:$0xf]
  %v8020 = vld [vmem:[%s1 + $0x938] sm:$0xf]
  %v8021 = vld [vmem:[%s1 + $0x944] sm:$0xf]
  %v8022 = vld [vmem:[%s1 + $0x950] sm:$0xf]
  %v8023 = vld [vmem:[%s1 + $0x95c] sm:$0xf]
  %v8024 = vld [vmem:[%s1 + $0x968] sm:$0xf]
  %v8025 = vld [vmem:[%s1 + $0x974] sm:$0xf]
  %v8026 = vld [vmem:[%s1 + $0x980] sm:$0xf]
  %v8027 = vld [vmem:[%s1 + $0x98c] sm:$0xf]
  %v8028 = vld [vmem:[%s1 + $0x998] sm:$0xf]
  %v8029 = vld [vmem:[%s1 + $0x9a4] sm:$0xf]
  %v8030 = vld [vmem:[%s1 + $0x9b0] sm:$0xf]
  %v8031 = vld [vmem:[%s1 + $0x9bc] sm:$0xf]
  %v8032 = vld [vmem:[%s1 + $0x9c8] sm:$0xf]
  %v8033 = vld [vmem:[%s1 + $0x9d4] sm:$0xf]
  %v8034 = vld [vmem:[%s1 + $0x9e0] sm:$0xf]
  %v8035 = vld [vmem:[%s1 + $0x9ec] sm:$0xf]
  %v8036 = vld [vmem:[%s1 + $0x9f8] sm:$0xf]
  %v8037 = vld [vmem:[%s1 + $0xa04] sm:$0xf]
  %v8038 = vld [vmem:[%s1 + $0xa10] sm:$0xf]
  %v8039 = vld [vmem:[%s1 + $0xa1c] sm:$0xf]
  %v8040 = vld [vmem:[%s1 + $0xa28] sm:$0xf]
  %v8041 = vld [vmem:[%s1 + $0xa34] sm:$0xf]
  %v8042 = vld [vmem:[%s1 + $0xa40] sm:$0xf]
  %v8043 = vld [vmem:[%s1 + $0xa4c] sm:$0xf]
  %v8044 = vld [vmem:[%s1 + $0xa58] sm:$0xf]
  %v8045 = vld [vmem:[%s1 + $0xa64] sm:$0xf]
  %v8046 = vld [vmem:[%s1 + $0xa70] sm:$0xf]
  %v8047 = vld [vmem:[%s1 + $0xa7c] sm:$0xf]
  %v8048 = vld [vmem:[%s1 + $0xa88] sm:$0xf]
  %v8049 = vld [vmem:[%s1 + $0xa94] sm:$0xf]
  %v8050 = vld [vmem:[%s1 + $0xaa0] sm:$0xf]
  %v8051 = vld [vmem:[%s1 + $0xaac] sm:$0xf]
  %v8052 = vld [vmem:[%s1 + $0xab8] sm:$0xf]
  %v8053 = vld [vmem:[%s1 + $0xac4] sm:$0xf]
  %v8054 = vld [vmem:[%s1 + $0xad0] sm:$0xf]
  %v8055 = vld [vmem:[%s1 + $0xadc] sm:$0xf]
  %v8056 = vld [vmem:[%s1 + $0xae8] sm:$0xf]
  %v8057 = vld [vmem:[%s1 + $0xaf4] sm:$0xf]
  %v8058 = vld [vmem:[%s1 + $0xb00] sm:$0xf]
  %v8059 = vld [vmem:[%s1 + $0xb0c] sm:$0xf]
  %v8060 = vld [vmem:[%s1 + $0xb18] sm:$0xf]
  %v8061 = vld [vmem:[%s1 + $0xb24] sm:$0xf]
  %v8062 = vld [vmem:[%s1 + $0xb30] sm:$0xf]
  %v8063 = vld [vmem:[%s1 + $0xb3c] sm:$0xf]
  %v8064 = vld [vmem:[%s1 + $0xb48] sm:$0xf]
  %v8065 = vld [vmem:[%s1 + $0xb54] sm:$0xf]
  %v8066 = vld [vmem:[%s1 + $0xb60] sm:$0xf]
  %v8067 = vld [vmem:[%s1 + $0xb6c] sm:$0xf]
  %v8068 = vld [vmem:[%s1 + $0xb78] sm:$0xf]
  %v8069 = vld [vmem:[%s1 + $0xb84] sm:$0xf]
  %v8070 = vld [vmem:[%s1 + $0xb90] sm:$0xf]
  %v8071 = vld [vmem:[%s1 + $0xb9c] sm:$0xf]
  %v8072 = vld [vmem:[%s1 + $0xba8] sm:$0xf]
  %v8073 = vld [vmem:[%s1 + $0xbb4] sm:$0xf]
  %v8074 = vld [vmem:[%s1 + $0xbc0] sm:$0xf]
  %v8075 = vld [vmem:[%s1 + $0xbcc] sm:$0xf]
  %v8076 = vld [vmem:[%s1 + $0xbd8] sm:$0xf]
  %v8077 = vld [vmem:[%s1 + $0xbe4] sm:$0xf]
  %v8078 = vld [vmem:[%s1 + $0xbf0] sm:$0xf]
  %v8079 = vld [vmem:[%s1 + $0xbfc] sm:$0xf]
  %v8080 = vld [vmem:[%s1 + $0xc08] sm:$0xf]
  %v8081 = vld [vmem:[%s1 + $0xc14] sm:$0xf]
  %v8082 = vld [vmem:[%s1 + $0xc20] sm:$0xf]
  %v8083 = vld [vmem:[%s1 + $0xc2c] sm:$0xf]
  %v8084 = vld [vmem:[%s1 + $0xc38] sm:$0xf]
  %v8085 = vld [vmem:[%s1 + $0xc44] sm:$0xf]
  %v8086 = vld [vmem:[%s1 + $0xc50] sm:$0xf]
  %v8087 = vld [vmem:[%s1 + $0xc5c] sm:$0xf]
  %v8088 = vld [vmem:[%s1 + $0xc68] sm:$0xf]
  %v8089 = vld [vmem:[%s1 + $0xc74] sm:$0xf]
  %v8090 = vld [vmem:[%s1 + $0xc80] sm:$0xf]
  %v8091 = vld [vmem:[%s1 + $0xc8c] sm:$0xf]
  %v8092 = vld [vmem:[%s1 + $0xc98] sm:$0xf]
  %v8093 = vld [vmem:[%s1 + $0xca4] sm:$0xf]
  %v8094 = vld [vmem:[%s1 + $0xcb0] sm:$0xf]
  %v8095 = vld [vmem:[%s1 + $0xcbc] sm:$0xf]
  %v8096 = vld [vmem:[%s1 + $0xcc8] sm:$0xf]
  %v8097 = vld [vmem:[%s1 + $0xcd4] sm:$0xf]
  %v8098 = vld [vmem:[%s1 + $0xce0] sm:$0xf]
  %v8099 = vld [vmem:[%s1 + $0xcec] sm:$0xf]
  %v8100 = vld [vmem:[%s1 + $0xcf8] sm:$0xf]
  %v8101 = vld [vmem:[%s1 + $0xd04] sm:$0xf]
  %v8102 = vld [vmem:[%s1 + $0xd10] sm:$0xf]
  %v8103 = vld [vmem:[%s1 + $0xd1c] sm:$0xf]
  %v8104 = vld [vmem:[%s1 + $0xd28] sm:$0xf]
  %v8105 = vld [vmem:[%s1 + $0xd34] sm:$0xf]
  %v8106 = vld [vmem:[%s1 + $0xd40] sm:$0xf]
  %v8107 = vld [vmem:[%s1 + $0xd4c] sm:$0xf]
  %v8108 = vld [vmem:[%s1 + $0xd58] sm:$0xf]
  %v8109 = vld [vmem:[%s1 + $0xd64] sm:$0xf]
  %v8110 = vld [vmem:[%s1 + $0xd70] sm:$0xf]
  %v8111 = vld [vmem:[%s1 + $0xd7c] sm:$0xf]
  %v8112 = vld [vmem:[%s1 + $0xd88] sm:$0xf]
  %v8113 = vld [vmem:[%s1 + $0xd94] sm:$0xf]
  %v8114 = vld [vmem:[%s1 + $0xda0] sm:$0xf]
  %v8115 = vld [vmem:[%s1 + $0xdac] sm:$0xf]
  %v8116 = vld [vmem:[%s1 + $0xdb8] sm:$0xf]
  %v8117 = vld [vmem:[%s1 + $0xdc4] sm:$0xf]
  %v8118 = vld [vmem:[%s1 + $0xdd0] sm:$0xf]
  %v8119 = vld [vmem:[%s1 + $0xddc] sm:$0xf]
  %v8120 = vld [vmem:[%s1 + $0xde8] sm:$0xf]
  %v8121 = vld [vmem:[%s1 + $0xdf4] sm:$0xf]
  %v8122 = vld [vmem:[%s1 + $0xe00] sm:$0xf]
  %v8123 = vld [vmem:[%s1 + $0xe0c] sm:$0xf]
  %v8124 = vld [vmem:[%s1 + $0xe18] sm:$0xf]
  %v8125 = vld [vmem:[%s1 + $0xe24] sm:$0xf]
  %v8126 = vld [vmem:[%s1 + $0xe30] sm:$0xf]
  %v8127 = vld [vmem:[%s1 + $0xe3c] sm:$0xf]
  %v8128 = vld [vmem:[%s1 + $0xe48] sm:$0xf]
  %v8129 = vld [vmem:[%s1 + $0xe54] sm:$0xf]
  %v8130 = vld [vmem:[%s1 + $0xe60] sm:$0xf]
  %v8131 = vld [vmem:[%s1 + $0xe6c] sm:$0xf]
  %v8132 = vld [vmem:[%s1 + $0xe78] sm:$0xf]
  %v8133 = vld [vmem:[%s1 + $0xe84] sm:$0xf]
  %v8134 = vld [vmem:[%s1 + $0xe90] sm:$0xf]
  %v8135 = vld [vmem:[%s1 + $0xe9c] sm:$0xf]
  %v8136 = vld [vmem:[%s1 + $0xea8] sm:$0xf]
  %v8137 = vld [vmem:[%s1 + $0xeb4] sm:$0xf]
  %v8138 = vld [vmem:[%s1 + $0xec0] sm:$0xf]
  %v8139 = vld [vmem:[%s1 + $0xecc] sm:$0xf]
  %v8140 = vld [vmem:[%s1 + $0xed8] sm:$0xf]
  %v8141 = vld [vmem:[%s1 + $0xee4] sm:$0xf]
  %v8142 = vld [vmem:[%s1 + $0xef0] sm:$0xf]
  %v8143 = vld [vmem:[%s1 + $0xefc] sm:$0xf]
  %v8144 = vld [vmem:[%s1 + $0xf08] sm:$0xf]
  %v8145 = vld [vmem:[%s1 + $0xf14] sm:$0xf]
  %v8146 = vld [vmem:[%s1 + $0xf20] sm:$0xf]
  %v8147 = vld [vmem:[%s1 + $0xf2c] sm:$0xf]
  %v8148 = vld [vmem:[%s1 + $0xf38] sm:$0xf]
  %v8149 = vld [vmem:[%s1 + $0xf44] sm:$0xf]
  %v8150 = vld [vmem:[%s1 + $0xf50] sm:$0xf]
  %v8151 = vld [vmem:[%s1 + $0xf5c] sm:$0xf]
  %v8152 = vld [vmem:[%s1 + $0xf68] sm:$0xf]
  %v8153 = vld [vmem:[%s1 + $0xf74] sm:$0xf]
  %v8154 = vld [vmem:[%s1 + $0xf80] sm:$0xf]
  %v8155 = vld [vmem:[%s1 + $0xf8c] sm:$0xf]
  %v8156 = vld [vmem:[%s1 + $0xf98] sm:$0xf]
  %v8157 = vld [vmem:[%s1 + $0xfa4] sm:$0xf]
  %v8158 = vld [vmem:[%s1 + $0xfb0] sm:$0xf]
  %v8159 = vld [vmem:[%s1 + $0xfbc] sm:$0xf]
  %v8358 = vunpack.c.l.b16 %v7626
  %v8359 = vunpack.c.h.b16 %v7626
  %v8360 = vunpack.c.l.b16 %v7627
  %v8361 = vunpack.c.h.b16 %v7627
  %v8362 = vunpack.c.l.b16 %v7628
  %v8363 = vunpack.c.h.b16 %v7628
  %v8364 = vunpack.c.l.b16 %v7629
  %v8365 = vunpack.c.h.b16 %v7629
  %v8366 = vunpack.c.l.b16 %v7630
  %v8367 = vunpack.c.h.b16 %v7630
  %v8368 = vunpack.c.l.b16 %v7631
  %v8369 = vunpack.c.h.b16 %v7631
  %v8370 = vunpack.c.l.b16 %v7632
  %v8371 = vunpack.c.h.b16 %v7632
  %v8372 = vunpack.c.l.b16 %v7633
  %v8373 = vunpack.c.h.b16 %v7633
  %v8374 = vunpack.c.l.b16 %v7634
  %v8375 = vunpack.c.h.b16 %v7634
  %v8376 = vunpack.c.l.b16 %v7635
  %v8377 = vunpack.c.h.b16 %v7635
  %v8378 = vunpack.c.l.b16 %v7636
  %v8379 = vunpack.c.l.b16 %v7637
  %v8380 = vunpack.c.h.b16 %v7637
  %v8381 = vunpack.c.l.b16 %v7638
  %v8382 = vunpack.c.h.b16 %v7638
  %v8383 = vunpack.c.l.b16 %v7639
  %v8384 = vunpack.c.h.b16 %v7639
  %v8385 = vunpack.c.l.b16 %v7640
  %v8386 = vunpack.c.h.b16 %v7640
  %v8387 = vunpack.c.l.b16 %v7641
  %v8388 = vunpack.c.h.b16 %v7641
  %v8389 = vunpack.c.l.b16 %v7642
  %v8390 = vunpack.c.h.b16 %v7642
  %v8391 = vunpack.c.l.b16 %v7643
  %v8392 = vunpack.c.h.b16 %v7643
  %v8393 = vunpack.c.l.b16 %v7644
  %v8394 = vunpack.c.h.b16 %v7644
  %v8395 = vunpack.c.l.b16 %v7645
  %v8396 = vunpack.c.h.b16 %v7645
  %v8397 = vunpack.c.l.b16 %v7646
  %v8398 = vunpack.c.h.b16 %v7646
  %v8399 = vunpack.c.l.b16 %v7647
  %v8400 = vunpack.c.l.b16 %v7648
  %v8401 = vunpack.c.h.b16 %v7648
  %v8402 = vunpack.c.l.b16 %v7649
  %v8403 = vunpack.c.h.b16 %v7649
  %v8404 = vunpack.c.l.b16 %v7650
  %v8405 = vunpack.c.h.b16 %v7650
  %v8406 = vunpack.c.l.b16 %v7651
  %v8407 = vunpack.c.h.b16 %v7651
  %v8408 = vunpack.c.l.b16 %v7652
  %v8409 = vunpack.c.h.b16 %v7652
  %v8410 = vunpack.c.l.b16 %v7653
  %v8411 = vunpack.c.h.b16 %v7653
  %v8412 = vunpack.c.l.b16 %v7654
  %v8413 = vunpack.c.h.b16 %v7654
  %v8414 = vunpack.c.l.b16 %v7655
  %v8415 = vunpack.c.h.b16 %v7655
  %v8416 = vunpack.c.l.b16 %v7656
  %v8417 = vunpack.c.h.b16 %v7656
  %v8418 = vunpack.c.l.b16 %v7657
  %v8419 = vunpack.c.h.b16 %v7657
  %v8420 = vunpack.c.l.b16 %v7658
  %v8421 = vunpack.c.l.b16 %v7659
  %v8422 = vunpack.c.h.b16 %v7659
  %v8423 = vunpack.c.l.b16 %v7660
  %v8424 = vunpack.c.h.b16 %v7660
  %v8425 = vunpack.c.l.b16 %v7661
  %v8426 = vunpack.c.h.b16 %v7661
  %v8427 = vunpack.c.l.b16 %v7662
  %v8428 = vunpack.c.h.b16 %v7662
  %v8429 = vunpack.c.l.b16 %v7663
  %v8430 = vunpack.c.h.b16 %v7663
  %v8431 = vunpack.c.l.b16 %v7664
  %v8432 = vunpack.c.h.b16 %v7664
  %v8433 = vunpack.c.l.b16 %v7665
  %v8434 = vunpack.c.h.b16 %v7665
  %v8435 = vunpack.c.l.b16 %v7666
  %v8436 = vunpack.c.h.b16 %v7666
  %v8437 = vunpack.c.l.b16 %v7667
  %v8438 = vunpack.c.h.b16 %v7667
  %v8439 = vunpack.c.l.b16 %v7668
  %v8440 = vunpack.c.h.b16 %v7668
  %v8441 = vunpack.c.l.b16 %v7669
  %v8442 = vunpack.c.l.b16 %v7670
  %v8443 = vunpack.c.h.b16 %v7670
  %v8444 = vunpack.c.l.b16 %v7671
  %v8445 = vunpack.c.h.b16 %v7671
  %v8446 = vunpack.c.l.b16 %v7672
  %v8447 = vunpack.c.h.b16 %v7672
  %v8448 = vunpack.c.l.b16 %v7673
  %v8449 = vunpack.c.h.b16 %v7673
  %v8450 = vunpack.c.l.b16 %v7674
  %v8451 = vunpack.c.h.b16 %v7674
  %v8452 = vunpack.c.l.b16 %v7675
  %v8453 = vunpack.c.h.b16 %v7675
  %v8454 = vunpack.c.l.b16 %v7676
  %v8455 = vunpack.c.h.b16 %v7676
  %v8456 = vunpack.c.l.b16 %v7677
  %v8457 = vunpack.c.h.b16 %v7677
  %v8458 = vunpack.c.l.b16 %v7678
  %v8459 = vunpack.c.h.b16 %v7678
  %v8460 = vunpack.c.l.b16 %v7679
  %v8461 = vunpack.c.h.b16 %v7679
  %v8462 = vunpack.c.l.b16 %v7680
  %v8463 = vunpack.c.l.b16 %v7681
  %v8464 = vunpack.c.h.b16 %v7681
  %v8465 = vunpack.c.l.b16 %v7682
  %v8466 = vunpack.c.h.b16 %v7682
  %v8467 = vunpack.c.l.b16 %v7683
  %v8468 = vunpack.c.h.b16 %v7683
  %v8469 = vunpack.c.l.b16 %v7684
  %v8470 = vunpack.c.h.b16 %v7684
  %v8471 = vunpack.c.l.b16 %v7685
  %v8472 = vunpack.c.h.b16 %v7685
  %v8473 = vunpack.c.l.b16 %v7686
  %v8474 = vunpack.c.h.b16 %v7686
  %v8475 = vunpack.c.l.b16 %v7687
  %v8476 = vunpack.c.h.b16 %v7687
  %v8477 = vunpack.c.l.b16 %v7688
  %v8478 = vunpack.c.h.b16 %v7688
  %v8479 = vunpack.c.l.b16 %v7689
  %v8480 = vunpack.c.h.b16 %v7689
  %v8481 = vunpack.c.l.b16 %v7690
  %v8482 = vunpack.c.h.b16 %v7690
  %v8483 = vunpack.c.l.b16 %v7691
  %v8484 = vunpack.c.l.b16 %v7692
  %v8485 = vunpack.c.h.b16 %v7692
  %v8486 = vunpack.c.l.b16 %v7693
  %v8487 = vunpack.c.h.b16 %v7693
  %v8488 = vunpack.c.l.b16 %v7694
  %v8489 = vunpack.c.h.b16 %v7694
  %v8490 = vunpack.c.l.b16 %v7695
  %v8491 = vunpack.c.h.b16 %v7695
  %v8492 = vunpack.c.l.b16 %v7696
  %v8493 = vunpack.c.h.b16 %v7696
  %v8494 = vunpack.c.l.b16 %v7697
  %v8495 = vunpack.c.h.b16 %v7697
  %v8496 = vunpack.c.l.b16 %v7698
  %v8497 = vunpack.c.h.b16 %v7698
  %v8498 = vunpack.c.l.b16 %v7699
  %v8499 = vunpack.c.h.b16 %v7699
  %v8500 = vunpack.c.l.b16 %v7700
  %v8501 = vunpack.c.h.b16 %v7700
  %v8502 = vunpack.c.l.b16 %v7701
  %v8503 = vunpack.c.h.b16 %v7701
  %v8504 = vunpack.c.l.b16 %v7702
  %v8505 = vunpack.c.l.b16 %v7703
  %v8506 = vunpack.c.h.b16 %v7703
  %v8507 = vunpack.c.l.b16 %v7704
  %v8508 = vunpack.c.h.b16 %v7704
  %v8509 = vunpack.c.l.b16 %v7705
  %v8510 = vunpack.c.h.b16 %v7705
  %v8511 = vunpack.c.l.b16 %v7706
  %v8512 = vunpack.c.h.b16 %v7706
  %v8513 = vunpack.c.l.b16 %v7707
  %v8514 = vunpack.c.h.b16 %v7707
  %v8515 = vunpack.c.l.b16 %v7708
  %v8516 = vunpack.c.h.b16 %v7708
  %v8517 = vunpack.c.l.b16 %v7709
  %v8518 = vunpack.c.h.b16 %v7709
  %v8519 = vunpack.c.l.b16 %v7710
  %v8520 = vunpack.c.h.b16 %v7710
  %v8521 = vunpack.c.l.b16 %v7711
  %v8522 = vunpack.c.h.b16 %v7711
  %v8523 = vunpack.c.l.b16 %v7712
  %v8524 = vunpack.c.h.b16 %v7712
  %v8525 = vunpack.c.l.b16 %v7713
  %v8526 = vunpack.c.l.b16 %v7714
  %v8527 = vunpack.c.h.b16 %v7714
  %v8528 = vunpack.c.l.b16 %v7715
  %v8529 = vunpack.c.h.b16 %v7715
  %v8530 = vunpack.c.l.b16 %v7716
  %v8531 = vunpack.c.h.b16 %v7716
  %v8532 = vunpack.c.l.b16 %v7717
  %v8533 = vunpack.c.h.b16 %v7717
  %v8534 = vunpack.c.l.b16 %v7718
  %v8535 = vunpack.c.h.b16 %v7718
  %v8536 = vunpack.c.l.b16 %v7719
  %v8537 = vunpack.c.h.b16 %v7719
  %v8538 = vunpack.c.l.b16 %v7720
  %v8539 = vunpack.c.h.b16 %v7720
  %v8540 = vunpack.c.l.b16 %v7721
  %v8541 = vunpack.c.h.b16 %v7721
  %v8542 = vunpack.c.l.b16 %v7722
  %v8543 = vunpack.c.h.b16 %v7722
  %v8544 = vunpack.c.l.b16 %v7723
  %v8545 = vunpack.c.h.b16 %v7723
  %v8546 = vunpack.c.l.b16 %v7724
  %v8547 = vunpack.c.l.b16 %v7725
  %v8548 = vunpack.c.h.b16 %v7725
  %v8549 = vunpack.c.l.b16 %v7726
  %v8550 = vunpack.c.h.b16 %v7726
  %v8551 = vunpack.c.l.b16 %v7727
  %v8552 = vunpack.c.h.b16 %v7727
  %v8553 = vunpack.c.l.b16 %v7728
  %v8554 = vunpack.c.h.b16 %v7728
  %v8555 = vunpack.c.l.b16 %v7729
  %v8556 = vunpack.c.h.b16 %v7729
  %v8557 = vunpack.c.l.b16 %v7730
  %v8558 = vunpack.c.h.b16 %v7730
  %v8559 = vunpack.c.l.b16 %v7731
  %v8560 = vunpack.c.h.b16 %v7731
  %v8561 = vunpack.c.l.b16 %v7732
  %v8562 = vunpack.c.h.b16 %v7732
  %v8563 = vunpack.c.l.b16 %v7733
  %v8564 = vunpack.c.h.b16 %v7733
  %v8565 = vunpack.c.l.b16 %v7734
  %v8566 = vunpack.c.h.b16 %v7734
  %v8567 = vunpack.c.l.b16 %v7735
  %v8568 = vunpack.c.l.b16 %v7736
  %v8569 = vunpack.c.h.b16 %v7736
  %v8570 = vunpack.c.l.b16 %v7737
  %v8571 = vunpack.c.h.b16 %v7737
  %v8572 = vunpack.c.l.b16 %v7738
  %v8573 = vunpack.c.h.b16 %v7738
  %v8574 = vunpack.c.l.b16 %v7739
  %v8575 = vunpack.c.h.b16 %v7739
  %v8576 = vunpack.c.l.b16 %v7740
  %v8577 = vunpack.c.h.b16 %v7740
  %v8578 = vunpack.c.l.b16 %v7741
  %v8579 = vunpack.c.h.b16 %v7741
  %v8580 = vunpack.c.l.b16 %v7742
  %v8581 = vunpack.c.h.b16 %v7742
  %v8582 = vunpack.c.l.b16 %v7743
  %v8583 = vunpack.c.h.b16 %v7743
  %v8584 = vunpack.c.l.b16 %v7744
  %v8585 = vunpack.c.h.b16 %v7744
  %v8586 = vunpack.c.l.b16 %v7745
  %v8587 = vunpack.c.h.b16 %v7745
  %v8588 = vunpack.c.l.b16 %v7746
  %v8589 = vunpack.c.l.b16 %v7747
  %v8590 = vunpack.c.h.b16 %v7747
  %v8591 = vunpack.c.l.b16 %v7748
  %v8592 = vunpack.c.h.b16 %v7748
  %v8593 = vunpack.c.l.b16 %v7749
  %v8594 = vunpack.c.h.b16 %v7749
  %v8595 = vunpack.c.l.b16 %v7750
  %v8596 = vunpack.c.h.b16 %v7750
  %v8597 = vunpack.c.l.b16 %v7751
  %v8598 = vunpack.c.h.b16 %v7751
  %v8599 = vunpack.c.l.b16 %v7752
  %v8600 = vunpack.c.h.b16 %v7752
  %v8601 = vunpack.c.l.b16 %v7753
  %v8602 = vunpack.c.h.b16 %v7753
  %v8603 = vunpack.c.l.b16 %v7754
  %v8604 = vunpack.c.h.b16 %v7754
  %v8605 = vunpack.c.l.b16 %v7755
  %v8606 = vunpack.c.h.b16 %v7755
  %v8607 = vunpack.c.l.b16 %v7756
  %v8608 = vunpack.c.h.b16 %v7756
  %v8609 = vunpack.c.l.b16 %v7757
  %v8610 = vunpack.c.l.b16 %v7758
  %v8611 = vunpack.c.h.b16 %v7758
  %v8612 = vunpack.c.l.b16 %v7759
  %v8613 = vunpack.c.h.b16 %v7759
  %v8614 = vunpack.c.l.b16 %v7760
  %v8615 = vunpack.c.h.b16 %v7760
  %v8616 = vunpack.c.l.b16 %v7761
  %v8617 = vunpack.c.h.b16 %v7761
  %v8618 = vunpack.c.l.b16 %v7762
  %v8619 = vunpack.c.h.b16 %v7762
  %v8620 = vunpack.c.l.b16 %v7763
  %v8621 = vunpack.c.h.b16 %v7763
  %v8622 = vunpack.c.l.b16 %v7764
  %v8623 = vunpack.c.h.b16 %v7764
  %v8624 = vunpack.c.l.b16 %v7765
  %v8625 = vunpack.c.h.b16 %v7765
  %v8626 = vunpack.c.l.b16 %v7766
  %v8627 = vunpack.c.h.b16 %v7766
  %v8628 = vunpack.c.l.b16 %v7767
  %v8629 = vunpack.c.h.b16 %v7767
  %v8630 = vunpack.c.l.b16 %v7768
  %v8631 = vunpack.c.l.b16 %v7769
  %v8632 = vunpack.c.h.b16 %v7769
  %v8633 = vunpack.c.l.b16 %v7770
  %v8634 = vunpack.c.h.b16 %v7770
  %v8635 = vunpack.c.l.b16 %v7771
  %v8636 = vunpack.c.h.b16 %v7771
  %v8637 = vunpack.c.l.b16 %v7772
  %v8638 = vunpack.c.h.b16 %v7772
  %v8639 = vunpack.c.l.b16 %v7773
  %v8640 = vunpack.c.h.b16 %v7773
  %v8641 = vunpack.c.l.b16 %v7774
  %v8642 = vunpack.c.h.b16 %v7774
  %v8643 = vunpack.c.l.b16 %v7775
  %v8644 = vunpack.c.h.b16 %v7775
  %v8645 = vunpack.c.l.b16 %v7776
  %v8646 = vunpack.c.h.b16 %v7776
  %v8647 = vunpack.c.l.b16 %v7777
  %v8648 = vunpack.c.h.b16 %v7777
  %v8649 = vunpack.c.l.b16 %v7778
  %v8650 = vunpack.c.h.b16 %v7778
  %v8651 = vunpack.c.l.b16 %v7779
  %v8652 = vunpack.c.l.b16 %v7780
  %v8653 = vunpack.c.h.b16 %v7780
  %v8654 = vunpack.c.l.b16 %v7781
  %v8655 = vunpack.c.h.b16 %v7781
  %v8656 = vunpack.c.l.b16 %v7782
  %v8657 = vunpack.c.h.b16 %v7782
  %v8658 = vunpack.c.l.b16 %v7783
  %v8659 = vunpack.c.h.b16 %v7783
  %v8660 = vunpack.c.l.b16 %v7784
  %v8661 = vunpack.c.h.b16 %v7784
  %v8662 = vunpack.c.l.b16 %v7785
  %v8663 = vunpack.c.h.b16 %v7785
  %v8664 = vunpack.c.l.b16 %v7786
  %v8665 = vunpack.c.h.b16 %v7786
  %v8666 = vunpack.c.l.b16 %v7787
  %v8667 = vunpack.c.h.b16 %v7787
  %v8668 = vunpack.c.l.b16 %v7788
  %v8669 = vunpack.c.h.b16 %v7788
  %v8670 = vunpack.c.l.b16 %v7789
  %v8671 = vunpack.c.h.b16 %v7789
  %v8672 = vunpack.c.l.b16 %v7790
  %v8673 = vunpack.c.l.b16 %v7791
  %v8674 = vunpack.c.h.b16 %v7791
  %v8675 = vunpack.c.l.b16 %v7792
  %v8676 = vunpack.c.h.b16 %v7792
  %v8677 = vunpack.c.l.b16 %v7793
  %v8678 = vunpack.c.h.b16 %v7793
  %v8679 = vunpack.c.l.b16 %v7794
  %v8680 = vunpack.c.h.b16 %v7794
  %v8681 = vunpack.c.l.b16 %v7795
  %v8682 = vunpack.c.h.b16 %v7795
  %v8683 = vunpack.c.l.b16 %v7796
  %v8684 = vunpack.c.h.b16 %v7796
  %v8685 = vunpack.c.l.b16 %v7797
  %v8686 = vunpack.c.h.b16 %v7797
  %v8687 = vunpack.c.l.b16 %v7798
  %v8688 = vunpack.c.h.b16 %v7798
  %v8689 = vunpack.c.l.b16 %v7799
  %v8690 = vunpack.c.h.b16 %v7799
  %v8691 = vunpack.c.l.b16 %v7800
  %v8692 = vunpack.c.h.b16 %v7800
  %v8693 = vunpack.c.l.b16 %v7801
  %v8694 = vunpack.c.l.b16 %v7802
  %v8695 = vunpack.c.h.b16 %v7802
  %v8696 = vunpack.c.l.b16 %v7803
  %v8697 = vunpack.c.h.b16 %v7803
  %v8698 = vunpack.c.l.b16 %v7804
  %v8699 = vunpack.c.h.b16 %v7804
  %v8700 = vunpack.c.l.b16 %v7805
  %v8701 = vunpack.c.h.b16 %v7805
  %v8702 = vunpack.c.l.b16 %v7806
  %v8703 = vunpack.c.h.b16 %v7806
  %v8704 = vunpack.c.l.b16 %v7807
  %v8705 = vunpack.c.h.b16 %v7807
  %v8706 = vunpack.c.l.b16 %v7808
  %v8707 = vunpack.c.h.b16 %v7808
  %v8708 = vunpack.c.l.b16 %v7809
  %v8709 = vunpack.c.h.b16 %v7809
  %v8710 = vunpack.c.l.b16 %v7810
  %v8711 = vunpack.c.h.b16 %v7810
  %v8712 = vunpack.c.l.b16 %v7811
  %v8713 = vunpack.c.h.b16 %v7811
  %v8714 = vunpack.c.l.b16 %v7812
  %v8715 = vunpack.c.l.b16 %v7813
  %v8716 = vunpack.c.h.b16 %v7813
  %v8717 = vunpack.c.l.b16 %v7814
  %v8718 = vunpack.c.h.b16 %v7814
  %v8719 = vunpack.c.l.b16 %v7815
  %v8720 = vunpack.c.h.b16 %v7815
  %v8721 = vunpack.c.l.b16 %v7816
  %v8722 = vunpack.c.h.b16 %v7816
  %v8723 = vunpack.c.l.b16 %v7817
  %v8724 = vunpack.c.h.b16 %v7817
  %v8725 = vunpack.c.l.b16 %v7818
  %v8726 = vunpack.c.h.b16 %v7818
  %v8727 = vunpack.c.l.b16 %v7819
  %v8728 = vunpack.c.h.b16 %v7819
  %v8729 = vunpack.c.l.b16 %v7820
  %v8730 = vunpack.c.h.b16 %v7820
  %v8731 = vunpack.c.l.b16 %v7821
  %v8732 = vunpack.c.h.b16 %v7821
  %v8733 = vunpack.c.l.b16 %v7822
  %v8734 = vunpack.c.h.b16 %v7822
  %v8735 = vunpack.c.l.b16 %v7823
  %v8736 = vpack.c.b16 %v8379, %v8358
  %v8737 = vpack.c.b16 %v8380, %v8359
  %v8738 = vpack.c.b16 %v8381, %v8360
  %v8739 = vpack.c.b16 %v8382, %v8361
  %v8740 = vpack.c.b16 %v8383, %v8362
  %v8741 = vpack.c.b16 %v8384, %v8363
  %v8742 = vpack.c.b16 %v8385, %v8364
  %v8743 = vpack.c.b16 %v8386, %v8365
  %v8744 = vpack.c.b16 %v8387, %v8366
  %v8745 = vpack.c.b16 %v8388, %v8367
  %v8746 = vpack.c.b16 %v8389, %v8368
  %v8747 = vpack.c.b16 %v8390, %v8369
  %v8748 = vpack.c.b16 %v8391, %v8370
  %v8749 = vpack.c.b16 %v8392, %v8371
  %v8750 = vpack.c.b16 %v8393, %v8372
  %v8751 = vpack.c.b16 %v8394, %v8373
  %v8752 = vpack.c.b16 %v8395, %v8374
  %v8753 = vpack.c.b16 %v8396, %v8375
  %v8754 = vpack.c.b16 %v8397, %v8376
  %v8755 = vpack.c.b16 %v8398, %v8377
  %v8756 = vpack.c.b16 %v8399, %v8378
  %v8757 = vpack.c.b16 %v8421, %v8400
  %v8758 = vpack.c.b16 %v8422, %v8401
  %v8759 = vpack.c.b16 %v8423, %v8402
  %v8760 = vpack.c.b16 %v8424, %v8403
  %v8761 = vpack.c.b16 %v8425, %v8404
  %v8762 = vpack.c.b16 %v8426, %v8405
  %v8763 = vpack.c.b16 %v8427, %v8406
  %v8764 = vpack.c.b16 %v8428, %v8407
  %v8765 = vpack.c.b16 %v8429, %v8408
  %v8766 = vpack.c.b16 %v8430, %v8409
  %v8767 = vpack.c.b16 %v8431, %v8410
  %v8768 = vpack.c.b16 %v8432, %v8411
  %v8769 = vpack.c.b16 %v8433, %v8412
  %v8770 = vpack.c.b16 %v8434, %v8413
  %v8771 = vpack.c.b16 %v8435, %v8414
  %v8772 = vpack.c.b16 %v8436, %v8415
  %v8773 = vpack.c.b16 %v8437, %v8416
  %v8774 = vpack.c.b16 %v8438, %v8417
  %v8775 = vpack.c.b16 %v8439, %v8418
  %v8776 = vpack.c.b16 %v8440, %v8419
  %v8777 = vpack.c.b16 %v8441, %v8420
  %v8778 = vpack.c.b16 %v8463, %v8442
  %v8779 = vpack.c.b16 %v8464, %v8443
  %v8780 = vpack.c.b16 %v8465, %v8444
  %v8781 = vpack.c.b16 %v8466, %v8445
  %v8782 = vpack.c.b16 %v8467, %v8446
  %v8783 = vpack.c.b16 %v8468, %v8447
  %v8784 = vpack.c.b16 %v8469, %v8448
  %v8785 = vpack.c.b16 %v8470, %v8449
  %v8786 = vpack.c.b16 %v8471, %v8450
  %v8787 = vpack.c.b16 %v8472, %v8451
  %v8788 = vpack.c.b16 %v8473, %v8452
  %v8789 = vpack.c.b16 %v8474, %v8453
  %v8790 = vpack.c.b16 %v8475, %v8454
  %v8791 = vpack.c.b16 %v8476, %v8455
  %v8792 = vpack.c.b16 %v8477, %v8456
  %v8793 = vpack.c.b16 %v8478, %v8457
  %v8794 = vpack.c.b16 %v8479, %v8458
  %v8795 = vpack.c.b16 %v8480, %v8459
  %v8796 = vpack.c.b16 %v8481, %v8460
  %v8797 = vpack.c.b16 %v8482, %v8461
  %v8798 = vpack.c.b16 %v8483, %v8462
  %v8799 = vpack.c.b16 %v8505, %v8484
  %v8800 = vpack.c.b16 %v8506, %v8485
  %v8801 = vpack.c.b16 %v8507, %v8486
  %v8802 = vpack.c.b16 %v8508, %v8487
  %v8803 = vpack.c.b16 %v8509, %v8488
  %v8804 = vpack.c.b16 %v8510, %v8489
  %v8805 = vpack.c.b16 %v8511, %v8490
  %v8806 = vpack.c.b16 %v8512, %v8491
  %v8807 = vpack.c.b16 %v8513, %v8492
  %v8808 = vpack.c.b16 %v8514, %v8493
  %v8809 = vpack.c.b16 %v8515, %v8494
  %v8810 = vpack.c.b16 %v8516, %v8495
  %v8811 = vpack.c.b16 %v8517, %v8496
  %v8812 = vpack.c.b16 %v8518, %v8497
  %v8813 = vpack.c.b16 %v8519, %v8498
  %v8814 = vpack.c.b16 %v8520, %v8499
  %v8815 = vpack.c.b16 %v8521, %v8500
  %v8816 = vpack.c.b16 %v8522, %v8501
  %v8817 = vpack.c.b16 %v8523, %v8502
  %v8818 = vpack.c.b16 %v8524, %v8503
  %v8819 = vpack.c.b16 %v8525, %v8504
  %v8820 = vpack.c.b16 %v8547, %v8526
  %v8821 = vpack.c.b16 %v8548, %v8527
  %v8822 = vpack.c.b16 %v8549, %v8528
  %v8823 = vpack.c.b16 %v8550, %v8529
  %v8824 = vpack.c.b16 %v8551, %v8530
  %v8825 = vpack.c.b16 %v8552, %v8531
  %v8826 = vpack.c.b16 %v8553, %v8532
  %v8827 = vpack.c.b16 %v8554, %v8533
  %v8828 = vpack.c.b16 %v8555, %v8534
  %v8829 = vpack.c.b16 %v8556, %v8535
  %v8830 = vpack.c.b16 %v8557, %v8536
  %v8831 = vpack.c.b16 %v8558, %v8537
  %v8832 = vpack.c.b16 %v8559, %v8538
  %v8833 = vpack.c.b16 %v8560, %v8539
  %v8834 = vpack.c.b16 %v8561, %v8540
  %v8835 = vpack.c.b16 %v8562, %v8541
  %v8836 = vpack.c.b16 %v8563, %v8542
  %v8837 = vpack.c.b16 %v8564, %v8543
  %v8838 = vpack.c.b16 %v8565, %v8544
  %v8839 = vpack.c.b16 %v8566, %v8545
  %v8840 = vpack.c.b16 %v8567, %v8546
  %v8841 = vpack.c.b16 %v8589, %v8568
  %v8842 = vpack.c.b16 %v8590, %v8569
  %v8843 = vpack.c.b16 %v8591, %v8570
  %v8844 = vpack.c.b16 %v8592, %v8571
  %v8845 = vpack.c.b16 %v8593, %v8572
  %v8846 = vpack.c.b16 %v8594, %v8573
  %v8847 = vpack.c.b16 %v8595, %v8574
  %v8848 = vpack.c.b16 %v8596, %v8575
  %v8849 = vpack.c.b16 %v8597, %v8576
  %v8850 = vpack.c.b16 %v8598, %v8577
  %v8851 = vpack.c.b16 %v8599, %v8578
  %v8852 = vpack.c.b16 %v8600, %v8579
  %v8853 = vpack.c.b16 %v8601, %v8580
  %v8854 = vpack.c.b16 %v8602, %v8581
  %v8855 = vpack.c.b16 %v8603, %v8582
  %v8856 = vpack.c.b16 %v8604, %v8583
  %v8857 = vpack.c.b16 %v8605, %v8584
  %v8858 = vpack.c.b16 %v8606, %v8585
  %v8859 = vpack.c.b16 %v8607, %v8586
  %v8860 = vpack.c.b16 %v8608, %v8587
  %v8861 = vpack.c.b16 %v8609, %v8588
  %v8862 = vpack.c.b16 %v8631, %v8610
  %v8863 = vpack.c.b16 %v8632, %v8611
  %v8864 = vpack.c.b16 %v8633, %v8612
  %v8865 = vpack.c.b16 %v8634, %v8613
  %v8866 = vpack.c.b16 %v8635, %v8614
  %v8867 = vpack.c.b16 %v8636, %v8615
  %v8868 = vpack.c.b16 %v8637, %v8616
  %v8869 = vpack.c.b16 %v8638, %v8617
  %v8870 = vpack.c.b16 %v8639, %v8618
  %v8871 = vpack.c.b16 %v8640, %v8619
  %v8872 = vpack.c.b16 %v8641, %v8620
  %v8873 = vpack.c.b16 %v8642, %v8621
  %v8874 = vpack.c.b16 %v8643, %v8622
  %v8875 = vpack.c.b16 %v8644, %v8623
  %v8876 = vpack.c.b16 %v8645, %v8624
  %v8877 = vpack.c.b16 %v8646, %v8625
  %v8878 = vpack.c.b16 %v8647, %v8626
  %v8879 = vpack.c.b16 %v8648, %v8627
  %v8880 = vpack.c.b16 %v8649, %v8628
  %v8881 = vpack.c.b16 %v8650, %v8629
  %v8882 = vpack.c.b16 %v8651, %v8630
  %v8883 = vpack.c.b16 %v8673, %v8652
  %v8884 = vpack.c.b16 %v8674, %v8653
  %v8885 = vpack.c.b16 %v8675, %v8654
  %v8886 = vpack.c.b16 %v8676, %v8655
  %v8887 = vpack.c.b16 %v8677, %v8656
  %v8888 = vpack.c.b16 %v8678, %v8657
  %v8889 = vpack.c.b16 %v8679, %v8658
  %v8890 = vpack.c.b16 %v8680, %v8659
  %v8891 = vpack.c.b16 %v8681, %v8660
  %v8892 = vpack.c.b16 %v8682, %v8661
  %v8893 = vpack.c.b16 %v8683, %v8662
  %v8894 = vpack.c.b16 %v8684, %v8663
  %v8895 = vpack.c.b16 %v8685, %v8664
  %v8896 = vpack.c.b16 %v8686, %v8665
  %v8897 = vpack.c.b16 %v8687, %v8666
  %v8898 = vpack.c.b16 %v8688, %v8667
  %v8899 = vpack.c.b16 %v8689, %v8668
  %v8900 = vpack.c.b16 %v8690, %v8669
  %v8901 = vpack.c.b16 %v8691, %v8670
  %v8902 = vpack.c.b16 %v8692, %v8671
  %v8903 = vpack.c.b16 %v8693, %v8672
  %v8904 = vpack.c.b16 %v8715, %v8694
  %v8905 = vpack.c.b16 %v8716, %v8695
  %v8906 = vpack.c.b16 %v8717, %v8696
  %v8907 = vpack.c.b16 %v8718, %v8697
  %v8908 = vpack.c.b16 %v8719, %v8698
  %v8909 = vpack.c.b16 %v8720, %v8699
  %v8910 = vpack.c.b16 %v8721, %v8700
  %v8911 = vpack.c.b16 %v8722, %v8701
  %v8912 = vpack.c.b16 %v8723, %v8702
  %v8913 = vpack.c.b16 %v8724, %v8703
  %v8914 = vpack.c.b16 %v8725, %v8704
  %v8915 = vpack.c.b16 %v8726, %v8705
  %v8916 = vpack.c.b16 %v8727, %v8706
  %v8917 = vpack.c.b16 %v8728, %v8707
  %v8918 = vpack.c.b16 %v8729, %v8708
  %v8919 = vpack.c.b16 %v8730, %v8709
  %v8920 = vpack.c.b16 %v8731, %v8710
  %v8921 = vpack.c.b16 %v8732, %v8711
  %v8922 = vpack.c.b16 %v8733, %v8712
  %v8923 = vpack.c.b16 %v8734, %v8713
  %v8924 = vpack.c.b16 %v8735, %v8714
  %v9450 = vunpack.c.l.b16 %v7824
  %v9451 = vunpack.c.l.b16 %v7825
  %v9452 = vunpack.c.l.b16 %v7826
  %v9453 = vunpack.c.l.b16 %v7827
  %v9454 = vunpack.c.l.b16 %v7828
  %v9455 = vunpack.c.l.b16 %v7829
  %v9456 = vunpack.c.l.b16 %v7830
  %v9457 = vunpack.c.l.b16 %v7831
  %v9458 = vunpack.c.l.b16 %v7832
  %v9459 = vunpack.c.l.b16 %v7833
  %v9460 = vunpack.c.l.b16 %v7834
  %v9461 = vunpack.c.l.b16 %v7835
  %v9462 = vunpack.c.l.b16 %v7836
  %v9463 = vunpack.c.l.b16 %v7837
  %v9464 = vunpack.c.l.b16 %v7838
  %v9465 = vunpack.c.l.b16 %v7839
  %v9466 = vunpack.c.l.b16 %v7840
  %v9467 = vunpack.c.l.b16 %v7841
  %v9468 = vunpack.c.l.b16 %v7842
  %v9469 = vunpack.c.l.b16 %v7843
  %v9470 = vunpack.c.l.b16 %v7844
  %v9471 = vunpack.c.l.b16 %v7845
  %v9472 = vunpack.c.l.b16 %v7846
  %v9473 = vunpack.c.l.b16 %v7847
  %v9474 = vunpack.c.l.b16 %v7848
  %v9475 = vunpack.c.l.b16 %v7849
  %v9476 = vunpack.c.l.b16 %v7850
  %v9477 = vunpack.c.l.b16 %v7851
  %v9478 = vunpack.c.l.b16 %v7852
  %v9479 = vunpack.c.l.b16 %v7853
  %v9480 = vunpack.c.l.b16 %v7854
  %v9481 = vunpack.c.l.b16 %v7855
  %v9482 = vunpack.c.l.b16 %v7856
  %v9483 = vunpack.c.l.b16 %v7857
  %v9484 = vunpack.c.l.b16 %v7858
  %v9485 = vunpack.c.l.b16 %v7859
  %v9486 = vunpack.c.l.b16 %v7860
  %v9487 = vunpack.c.l.b16 %v7861
  %v9488 = vunpack.c.l.b16 %v7862
  %v9489 = vunpack.c.l.b16 %v7863
  %v9490 = vunpack.c.l.b16 %v7864
  %v9491 = vunpack.c.l.b16 %v7865
  %v9492 = vunpack.c.l.b16 %v7866
  %v9493 = vunpack.c.l.b16 %v7867
  %v9494 = vunpack.c.l.b16 %v7868
  %v9495 = vunpack.c.l.b16 %v7869
  %v9496 = vunpack.c.l.b16 %v7870
  %v9497 = vunpack.c.l.b16 %v7871
  %v9498 = vunpack.c.l.b16 %v7872
  %v9499 = vunpack.c.l.b16 %v7873
  %v9500 = vunpack.c.l.b16 %v7874
  %v9501 = vunpack.c.l.b16 %v7875
  %v9502 = vunpack.c.l.b16 %v7876
  %v9503 = vunpack.c.l.b16 %v7877
  %v9504 = vunpack.c.l.b16 %v7878
  %v9505 = vunpack.c.l.b16 %v7879
  %v9506 = vunpack.c.l.b16 %v7880
  %v9507 = vunpack.c.l.b16 %v7881
  %v9508 = vunpack.c.l.b16 %v7882
  %v9509 = vunpack.c.l.b16 %v7883
  %v9510 = vunpack.c.l.b16 %v7884
  %v9511 = vunpack.c.l.b16 %v7885
  %v9512 = vunpack.c.l.b16 %v7886
  %v9513 = vunpack.c.l.b16 %v7887
  %v9514 = vunpack.c.l.b16 %v7888
  %v9515 = vunpack.c.l.b16 %v7889
  %v9516 = vunpack.c.l.b16 %v7890
  %v9517 = vunpack.c.l.b16 %v7891
  %v9518 = vunpack.c.l.b16 %v7892
  %v9519 = vunpack.c.l.b16 %v7893
  %v9520 = vunpack.c.l.b16 %v7894
  %v9521 = vunpack.c.l.b16 %v7895
  %v9522 = vunpack.c.l.b16 %v7896
  %v9523 = vunpack.c.l.b16 %v7897
  %v9524 = vunpack.c.l.b16 %v7898
  %v9525 = vunpack.c.l.b16 %v7899
  %v9526 = vunpack.c.l.b16 %v7900
  %v9527 = vunpack.c.l.b16 %v7901
  %v9528 = vunpack.c.l.b16 %v7902
  %v9529 = vunpack.c.l.b16 %v7903
  %v9530 = vunpack.c.l.b16 %v7904
  %v9531 = vunpack.c.l.b16 %v7905
  %v9532 = vunpack.c.l.b16 %v7906
  %v9533 = vunpack.c.l.b16 %v7907
  %v9534 = vunpack.c.l.b16 %v7908
  %v9535 = vunpack.c.l.b16 %v7909
  %v9536 = vunpack.c.l.b16 %v7910
  %v9537 = vunpack.c.l.b16 %v7911
  %v9538 = vunpack.c.l.b16 %v7912
  %v9539 = vunpack.c.l.b16 %v7913
  %v9540 = vunpack.c.l.b16 %v7914
  %v9541 = vunpack.c.l.b16 %v7915
  %v9542 = vunpack.c.l.b16 %v7916
  %v9543 = vunpack.c.l.b16 %v7917
  %v9544 = vunpack.c.l.b16 %v7918
  %v9545 = vunpack.c.l.b16 %v7919
  %v9546 = vunpack.c.l.b16 %v7920
  %v9547 = vunpack.c.l.b16 %v7921
  %v9548 = vunpack.c.l.b16 %v7922
  %v9549 = vunpack.c.l.b16 %v7923
  %v9550 = vunpack.c.l.b16 %v7924
  %v9551 = vunpack.c.l.b16 %v7925
  %v9552 = vunpack.c.l.b16 %v7926
  %v9553 = vunpack.c.l.b16 %v7927
  %v9554 = vunpack.c.l.b16 %v7928
  %v9555 = vunpack.c.l.b16 %v7929
  %v9556 = vunpack.c.l.b16 %v7930
  %v9557 = vunpack.c.l.b16 %v7931
  %v9558 = vunpack.c.l.b16 %v7932
  %v9559 = vunpack.c.l.b16 %v7933
  %v9560 = vunpack.c.l.b16 %v7934
  %v9561 = vunpack.c.l.b16 %v7935
  %v9562 = vunpack.c.l.b16 %v7936
  %v9563 = vunpack.c.l.b16 %v7937
  %v9564 = vunpack.c.l.b16 %v7938
  %v9565 = vunpack.c.l.b16 %v7939
  %v9566 = vunpack.c.l.b16 %v7940
  %v9567 = vunpack.c.l.b16 %v7941
  %v9568 = vunpack.c.l.b16 %v7942
  %v9569 = vunpack.c.l.b16 %v7943
  %v9570 = vunpack.c.l.b16 %v7944
  %v9571 = vunpack.c.l.b16 %v7945
  %v9572 = vunpack.c.l.b16 %v7946
  %v9573 = vunpack.c.l.b16 %v7947
  %v9574 = vunpack.c.l.b16 %v7948
  %v9575 = vunpack.c.l.b16 %v7949
  %v9576 = vunpack.c.l.b16 %v7950
  %v9577 = vunpack.c.l.b16 %v7951
  %v9578 = vunpack.c.l.b16 %v7952
  %v9579 = vunpack.c.l.b16 %v7953
  %v9580 = vunpack.c.l.b16 %v7954
  %v9581 = vunpack.c.l.b16 %v7955
  %v9582 = vunpack.c.l.b16 %v7956
  %v9583 = vunpack.c.l.b16 %v7957
  %v9584 = vunpack.c.l.b16 %v7958
  %v9585 = vunpack.c.l.b16 %v7959
  %v9586 = vunpack.c.l.b16 %v7960
  %v9587 = vunpack.c.l.b16 %v7961
  %v9588 = vunpack.c.l.b16 %v7962
  %v9589 = vunpack.c.l.b16 %v7963
  %v9590 = vunpack.c.l.b16 %v7964
  %v9591 = vunpack.c.l.b16 %v7965
  %v9592 = vunpack.c.l.b16 %v7966
  %v9593 = vunpack.c.l.b16 %v7967
  %v9594 = vunpack.c.l.b16 %v7968
  %v9595 = vunpack.c.l.b16 %v7969
  %v9596 = vunpack.c.l.b16 %v7970
  %v9597 = vunpack.c.l.b16 %v7971
  %v9598 = vunpack.c.l.b16 %v7972
  %v9599 = vunpack.c.l.b16 %v7973
  %v9600 = vunpack.c.l.b16 %v7974
  %v9601 = vunpack.c.l.b16 %v7975
  %v9602 = vunpack.c.l.b16 %v7976
  %v9603 = vunpack.c.l.b16 %v7977
  %v9604 = vunpack.c.l.b16 %v7978
  %v9605 = vunpack.c.l.b16 %v7979
  %v9606 = vunpack.c.l.b16 %v7980
  %v9607 = vunpack.c.l.b16 %v7981
  %v9608 = vunpack.c.l.b16 %v7982
  %v9609 = vunpack.c.l.b16 %v7983
  %v9610 = vunpack.c.l.b16 %v7984
  %v9611 = vunpack.c.l.b16 %v7985
  %v9612 = vunpack.c.l.b16 %v7986
  %v9613 = vunpack.c.l.b16 %v7987
  %v9614 = vunpack.c.l.b16 %v7988
  %v9615 = vunpack.c.l.b16 %v7989
  %v9616 = vunpack.c.l.b16 %v7990
  %v9617 = vunpack.c.l.b16 %v7991
  %v9618 = vunpack.c.l.b16 %v7992
  %v9619 = vunpack.c.l.b16 %v7993
  %v9620 = vunpack.c.l.b16 %v7994
  %v9621 = vunpack.c.l.b16 %v7995
  %v9622 = vunpack.c.l.b16 %v7996
  %v9623 = vunpack.c.l.b16 %v7997
  %v9624 = vunpack.c.l.b16 %v7998
  %v9625 = vunpack.c.l.b16 %v7999
  %v9626 = vunpack.c.l.b16 %v8000
  %v9627 = vunpack.c.l.b16 %v8001
  %v9628 = vunpack.c.l.b16 %v8002
  %v9629 = vunpack.c.l.b16 %v8003
  %v9630 = vunpack.c.l.b16 %v8004
  %v9631 = vunpack.c.l.b16 %v8005
  %v9632 = vunpack.c.l.b16 %v8006
  %v9633 = vunpack.c.l.b16 %v8007
  %v9634 = vunpack.c.l.b16 %v8008
  %v9635 = vunpack.c.l.b16 %v8009
  %v9636 = vunpack.c.l.b16 %v8010
  %v9637 = vunpack.c.l.b16 %v8011
  %v9638 = vunpack.c.l.b16 %v8012
  %v9639 = vunpack.c.l.b16 %v8013
  %v9640 = vunpack.c.l.b16 %v8014
  %v9641 = vunpack.c.l.b16 %v8015
  %v9642 = vunpack.c.l.b16 %v8016
  %v9643 = vunpack.c.l.b16 %v8017
  %v9644 = vunpack.c.l.b16 %v8018
  %v9645 = vunpack.c.l.b16 %v8019
  %v9646 = vunpack.c.l.b16 %v8020
  %v9647 = vunpack.c.l.b16 %v8021
  %v9648 = vunpack.c.l.b16 %v8022
  %v9649 = vunpack.c.l.b16 %v8023
  %v9650 = vunpack.c.l.b16 %v8024
  %v9651 = vunpack.c.l.b16 %v8025
  %v9652 = vunpack.c.l.b16 %v8026
  %v9653 = vunpack.c.l.b16 %v8027
  %v9654 = vunpack.c.l.b16 %v8028
  %v9655 = vunpack.c.l.b16 %v8029
  %v9656 = vunpack.c.l.b16 %v8030
  %v9657 = vunpack.c.l.b16 %v8031
  %v9658 = vunpack.c.l.b16 %v8032
  %v9659 = vunpack.c.l.b16 %v8033
  %v9660 = vunpack.c.l.b16 %v8034
  %v9661 = vunpack.c.l.b16 %v8035
  %v9662 = vunpack.c.l.b16 %v8036
  %v9663 = vunpack.c.l.b16 %v8037
  %v9664 = vunpack.c.l.b16 %v8038
  %v9665 = vunpack.c.l.b16 %v8039
  %v9666 = vunpack.c.l.b16 %v8040
  %v9667 = vunpack.c.l.b16 %v8041
  %v9668 = vunpack.c.l.b16 %v8042
  %v9669 = vunpack.c.l.b16 %v8043
  %v9670 = vunpack.c.l.b16 %v8044
  %v9671 = vunpack.c.l.b16 %v8045
  %v9672 = vunpack.c.l.b16 %v8046
  %v9673 = vunpack.c.l.b16 %v8047
  %v9674 = vunpack.c.l.b16 %v8048
  %v9675 = vunpack.c.l.b16 %v8049
  %v9676 = vunpack.c.l.b16 %v8050
  %v9677 = vunpack.c.l.b16 %v8051
  %v9678 = vunpack.c.l.b16 %v8052
  %v9679 = vunpack.c.l.b16 %v8053
  %v9680 = vunpack.c.l.b16 %v8054
  %v9681 = vunpack.c.l.b16 %v8055
  %v9682 = vunpack.c.l.b16 %v8056
  %v9683 = vunpack.c.l.b16 %v8057
  %v9684 = vunpack.c.l.b16 %v8058
  %v9685 = vunpack.c.l.b16 %v8059
  %v9686 = vunpack.c.l.b16 %v8060
  %v9687 = vunpack.c.l.b16 %v8061
  %v9688 = vunpack.c.l.b16 %v8062
  %v9689 = vunpack.c.l.b16 %v8063
  %v9690 = vunpack.c.l.b16 %v8064
  %v9691 = vunpack.c.l.b16 %v8065
  %v9692 = vunpack.c.l.b16 %v8066
  %v9693 = vunpack.c.l.b16 %v8067
  %v9694 = vunpack.c.l.b16 %v8068
  %v9695 = vunpack.c.l.b16 %v8069
  %v9696 = vunpack.c.l.b16 %v8070
  %v9697 = vunpack.c.l.b16 %v8071
  %v9698 = vunpack.c.l.b16 %v8072
  %v9699 = vunpack.c.l.b16 %v8073
  %v9700 = vunpack.c.l.b16 %v8074
  %v9701 = vunpack.c.l.b16 %v8075
  %v9702 = vunpack.c.l.b16 %v8076
  %v9703 = vunpack.c.l.b16 %v8077
  %v9704 = vunpack.c.l.b16 %v8078
  %v9705 = vunpack.c.l.b16 %v8079
  %v9706 = vunpack.c.l.b16 %v8080
  %v9707 = vunpack.c.l.b16 %v8081
  %v9708 = vunpack.c.l.b16 %v8082
  %v9709 = vunpack.c.l.b16 %v8083
  %v9710 = vunpack.c.l.b16 %v8084
  %v9711 = vunpack.c.l.b16 %v8085
  %v9712 = vunpack.c.l.b16 %v8086
  %v9713 = vunpack.c.l.b16 %v8087
  %v9714 = vunpack.c.l.b16 %v8088
  %v9715 = vunpack.c.l.b16 %v8089
  %v9716 = vunpack.c.l.b16 %v8090
  %v9717 = vunpack.c.l.b16 %v8091
  %v9718 = vunpack.c.l.b16 %v8092
  %v9719 = vunpack.c.l.b16 %v8093
  %v9720 = vunpack.c.l.b16 %v8094
  %v9721 = vunpack.c.l.b16 %v8095
  %v9722 = vunpack.c.l.b16 %v8096
  %v9723 = vunpack.c.l.b16 %v8097
  %v9724 = vunpack.c.l.b16 %v8098
  %v9725 = vunpack.c.l.b16 %v8099
  %v9726 = vunpack.c.l.b16 %v8100
  %v9727 = vunpack.c.l.b16 %v8101
  %v9728 = vunpack.c.l.b16 %v8102
  %v9729 = vunpack.c.l.b16 %v8103
  %v9730 = vunpack.c.l.b16 %v8104
  %v9731 = vunpack.c.l.b16 %v8105
  %v9732 = vunpack.c.l.b16 %v8106
  %v9733 = vunpack.c.l.b16 %v8107
  %v9734 = vunpack.c.l.b16 %v8108
  %v9735 = vunpack.c.l.b16 %v8109
  %v9736 = vunpack.c.l.b16 %v8110
  %v9737 = vunpack.c.l.b16 %v8111
  %v9738 = vunpack.c.l.b16 %v8112
  %v9739 = vunpack.c.l.b16 %v8113
  %v9740 = vunpack.c.l.b16 %v8114
  %v9741 = vunpack.c.l.b16 %v8115
  %v9742 = vunpack.c.l.b16 %v8116
  %v9743 = vunpack.c.l.b16 %v8117
  %v9744 = vunpack.c.l.b16 %v8118
  %v9745 = vunpack.c.l.b16 %v8119
  %v9746 = vunpack.c.l.b16 %v8120
  %v9747 = vunpack.c.l.b16 %v8121
  %v9748 = vunpack.c.l.b16 %v8122
  %v9749 = vunpack.c.l.b16 %v8123
  %v9750 = vunpack.c.l.b16 %v8124
  %v9751 = vunpack.c.l.b16 %v8125
  %v9752 = vunpack.c.l.b16 %v8126
  %v9753 = vunpack.c.l.b16 %v8127
  %v9754 = vunpack.c.l.b16 %v8128
  %v9755 = vunpack.c.l.b16 %v8129
  %v9756 = vunpack.c.l.b16 %v8130
  %v9757 = vunpack.c.l.b16 %v8131
  %v9758 = vunpack.c.l.b16 %v8132
  %v9759 = vunpack.c.l.b16 %v8133
  %v9760 = vunpack.c.l.b16 %v8134
  %v9761 = vunpack.c.l.b16 %v8135
  %v9762 = vunpack.c.l.b16 %v8136
  %v9763 = vunpack.c.l.b16 %v8137
  %v9764 = vunpack.c.l.b16 %v8138
  %v9765 = vunpack.c.l.b16 %v8139
  %v9766 = vunpack.c.l.b16 %v8140
  %v9767 = vunpack.c.l.b16 %v8141
  %v9768 = vunpack.c.l.b16 %v8142
  %v9769 = vunpack.c.l.b16 %v8143
  %v9770 = vunpack.c.l.b16 %v8144
  %v9771 = vunpack.c.l.b16 %v8145
  %v9772 = vunpack.c.l.b16 %v8146
  %v9773 = vunpack.c.l.b16 %v8147
  %v9774 = vunpack.c.l.b16 %v8148
  %v9775 = vunpack.c.l.b16 %v8149
  %v9776 = vunpack.c.l.b16 %v8150
  %v9777 = vunpack.c.l.b16 %v8151
  %v9778 = vunpack.c.l.b16 %v8152
  %v9779 = vunpack.c.l.b16 %v8153
  %v9780 = vunpack.c.l.b16 %v8154
  %v9781 = vunpack.c.l.b16 %v8155
  %v9782 = vunpack.c.l.b16 %v8156
  %v9783 = vunpack.c.l.b16 %v8157
  %v9784 = vunpack.c.l.b16 %v8158
  %v9785 = vunpack.c.l.b16 %v8159
  %v9786 = vpack.c.b16 %v9451, %v9450
  %v9787 = vpack.c.b16 %v9453, %v9452
  %v9788 = vpack.c.b16 %v9455, %v9454
  %v9789 = vpack.c.b16 %v9457, %v9456
  %v9790 = vpack.c.b16 %v9459, %v9458
  %v9791 = vpack.c.b16 %v9461, %v9460
  %v9792 = vpack.c.b16 %v9463, %v9462
  %v9793 = vpack.c.b16 %v9465, %v9464
  %v9794 = vpack.c.b16 %v9467, %v9466
  %v9795 = vpack.c.b16 %v9469, %v9468
  %v9796 = vpack.c.b16 %v9471, %v9470
  %v9797 = vpack.c.b16 %v9473, %v9472
  %v9798 = vpack.c.b16 %v9475, %v9474
  %v9799 = vpack.c.b16 %v9477, %v9476
  %v9800 = vpack.c.b16 %v9479, %v9478
  %v9801 = vpack.c.b16 %v9481, %v9480
  %v9802 = vpack.c.b16 %v9483, %v9482
  %v9803 = vpack.c.b16 %v9485, %v9484
  %v9804 = vpack.c.b16 %v9487, %v9486
  %v9805 = vpack.c.b16 %v9489, %v9488
  %v9806 = vpack.c.b16 %v9491, %v9490
  %v9807 = vpack.c.b16 %v9493, %v9492
  %v9808 = vpack.c.b16 %v9495, %v9494
  %v9809 = vpack.c.b16 %v9497, %v9496
  %v9810 = vpack.c.b16 %v9499, %v9498
  %v9811 = vpack.c.b16 %v9501, %v9500
  %v9812 = vpack.c.b16 %v9503, %v9502
  %v9813 = vpack.c.b16 %v9505, %v9504
  %v9814 = vpack.c.b16 %v9507, %v9506
  %v9815 = vpack.c.b16 %v9509, %v9508
  %v9816 = vpack.c.b16 %v9511, %v9510
  %v9817 = vpack.c.b16 %v9513, %v9512
  %v9818 = vpack.c.b16 %v9515, %v9514
  %v9819 = vpack.c.b16 %v9517, %v9516
  %v9820 = vpack.c.b16 %v9519, %v9518
  %v9821 = vpack.c.b16 %v9521, %v9520
  %v9822 = vpack.c.b16 %v9523, %v9522
  %v9823 = vpack.c.b16 %v9525, %v9524
  %v9824 = vpack.c.b16 %v9527, %v9526
  %v9825 = vpack.c.b16 %v9529, %v9528
  %v9826 = vpack.c.b16 %v9531, %v9530
  %v9827 = vpack.c.b16 %v9533, %v9532
  %v9828 = vpack.c.b16 %v9535, %v9534
  %v9829 = vpack.c.b16 %v9537, %v9536
  %v9830 = vpack.c.b16 %v9539, %v9538
  %v9831 = vpack.c.b16 %v9541, %v9540
  %v9832 = vpack.c.b16 %v9543, %v9542
  %v9833 = vpack.c.b16 %v9545, %v9544
  %v9834 = vpack.c.b16 %v9547, %v9546
  %v9835 = vpack.c.b16 %v9549, %v9548
  %v9836 = vpack.c.b16 %v9551, %v9550
  %v9837 = vpack.c.b16 %v9553, %v9552
  %v9838 = vpack.c.b16 %v9555, %v9554
  %v9839 = vpack.c.b16 %v9557, %v9556
  %v9840 = vpack.c.b16 %v9559, %v9558
  %v9841 = vpack.c.b16 %v9561, %v9560
  %v9842 = vpack.c.b16 %v9563, %v9562
  %v9843 = vpack.c.b16 %v9565, %v9564
  %v9844 = vpack.c.b16 %v9567, %v9566
  %v9845 = vpack.c.b16 %v9569, %v9568
  %v9846 = vpack.c.b16 %v9571, %v9570
  %v9847 = vpack.c.b16 %v9573, %v9572
  %v9848 = vpack.c.b16 %v9575, %v9574
  %v9849 = vpack.c.b16 %v9577, %v9576
  %v9850 = vpack.c.b16 %v9579, %v9578
  %v9851 = vpack.c.b16 %v9581, %v9580
  %v9852 = vpack.c.b16 %v9583, %v9582
  %v9853 = vpack.c.b16 %v9585, %v9584
  %v9854 = vpack.c.b16 %v9587, %v9586
  %v9855 = vpack.c.b16 %v9589, %v9588
  %v9856 = vpack.c.b16 %v9591, %v9590
  %v9857 = vpack.c.b16 %v9593, %v9592
  %v9858 = vpack.c.b16 %v9595, %v9594
  %v9859 = vpack.c.b16 %v9597, %v9596
  %v9860 = vpack.c.b16 %v9599, %v9598
  %v9861 = vpack.c.b16 %v9601, %v9600
  %v9862 = vpack.c.b16 %v9603, %v9602
  %v9863 = vpack.c.b16 %v9605, %v9604
  %v9864 = vpack.c.b16 %v9607, %v9606
  %v9865 = vpack.c.b16 %v9609, %v9608
  %v9866 = vpack.c.b16 %v9611, %v9610
  %v9867 = vpack.c.b16 %v9613, %v9612
  %v9868 = vpack.c.b16 %v9615, %v9614
  %v9869 = vpack.c.b16 %v9617, %v9616
  %v9870 = vpack.c.b16 %v9619, %v9618
  %v9871 = vpack.c.b16 %v9621, %v9620
  %v9872 = vpack.c.b16 %v9623, %v9622
  %v9873 = vpack.c.b16 %v9625, %v9624
  %v9874 = vpack.c.b16 %v9627, %v9626
  %v9875 = vpack.c.b16 %v9629, %v9628
  %v9876 = vpack.c.b16 %v9631, %v9630
  %v9877 = vpack.c.b16 %v9633, %v9632
  %v9878 = vpack.c.b16 %v9635, %v9634
  %v9879 = vpack.c.b16 %v9637, %v9636
  %v9880 = vpack.c.b16 %v9639, %v9638
  %v9881 = vpack.c.b16 %v9641, %v9640
  %v9882 = vpack.c.b16 %v9643, %v9642
  %v9883 = vpack.c.b16 %v9645, %v9644
  %v9884 = vpack.c.b16 %v9647, %v9646
  %v9885 = vpack.c.b16 %v9649, %v9648
  %v9886 = vpack.c.b16 %v9651, %v9650
  %v9887 = vpack.c.b16 %v9653, %v9652
  %v9888 = vpack.c.b16 %v9655, %v9654
  %v9889 = vpack.c.b16 %v9657, %v9656
  %v9890 = vpack.c.b16 %v9659, %v9658
  %v9891 = vpack.c.b16 %v9661, %v9660
  %v9892 = vpack.c.b16 %v9663, %v9662
  %v9893 = vpack.c.b16 %v9665, %v9664
  %v9894 = vpack.c.b16 %v9667, %v9666
  %v9895 = vpack.c.b16 %v9669, %v9668
  %v9896 = vpack.c.b16 %v9671, %v9670
  %v9897 = vpack.c.b16 %v9673, %v9672
  %v9898 = vpack.c.b16 %v9675, %v9674
  %v9899 = vpack.c.b16 %v9677, %v9676
  %v9900 = vpack.c.b16 %v9679, %v9678
  %v9901 = vpack.c.b16 %v9681, %v9680
  %v9902 = vpack.c.b16 %v9683, %v9682
  %v9903 = vpack.c.b16 %v9685, %v9684
  %v9904 = vpack.c.b16 %v9687, %v9686
  %v9905 = vpack.c.b16 %v9689, %v9688
  %v9906 = vpack.c.b16 %v9691, %v9690
  %v9907 = vpack.c.b16 %v9693, %v9692
  %v9908 = vpack.c.b16 %v9695, %v9694
  %v9909 = vpack.c.b16 %v9697, %v9696
  %v9910 = vpack.c.b16 %v9699, %v9698
  %v9911 = vpack.c.b16 %v9701, %v9700
  %v9912 = vpack.c.b16 %v9703, %v9702
  %v9913 = vpack.c.b16 %v9705, %v9704
  %v9914 = vpack.c.b16 %v9707, %v9706
  %v9915 = vpack.c.b16 %v9709, %v9708
  %v9916 = vpack.c.b16 %v9711, %v9710
  %v9917 = vpack.c.b16 %v9713, %v9712
  %v9918 = vpack.c.b16 %v9715, %v9714
  %v9919 = vpack.c.b16 %v9717, %v9716
  %v9920 = vpack.c.b16 %v9719, %v9718
  %v9921 = vpack.c.b16 %v9721, %v9720
  %v9922 = vpack.c.b16 %v9723, %v9722
  %v9923 = vpack.c.b16 %v9725, %v9724
  %v9924 = vpack.c.b16 %v9727, %v9726
  %v9925 = vpack.c.b16 %v9729, %v9728
  %v9926 = vpack.c.b16 %v9731, %v9730
  %v9927 = vpack.c.b16 %v9733, %v9732
  %v9928 = vpack.c.b16 %v9735, %v9734
  %v9929 = vpack.c.b16 %v9737, %v9736
  %v9930 = vpack.c.b16 %v9739, %v9738
  %v9931 = vpack.c.b16 %v9741, %v9740
  %v9932 = vpack.c.b16 %v9743, %v9742
  %v9933 = vpack.c.b16 %v9745, %v9744
  %v9934 = vpack.c.b16 %v9747, %v9746
  %v9935 = vpack.c.b16 %v9749, %v9748
  %v9936 = vpack.c.b16 %v9751, %v9750
  %v9937 = vpack.c.b16 %v9753, %v9752
  %v9938 = vpack.c.b16 %v9755, %v9754
  %v9939 = vpack.c.b16 %v9757, %v9756
  %v9940 = vpack.c.b16 %v9759, %v9758
  %v9941 = vpack.c.b16 %v9761, %v9760
  %v9942 = vpack.c.b16 %v9763, %v9762
  %v9943 = vpack.c.b16 %v9765, %v9764
  %v9944 = vpack.c.b16 %v9767, %v9766
  %v9945 = vpack.c.b16 %v9769, %v9768
  %v9946 = vpack.c.b16 %v9771, %v9770
  %v9947 = vpack.c.b16 %v9773, %v9772
  %v9948 = vpack.c.b16 %v9775, %v9774
  %v9949 = vpack.c.b16 %v9777, %v9776
  %v9950 = vpack.c.b16 %v9779, %v9778
  %v9951 = vpack.c.b16 %v9781, %v9780
  %v9952 = vpack.c.b16 %v9783, %v9782
  %v9953 = vpack.c.b16 %v9785, %v9784
  %10122 = vmatprep.subr.bf16.mxu0 0
  %10123 = vmatpush1.bf16.msra.mxu0 %v9786
  %10124 = vmatprep.subr.bf16.mxu0 0
  %10125 = vmatpush1.bf16.msra.mxu0 %v9787
  %10126 = vmatprep.subr.bf16.mxu0 0
  %10127 = vmatpush1.bf16.msra.mxu0 %v9788
  %10128 = vmatprep.subr.bf16.mxu0 0
  %10129 = vmatpush1.bf16.msra.mxu0 %v9789
  %10130 = vmatprep.subr.bf16.mxu0 0
  %10131 = vmatpush1.bf16.msra.mxu0 %v9790
  %10132 = vmatprep.subr.bf16.mxu0 0
  %10133 = vmatpush1.bf16.msra.mxu0 %v9791
  %10134 = vmatprep.subr.bf16.mxu0 0
  %10135 = vmatpush1.bf16.msra.mxu0 %v9792
  %10136 = vmatprep.subr.bf16.mxu0 0
  %10137 = vmatpush1.bf16.msra.mxu0 %v9793
  %10138 = vmatprep.subr.bf16.mxu0 0
  %10139 = vmatpush1.bf16.msra.mxu0 %v9794
  %10140 = vmatprep.subr.bf16.mxu0 0
  %10141 = vmatpush1.bf16.msra.mxu0 %v9795
  %10142 = vmatprep.subr.bf16.mxu0 0
  %10143 = vmatpush1.bf16.msra.mxu0 %v9796
  %10144 = vmatprep.subr.bf16.mxu0 0
  %10145 = vmatpush1.bf16.msra.mxu0 %v9797
  %10146 = vmatprep.subr.bf16.mxu0 0
  %10147 = vmatpush1.bf16.msra.mxu0 %v9798
  %10148 = vmatprep.subr.bf16.mxu0 0
  %10149 = vmatpush1.bf16.msra.mxu0 %v9799
  %10150 = vmatprep.subr.bf16.mxu0 0
  %10151 = vmatpush1.bf16.msra.mxu0 %v9800
  %10152 = vmatprep.subr.bf16.mxu0 0
  %10153 = vmatpush1.bf16.msra.mxu0 %v9801
  %10154 = vmatprep.mubr.bf16.mxu0 %v8737
  %10155 = vmatmul.mubr.bf16.gmra.mrb[0].mxu0 %v8736
  %v10156 = vpop.f32.mrb[0].mxu0
  %v10157 = vadd.f32 0.0, %v10156
  %v10158 = vpop.f32.mrb[0].mxu0
  %v10159 = vpop.f32.mrb[0].mxu0
  %v10160 = vadd.f32 0.0, %v10159
  %v10161 = vpop.f32.mrb[0].mxu0
  %10162 = vmatprep.mubr.bf16.mxu0 %v8758
  %10163 = vmatmul.mubr.bf16.gmra.mrb[0].mxu0 %v8757
  %v10164 = vpop.f32.mrb[0].mxu0
  %v10165 = vadd.f32 0.0, %v10164
  %v10166 = vpop.f32.mrb[0].mxu0
  %v10167 = vpop.f32.mrb[0].mxu0
  %v10168 = vadd.f32 0.0, %v10167
  %v10169 = vpop.f32.mrb[0].mxu0
  %10170 = vmatprep.mubr.bf16.mxu0 %v8779
  %10171 = vmatmul.mubr.bf16.gmra.mrb[0].mxu0 %v8778
  %v10172 = vpop.f32.mrb[0].mxu0
  %v10173 = vadd.f32 0.0, %v10172
  %v10174 = vpop.f32.mrb[0].mxu0
  %v10175 = vpop.f32.mrb[0].mxu0
  %v10176 = vadd.f32 0.0, %v10175
  %v10177 = vpop.f32.mrb[0].mxu0
  %10178 = vmatprep.mubr.bf16.mxu0 %v8800
  %10179 = vmatmul.mubr.bf16.gmra.mrb[0].mxu0 %v8799
  %v10180 = vpop.f32.mrb[0].mxu0
  %v10181 = vadd.f32 0.0, %v10180
  %v10182 = vpop.f32.mrb[0].mxu0
  %v10183 = vpop.f32.mrb[0].mxu0
  %v10184 = vadd.f32 0.0, %v10183
  %v10185 = vpop.f32.mrb[0].mxu0
  %10186 = vmatprep.mubr.bf16.mxu0 %v8821
  %10187 = vmatmul.mubr.bf16.gmra.mrb[0].mxu0 %v8820
  %v10188 = vpop.f32.mrb[0].mxu0
  %v10189 = vadd.f32 0.0, %v10188
  %v10190 = vpop.f32.mrb[0].mxu0
  %v10191 = vpop.f32.mrb[0].mxu0
  %v10192 = vadd.f32 0.0, %v10191
  %v10193 = vpop.f32.mrb[0].mxu0
  %10194 = vmatprep.mubr.bf16.mxu0 %v8842
  %10195 = vmatmul.mubr.bf16.gmra.mrb[0].mxu0 %v8841
  %v10196 = vpop.f32.mrb[0].mxu0
  %v10197 = vadd.f32 0.0, %v10196
  %v10198 = vpop.f32.mrb[0].mxu0
  %v10199 = vpop.f32.mrb[0].mxu0
  %v10200 = vadd.f32 0.0, %v10199
  %v10201 = vpop.f32.mrb[0].mxu0
  %10202 = vmatprep.mubr.bf16.mxu0 %v8863
  %10203 = vmatmul.mubr.bf16.gmra.mrb[0].mxu0 %v8862
  %v10204 = vpop.f32.mrb[0].mxu0
  %v10205 = vadd.f32 0.0, %v10204
  %v10206 = vpop.f32.mrb[0].mxu0
  %v10207 = vpop.f32.mrb[0].mxu0
  %v10208 = vadd.f32 0.0, %v10207
  %v10209 = vpop.f32.mrb[0].mxu0
  %10210 = vmatprep.mubr.bf16.mxu0 %v8884
  %10211 = vmatmul.mubr.bf16.gmra.mrb[0].mxu0 %v8883
  %v10212 = vpop.f32.mrb[0].mxu0
  %v10213 = vadd.f32 0.0, %v10212
  %v10214 = vpop.f32.mrb[0].mxu0
  %v10215 = vpop.f32.mrb[0].mxu0
  %v10216 = vadd.f32 0.0, %v10215
  %v10217 = vpop.f32.mrb[0].mxu0
  %10218 = vmatprep.mubr.bf16.mxu0 %v8905
  %10219 = vmatmul.mubr.bf16.gmra.mrb[0].mxu0 %v8904
  %v10220 = vpop.f32.mrb[0].mxu0
  %v10221 = vadd.f32 0.0, %v10220
  %v10222 = vpop.f32.mrb[0].mxu0
  %v10223 = vpop.f32.mrb[0].mxu0
  %v10224 = vadd.f32 0.0, %v10223
  %v10225 = vpop.f32.mrb[0].mxu0
  %10226 = vdwg.mxu0
  %10227 = vmatprep.subr.bf16.mxu0 0
  %10228 = vmatpush1.bf16.msra.mxu0 %v9802
  %10229 = vmatprep.subr.bf16.mxu0 0
  %10230 = vmatpush1.bf16.msra.mxu0 %v9803
  %10231 = vmatprep.subr.bf16.mxu0 0
  %10232 = vmatpush1.bf16.msra.mxu0 %v9804
  %10233 = vmatprep.subr.bf16.mxu0 0
  %10234 = vmatpush1.bf16.msra.mxu0 %v9805
  %10235 = vmatprep.subr.bf16.mxu0 0
  %10236 = vmatpush1.bf16.msra.mxu0 %v9806
  %10237 = vmatprep.subr.bf16.mxu0 0
  %10238 = vmatpush1.bf16.msra.mxu0 %v9807
  %10239 = vmatprep.subr.bf16.mxu0 0
  %10240 = vmatpush1.bf16.msra.mxu0 %v9808
  %10241 = vmatprep.subr.bf16.mxu0 0
  %10242 = vmatpush1.bf16.msra.mxu0 %v9809
  %10243 = vmatprep.subr.bf16.mxu0 0
  %10244 = vmatpush1.bf16.msra.mxu0 %v9810
  %10245 = vmatprep.subr.bf16.mxu0 0
  %10246 = vmatpush1.bf16.msra.mxu0 %v9811
  %10247 = vmatprep.subr.bf16.mxu0 0
  %10248 = vmatpush1.bf16.msra.mxu0 %v9812
  %10249 = vmatprep.subr.bf16.mxu0 0
  %10250 = vmatpush1.bf16.msra.mxu0 %v9813
  %10251 = vmatprep.subr.bf16.mxu0 0
  %10252 = vmatpush1.bf16.msra.mxu0 %v9814
  %10253 = vmatprep.subr.bf16.mxu0 0
  %10254 = vmatpush1.bf16.msra.mxu0 %v9815
  %10255 = vmatprep.subr.bf16.mxu0 0
  %10256 = vmatpush1.bf16.msra.mxu0 %v9816
  %10257 = vmatprep.subr.bf16.mxu0 0
  %10258 = vmatpush1.bf16.msra.mxu0 %v9817
  %10259 = vmatprep.mubr.bf16.mxu0 %v8739
  %10260 = vmatmul.mubr.bf16.gmra.mrb[0].mxu0 %v8738
  %v10261 = vpop.f32.mrb[0].mxu0
  %v10262 = vadd.f32 %v10157, %v10261
  %v10263 = vpop.f32.mrb[0].mxu0
  %v10264 = vpop.f32.mrb[0].mxu0
  %v10265 = vadd.f32 %v10160, %v10264
  %v10266 = vpop.f32.mrb[0].mxu0
  %10267 = vmatprep.mubr.bf16.mxu0 %v8760
  %10268 = vmatmul.mubr.bf16.gmra.mrb[0].mxu0 %v8759
  %v10269 = vpop.f32.mrb[0].mxu0
  %v10270 = vadd.f32 %v10165, %v10269
  %v10271 = vpop.f32.mrb[0].mxu0
  %v10272 = vpop.f32.mrb[0].mxu0
  %v10273 = vadd.f32 %v10168, %v10272
  %v10274 = vpop.f32.mrb[0].mxu0
  %10275 = vmatprep.mubr.bf16.mxu0 %v8781
  %10276 = vmatmul.mubr.bf16.gmra.mrb[0].mxu0 %v8780
  %v10277 = vpop.f32.mrb[0].mxu0
  %v10278 = vadd.f32 %v10173, %v10277
  %v10279 = vpop.f32.mrb[0].mxu0
  %v10280 = vpop.f32.mrb[0].mxu0
  %v10281 = vadd.f32 %v10176, %v10280
  %v10282 = vpop.f32.mrb[0].mxu0
  %10283 = vmatprep.mubr.bf16.mxu0 %v8802
  %10284 = vmatmul.mubr.bf16.gmra.mrb[0].mxu0 %v8801
  %v10285 = vpop.f32.mrb[0].mxu0
  %v10286 = vadd.f32 %v10181, %v10285
  %v10287 = vpop.f32.mrb[0].mxu0
  %v10288 = vpop.f32.mrb[0].mxu0
  %v10289 = vadd.f32 %v10184, %v10288
  %v10290 = vpop.f32.mrb[0].mxu0
  %10291 = vmatprep.mubr.bf16.mxu0 %v8823
  %10292 = vmatmul.mubr.bf16.gmra.mrb[0].mxu0 %v8822
  %v10293 = vpop.f32.mrb[0].mxu0
  %v10294 = vadd.f32 %v10189, %v10293
  %v10295 = vpop.f32.mrb[0].mxu0
  %v10296 = vpop.f32.mrb[0].mxu0
  %v10297 = vadd.f32 %v10192, %v10296
  %v10298 = vpop.f32.mrb[0].mxu0
  %10299 = vmatprep.mubr.bf16.mxu0 %v8844
  %10300 = vmatmul.mubr.bf16.gmra.mrb[0].mxu0 %v8843
  %v10301 = vpop.f32.mrb[0].mxu0
  %v10302 = vadd.f32 %v10197, %v10301
  %v10303 = vpop.f32.mrb[0].mxu0
  %v10304 = vpop.f32.mrb[0].mxu0
  %v10305 = vadd.f32 %v10200, %v10304
  %v10306 = vpop.f32.mrb[0].mxu0
  %10307 = vmatprep.mubr.bf16.mxu0 %v8865
  %10308 = vmatmul.mubr.bf16.gmra.mrb[0].mxu0 %v8864
  %v10309 = vpop.f32.mrb[0].mxu0
  %v10310 = vadd.f32 %v10205, %v10309
  %v10311 = vpop.f32.mrb[0].mxu0
  %v10312 = vpop.f32.mrb[0].mxu0
  %v10313 = vadd.f32 %v10208, %v10312
  %v10314 = vpop.f32.mrb[0].mxu0
  %10315 = vmatprep.mubr.bf16.mxu0 %v8886
  %10316 = vmatmul.mubr.bf16.gmra.mrb[0].mxu0 %v8885
  %v10317 = vpop.f32.mrb[0].mxu0
  %v10318 = vadd.f32 %v10213, %v10317
  %v10319 = vpop.f32.mrb[0].mxu0
  %v10320 = vpop.f32.mrb[0].mxu0
  %v10321 = vadd.f32 %v10216, %v10320
  %v10322 = vpop.f32.mrb[0].mxu0
  %10323 = vmatprep.mubr.bf16.mxu0 %v8907
  %10324 = vmatmul.mubr.bf16.gmra.mrb[0].mxu0 %v8906
  %v10325 = vpop.f32.mrb[0].mxu0
  %v10326 = vadd.f32 %v10221, %v10325
  %v10327 = vpop.f32.mrb[0].mxu0
  %v10328 = vpop.f32.mrb[0].mxu0
  %v10329 = vadd.f32 %v10224, %v10328
  %v10330 = vpop.f32.mrb[0].mxu0
  %10331 = vdwg.mxu0
  %10332 = vmatprep.subr.bf16.mxu0 0
  %10333 = vmatpush1.bf16.msra.mxu0 %v9818
  %10334 = vmatprep.subr.bf16.mxu0 0
  %10335 = vmatpush1.bf16.msra.mxu0 %v9819
  %10336 = vmatprep.subr.bf16.mxu0 0
  %10337 = vmatpush1.bf16.msra.mxu0 %v9820
  %10338 = vmatprep.subr.bf16.mxu0 0
  %10339 = vmatpush1.bf16.msra.mxu0 %v9821
  %10340 = vmatprep.subr.bf16.mxu0 0
  %10341 = vmatpush1.bf16.msra.mxu0 %v9822
  %10342 = vmatprep.subr.bf16.mxu0 0
  %10343 = vmatpush1.bf16.msra.mxu0 %v9823
  %10344 = vmatprep.subr.bf16.mxu0 0
  %10345 = vmatpush1.bf16.msra.mxu0 %v9824
  %10346 = vmatprep.subr.bf16.mxu0 0
  %10347 = vmatpush1.bf16.msra.mxu0 %v9825
  %10348 = vmatprep.subr.bf16.mxu0 0
  %10349 = vmatpush1.bf16.msra.mxu0 %v9826
  %10350 = vmatprep.subr.bf16.mxu0 0
  %10351 = vmatpush1.bf16.msra.mxu0 %v9827
  %10352 = vmatprep.subr.bf16.mxu0 0
  %10353 = vmatpush1.bf16.msra.mxu0 %v9828
  %10354 = vmatprep.subr.bf16.mxu0 0
  %10355 = vmatpush1.bf16.msra.mxu0 %v9829
  %10356 = vmatprep.subr.bf16.mxu0 0
  %10357 = vmatpush1.bf16.msra.mxu0 %v9830
  %10358 = vmatprep.subr.bf16.mxu0 0
  %10359 = vmatpush1.bf16.msra.mxu0 %v9831
  %10360 = vmatprep.subr.bf16.mxu0 0
  %10361 = vmatpush1.bf16.msra.mxu0 %v9832
  %10362 = vmatprep.subr.bf16.mxu0 0
  %10363 = vmatpush1.bf16.msra.mxu0 %v9833
  %10364 = vmatprep.mubr.bf16.mxu0 %v8741
  %10365 = vmatmul.mubr.bf16.gmra.mrb[0].mxu0 %v8740
  %v10366 = vpop.f32.mrb[0].mxu0
  %v10367 = vadd.f32 %v10262, %v10366
  %v10368 = vpop.f32.mrb[0].mxu0
  %v10369 = vpop.f32.mrb[0].mxu0
  %v10370 = vadd.f32 %v10265, %v10369
  %v10371 = vpop.f32.mrb[0].mxu0
  %10372 = vmatprep.mubr.bf16.mxu0 %v8762
  %10373 = vmatmul.mubr.bf16.gmra.mrb[0].mxu0 %v8761
  %v10374 = vpop.f32.mrb[0].mxu0
  %v10375 = vadd.f32 %v10270, %v10374
  %v10376 = vpop.f32.mrb[0].mxu0
  %v10377 = vpop.f32.mrb[0].mxu0
  %v10378 = vadd.f32 %v10273, %v10377
  %v10379 = vpop.f32.mrb[0].mxu0
  %10380 = vmatprep.mubr.bf16.mxu0 %v8783
  %10381 = vmatmul.mubr.bf16.gmra.mrb[0].mxu0 %v8782
  %v10382 = vpop.f32.mrb[0].mxu0
  %v10383 = vadd.f32 %v10278, %v10382
  %v10384 = vpop.f32.mrb[0].mxu0
  %v10385 = vpop.f32.mrb[0].mxu0
  %v10386 = vadd.f32 %v10281, %v10385
  %v10387 = vpop.f32.mrb[0].mxu0
  %10388 = vmatprep.mubr.bf16.mxu0 %v8804
  %10389 = vmatmul.mubr.bf16.gmra.mrb[0].mxu0 %v8803
  %v10390 = vpop.f32.mrb[0].mxu0
  %v10391 = vadd.f32 %v10286, %v10390
  %v10392 = vpop.f32.mrb[0].mxu0
  %v10393 = vpop.f32.mrb[0].mxu0
  %v10394 = vadd.f32 %v10289, %v10393
  %v10395 = vpop.f32.mrb[0].mxu0
  %10396 = vmatprep.mubr.bf16.mxu0 %v8825
  %10397 = vmatmul.mubr.bf16.gmra.mrb[0].mxu0 %v8824
  %v10398 = vpop.f32.mrb[0].mxu0
  %v10399 = vadd.f32 %v10294, %v10398
  %v10400 = vpop.f32.mrb[0].mxu0
  %v10401 = vpop.f32.mrb[0].mxu0
  %v10402 = vadd.f32 %v10297, %v10401
  %v10403 = vpop.f32.mrb[0].mxu0
  %10404 = vmatprep.mubr.bf16.mxu0 %v8846
  %10405 = vmatmul.mubr.bf16.gmra.mrb[0].mxu0 %v8845
  %v10406 = vpop.f32.mrb[0].mxu0
  %v10407 = vadd.f32 %v10302, %v10406
  %v10408 = vpop.f32.mrb[0].mxu0
  %v10409 = vpop.f32.mrb[0].mxu0
  %v10410 = vadd.f32 %v10305, %v10409
  %v10411 = vpop.f32.mrb[0].mxu0
  %10412 = vmatprep.mubr.bf16.mxu0 %v8867
  %10413 = vmatmul.mubr.bf16.gmra.mrb[0].mxu0 %v8866
  %v10414 = vpop.f32.mrb[0].mxu0
  %v10415 = vadd.f32 %v10310, %v10414
  %v10416 = vpop.f32.mrb[0].mxu0
  %v10417 = vpop.f32.mrb[0].mxu0
  %v10418 = vadd.f32 %v10313, %v10417
  %v10419 = vpop.f32.mrb[0].mxu0
  %10420 = vmatprep.mubr.bf16.mxu0 %v8888
  %10421 = vmatmul.mubr.bf16.gmra.mrb[0].mxu0 %v8887
  %v10422 = vpop.f32.mrb[0].mxu0
  %v10423 = vadd.f32 %v10318, %v10422
  %v10424 = vpop.f32.mrb[0].mxu0
  %v10425 = vpop.f32.mrb[0].mxu0
  %v10426 = vadd.f32 %v10321, %v10425
  %v10427 = vpop.f32.mrb[0].mxu0
  %10428 = vmatprep.mubr.bf16.mxu0 %v8909
  %10429 = vmatmul.mubr.bf16.gmra.mrb[0].mxu0 %v8908
  %v10430 = vpop.f32.mrb[0].mxu0
  %v10431 = vadd.f32 %v10326, %v10430
  %v10432 = vpop.f32.mrb[0].mxu0
  %v10433 = vpop.f32.mrb[0].mxu0
  %v10434 = vadd.f32 %v10329, %v10433
  %v10435 = vpop.f32.mrb[0].mxu0
  %10436 = vdwg.mxu0
  %10437 = vmatprep.subr.bf16.mxu0 0
  %10438 = vmatpush1.bf16.msra.mxu0 %v9834
  %10439 = vmatprep.subr.bf16.mxu0 0
  %10440 = vmatpush1.bf16.msra.mxu0 %v9835
  %10441 = vmatprep.subr.bf16.mxu0 0
  %10442 = vmatpush1.bf16.msra.mxu0 %v9836
  %10443 = vmatprep.subr.bf16.mxu0 0
  %10444 = vmatpush1.bf16.msra.mxu0 %v9837
  %10445 = vmatprep.subr.bf16.mxu0 0
  %10446 = vmatpush1.bf16.msra.mxu0 %v9838
  %10447 = vmatprep.subr.bf16.mxu0 0
  %10448 = vmatpush1.bf16.msra.mxu0 %v9839
  %10449 = vmatprep.subr.bf16.mxu0 0
  %10450 = vmatpush1.bf16.msra.mxu0 %v9840
  %10451 = vmatprep.subr.bf16.mxu0 0
  %10452 = vmatpush1.bf16.msra.mxu0 %v9841
  %10453 = vmatprep.subr.bf16.mxu0 0
  %10454 = vmatpush1.bf16.msra.mxu0 %v9842
  %10455 = vmatprep.subr.bf16.mxu0 0
  %10456 = vmatpush1.bf16.msra.mxu0 %v9843
  %10457 = vmatprep.subr.bf16.mxu0 0
  %10458 = vmatpush1.bf16.msra.mxu0 %v9844
  %10459 = vmatprep.subr.bf16.mxu0 0
  %10460 = vmatpush1.bf16.msra.mxu0 %v9845
  %10461 = vmatprep.subr.bf16.mxu0 0
  %10462 = vmatpush1.bf16.msra.mxu0 %v9846
  %10463 = vmatprep.subr.bf16.mxu0 0
  %10464 = vmatpush1.bf16.msra.mxu0 %v9847
  %10465 = vmatprep.subr.bf16.mxu0 0
  %10466 = vmatpush1.bf16.msra.mxu0 %v9848
  %10467 = vmatprep.subr.bf16.mxu0 0
  %10468 = vmatpush1.bf16.msra.mxu0 %v9849
  %10469 = vmatprep.mubr.bf16.mxu0 %v8743
  %10470 = vmatmul.mubr.bf16.gmra.mrb[0].mxu0 %v8742
  %v10471 = vpop.f32.mrb[0].mxu0
  %v10472 = vadd.f32 %v10367, %v10471
  %v10473 = vpop.f32.mrb[0].mxu0
  %v10474 = vpop.f32.mrb[0].mxu0
  %v10475 = vadd.f32 %v10370, %v10474
  %v10476 = vpop.f32.mrb[0].mxu0
  %10477 = vmatprep.mubr.bf16.mxu0 %v8764
  %10478 = vmatmul.mubr.bf16.gmra.mrb[0].mxu0 %v8763
  %v10479 = vpop.f32.mrb[0].mxu0
  %v10480 = vadd.f32 %v10375, %v10479
  %v10481 = vpop.f32.mrb[0].mxu0
  %v10482 = vpop.f32.mrb[0].mxu0
  %v10483 = vadd.f32 %v10378, %v10482
  %v10484 = vpop.f32.mrb[0].mxu0
  %10485 = vmatprep.mubr.bf16.mxu0 %v8785
  %10486 = vmatmul.mubr.bf16.gmra.mrb[0].mxu0 %v8784
  %v10487 = vpop.f32.mrb[0].mxu0
  %v10488 = vadd.f32 %v10383, %v10487
  %v10489 = vpop.f32.mrb[0].mxu0
  %v10490 = vpop.f32.mrb[0].mxu0
  %v10491 = vadd.f32 %v10386, %v10490
  %v10492 = vpop.f32.mrb[0].mxu0
  %10493 = vmatprep.mubr.bf16.mxu0 %v8806
  %10494 = vmatmul.mubr.bf16.gmra.mrb[0].mxu0 %v8805
  %v10495 = vpop.f32.mrb[0].mxu0
  %v10496 = vadd.f32 %v10391, %v10495
  %v10497 = vpop.f32.mrb[0].mxu0
  %v10498 = vpop.f32.mrb[0].mxu0
  %v10499 = vadd.f32 %v10394, %v10498
  %v10500 = vpop.f32.mrb[0].mxu0
  %10501 = vmatprep.mubr.bf16.mxu0 %v8827
  %10502 = vmatmul.mubr.bf16.gmra.mrb[0].mxu0 %v8826
  %v10503 = vpop.f32.mrb[0].mxu0
  %v10504 = vadd.f32 %v10399, %v10503
  %v10505 = vpop.f32.mrb[0].mxu0
  %v10506 = vpop.f32.mrb[0].mxu0
  %v10507 = vadd.f32 %v10402, %v10506
  %v10508 = vpop.f32.mrb[0].mxu0
  %10509 = vmatprep.mubr.bf16.mxu0 %v8848
  %10510 = vmatmul.mubr.bf16.gmra.mrb[0].mxu0 %v8847
  %v10511 = vpop.f32.mrb[0].mxu0
  %v10512 = vadd.f32 %v10407, %v10511
  %v10513 = vpop.f32.mrb[0].mxu0
  %v10514 = vpop.f32.mrb[0].mxu0
  %v10515 = vadd.f32 %v10410, %v10514
  %v10516 = vpop.f32.mrb[0].mxu0
  %10517 = vmatprep.mubr.bf16.mxu0 %v8869
  %10518 = vmatmul.mubr.bf16.gmra.mrb[0].mxu0 %v8868
  %v10519 = vpop.f32.mrb[0].mxu0
  %v10520 = vadd.f32 %v10415, %v10519
  %v10521 = vpop.f32.mrb[0].mxu0
  %v10522 = vpop.f32.mrb[0].mxu0
  %v10523 = vadd.f32 %v10418, %v10522
  %v10524 = vpop.f32.mrb[0].mxu0
  %10525 = vmatprep.mubr.bf16.mxu0 %v8890
  %10526 = vmatmul.mubr.bf16.gmra.mrb[0].mxu0 %v8889
  %v10527 = vpop.f32.mrb[0].mxu0
  %v10528 = vadd.f32 %v10423, %v10527
  %v10529 = vpop.f32.mrb[0].mxu0
  %v10530 = vpop.f32.mrb[0].mxu0
  %v10531 = vadd.f32 %v10426, %v10530
  %v10532 = vpop.f32.mrb[0].mxu0
  %10533 = vmatprep.mubr.bf16.mxu0 %v8911
  %10534 = vmatmul.mubr.bf16.gmra.mrb[0].mxu0 %v8910
  %v10535 = vpop.f32.mrb[0].mxu0
  %v10536 = vadd.f32 %v10431, %v10535
  %v10537 = vpop.f32.mrb[0].mxu0
  %v10538 = vpop.f32.mrb[0].mxu0
  %v10539 = vadd.f32 %v10434, %v10538
  %v10540 = vpop.f32.mrb[0].mxu0
  %10541 = vdwg.mxu0
  %10542 = vmatprep.subr.bf16.mxu0 0
  %10543 = vmatpush1.bf16.msra.mxu0 %v9850
  %10544 = vmatprep.subr.bf16.mxu0 0
  %10545 = vmatpush1.bf16.msra.mxu0 %v9851
  %10546 = vmatprep.subr.bf16.mxu0 0
  %10547 = vmatpush1.bf16.msra.mxu0 %v9852
  %10548 = vmatprep.subr.bf16.mxu0 0
  %10549 = vmatpush1.bf16.msra.mxu0 %v9853
  %10550 = vmatprep.subr.bf16.mxu0 0
  %10551 = vmatpush1.bf16.msra.mxu0 %v9854
  %10552 = vmatprep.subr.bf16.mxu0 0
  %10553 = vmatpush1.bf16.msra.mxu0 %v9855
  %10554 = vmatprep.subr.bf16.mxu0 0
  %10555 = vmatpush1.bf16.msra.mxu0 %v9856
  %10556 = vmatprep.subr.bf16.mxu0 0
  %10557 = vmatpush1.bf16.msra.mxu0 %v9857
  %10558 = vmatprep.subr.bf16.mxu0 0
  %10559 = vmatpush1.bf16.msra.mxu0 %v9858
  %10560 = vmatprep.subr.bf16.mxu0 0
  %10561 = vmatpush1.bf16.msra.mxu0 %v9859
  %10562 = vmatprep.subr.bf16.mxu0 0
  %10563 = vmatpush1.bf16.msra.mxu0 %v9860
  %10564 = vmatprep.subr.bf16.mxu0 0
  %10565 = vmatpush1.bf16.msra.mxu0 %v9861
  %10566 = vmatprep.subr.bf16.mxu0 0
  %10567 = vmatpush1.bf16.msra.mxu0 %v9862
  %10568 = vmatprep.subr.bf16.mxu0 0
  %10569 = vmatpush1.bf16.msra.mxu0 %v9863
  %10570 = vmatprep.subr.bf16.mxu0 0
  %10571 = vmatpush1.bf16.msra.mxu0 %v9864
  %10572 = vmatprep.subr.bf16.mxu0 0
  %10573 = vmatpush1.bf16.msra.mxu0 %v9865
  %10574 = vmatprep.mubr.bf16.mxu0 %v8745
  %10575 = vmatmul.mubr.bf16.gmra.mrb[0].mxu0 %v8744
  %v10576 = vpop.f32.mrb[0].mxu0
  %v10577 = vadd.f32 %v10472, %v10576
  %v10578 = vpop.f32.mrb[0].mxu0
  %v10579 = vpop.f32.mrb[0].mxu0
  %v10580 = vadd.f32 %v10475, %v10579
  %v10581 = vpop.f32.mrb[0].mxu0
  %10582 = vmatprep.mubr.bf16.mxu0 %v8766
  %10583 = vmatmul.mubr.bf16.gmra.mrb[0].mxu0 %v8765
  %v10584 = vpop.f32.mrb[0].mxu0
  %v10585 = vadd.f32 %v10480, %v10584
  %v10586 = vpop.f32.mrb[0].mxu0
  %v10587 = vpop.f32.mrb[0].mxu0
  %v10588 = vadd.f32 %v10483, %v10587
  %v10589 = vpop.f32.mrb[0].mxu0
  %10590 = vmatprep.mubr.bf16.mxu0 %v8787
  %10591 = vmatmul.mubr.bf16.gmra.mrb[0].mxu0 %v8786
  %v10592 = vpop.f32.mrb[0].mxu0
  %v10593 = vadd.f32 %v10488, %v10592
  %v10594 = vpop.f32.mrb[0].mxu0
  %v10595 = vpop.f32.mrb[0].mxu0
  %v10596 = vadd.f32 %v10491, %v10595
  %v10597 = vpop.f32.mrb[0].mxu0
  %10598 = vmatprep.mubr.bf16.mxu0 %v8808
  %10599 = vmatmul.mubr.bf16.gmra.mrb[0].mxu0 %v8807
  %v10600 = vpop.f32.mrb[0].mxu0
  %v10601 = vadd.f32 %v10496, %v10600
  %v10602 = vpop.f32.mrb[0].mxu0
  %v10603 = vpop.f32.mrb[0].mxu0
  %v10604 = vadd.f32 %v10499, %v10603
  %v10605 = vpop.f32.mrb[0].mxu0
  %10606 = vmatprep.mubr.bf16.mxu0 %v8829
  %10607 = vmatmul.mubr.bf16.gmra.mrb[0].mxu0 %v8828
  %v10608 = vpop.f32.mrb[0].mxu0
  %v10609 = vadd.f32 %v10504, %v10608
  %v10610 = vpop.f32.mrb[0].mxu0
  %v10611 = vpop.f32.mrb[0].mxu0
  %v10612 = vadd.f32 %v10507, %v10611
  %v10613 = vpop.f32.mrb[0].mxu0
  %10614 = vmatprep.mubr.bf16.mxu0 %v8850
  %10615 = vmatmul.mubr.bf16.gmra.mrb[0].mxu0 %v8849
  %v10616 = vpop.f32.mrb[0].mxu0
  %v10617 = vadd.f32 %v10512, %v10616
  %v10618 = vpop.f32.mrb[0].mxu0
  %v10619 = vpop.f32.mrb[0].mxu0
  %v10620 = vadd.f32 %v10515, %v10619
  %v10621 = vpop.f32.mrb[0].mxu0
  %10622 = vmatprep.mubr.bf16.mxu0 %v8871
  %10623 = vmatmul.mubr.bf16.gmra.mrb[0].mxu0 %v8870
  %v10624 = vpop.f32.mrb[0].mxu0
  %v10625 = vadd.f32 %v10520, %v10624
  %v10626 = vpop.f32.mrb[0].mxu0
  %v10627 = vpop.f32.mrb[0].mxu0
  %v10628 = vadd.f32 %v10523, %v10627
  %v10629 = vpop.f32.mrb[0].mxu0
  %10630 = vmatprep.mubr.bf16.mxu0 %v8892
  %10631 = vmatmul.mubr.bf16.gmra.mrb[0].mxu0 %v8891
  %v10632 = vpop.f32.mrb[0].mxu0
  %v10633 = vadd.f32 %v10528, %v10632
  %v10634 = vpop.f32.mrb[0].mxu0
  %v10635 = vpop.f32.mrb[0].mxu0
  %v10636 = vadd.f32 %v10531, %v10635
  %v10637 = vpop.f32.mrb[0].mxu0
  %10638 = vmatprep.mubr.bf16.mxu0 %v8913
  %10639 = vmatmul.mubr.bf16.gmra.mrb[0].mxu0 %v8912
  %v10640 = vpop.f32.mrb[0].mxu0
  %v10641 = vadd.f32 %v10536, %v10640
  %v10642 = vpop.f32.mrb[0].mxu0
  %v10643 = vpop.f32.mrb[0].mxu0
  %v10644 = vadd.f32 %v10539, %v10643
  %v10645 = vpop.f32.mrb[0].mxu0
  %10646 = vdwg.mxu0
  %10647 = vmatprep.subr.bf16.mxu0 0
  %10648 = vmatpush1.bf16.msra.mxu0 %v9866
  %10649 = vmatprep.subr.bf16.mxu0 0
  %10650 = vmatpush1.bf16.msra.mxu0 %v9867
  %10651 = vmatprep.subr.bf16.mxu0 0
  %10652 = vmatpush1.bf16.msra.mxu0 %v9868
  %10653 = vmatprep.subr.bf16.mxu0 0
  %10654 = vmatpush1.bf16.msra.mxu0 %v9869
  %10655 = vmatprep.subr.bf16.mxu0 0
  %10656 = vmatpush1.bf16.msra.mxu0 %v9870
  %10657 = vmatprep.subr.bf16.mxu0 0
  %10658 = vmatpush1.bf16.msra.mxu0 %v9871
  %10659 = vmatprep.subr.bf16.mxu0 0
  %10660 = vmatpush1.bf16.msra.mxu0 %v9872
  %10661 = vmatprep.subr.bf16.mxu0 0
  %10662 = vmatpush1.bf16.msra.mxu0 %v9873
  %10663 = vmatprep.subr.bf16.mxu0 0
  %10664 = vmatpush1.bf16.msra.mxu0 %v9874
  %10665 = vmatprep.subr.bf16.mxu0 0
  %10666 = vmatpush1.bf16.msra.mxu0 %v9875
  %10667 = vmatprep.subr.bf16.mxu0 0
  %10668 = vmatpush1.bf16.msra.mxu0 %v9876
  %10669 = vmatprep.subr.bf16.mxu0 0
  %10670 = vmatpush1.bf16.msra.mxu0 %v9877
  %10671 = vmatprep.subr.bf16.mxu0 0
  %10672 = vmatpush1.bf16.msra.mxu0 %v9878
  %10673 = vmatprep.subr.bf16.mxu0 0
  %10674 = vmatpush1.bf16.msra.mxu0 %v9879
  %10675 = vmatprep.subr.bf16.mxu0 0
  %10676 = vmatpush1.bf16.msra.mxu0 %v9880
  %10677 = vmatprep.subr.bf16.mxu0 0
  %10678 = vmatpush1.bf16.msra.mxu0 %v9881
  %10679 = vmatprep.mubr.bf16.mxu0 %v8747
  %10680 = vmatmul.mubr.bf16.gmra.mrb[0].mxu0 %v8746
  %v10681 = vpop.f32.mrb[0].mxu0
  %v10682 = vadd.f32 %v10577, %v10681
  %v10683 = vpop.f32.mrb[0].mxu0
  %v10684 = vpop.f32.mrb[0].mxu0
  %v10685 = vadd.f32 %v10580, %v10684
  %v10686 = vpop.f32.mrb[0].mxu0
  %10687 = vmatprep.mubr.bf16.mxu0 %v8768
  %10688 = vmatmul.mubr.bf16.gmra.mrb[0].mxu0 %v8767
  %v10689 = vpop.f32.mrb[0].mxu0
  %v10690 = vadd.f32 %v10585, %v10689
  %v10691 = vpop.f32.mrb[0].mxu0
  %v10692 = vpop.f32.mrb[0].mxu0
  %v10693 = vadd.f32 %v10588, %v10692
  %v10694 = vpop.f32.mrb[0].mxu0
  %10695 = vmatprep.mubr.bf16.mxu0 %v8789
  %10696 = vmatmul.mubr.bf16.gmra.mrb[0].mxu0 %v8788
  %v10697 = vpop.f32.mrb[0].mxu0
  %v10698 = vadd.f32 %v10593, %v10697
  %v10699 = vpop.f32.mrb[0].mxu0
  %v10700 = vpop.f32.mrb[0].mxu0
  %v10701 = vadd.f32 %v10596, %v10700
  %v10702 = vpop.f32.mrb[0].mxu0
  %10703 = vmatprep.mubr.bf16.mxu0 %v8810
  %10704 = vmatmul.mubr.bf16.gmra.mrb[0].mxu0 %v8809
  %v10705 = vpop.f32.mrb[0].mxu0
  %v10706 = vadd.f32 %v10601, %v10705
  %v10707 = vpop.f32.mrb[0].mxu0
  %v10708 = vpop.f32.mrb[0].mxu0
  %v10709 = vadd.f32 %v10604, %v10708
  %v10710 = vpop.f32.mrb[0].mxu0
  %10711 = vmatprep.mubr.bf16.mxu0 %v8831
  %10712 = vmatmul.mubr.bf16.gmra.mrb[0].mxu0 %v8830
  %v10713 = vpop.f32.mrb[0].mxu0
  %v10714 = vadd.f32 %v10609, %v10713
  %v10715 = vpop.f32.mrb[0].mxu0
  %v10716 = vpop.f32.mrb[0].mxu0
  %v10717 = vadd.f32 %v10612, %v10716
  %v10718 = vpop.f32.mrb[0].mxu0
  %10719 = vmatprep.mubr.bf16.mxu0 %v8852
  %10720 = vmatmul.mubr.bf16.gmra.mrb[0].mxu0 %v8851
  %v10721 = vpop.f32.mrb[0].mxu0
  %v10722 = vadd.f32 %v10617, %v10721
  %v10723 = vpop.f32.mrb[0].mxu0
  %v10724 = vpop.f32.mrb[0].mxu0
  %v10725 = vadd.f32 %v10620, %v10724
  %v10726 = vpop.f32.mrb[0].mxu0
  %10727 = vmatprep.mubr.bf16.mxu0 %v8873
  %10728 = vmatmul.mubr.bf16.gmra.mrb[0].mxu0 %v8872
  %v10729 = vpop.f32.mrb[0].mxu0
  %v10730 = vadd.f32 %v10625, %v10729
  %v10731 = vpop.f32.mrb[0].mxu0
  %v10732 = vpop.f32.mrb[0].mxu0
  %v10733 = vadd.f32 %v10628, %v10732
  %v10734 = vpop.f32.mrb[0].mxu0
  %10735 = vmatprep.mubr.bf16.mxu0 %v8894
  %10736 = vmatmul.mubr.bf16.gmra.mrb[0].mxu0 %v8893
  %v10737 = vpop.f32.mrb[0].mxu0
  %v10738 = vadd.f32 %v10633, %v10737
  %v10739 = vpop.f32.mrb[0].mxu0
  %v10740 = vpop.f32.mrb[0].mxu0
  %v10741 = vadd.f32 %v10636, %v10740
  %v10742 = vpop.f32.mrb[0].mxu0
  %10743 = vmatprep.mubr.bf16.mxu0 %v8915
  %10744 = vmatmul.mubr.bf16.gmra.mrb[0].mxu0 %v8914
  %v10745 = vpop.f32.mrb[0].mxu0
  %v10746 = vadd.f32 %v10641, %v10745
  %v10747 = vpop.f32.mrb[0].mxu0
  %v10748 = vpop.f32.mrb[0].mxu0
  %v10749 = vadd.f32 %v10644, %v10748
  %v10750 = vpop.f32.mrb[0].mxu0
  %10751 = vdwg.mxu0
  %10752 = vmatprep.subr.bf16.mxu0 0
  %10753 = vmatpush1.bf16.msra.mxu0 %v9882
  %10754 = vmatprep.subr.bf16.mxu0 0
  %10755 = vmatpush1.bf16.msra.mxu0 %v9883
  %10756 = vmatprep.subr.bf16.mxu0 0
  %10757 = vmatpush1.bf16.msra.mxu0 %v9884
  %10758 = vmatprep.subr.bf16.mxu0 0
  %10759 = vmatpush1.bf16.msra.mxu0 %v9885
  %10760 = vmatprep.subr.bf16.mxu0 0
  %10761 = vmatpush1.bf16.msra.mxu0 %v9886
  %10762 = vmatprep.subr.bf16.mxu0 0
  %10763 = vmatpush1.bf16.msra.mxu0 %v9887
  %10764 = vmatprep.subr.bf16.mxu0 0
  %10765 = vmatpush1.bf16.msra.mxu0 %v9888
  %10766 = vmatprep.subr.bf16.mxu0 0
  %10767 = vmatpush1.bf16.msra.mxu0 %v9889
  %10768 = vmatprep.subr.bf16.mxu0 0
  %10769 = vmatpush1.bf16.msra.mxu0 %v9890
  %10770 = vmatprep.subr.bf16.mxu0 0
  %10771 = vmatpush1.bf16.msra.mxu0 %v9891
  %10772 = vmatprep.subr.bf16.mxu0 0
  %10773 = vmatpush1.bf16.msra.mxu0 %v9892
  %10774 = vmatprep.subr.bf16.mxu0 0
  %10775 = vmatpush1.bf16.msra.mxu0 %v9893
  %10776 = vmatprep.subr.bf16.mxu0 0
  %10777 = vmatpush1.bf16.msra.mxu0 %v9894
  %10778 = vmatprep.subr.bf16.mxu0 0
  %10779 = vmatpush1.bf16.msra.mxu0 %v9895
  %10780 = vmatprep.subr.bf16.mxu0 0
  %10781 = vmatpush1.bf16.msra.mxu0 %v9896
  %10782 = vmatprep.subr.bf16.mxu0 0
  %10783 = vmatpush1.bf16.msra.mxu0 %v9897
  %10784 = vmatprep.mubr.bf16.mxu0 %v8749
  %10785 = vmatmul.mubr.bf16.gmra.mrb[0].mxu0 %v8748
  %v10786 = vpop.f32.mrb[0].mxu0
  %v10787 = vadd.f32 %v10682, %v10786
  %v10788 = vpop.f32.mrb[0].mxu0
  %v10789 = vpop.f32.mrb[0].mxu0
  %v10790 = vadd.f32 %v10685, %v10789
  %v10791 = vpop.f32.mrb[0].mxu0
  %10792 = vmatprep.mubr.bf16.mxu0 %v8770
  %10793 = vmatmul.mubr.bf16.gmra.mrb[0].mxu0 %v8769
  %v10794 = vpop.f32.mrb[0].mxu0
  %v10795 = vadd.f32 %v10690, %v10794
  %v10796 = vpop.f32.mrb[0].mxu0
  %v10797 = vpop.f32.mrb[0].mxu0
  %v10798 = vadd.f32 %v10693, %v10797
  %v10799 = vpop.f32.mrb[0].mxu0
  %10800 = vmatprep.mubr.bf16.mxu0 %v8791
  %10801 = vmatmul.mubr.bf16.gmra.mrb[0].mxu0 %v8790
  %v10802 = vpop.f32.mrb[0].mxu0
  %v10803 = vadd.f32 %v10698, %v10802
  %v10804 = vpop.f32.mrb[0].mxu0
  %v10805 = vpop.f32.mrb[0].mxu0
  %v10806 = vadd.f32 %v10701, %v10805
  %v10807 = vpop.f32.mrb[0].mxu0
  %10808 = vmatprep.mubr.bf16.mxu0 %v8812
  %10809 = vmatmul.mubr.bf16.gmra.mrb[0].mxu0 %v8811
  %v10810 = vpop.f32.mrb[0].mxu0
  %v10811 = vadd.f32 %v10706, %v10810
  %v10812 = vpop.f32.mrb[0].mxu0
  %v10813 = vpop.f32.mrb[0].mxu0
  %v10814 = vadd.f32 %v10709, %v10813
  %v10815 = vpop.f32.mrb[0].mxu0
  %10816 = vmatprep.mubr.bf16.mxu0 %v8833
  %10817 = vmatmul.mubr.bf16.gmra.mrb[0].mxu0 %v8832
  %v10818 = vpop.f32.mrb[0].mxu0
  %v10819 = vadd.f32 %v10714, %v10818
  %v10820 = vpop.f32.mrb[0].mxu0
  %v10821 = vpop.f32.mrb[0].mxu0
  %v10822 = vadd.f32 %v10717, %v10821
  %v10823 = vpop.f32.mrb[0].mxu0
  %10824 = vmatprep.mubr.bf16.mxu0 %v8854
  %10825 = vmatmul.mubr.bf16.gmra.mrb[0].mxu0 %v8853
  %v10826 = vpop.f32.mrb[0].mxu0
  %v10827 = vadd.f32 %v10722, %v10826
  %v10828 = vpop.f32.mrb[0].mxu0
  %v10829 = vpop.f32.mrb[0].mxu0
  %v10830 = vadd.f32 %v10725, %v10829
  %v10831 = vpop.f32.mrb[0].mxu0
  %10832 = vmatprep.mubr.bf16.mxu0 %v8875
  %10833 = vmatmul.mubr.bf16.gmra.mrb[0].mxu0 %v8874
  %v10834 = vpop.f32.mrb[0].mxu0
  %v10835 = vadd.f32 %v10730, %v10834
  %v10836 = vpop.f32.mrb[0].mxu0
  %v10837 = vpop.f32.mrb[0].mxu0
  %v10838 = vadd.f32 %v10733, %v10837
  %v10839 = vpop.f32.mrb[0].mxu0
  %10840 = vmatprep.mubr.bf16.mxu0 %v8896
  %10841 = vmatmul.mubr.bf16.gmra.mrb[0].mxu0 %v8895
  %v10842 = vpop.f32.mrb[0].mxu0
  %v10843 = vadd.f32 %v10738, %v10842
  %v10844 = vpop.f32.mrb[0].mxu0
  %v10845 = vpop.f32.mrb[0].mxu0
  %v10846 = vadd.f32 %v10741, %v10845
  %v10847 = vpop.f32.mrb[0].mxu0
  %10848 = vmatprep.mubr.bf16.mxu0 %v8917
  %10849 = vmatmul.mubr.bf16.gmra.mrb[0].mxu0 %v8916
  %v10850 = vpop.f32.mrb[0].mxu0
  %v10851 = vadd.f32 %v10746, %v10850
  %v10852 = vpop.f32.mrb[0].mxu0
  %v10853 = vpop.f32.mrb[0].mxu0
  %v10854 = vadd.f32 %v10749, %v10853
  %v10855 = vpop.f32.mrb[0].mxu0
  %10856 = vdwg.mxu0
  %10857 = vmatprep.subr.bf16.mxu0 0
  %10858 = vmatpush1.bf16.msra.mxu0 %v9898
  %10859 = vmatprep.subr.bf16.mxu0 0
  %10860 = vmatpush1.bf16.msra.mxu0 %v9899
  %10861 = vmatprep.subr.bf16.mxu0 0
  %10862 = vmatpush1.bf16.msra.mxu0 %v9900
  %10863 = vmatprep.subr.bf16.mxu0 0
  %10864 = vmatpush1.bf16.msra.mxu0 %v9901
  %10865 = vmatprep.subr.bf16.mxu0 0
  %10866 = vmatpush1.bf16.msra.mxu0 %v9902
  %10867 = vmatprep.subr.bf16.mxu0 0
  %10868 = vmatpush1.bf16.msra.mxu0 %v9903
  %10869 = vmatprep.subr.bf16.mxu0 0
  %10870 = vmatpush1.bf16.msra.mxu0 %v9904
  %10871 = vmatprep.subr.bf16.mxu0 0
  %10872 = vmatpush1.bf16.msra.mxu0 %v9905
  %10873 = vmatprep.subr.bf16.mxu0 0
  %10874 = vmatpush1.bf16.msra.mxu0 %v9906
  %10875 = vmatprep.subr.bf16.mxu0 0
  %10876 = vmatpush1.bf16.msra.mxu0 %v9907
  %10877 = vmatprep.subr.bf16.mxu0 0
  %10878 = vmatpush1.bf16.msra.mxu0 %v9908
  %10879 = vmatprep.subr.bf16.mxu0 0
  %10880 = vmatpush1.bf16.msra.mxu0 %v9909
  %10881 = vmatprep.subr.bf16.mxu0 0
  %10882 = vmatpush1.bf16.msra.mxu0 %v9910
  %10883 = vmatprep.subr.bf16.mxu0 0
  %10884 = vmatpush1.bf16.msra.mxu0 %v9911
  %10885 = vmatprep.subr.bf16.mxu0 0
  %10886 = vmatpush1.bf16.msra.mxu0 %v9912
  %10887 = vmatprep.subr.bf16.mxu0 0
  %10888 = vmatpush1.bf16.msra.mxu0 %v9913
  %10889 = vmatprep.mubr.bf16.mxu0 %v8751
  %10890 = vmatmul.mubr.bf16.gmra.mrb[0].mxu0 %v8750
  %v10891 = vpop.f32.mrb[0].mxu0
  %v10892 = vadd.f32 %v10787, %v10891
  %v10893 = vpop.f32.mrb[0].mxu0
  %v10894 = vpop.f32.mrb[0].mxu0
  %v10895 = vadd.f32 %v10790, %v10894
  %v10896 = vpop.f32.mrb[0].mxu0
  %10897 = vmatprep.mubr.bf16.mxu0 %v8772
  %10898 = vmatmul.mubr.bf16.gmra.mrb[0].mxu0 %v8771
  %v10899 = vpop.f32.mrb[0].mxu0
  %v10900 = vadd.f32 %v10795, %v10899
  %v10901 = vpop.f32.mrb[0].mxu0
  %v10902 = vpop.f32.mrb[0].mxu0
  %v10903 = vadd.f32 %v10798, %v10902
  %v10904 = vpop.f32.mrb[0].mxu0
  %10905 = vmatprep.mubr.bf16.mxu0 %v8793
  %10906 = vmatmul.mubr.bf16.gmra.mrb[0].mxu0 %v8792
  %v10907 = vpop.f32.mrb[0].mxu0
  %v10908 = vadd.f32 %v10803, %v10907
  %v10909 = vpop.f32.mrb[0].mxu0
  %v10910 = vpop.f32.mrb[0].mxu0
  %v10911 = vadd.f32 %v10806, %v10910
  %v10912 = vpop.f32.mrb[0].mxu0
  %10913 = vmatprep.mubr.bf16.mxu0 %v8814
  %10914 = vmatmul.mubr.bf16.gmra.mrb[0].mxu0 %v8813
  %v10915 = vpop.f32.mrb[0].mxu0
  %v10916 = vadd.f32 %v10811, %v10915
  %v10917 = vpop.f32.mrb[0].mxu0
  %v10918 = vpop.f32.mrb[0].mxu0
  %v10919 = vadd.f32 %v10814, %v10918
  %v10920 = vpop.f32.mrb[0].mxu0
  %10921 = vmatprep.mubr.bf16.mxu0 %v8835
  %10922 = vmatmul.mubr.bf16.gmra.mrb[0].mxu0 %v8834
  %v10923 = vpop.f32.mrb[0].mxu0
  %v10924 = vadd.f32 %v10819, %v10923
  %v10925 = vpop.f32.mrb[0].mxu0
  %v10926 = vpop.f32.mrb[0].mxu0
  %v10927 = vadd.f32 %v10822, %v10926
  %v10928 = vpop.f32.mrb[0].mxu0
  %10929 = vmatprep.mubr.bf16.mxu0 %v8856
  %10930 = vmatmul.mubr.bf16.gmra.mrb[0].mxu0 %v8855
  %v10931 = vpop.f32.mrb[0].mxu0
  %v10932 = vadd.f32 %v10827, %v10931
  %v10933 = vpop.f32.mrb[0].mxu0
  %v10934 = vpop.f32.mrb[0].mxu0
  %v10935 = vadd.f32 %v10830, %v10934
  %v10936 = vpop.f32.mrb[0].mxu0
  %10937 = vmatprep.mubr.bf16.mxu0 %v8877
  %10938 = vmatmul.mubr.bf16.gmra.mrb[0].mxu0 %v8876
  %v10939 = vpop.f32.mrb[0].mxu0
  %v10940 = vadd.f32 %v10835, %v10939
  %v10941 = vpop.f32.mrb[0].mxu0
  %v10942 = vpop.f32.mrb[0].mxu0
  %v10943 = vadd.f32 %v10838, %v10942
  %v10944 = vpop.f32.mrb[0].mxu0
  %10945 = vmatprep.mubr.bf16.mxu0 %v8898
  %10946 = vmatmul.mubr.bf16.gmra.mrb[0].mxu0 %v8897
  %v10947 = vpop.f32.mrb[0].mxu0
  %v10948 = vadd.f32 %v10843, %v10947
  %v10949 = vpop.f32.mrb[0].mxu0
  %v10950 = vpop.f32.mrb[0].mxu0
  %v10951 = vadd.f32 %v10846, %v10950
  %v10952 = vpop.f32.mrb[0].mxu0
  %10953 = vmatprep.mubr.bf16.mxu0 %v8919
  %10954 = vmatmul.mubr.bf16.gmra.mrb[0].mxu0 %v8918
  %v10955 = vpop.f32.mrb[0].mxu0
  %v10956 = vadd.f32 %v10851, %v10955
  %v10957 = vpop.f32.mrb[0].mxu0
  %v10958 = vpop.f32.mrb[0].mxu0
  %v10959 = vadd.f32 %v10854, %v10958
  %v10960 = vpop.f32.mrb[0].mxu0
  %10961 = vdwg.mxu0
  %10962 = vmatprep.subr.bf16.mxu0 0
  %10963 = vmatpush1.bf16.msra.mxu0 %v9914
  %10964 = vmatprep.subr.bf16.mxu0 0
  %10965 = vmatpush1.bf16.msra.mxu0 %v9915
  %10966 = vmatprep.subr.bf16.mxu0 0
  %10967 = vmatpush1.bf16.msra.mxu0 %v9916
  %10968 = vmatprep.subr.bf16.mxu0 0
  %10969 = vmatpush1.bf16.msra.mxu0 %v9917
  %10970 = vmatprep.subr.bf16.mxu0 0
  %10971 = vmatpush1.bf16.msra.mxu0 %v9918
  %10972 = vmatprep.subr.bf16.mxu0 0
  %10973 = vmatpush1.bf16.msra.mxu0 %v9919
  %10974 = vmatprep.subr.bf16.mxu0 0
  %10975 = vmatpush1.bf16.msra.mxu0 %v9920
  %10976 = vmatprep.subr.bf16.mxu0 0
  %10977 = vmatpush1.bf16.msra.mxu0 %v9921
  %10978 = vmatprep.subr.bf16.mxu0 0
  %10979 = vmatpush1.bf16.msra.mxu0 %v9922
  %10980 = vmatprep.subr.bf16.mxu0 0
  %10981 = vmatpush1.bf16.msra.mxu0 %v9923
  %10982 = vmatprep.subr.bf16.mxu0 0
  %10983 = vmatpush1.bf16.msra.mxu0 %v9924
  %10984 = vmatprep.subr.bf16.mxu0 0
  %10985 = vmatpush1.bf16.msra.mxu0 %v9925
  %10986 = vmatprep.subr.bf16.mxu0 0
  %10987 = vmatpush1.bf16.msra.mxu0 %v9926
  %10988 = vmatprep.subr.bf16.mxu0 0
  %10989 = vmatpush1.bf16.msra.mxu0 %v9927
  %10990 = vmatprep.subr.bf16.mxu0 0
  %10991 = vmatpush1.bf16.msra.mxu0 %v9928
  %10992 = vmatprep.subr.bf16.mxu0 0
  %10993 = vmatpush1.bf16.msra.mxu0 %v9929
  %10994 = vmatprep.mubr.bf16.mxu0 %v8753
  %10995 = vmatmul.mubr.bf16.gmra.mrb[0].mxu0 %v8752
  %v10996 = vpop.f32.mrb[0].mxu0
  %v10997 = vadd.f32 %v10892, %v10996
  %v10998 = vpop.f32.mrb[0].mxu0
  %v10999 = vpop.f32.mrb[0].mxu0
  %v11000 = vadd.f32 %v10895, %v10999
  %v11001 = vpop.f32.mrb[0].mxu0
  %11002 = vmatprep.mubr.bf16.mxu0 %v8774
  %11003 = vmatmul.mubr.bf16.gmra.mrb[0].mxu0 %v8773
  %v11004 = vpop.f32.mrb[0].mxu0
  %v11005 = vadd.f32 %v10900, %v11004
  %v11006 = vpop.f32.mrb[0].mxu0
  %v11007 = vpop.f32.mrb[0].mxu0
  %v11008 = vadd.f32 %v10903, %v11007
  %v11009 = vpop.f32.mrb[0].mxu0
  %11010 = vmatprep.mubr.bf16.mxu0 %v8795
  %11011 = vmatmul.mubr.bf16.gmra.mrb[0].mxu0 %v8794
  %v11012 = vpop.f32.mrb[0].mxu0
  %v11013 = vadd.f32 %v10908, %v11012
  %v11014 = vpop.f32.mrb[0].mxu0
  %v11015 = vpop.f32.mrb[0].mxu0
  %v11016 = vadd.f32 %v10911, %v11015
  %v11017 = vpop.f32.mrb[0].mxu0
  %11018 = vmatprep.mubr.bf16.mxu0 %v8816
  %11019 = vmatmul.mubr.bf16.gmra.mrb[0].mxu0 %v8815
  %v11020 = vpop.f32.mrb[0].mxu0
  %v11021 = vadd.f32 %v10916, %v11020
  %v11022 = vpop.f32.mrb[0].mxu0
  %v11023 = vpop.f32.mrb[0].mxu0
  %v11024 = vadd.f32 %v10919, %v11023
  %v11025 = vpop.f32.mrb[0].mxu0
  %11026 = vmatprep.mubr.bf16.mxu0 %v8837
  %11027 = vmatmul.mubr.bf16.gmra.mrb[0].mxu0 %v8836
  %v11028 = vpop.f32.mrb[0].mxu0
  %v11029 = vadd.f32 %v10924, %v11028
  %v11030 = vpop.f32.mrb[0].mxu0
  %v11031 = vpop.f32.mrb[0].mxu0
  %v11032 = vadd.f32 %v10927, %v11031
  %v11033 = vpop.f32.mrb[0].mxu0
  %11034 = vmatprep.mubr.bf16.mxu0 %v8858
  %11035 = vmatmul.mubr.bf16.gmra.mrb[0].mxu0 %v8857
  %v11036 = vpop.f32.mrb[0].mxu0
  %v11037 = vadd.f32 %v10932, %v11036
  %v11038 = vpop.f32.mrb[0].mxu0
  %v11039 = vpop.f32.mrb[0].mxu0
  %v11040 = vadd.f32 %v10935, %v11039
  %v11041 = vpop.f32.mrb[0].mxu0
  %11042 = vmatprep.mubr.bf16.mxu0 %v8879
  %11043 = vmatmul.mubr.bf16.gmra.mrb[0].mxu0 %v8878
  %v11044 = vpop.f32.mrb[0].mxu0
  %v11045 = vadd.f32 %v10940, %v11044
  %v11046 = vpop.f32.mrb[0].mxu0
  %v11047 = vpop.f32.mrb[0].mxu0
  %v11048 = vadd.f32 %v10943, %v11047
  %v11049 = vpop.f32.mrb[0].mxu0
  %11050 = vmatprep.mubr.bf16.mxu0 %v8900
  %11051 = vmatmul.mubr.bf16.gmra.mrb[0].mxu0 %v8899
  %v11052 = vpop.f32.mrb[0].mxu0
  %v11053 = vadd.f32 %v10948, %v11052
  %v11054 = vpop.f32.mrb[0].mxu0
  %v11055 = vpop.f32.mrb[0].mxu0
  %v11056 = vadd.f32 %v10951, %v11055
  %v11057 = vpop.f32.mrb[0].mxu0
  %11058 = vmatprep.mubr.bf16.mxu0 %v8921
  %11059 = vmatmul.mubr.bf16.gmra.mrb[0].mxu0 %v8920
  %v11060 = vpop.f32.mrb[0].mxu0
  %v11061 = vadd.f32 %v10956, %v11060
  %v11062 = vpop.f32.mrb[0].mxu0
  %v11063 = vpop.f32.mrb[0].mxu0
  %v11064 = vadd.f32 %v10959, %v11063
  %v11065 = vpop.f32.mrb[0].mxu0
  %11066 = vdwg.mxu0
  %11067 = vmatprep.subr.bf16.mxu0 0
  %11068 = vmatpush1.bf16.msra.mxu0 %v9930
  %11069 = vmatprep.subr.bf16.mxu0 0
  %11070 = vmatpush1.bf16.msra.mxu0 %v9931
  %11071 = vmatprep.subr.bf16.mxu0 0
  %11072 = vmatpush1.bf16.msra.mxu0 %v9932
  %11073 = vmatprep.subr.bf16.mxu0 0
  %11074 = vmatpush1.bf16.msra.mxu0 %v9933
  %11075 = vmatprep.subr.bf16.mxu0 0
  %11076 = vmatpush1.bf16.msra.mxu0 %v9934
  %11077 = vmatprep.subr.bf16.mxu0 0
  %11078 = vmatpush1.bf16.msra.mxu0 %v9935
  %11079 = vmatprep.subr.bf16.mxu0 0
  %11080 = vmatpush1.bf16.msra.mxu0 %v9936
  %11081 = vmatprep.subr.bf16.mxu0 0
  %11082 = vmatpush1.bf16.msra.mxu0 %v9937
  %11083 = vmatprep.subr.bf16.mxu0 0
  %11084 = vmatpush1.bf16.msra.mxu0 %v9938
  %11085 = vmatprep.subr.bf16.mxu0 0
  %11086 = vmatpush1.bf16.msra.mxu0 %v9939
  %11087 = vmatprep.subr.bf16.mxu0 0
  %11088 = vmatpush1.bf16.msra.mxu0 %v9940
  %11089 = vmatprep.subr.bf16.mxu0 0
  %11090 = vmatpush1.bf16.msra.mxu0 %v9941
  %11091 = vmatprep.subr.bf16.mxu0 0
  %11092 = vmatpush1.bf16.msra.mxu0 %v9942
  %11093 = vmatprep.subr.bf16.mxu0 0
  %11094 = vmatpush1.bf16.msra.mxu0 %v9943
  %11095 = vmatprep.subr.bf16.mxu0 0
  %11096 = vmatpush1.bf16.msra.mxu0 %v9944
  %11097 = vmatprep.subr.bf16.mxu0 0
  %11098 = vmatpush1.bf16.msra.mxu0 %v9945
  %11099 = vmatprep.mubr.bf16.mxu0 %v8755
  %11100 = vmatmul.mubr.bf16.gmra.mrb[0].mxu0 %v8754
  %v11101 = vpop.f32.mrb[0].mxu0
  %v11102 = vadd.f32 %v10997, %v11101
  %v11103 = vpop.f32.mrb[0].mxu0
  %v11104 = vpop.f32.mrb[0].mxu0
  %v11105 = vadd.f32 %v11000, %v11104
  %v11106 = vpop.f32.mrb[0].mxu0
  %11107 = vmatprep.mubr.bf16.mxu0 %v8776
  %11108 = vmatmul.mubr.bf16.gmra.mrb[0].mxu0 %v8775
  %v11109 = vpop.f32.mrb[0].mxu0
  %v11110 = vadd.f32 %v11005, %v11109
  %v11111 = vpop.f32.mrb[0].mxu0
  %v11112 = vpop.f32.mrb[0].mxu0
  %v11113 = vadd.f32 %v11008, %v11112
  %v11114 = vpop.f32.mrb[0].mxu0
  %11115 = vmatprep.mubr.bf16.mxu0 %v8797
  %11116 = vmatmul.mubr.bf16.gmra.mrb[0].mxu0 %v8796
  %v11117 = vpop.f32.mrb[0].mxu0
  %v11118 = vadd.f32 %v11013, %v11117
  %v11119 = vpop.f32.mrb[0].mxu0
  %v11120 = vpop.f32.mrb[0].mxu0
  %v11121 = vadd.f32 %v11016, %v11120
  %v11122 = vpop.f32.mrb[0].mxu0
  %11123 = vmatprep.mubr.bf16.mxu0 %v8818
  %11124 = vmatmul.mubr.bf16.gmra.mrb[0].mxu0 %v8817
  %v11125 = vpop.f32.mrb[0].mxu0
  %v11126 = vadd.f32 %v11021, %v11125
  %v11127 = vpop.f32.mrb[0].mxu0
  %v11128 = vpop.f32.mrb[0].mxu0
  %v11129 = vadd.f32 %v11024, %v11128
  %v11130 = vpop.f32.mrb[0].mxu0
  %11131 = vmatprep.mubr.bf16.mxu0 %v8839
  %11132 = vmatmul.mubr.bf16.gmra.mrb[0].mxu0 %v8838
  %v11133 = vpop.f32.mrb[0].mxu0
  %v11134 = vadd.f32 %v11029, %v11133
  %v11135 = vpop.f32.mrb[0].mxu0
  %v11136 = vpop.f32.mrb[0].mxu0
  %v11137 = vadd.f32 %v11032, %v11136
  %v11138 = vpop.f32.mrb[0].mxu0
  %11139 = vmatprep.mubr.bf16.mxu0 %v8860
  %11140 = vmatmul.mubr.bf16.gmra.mrb[0].mxu0 %v8859
  %v11141 = vpop.f32.mrb[0].mxu0
  %v11142 = vadd.f32 %v11037, %v11141
  %v11143 = vpop.f32.mrb[0].mxu0
  %v11144 = vpop.f32.mrb[0].mxu0
  %v11145 = vadd.f32 %v11040, %v11144
  %v11146 = vpop.f32.mrb[0].mxu0
  %11147 = vmatprep.mubr.bf16.mxu0 %v8881
  %11148 = vmatmul.mubr.bf16.gmra.mrb[0].mxu0 %v8880
  %v11149 = vpop.f32.mrb[0].mxu0
  %v11150 = vadd.f32 %v11045, %v11149
  %v11151 = vpop.f32.mrb[0].mxu0
  %v11152 = vpop.f32.mrb[0].mxu0
  %v11153 = vadd.f32 %v11048, %v11152
  %v11154 = vpop.f32.mrb[0].mxu0
  %11155 = vmatprep.mubr.bf16.mxu0 %v8902
  %11156 = vmatmul.mubr.bf16.gmra.mrb[0].mxu0 %v8901
  %v11157 = vpop.f32.mrb[0].mxu0
  %v11158 = vadd.f32 %v11053, %v11157
  %v11159 = vpop.f32.mrb[0].mxu0
  %v11160 = vpop.f32.mrb[0].mxu0
  %v11161 = vadd.f32 %v11056, %v11160
  %v11162 = vpop.f32.mrb[0].mxu0
  %11163 = vmatprep.mubr.bf16.mxu0 %v8923
  %11164 = vmatmul.mubr.bf16.gmra.mrb[0].mxu0 %v8922
  %v11165 = vpop.f32.mrb[0].mxu0
  %v11166 = vadd.f32 %v11061, %v11165
  %v11167 = vpop.f32.mrb[0].mxu0
  %v11168 = vpop.f32.mrb[0].mxu0
  %v11169 = vadd.f32 %v11064, %v11168
  %v11170 = vpop.f32.mrb[0].mxu0
  %11171 = vdwg.mxu0
  %11172 = vmatprep.subr.bf16.mxu0 0
  %11173 = vmatpush1.bf16.msra.mxu0 %v9946
  %11174 = vmatprep.subr.bf16.mxu0 0
  %11175 = vmatpush1.bf16.msra.mxu0 %v9947
  %11176 = vmatprep.subr.bf16.mxu0 0
  %11177 = vmatpush1.bf16.msra.mxu0 %v9948
  %11178 = vmatprep.subr.bf16.mxu0 0
  %11179 = vmatpush1.bf16.msra.mxu0 %v9949
  %11180 = vmatprep.subr.bf16.mxu0 0
  %11181 = vmatpush1.bf16.msra.mxu0 %v9950
  %11182 = vmatprep.subr.bf16.mxu0 0
  %11183 = vmatpush1.bf16.msra.mxu0 %v9951
  %11184 = vmatprep.subr.bf16.mxu0 0
  %11185 = vmatpush1.bf16.msra.mxu0 %v9952
  %11186 = vmatprep.subr.bf16.mxu0 0
  %11187 = vmatpush1.bf16.msra.mxu0 %v9953
  %11188 = vmatprep.subr.bf16.mxu0 0
  %11189 = vmatpush1.bf16.msra.mxu0 0
  %11190 = vmatprep.subr.bf16.mxu0 0
  %11191 = vmatpush1.bf16.msra.mxu0 0
  %11192 = vmatprep.subr.bf16.mxu0 0
  %11193 = vmatpush1.bf16.msra.mxu0 0
  %11194 = vmatprep.subr.bf16.mxu0 0
  %11195 = vmatpush1.bf16.msra.mxu0 0
  %11196 = vmatprep.subr.bf16.mxu0 0
  %11197 = vmatpush1.bf16.msra.mxu0 0
  %11198 = vmatprep.subr.bf16.mxu0 0
  %11199 = vmatpush1.bf16.msra.mxu0 0
  %11200 = vmatprep.subr.bf16.mxu0 0
  %11201 = vmatpush1.bf16.msra.mxu0 0
  %11202 = vmatprep.subr.bf16.mxu0 0
  %11203 = vmatpush1.bf16.msra.mxu0 0
  %11204 = vmatprep.mubr.bf16.mxu0 0
  %11205 = vmatmul.mubr.bf16.gmra.mrb[0].mxu0 %v8756
  %v11206 = vpop.f32.mrb[0].mxu0
  %v11207 = vadd.f32 %v11102, %v11206
  %v11208 = vpop.f32.mrb[0].mxu0
  %v11209 = vpop.f32.mrb[0].mxu0
  %v11210 = vadd.f32 %v11105, %v11209
  %v11211 = vpop.f32.mrb[0].mxu0
  %11212 = vmatprep.mubr.bf16.mxu0 0
  %11213 = vmatmul.mubr.bf16.gmra.mrb[0].mxu0 %v8777
  %v11214 = vpop.f32.mrb[0].mxu0
  %v11215 = vadd.f32 %v11110, %v11214
  %v11216 = vpop.f32.mrb[0].mxu0
  %v11217 = vpop.f32.mrb[0].mxu0
  %v11218 = vadd.f32 %v11113, %v11217
  %v11219 = vpop.f32.mrb[0].mxu0
  %11220 = vmatprep.mubr.bf16.mxu0 0
  %11221 = vmatmul.mubr.bf16.gmra.mrb[0].mxu0 %v8798
  %v11222 = vpop.f32.mrb[0].mxu0
  %v11223 = vadd.f32 %v11118, %v11222
  %v11224 = vpop.f32.mrb[0].mxu0
  %v11225 = vpop.f32.mrb[0].mxu0
  %v11226 = vadd.f32 %v11121, %v11225
  %v11227 = vpop.f32.mrb[0].mxu0
  %11228 = vmatprep.mubr.bf16.mxu0 0
  %11229 = vmatmul.mubr.bf16.gmra.mrb[0].mxu0 %v8819
  %v11230 = vpop.f32.mrb[0].mxu0
  %v11231 = vadd.f32 %v11126, %v11230
  %v11232 = vpop.f32.mrb[0].mxu0
  %v11233 = vpop.f32.mrb[0].mxu0
  %v11234 = vadd.f32 %v11129, %v11233
  %v11235 = vpop.f32.mrb[0].mxu0
  %11236 = vmatprep.mubr.bf16.mxu0 0
  %11237 = vmatmul.mubr.bf16.gmra.mrb[0].mxu0 %v8840
  %v11238 = vpop.f32.mrb[0].mxu0
  %v11239 = vadd.f32 %v11134, %v11238
  %v11240 = vpop.f32.mrb[0].mxu0
  %v11241 = vpop.f32.mrb[0].mxu0
  %v11242 = vadd.f32 %v11137, %v11241
  %v11243 = vpop.f32.mrb[0].mxu0
  %11244 = vmatprep.mubr.bf16.mxu0 0
  %11245 = vmatmul.mubr.bf16.gmra.mrb[0].mxu0 %v8861
  %v11246 = vpop.f32.mrb[0].mxu0
  %v11247 = vadd.f32 %v11142, %v11246
  %v11248 = vpop.f32.mrb[0].mxu0
  %v11249 = vpop.f32.mrb[0].mxu0
  %v11250 = vadd.f32 %v11145, %v11249
  %v11251 = vpop.f32.mrb[0].mxu0
  %11252 = vmatprep.mubr.bf16.mxu0 0
  %11253 = vmatmul.mubr.bf16.gmra.mrb[0].mxu0 %v8882
  %v11254 = vpop.f32.mrb[0].mxu0
  %v11255 = vadd.f32 %v11150, %v11254
  %v11256 = vpop.f32.mrb[0].mxu0
  %v11257 = vpop.f32.mrb[0].mxu0
  %v11258 = vadd.f32 %v11153, %v11257
  %v11259 = vpop.f32.mrb[0].mxu0
  %11260 = vmatprep.mubr.bf16.mxu0 0
  %11261 = vmatmul.mubr.bf16.gmra.mrb[0].mxu0 %v8903
  %v11262 = vpop.f32.mrb[0].mxu0
  %v11263 = vadd.f32 %v11158, %v11262
  %v11264 = vpop.f32.mrb[0].mxu0
  %v11265 = vpop.f32.mrb[0].mxu0
  %v11266 = vadd.f32 %v11161, %v11265
  %v11267 = vpop.f32.mrb[0].mxu0
  %11268 = vmatprep.mubr.bf16.mxu0 0
  %11269 = vmatmul.mubr.bf16.gmra.mrb[0].mxu0 %v8924
  %v11270 = vpop.f32.mrb[0].mxu0
  %v11271 = vadd.f32 %v11166, %v11270
  %v11272 = vpop.f32.mrb[0].mxu0
  %v11273 = vpop.f32.mrb[0].mxu0
  %v11274 = vadd.f32 %v11169, %v11273
  %v11275 = vpop.f32.mrb[0].mxu0
  %11276 = vdwg.mxu0
  %v11277 = vadd.f32 %v11207, %v11210
  %v11278 = vadd.f32 %v11277, %v11215
  %v11279 = vadd.f32 %v11278, %v11218
  %v11280 = vadd.f32 %v11279, %v11223
  %v11281 = vadd.f32 %v11280, %v11226
  %v11282 = vadd.f32 %v11281, %v11231
  %v11283 = vadd.f32 %v11282, %v11234
  %v11284 = vadd.f32 %v11283, %v11239
  %v11285 = vadd.f32 %v11284, %v11242
  %v11286 = vadd.f32 %v11285, %v11247
  %v11287 = vadd.f32 %v11286, %v11250
  %v11288 = vadd.f32 %v11287, %v11255
  %v11289 = vadd.f32 %v11288, %v11258
  %v11290 = vadd.f32 %v11289, %v11263
  %v11291 = vadd.f32 %v11290, %v11266
  %v11292 = vadd.f32 %v11291, %v11271
  %v11293 = vadd.f32 %v11292, %v11274
  %v11294 = vrot.slane %v11293, 4
  %v11295 = vadd.f32 %v11293, %v11294
  %v11296 = vrot.slane %v11295, 2
  %v11297 = vadd.f32 %v11295, %v11296
  %v11298 = vrot.slane %v11297, 1
  %v11299 = vadd.f32 %v11297, %v11298
  %v11300 = vmul.f32 %v11299, 0.0069444445
  %v11301 = vsub.f32 %v11207, %v11300
  %v11302 = vsub.f32 %v11210, %v11300
  %v11303 = vsub.f32 %v11215, %v11300
  %v11304 = vsub.f32 %v11218, %v11300
  %v11305 = vsub.f32 %v11223, %v11300
  %v11306 = vsub.f32 %v11226, %v11300
  %v11307 = vsub.f32 %v11231, %v11300
  %v11308 = vsub.f32 %v11234, %v11300
  %v11309 = vsub.f32 %v11239, %v11300
  %v11310 = vsub.f32 %v11242, %v11300
  %v11311 = vsub.f32 %v11247, %v11300
  %v11312 = vsub.f32 %v11250, %v11300
  %v11313 = vsub.f32 %v11255, %v11300
  %v11314 = vsub.f32 %v11258, %v11300
  %v11315 = vsub.f32 %v11263, %v11300
  %v11316 = vsub.f32 %v11266, %v11300
  %v11317 = vsub.f32 %v11271, %v11300
  %v11318 = vsub.f32 %v11274, %v11300
  %v11319 = vmul.f32 %v11301, %v11301
  %v11320 = vmul.f32 %v11302, %v11302
  %v11321 = vmul.f32 %v11303, %v11303
  %v11322 = vmul.f32 %v11304, %v11304
  %v11323 = vmul.f32 %v11305, %v11305
  %v11324 = vmul.f32 %v11306, %v11306
  %v11325 = vmul.f32 %v11307, %v11307
  %v11326 = vmul.f32 %v11308, %v11308
  %v11327 = vmul.f32 %v11309, %v11309
  %v11328 = vmul.f32 %v11310, %v11310
  %v11329 = vmul.f32 %v11311, %v11311
  %v11330 = vmul.f32 %v11312, %v11312
  %v11331 = vmul.f32 %v11313, %v11313
  %v11332 = vmul.f32 %v11314, %v11314
  %v11333 = vmul.f32 %v11315, %v11315
  %v11334 = vmul.f32 %v11316, %v11316
  %v11335 = vmul.f32 %v11317, %v11317
  %v11336 = vmul.f32 %v11318, %v11318
  %v11337 = vadd.f32 %v11319, %v11320
  %v11338 = vadd.f32 %v11337, %v11321
  %v11339 = vadd.f32 %v11338, %v11322
  %v11340 = vadd.f32 %v11339, %v11323
  %v11341 = vadd.f32 %v11340, %v11324
  %v11342 = vadd.f32 %v11341, %v11325
  %v11343 = vadd.f32 %v11342, %v11326
  %v11344 = vadd.f32 %v11343, %v11327
  %v11345 = vadd.f32 %v11344, %v11328
  %v11346 = vadd.f32 %v11345, %v11329
  %v11347 = vadd.f32 %v11346, %v11330
  %v11348 = vadd.f32 %v11347, %v11331
  %v11349 = vadd.f32 %v11348, %v11332
  %v11350 = vadd.f32 %v11349, %v11333
  %v11351 = vadd.f32 %v11350, %v11334
  %v11352 = vadd.f32 %v11351, %v11335
  %v11353 = vadd.f32 %v11352, %v11336
  %v11354 = vrot.slane %v11353, 4
  %v11355 = vadd.f32 %v11353, %v11354
  %v11356 = vrot.slane %v11355, 2
  %v11357 = vadd.f32 %v11355, %v11356
  %v11358 = vrot.slane %v11357, 1
  %v11359 = vadd.f32 %v11357, %v11358
  %v11360 = vmul.f32 %v11359, 0.0069444445
  %v11361 = vadd.f32 %v11360, 0.001
  %v11362 = vrsqrt.pop %v11361
  %v11363 = vld [vmem:[%s2 + $0x2] sm:$0x1]
  %v11364 = vmul.f32 %v11362, %v11363
  %v11365 = vlaneseq
  %v11366 = vshrl.u32 %v11365, 7
  %v11367 = vsub.s32 0, %v11366
  %v11368 = vrot.slane %v11364, %v11367
  %v11369 = vmul.f32 %v11301, %v11368
  %v11370 = vmul.f32 %v11302, %v11368
  %v11371 = vmul.f32 %v11303, %v11368
  %v11372 = vmul.f32 %v11304, %v11368
  %v11373 = vmul.f32 %v11305, %v11368
  %v11374 = vmul.f32 %v11306, %v11368
  %v11375 = vmul.f32 %v11307, %v11368
  %v11376 = vmul.f32 %v11308, %v11368
  %v11377 = vmul.f32 %v11309, %v11368
  %v11378 = vmul.f32 %v11310, %v11368
  %v11379 = vmul.f32 %v11311, %v11368
  %v11380 = vmul.f32 %v11312, %v11368
  %v11381 = vmul.f32 %v11313, %v11368
  %v11382 = vmul.f32 %v11314, %v11368
  %v11383 = vmul.f32 %v11315, %v11368
  %v11384 = vmul.f32 %v11316, %v11368
  %v11385 = vmul.f32 %v11317, %v11368
  %v11386 = vmul.f32 %v11318, %v11368
  %v11387 = vld [vmem:[%s3 + $0x2] sm:$0x1]
  %v11389 = vlaneseq
  %v11390 = vshrl.u32 %v11389, 7
  %v11391 = vsub.s32 0, %v11390
  %v11392 = vrot.slane %v11387, %v11391
  %v11394 = vadd.f32 %v11369, %v11392
  %v11395 = vadd.f32 %v11370, %v11392
  %v11396 = vadd.f32 %v11371, %v11392
  %v11397 = vadd.f32 %v11372, %v11392
  %v11398 = vadd.f32 %v11373, %v11392
  %v11399 = vadd.f32 %v11374, %v11392
  %v11400 = vadd.f32 %v11375, %v11392
  %v11401 = vadd.f32 %v11376, %v11392
  %v11402 = vadd.f32 %v11377, %v11392
  %v11403 = vadd.f32 %v11378, %v11392
  %v11404 = vadd.f32 %v11379, %v11392
  %v11405 = vadd.f32 %v11380, %v11392
  %v11406 = vadd.f32 %v11381, %v11392
  %v11407 = vadd.f32 %v11382, %v11392
  %v11408 = vadd.f32 %v11383, %v11392
  %v11409 = vadd.f32 %v11384, %v11392
  %v11410 = vadd.f32 %v11385, %v11392
  %v11411 = vadd.f32 %v11386, %v11392
  %11412 = vst [vmem:[%s4 + $0x10] sm:$0xff] %v11394
  %11413 = vst [vmem:[%s4 + $0x28] sm:$0xff] %v11395
  %11414 = vst [vmem:[%s4 + $0x40] sm:$0xff] %v11396
  %11415 = vst [vmem:[%s4 + $0x58] sm:$0xff] %v11397
  %11416 = vst [vmem:[%s4 + $0x70] sm:$0xff] %v11398
  %11417 = vst [vmem:[%s4 + $0x88] sm:$0xff] %v11399
  %11418 = vst [vmem:[%s4 + $0xa0] sm:$0xff] %v11400
  %11419 = vst [vmem:[%s4 + $0xb8] sm:$0xff] %v11401
  %11420 = vst [vmem:[%s4 + $0xd0] sm:$0xff] %v11402
  %11421 = vst [vmem:[%s4 + $0xe8] sm:$0xff] %v11403
  %11422 = vst [vmem:[%s4 + $0x100] sm:$0xff] %v11404
  %11423 = vst [vmem:[%s4 + $0x118] sm:$0xff] %v11405
  %11424 = vst [vmem:[%s4 + $0x130] sm:$0xff] %v11406
  %11425 = vst [vmem:[%s4 + $0x148] sm:$0xff] %v11407
  %11426 = vst [vmem:[%s4 + $0x160] sm:$0xff] %v11408
  %11427 = vst [vmem:[%s4 + $0x178] sm:$0xff] %v11409
  %11428 = vst [vmem:[%s4 + $0x190] sm:$0xff] %v11410
  %11429 = vst [vmem:[%s4 + $0x1a8] sm:$0xff] %v11411
  // Predicated region
  $region18: #{forward.1} parent=0 // pred_check
    _
  $region19: #{forward.1} parent=0 // pred_check_branch
    %11431 = sbr.rel (0) target = $region21
  $region20: #{forward.1} parent=0 // pred_region
    _
  $region21: #{forward.1} parent=0 // pred_fallthru
    _
  // Predicated region
  $region22: #{forward.1} parent=0 // pred_check
    _
  $region23: #{forward.1} parent=0 // pred_check_branch
    %11433 = sbr.rel (0) target = $region25
  $region24: #{forward.1} parent=0 // pred_region
    _
  $region25: #{forward.1} parent=0 // pred_fallthru
    _

</llo_original>
